<compile_context>
chip_gen: v5e
topology: v5e:2x2
jax: 0.10.0
libtpu: 0.0.40
codegen_flags: <defaults>
</compile_context>

<pallas_src>
import functools
from math import log2

import jax
import jax.numpy as jnp
from jax.experimental import pallas as pl
from jax.experimental.pallas import tpu as pltpu

LANE = 128


def _round_up(n, m):
    return (n + m - 1) // m * m


# ----------------------------------------------------------------------------
# In-kernel 3x3 "same" conv on one (H, W, Cin) tile via im2col + single matmul
# ----------------------------------------------------------------------------
def _conv3x3_im2col(x_hwc, w_ref, b_ref, pad_ref, col_ref):
    """x_hwc: (H, W, Cin) f32 value.  Returns (H*W, Cout) f32 value.

    w_ref  : (9*Cin, Cout) VMEM ref, taps flattened (kh, kw, cin) row-major.
    b_ref  : (1, Cout) VMEM ref.
    pad_ref: (H+2, W+2, Cin) f32 VMEM scratch (halo buffer, border kept zero).
    col_ref: (H*W, 9*Cin) f32 VMEM scratch (im2col buffer).
    """
    H, W, Cin = x_hwc.shape
    # Build the zero-halo'd tile in VMEM (replaces host-side jnp.pad).
    pad_ref[...] = jnp.zeros_like(pad_ref)
    pad_ref[1:H + 1, 1:W + 1, :] = x_hwc
    # im2col: 9 lane-aligned column-block writes, then ONE big matmul.
    for t in range(9):
        kh, kw = divmod(t, 3)
        col_ref[:, t * Cin:(t + 1) * Cin] = (
            pad_ref[kh:kh + H, kw:kw + W, :].reshape(H * W, Cin))
    return (jnp.dot(col_ref[...], w_ref[...],
                    preferred_element_type=jnp.float32) + b_ref[...])


# ----------------------------------------------------------------------------
# Kernel A: standalone 3x3 conv (head conv, upsample convs, tail conv)
# ----------------------------------------------------------------------------
def _conv3x3_kernel(x_ref, w_ref, b_ref, o_ref, pad_ref, col_ref, *, apply_relu):
    H, W, Cout = o_ref.shape
    out = _conv3x3_im2col(x_ref[...].astype(jnp.float32),
                          w_ref, b_ref, pad_ref, col_ref)
    if apply_relu:
        out = jnp.maximum(out, 0.0)
    o_ref[...] = out.reshape(H, W, Cout).astype(o_ref.dtype)


def conv3x3(x, w_flat, b_row, *, apply_relu=False):
    """3x3 conv, padding=1, stride=1.  x: (N,H,W,Cin) -> (N,H,W,Cout).

    Cin / Cout are expected to be multiples of 128 (lane-dense)."""
    N, H, W, Cin = x.shape
    Cout = w_flat.shape[-1]
    return pl.pallas_call(
        functools.partial(_conv3x3_kernel, apply_relu=apply_relu),
        out_shape=jax.ShapeDtypeStruct((N, H, W, Cout), x.dtype),
        grid=(N,),
        in_specs=[
            pl.BlockSpec((None, H, W, Cin), lambda n: (n, 0, 0, 0)),
            pl.BlockSpec((9 * Cin, Cout), lambda n: (0, 0)),
            pl.BlockSpec((1, Cout), lambda n: (0, 0)),
        ],
        out_specs=pl.BlockSpec((None, H, W, Cout), lambda n: (n, 0, 0, 0)),
        scratch_shapes=[
            pltpu.VMEM((H + 2, W + 2, Cin), jnp.float32),   # halo buffer
            pltpu.VMEM((H * W, 9 * Cin), jnp.float32),      # im2col buffer
        ],
        compiler_params=pltpu.CompilerParams(
            dimension_semantics=("parallel",)),
    )(x, w_flat, b_row)


# ----------------------------------------------------------------------------
# Kernel B: fused residual trunk (all ResBlocks + global 0.1*x skip)
# ----------------------------------------------------------------------------
def _res_trunk_kernel(x_ref, w_ref, b_ref, o_ref, y_ref, pad_ref, col_ref):
    # x_ref: (H, W, C) head features (constant across the block axis)
    # w_ref: (9C, C) conv1 weight of ResBlock r;  b_ref: (1, C)
    # y_ref: (H, W, C) f32 VMEM carry of the running feature map
    H, W, C = x_ref.shape
    r = pl.program_id(1)

    @pl.when(r == 0)
    def _init():
        y_ref[...] = x_ref[...].astype(jnp.float32)

    x_in = y_ref[...]                                              # (H, W, C)
    # ResBlock forward (reference applies conv1 twice; conv2 is unused).
    t = _conv3x3_im2col(x_in, w_ref, b_ref, pad_ref, col_ref)
    t = jnp.maximum(t, 0.0)                                        # ReLU
    y = _conv3x3_im2col(t.reshape(H, W, C), w_ref, b_ref, pad_ref, col_ref)
    y3 = y.reshape(H, W, C) + 0.1 * x_in                           # local skip
    y_ref[...] = y3

    @pl.when(r == pl.num_programs(1) - 1)
    def _finalize():
        out = y3 + 0.1 * x_ref[...].astype(jnp.float32)            # global skip
        o_ref[...] = out.astype(o_ref.dtype)


def res_trunk(x, w_stack, b_stack):
    """x: (N,H,W,C);  w_stack: (R, 9C, C);  b_stack: (R, 1, C)."""
    N, H, W, C = x.shape
    R = w_stack.shape[0]
    return pl.pallas_call(
        _res_trunk_kernel,
        out_shape=jax.ShapeDtypeStruct((N, H, W, C), x.dtype),
        grid=(N, R),
        in_specs=[
            pl.BlockSpec((None, H, W, C), lambda n, r: (n, 0, 0, 0)),
            pl.BlockSpec((None, 9 * C, C), lambda n, r: (r, 0, 0)),
            pl.BlockSpec((None, 1, C), lambda n, r: (r, 0, 0)),
        ],
        out_specs=pl.BlockSpec((None, H, W, C), lambda n, r: (n, 0, 0, 0)),
        scratch_shapes=[
            pltpu.VMEM((H, W, C), jnp.float32),             # feature carry
            pltpu.VMEM((H + 2, W + 2, C), jnp.float32),     # halo buffer
            pltpu.VMEM((H * W, 9 * C), jnp.float32),        # im2col buffer
        ],
        compiler_params=pltpu.CompilerParams(
            dimension_semantics=("parallel", "arbitrary")),
    )(x, w_stack, b_stack)


# ----------------------------------------------------------------------------
# Glue ops (plain JAX): pixel shuffle, layout conversion
# ----------------------------------------------------------------------------
def pixel_shuffle_nhwc(x, r):
    # Matches torch.nn.PixelShuffle ordering: channel index = c*r*r + i*r + j.
    # Works on the channel-padded representation (padded channels stay zero).
    N, H, W, Cr2 = x.shape
    C = Cr2 // (r * r)
    x = x.reshape(N, H, W, C, r, r)
    x = jnp.transpose(x, (0, 1, 4, 2, 5, 3))
    return x.reshape(N, H * r, W * r, C)


# ----------------------------------------------------------------------------
# Parameter construction (deterministic synthetic init, channel-padded)
# ----------------------------------------------------------------------------
def _conv_init(key, cin, cout):
    k1, k2 = jax.random.split(key)
    fan_in = cin * 9
    w = jax.random.normal(k1, (3, 3, cin, cout), jnp.float32) / jnp.sqrt(float(fan_in))
    b = 0.01 * jax.random.normal(k2, (cout,), jnp.float32)
    return w, b


def _pad_and_flatten(w, b, cin_pad, cout_pad):
    """(3,3,cin,cout) weight -> lane-dense flattened (9*cin_pad, cout_pad)."""
    kh, kw, cin, cout = w.shape
    wp = jnp.zeros((kh, kw, cin_pad, cout_pad), w.dtype).at[:, :, :cin, :cout].set(w)
    bp = jnp.zeros((1, cout_pad), b.dtype).at[0, :cout].set(b)
    return wp.reshape(kh * kw * cin_pad, cout_pad), bp


def init_params(key, num_resblock, num_feature, scaling_size,
                in_channels=3, out_channels=3):
    assert scaling_size in (2, 3, 4, 8)
    num_upsample = int(log2(scaling_size))
    Cp = _round_up(num_feature, LANE)
    Cin0p = _round_up(in_channels, LANE)
    Coutp = _round_up(out_channels, LANE)

    keys = jax.random.split(key, 2 + num_resblock + num_upsample)
    params = {}

    w, b = _conv_init(keys[0], in_channels, num_feature)
    params["conv1"] = _pad_and_flatten(w, b, Cin0p, Cp)

    ws, bs = [], []
    for i in range(num_resblock):
        # Only conv1 of each ResBlock participates in forward (reference bug),
        # so conv2 parameters are not materialized.
        w, b = _conv_init(keys[1 + i], num_feature, num_feature)
        wf, bf = _pad_and_flatten(w, b, Cp, Cp)
        ws.append(wf)
        bs.append(bf)
    params["res"] = (jnp.stack(ws), jnp.stack(bs))

    params["up"] = []
    for i in range(num_upsample):
        r = 3 if scaling_size == 3 else 2
        w, b = _conv_init(keys[1 + num_resblock + i], num_feature,
                          r * r * num_feature)
        params["up"].append(_pad_and_flatten(w, b, Cp, r * r * Cp))

    w, b = _conv_init(keys[-1], num_feature, out_channels)
    params["conv2"] = _pad_and_flatten(w, b, Cp, Coutp)
    return params


# ----------------------------------------------------------------------------
# EDSR forward
# ----------------------------------------------------------------------------
def edsr_forward(x_nchw, params):
    w1, b1 = params["conv1"]
    Cin0_pad = w1.shape[0] // 9
    Cp = w1.shape[1]

    x = jnp.transpose(x_nchw, (0, 2, 3, 1))                # NCHW -> NHWC
    cin = x.shape[-1]
    if cin < Cin0_pad:                                     # lane-pad input channels
        x = jnp.pad(x, ((0, 0), (0, 0), (0, 0), (0, Cin0_pad - cin)))

    # head conv
    x = conv3x3(x, w1, b1)

    # fused residual trunk: all ResBlocks + the global 0.1*x skip
    w_stack, b_stack = params["res"]
    y = res_trunk(x, w_stack, b_stack)

    # upsample stages: conv (channel-padded r*r*Cp outputs) + pixel shuffle
    for (wu, bu) in params["up"]:
        r = int(round((wu.shape[1] // Cp) ** 0.5))
        y = conv3x3(y, wu, bu)
        y = pixel_shuffle_nhwc(y, r)

    # tail conv (output channels padded to 128, then sliced back to 3)
    w2, b2 = params["conv2"]
    y = conv3x3(y, w2, b2)
    y = y[..., :3]
    return jnp.transpose(y, (0, 3, 1, 2))                  # NHWC -> NCHW


# ----------------------------------------------------------------------------
if __name__ == "__main__":
    # Small config consistent with the module (input must have 3 channels).
    num_resblock = 2
    num_feature = 8
    scaling_size = 2

    key = jax.random.PRNGKey(0)
    k_x, k_p = jax.random.split(key)

    x = jax.random.normal(k_x, (2, 3, 8, 8), jnp.float32)          # NCHW input
    params = init_params(k_p, num_resblock, num_feature, scaling_size)

    fwd = jax.jit(edsr_forward)
    out = jax.block_until_ready(fwd(x, params))

    assert out.shape == (2, 3, 8 * scaling_size, 8 * scaling_size), out.shape
    assert out.dtype == jnp.float32
    print("KERNEL_OK")
</pallas_src>

<mosaic_0001>
module attributes {stable_mosaic.version = 11 : i64} {
  func.func @_conv3x3_kernel(%arg0: i32, %arg1: memref<1x8x8x128xf32, #tpu.memory_space<vmem>>, %arg2: memref<1152x128xf32, #tpu.memory_space<vmem>>, %arg3: memref<1x128xf32, #tpu.memory_space<vmem>>, %arg4: memref<1x8x8x128xf32, #tpu.memory_space<vmem>>, %arg5: memref<10x10x128xf32, #tpu.memory_space<vmem>>, %arg6: memref<64x1152xf32, #tpu.memory_space<vmem>>) attributes {dimension_semantics = [#tpu.dimension_semantics<parallel>], iteration_bounds = array<i64: 2>, scalar_prefetch = 0 : i64, scratch_operands = 2 : i64, tpu.core_type = #tpu.core_type<tc>, window_params = [{transform_indices = @transform_0, window_bounds = array<i64: 1, 8, 8, 128>}, {pipeline_mode = #tpu.pipeline_mode<synchronous>, transform_indices = @transform_1, window_bounds = array<i64: 1152, 128>}, {pipeline_mode = #tpu.pipeline_mode<synchronous>, transform_indices = @transform_2, window_bounds = array<i64: 1, 128>}, {transform_indices = @transform_3, window_bounds = array<i64: 1, 8, 8, 128>}]} {
    %c0 = arith.constant 0 : index
    %c0_0 = arith.constant 0 : index
    %c0_1 = arith.constant 0 : index
    %c0_2 = arith.constant 0 : index
    %0 = vector.load %arg1[%c0, %c0_0, %c0_1, %c0_2] : memref<1x8x8x128xf32, #tpu.memory_space<vmem>>, vector<1x8x8x128xf32>
    %1 = vector.shape_cast %0 : vector<1x8x8x128xf32> to vector<8x8x128xf32>
    %cst = arith.constant 0.000000e+00 : f32
    %2 = vector.broadcast %cst : f32 to vector<10x10x128xf32>
    %c0_3 = arith.constant 0 : index
    %c0_4 = arith.constant 0 : index
    %c0_5 = arith.constant 0 : index
    %3 = vector.load %arg5[%c0_3, %c0_4, %c0_5] : memref<10x10x128xf32, #tpu.memory_space<vmem>>, vector<10x10x128xf32>
    tpu.vector_store %arg5[%c0_3, %c0_4, %c0_5], %2 {strides = array<i32>} : memref<10x10x128xf32, #tpu.memory_space<vmem>>, vector<10x10x128xf32>,
    %c1 = arith.constant 1 : index
    %c1_6 = arith.constant 1 : index
    %c0_7 = arith.constant 0 : index
    %4 = vector.load %arg5[%c1, %c1_6, %c0_7] : memref<10x10x128xf32, #tpu.memory_space<vmem>>, vector<8x8x128xf32>
    tpu.vector_store %arg5[%c1, %c1_6, %c0_7], %1 {strides = array<i32>} : memref<10x10x128xf32, #tpu.memory_space<vmem>>, vector<8x8x128xf32>,
    %c0_8 = arith.constant 0 : index
    %c0_9 = arith.constant 0 : index
    %c0_10 = arith.constant 0 : index
    %5 = vector.load %arg5[%c0_8, %c0_9, %c0_10] : memref<10x10x128xf32, #tpu.memory_space<vmem>>, vector<8x8x128xf32>
    %6 = vector.shape_cast %5 : vector<8x8x128xf32> to vector<64x128xf32>
    %c0_11 = arith.constant 0 : index
    %c0_12 = arith.constant 0 : index
    %7 = vector.load %arg6[%c0_11, %c0_12] : memref<64x1152xf32, #tpu.memory_space<vmem>>, vector<64x128xf32>
    tpu.vector_store %arg6[%c0_11, %c0_12], %6 {strides = array<i32>} : memref<64x1152xf32, #tpu.memory_space<vmem>>, vector<64x128xf32>,
    %c0_13 = arith.constant 0 : index
    %c1_14 = arith.constant 1 : index
    %c0_15 = arith.constant 0 : index
    %8 = vector.load %arg5[%c0_13, %c1_14, %c0_15] : memref<10x10x128xf32, #tpu.memory_space<vmem>>, vector<8x8x128xf32>
    %9 = vector.shape_cast %8 : vector<8x8x128xf32> to vector<64x128xf32>
    %c0_16 = arith.constant 0 : index
    %c128 = arith.constant 128 : index
    %10 = vector.load %arg6[%c0_16, %c128] : memref<64x1152xf32, #tpu.memory_space<vmem>>, vector<64x128xf32>
    tpu.vector_store %arg6[%c0_16, %c128], %9 {strides = array<i32>} : memref<64x1152xf32, #tpu.memory_space<vmem>>, vector<64x128xf32>,
    %c0_17 = arith.constant 0 : index
    %c2 = arith.constant 2 : index
    %c0_18 = arith.constant 0 : index
    %11 = vector.load %arg5[%c0_17, %c2, %c0_18] : memref<10x10x128xf32, #tpu.memory_space<vmem>>, vector<8x8x128xf32>
    %12 = vector.shape_cast %11 : vector<8x8x128xf32> to vector<64x128xf32>
    %c0_19 = arith.constant 0 : index
    %c256 = arith.constant 256 : index
    %13 = vector.load %arg6[%c0_19, %c256] : memref<64x1152xf32, #tpu.memory_space<vmem>>, vector<64x128xf32>
    tpu.vector_store %arg6[%c0_19, %c256], %12 {strides = array<i32>} : memref<64x1152xf32, #tpu.memory_space<vmem>>, vector<64x128xf32>,
    %c1_20 = arith.constant 1 : index
    %c0_21 = arith.constant 0 : index
    %c0_22 = arith.constant 0 : index
    %14 = vector.load %arg5[%c1_20, %c0_21, %c0_22] : memref<10x10x128xf32, #tpu.memory_space<vmem>>, vector<8x8x128xf32>
    %15 = vector.shape_cast %14 : vector<8x8x128xf32> to vector<64x128xf32>
    %c0_23 = arith.constant 0 : index
    %c384 = arith.constant 384 : index
    %16 = vector.load %arg6[%c0_23, %c384] : memref<64x1152xf32, #tpu.memory_space<vmem>>, vector<64x128xf32>
    tpu.vector_store %arg6[%c0_23, %c384], %15 {strides = array<i32>} : memref<64x1152xf32, #tpu.memory_space<vmem>>, vector<64x128xf32>,
    %c1_24 = arith.constant 1 : index
    %c1_25 = arith.constant 1 : index
    %c0_26 = arith.constant 0 : index
    %17 = vector.load %arg5[%c1_24, %c1_25, %c0_26] : memref<10x10x128xf32, #tpu.memory_space<vmem>>, vector<8x8x128xf32>
    %18 = vector.shape_cast %17 : vector<8x8x128xf32> to vector<64x128xf32>
    %c0_27 = arith.constant 0 : index
    %c512 = arith.constant 512 : index
    %19 = vector.load %arg6[%c0_27, %c512] : memref<64x1152xf32, #tpu.memory_space<vmem>>, vector<64x128xf32>
    tpu.vector_store %arg6[%c0_27, %c512], %18 {strides = array<i32>} : memref<64x1152xf32, #tpu.memory_space<vmem>>, vector<64x128xf32>,
    %c1_28 = arith.constant 1 : index
    %c2_29 = arith.constant 2 : index
    %c0_30 = arith.constant 0 : index
    %20 = vector.load %arg5[%c1_28, %c2_29, %c0_30] : memref<10x10x128xf32, #tpu.memory_space<vmem>>, vector<8x8x128xf32>
    %21 = vector.shape_cast %20 : vector<8x8x128xf32> to vector<64x128xf32>
    %c0_31 = arith.constant 0 : index
    %c640 = arith.constant 640 : index
    %22 = vector.load %arg6[%c0_31, %c640] : memref<64x1152xf32, #tpu.memory_space<vmem>>, vector<64x128xf32>
    tpu.vector_store %arg6[%c0_31, %c640], %21 {strides = array<i32>} : memref<64x1152xf32, #tpu.memory_space<vmem>>, vector<64x128xf32>,
    %c2_32 = arith.constant 2 : index
    %c0_33 = arith.constant 0 : index
    %c0_34 = arith.constant 0 : index
    %23 = vector.load %arg5[%c2_32, %c0_33, %c0_34] : memref<10x10x128xf32, #tpu.memory_space<vmem>>, vector<8x8x128xf32>
    %24 = vector.shape_cast %23 : vector<8x8x128xf32> to vector<64x128xf32>
    %c0_35 = arith.constant 0 : index
    %c768 = arith.constant 768 : index
    %25 = vector.load %arg6[%c0_35, %c768] : memref<64x1152xf32, #tpu.memory_space<vmem>>, vector<64x128xf32>
    tpu.vector_store %arg6[%c0_35, %c768], %24 {strides = array<i32>} : memref<64x1152xf32, #tpu.memory_space<vmem>>, vector<64x128xf32>,
    %c2_36 = arith.constant 2 : index
    %c1_37 = arith.constant 1 : index
    %c0_38 = arith.constant 0 : index
    %26 = vector.load %arg5[%c2_36, %c1_37, %c0_38] : memref<10x10x128xf32, #tpu.memory_space<vmem>>, vector<8x8x128xf32>
    %27 = vector.shape_cast %26 : vector<8x8x128xf32> to vector<64x128xf32>
    %c0_39 = arith.constant 0 : index
    %c896 = arith.constant 896 : index
    %28 = vector.load %arg6[%c0_39, %c896] : memref<64x1152xf32, #tpu.memory_space<vmem>>, vector<64x128xf32>
    tpu.vector_store %arg6[%c0_39, %c896], %27 {strides = array<i32>} : memref<64x1152xf32, #tpu.memory_space<vmem>>, vector<64x128xf32>,
    %c2_40 = arith.constant 2 : index
    %c2_41 = arith.constant 2 : index
    %c0_42 = arith.constant 0 : index
    %29 = vector.load %arg5[%c2_40, %c2_41, %c0_42] : memref<10x10x128xf32, #tpu.memory_space<vmem>>, vector<8x8x128xf32>
    %30 = vector.shape_cast %29 : vector<8x8x128xf32> to vector<64x128xf32>
    %c0_43 = arith.constant 0 : index
    %c1024 = arith.constant 1024 : index
    %31 = vector.load %arg6[%c0_43, %c1024] : memref<64x1152xf32, #tpu.memory_space<vmem>>, vector<64x128xf32>
    tpu.vector_store %arg6[%c0_43, %c1024], %30 {strides = array<i32>} : memref<64x1152xf32, #tpu.memory_space<vmem>>, vector<64x128xf32>,
    %c0_44 = arith.constant 0 : index
    %c0_45 = arith.constant 0 : index
    %32 = vector.load %arg6[%c0_44, %c0_45] : memref<64x1152xf32, #tpu.memory_space<vmem>>, vector<64x1152xf32>
    %c0_46 = arith.constant 0 : index
    %c0_47 = arith.constant 0 : index
    %33 = vector.load %arg2[%c0_46, %c0_47] : memref<1152x128xf32, #tpu.memory_space<vmem>>, vector<1152x128xf32>
    %cst_48 = arith.constant dense<0.000000e+00> : vector<64x128xf32>
    %34 = tpu.matmul %32, %33, %cst_48 {dimension_numbers = #tpu.dot_dimension_numbers<[1], [0], [0], [1], [0, 0, 1, 1], [], []>} : vector<64x1152xf32>, vector<1152x128xf32>, vector<64x128xf32> -> vector<64x128xf32>
    %c0_49 = arith.constant 0 : index
    %c0_50 = arith.constant 0 : index
    %35 = vector.load %arg3[%c0_49, %c0_50] : memref<1x128xf32, #tpu.memory_space<vmem>>, vector<1x128xf32>
    %36 = vector.broadcast %35 : vector<1x128xf32> to vector<64x128xf32>
    %37 = arith.addf %34, %36 : vector<64x128xf32>
    %38 = vector.shape_cast %37 : vector<64x128xf32> to vector<8x8x128xf32>
    %c0_51 = arith.constant 0 : index
    %c0_52 = arith.constant 0 : index
    %c0_53 = arith.constant 0 : index
    %c0_54 = arith.constant 0 : index
    %39 = vector.load %arg4[%c0_51, %c0_52, %c0_53, %c0_54] : memref<1x8x8x128xf32, #tpu.memory_space<vmem>>, vector<1x8x8x128xf32>
    %40 = vector.shape_cast %39 : vector<1x8x8x128xf32> to vector<8x8x128xf32>
    %41 = vector.shape_cast %38 : vector<8x8x128xf32> to vector<1x8x8x128xf32>
    tpu.vector_store %arg4[%c0_51, %c0_52, %c0_53, %c0_54], %41 {strides = array<i32>} : memref<1x8x8x128xf32, #tpu.memory_space<vmem>>, vector<1x8x8x128xf32>,
    return
  }
  func.func @transform_0(%arg0: i32) -> (i32, i32, i32, i32) {
    %c0_i32 = arith.constant 0 : i32
    %c0_i32_0 = arith.constant 0 : i32
    %c0_i32_1 = arith.constant 0 : i32
    %c0_i32_2 = arith.constant 0 : i32
    return %arg0, %c0_i32, %c0_i32_0, %c0_i32_1 : i32, i32, i32, i32
  }
  func.func @transform_1(%arg0: i32) -> (i32, i32) {
    %c0_i32 = arith.constant 0 : i32
    %c0_i32_0 = arith.constant 0 : i32
    %c0_i32_1 = arith.constant 0 : i32
    return %c0_i32, %c0_i32_0 : i32, i32
  }
  func.func @transform_2(%arg0: i32) -> (i32, i32) {
    %c0_i32 = arith.constant 0 : i32
    %c0_i32_0 = arith.constant 0 : i32
    %c0_i32_1 = arith.constant 0 : i32
    return %c0_i32, %c0_i32_0 : i32, i32
  }
  func.func @transform_3(%arg0: i32) -> (i32, i32, i32, i32) {
    %c0_i32 = arith.constant 0 : i32
    %c0_i32_0 = arith.constant 0 : i32
    %c0_i32_1 = arith.constant 0 : i32
    %c0_i32_2 = arith.constant 0 : i32
    return %arg0, %c0_i32, %c0_i32_0, %c0_i32_1 : i32, i32, i32, i32
  }
}

module attributes {stable_mosaic.version = 11 : i64} {
  func.func @_res_trunk_kernel(%arg0: i32, %arg1: i32, %arg2: memref<1x8x8x128xf32, #tpu.memory_space<vmem>>, %arg3: memref<1x1152x128xf32, #tpu.memory_space<vmem>>, %arg4: memref<1x1x128xf32, #tpu.memory_space<vmem>>, %arg5: memref<1x8x8x128xf32, #tpu.memory_space<vmem>>, %arg6: memref<8x8x128xf32, #tpu.memory_space<vmem>>, %arg7: memref<10x10x128xf32, #tpu.memory_space<vmem>>, %arg8: memref<64x1152xf32, #tpu.memory_space<vmem>>) attributes {dimension_semantics = [#tpu.dimension_semantics<parallel>, #tpu.dimension_semantics<arbitrary>], iteration_bounds = array<i64: 2, 2>, scalar_prefetch = 0 : i64, scratch_operands = 3 : i64, tpu.core_type = #tpu.core_type<tc>, window_params = [{transform_indices = @transform_0, window_bounds = array<i64: 1, 8, 8, 128>}, {transform_indices = @transform_1, window_bounds = array<i64: 1, 1152, 128>}, {transform_indices = @transform_2, window_bounds = array<i64: 1, 1, 128>}, {transform_indices = @transform_3, window_bounds = array<i64: 1, 8, 8, 128>}]} {
    %c0_i32 = arith.constant 0 : i32
    %0 = arith.cmpi eq, %arg1, %c0_i32 : i32
    %1 = arith.extui %0 : i1 to i32
    %c0_i32_0 = arith.constant 0 : i32
    %2 = arith.cmpi ne, %1, %c0_i32_0 : i32
    scf.if %2 {
      %c0_120 = arith.constant 0 : index
      %c0_121 = arith.constant 0 : index
      %c0_122 = arith.constant 0 : index
      %c0_123 = arith.constant 0 : index
      %91 = vector.load %arg2[%c0_120, %c0_121, %c0_122, %c0_123] : memref<1x8x8x128xf32, #tpu.memory_space<vmem>>, vector<1x8x8x128xf32>
      %92 = vector.shape_cast %91 : vector<1x8x8x128xf32> to vector<8x8x128xf32>
      %c0_124 = arith.constant 0 : index
      %c0_125 = arith.constant 0 : index
      %c0_126 = arith.constant 0 : index
      %93 = vector.load %arg6[%c0_124, %c0_125, %c0_126] : memref<8x8x128xf32, #tpu.memory_space<vmem>>, vector<8x8x128xf32>
      tpu.vector_store %arg6[%c0_124, %c0_125, %c0_126], %92 {strides = array<i32>} : memref<8x8x128xf32, #tpu.memory_space<vmem>>, vector<8x8x128xf32>,
    } else {
    }
    %c0 = arith.constant 0 : index
    %c0_1 = arith.constant 0 : index
    %c0_2 = arith.constant 0 : index
    %3 = vector.load %arg6[%c0, %c0_1, %c0_2] : memref<8x8x128xf32, #tpu.memory_space<vmem>>, vector<8x8x128xf32>
    %cst = arith.constant 0.000000e+00 : f32
    %4 = vector.broadcast %cst : f32 to vector<10x10x128xf32>
    %c0_3 = arith.constant 0 : index
    %c0_4 = arith.constant 0 : index
    %c0_5 = arith.constant 0 : index
    %5 = vector.load %arg7[%c0_3, %c0_4, %c0_5] : memref<10x10x128xf32, #tpu.memory_space<vmem>>, vector<10x10x128xf32>
    tpu.vector_store %arg7[%c0_3, %c0_4, %c0_5], %4 {strides = array<i32>} : memref<10x10x128xf32, #tpu.memory_space<vmem>>, vector<10x10x128xf32>,
    %c1 = arith.constant 1 : index
    %c1_6 = arith.constant 1 : index
    %c0_7 = arith.constant 0 : index
    %6 = vector.load %arg7[%c1, %c1_6, %c0_7] : memref<10x10x128xf32, #tpu.memory_space<vmem>>, vector<8x8x128xf32>
    tpu.vector_store %arg7[%c1, %c1_6, %c0_7], %3 {strides = array<i32>} : memref<10x10x128xf32, #tpu.memory_space<vmem>>, vector<8x8x128xf32>,
    %c0_8 = arith.constant 0 : index
    %c0_9 = arith.constant 0 : index
    %c0_10 = arith.constant 0 : index
    %7 = vector.load %arg7[%c0_8, %c0_9, %c0_10] : memref<10x10x128xf32, #tpu.memory_space<vmem>>, vector<8x8x128xf32>
    %8 = vector.shape_cast %7 : vector<8x8x128xf32> to vector<64x128xf32>
    %c0_11 = arith.constant 0 : index
    %c0_12 = arith.constant 0 : index
    %9 = vector.load %arg8[%c0_11, %c0_12] : memref<64x1152xf32, #tpu.memory_space<vmem>>, vector<64x128xf32>
    tpu.vector_store %arg8[%c0_11, %c0_12], %8 {strides = array<i32>} : memref<64x1152xf32, #tpu.memory_space<vmem>>, vector<64x128xf32>,
    %c0_13 = arith.constant 0 : index
    %c1_14 = arith.constant 1 : index
    %c0_15 = arith.constant 0 : index
    %10 = vector.load %arg7[%c0_13, %c1_14, %c0_15] : memref<10x10x128xf32, #tpu.memory_space<vmem>>, vector<8x8x128xf32>
    %11 = vector.shape_cast %10 : vector<8x8x128xf32> to vector<64x128xf32>
    %c0_16 = arith.constant 0 : index
    %c128 = arith.constant 128 : index
    %12 = vector.load %arg8[%c0_16, %c128] : memref<64x1152xf32, #tpu.memory_space<vmem>>, vector<64x128xf32>
    tpu.vector_store %arg8[%c0_16, %c128], %11 {strides = array<i32>} : memref<64x1152xf32, #tpu.memory_space<vmem>>, vector<64x128xf32>,
    %c0_17 = arith.constant 0 : index
    %c2 = arith.constant 2 : index
    %c0_18 = arith.constant 0 : index
    %13 = vector.load %arg7[%c0_17, %c2, %c0_18] : memref<10x10x128xf32, #tpu.memory_space<vmem>>, vector<8x8x128xf32>
    %14 = vector.shape_cast %13 : vector<8x8x128xf32> to vector<64x128xf32>
    %c0_19 = arith.constant 0 : index
    %c256 = arith.constant 256 : index
    %15 = vector.load %arg8[%c0_19, %c256] : memref<64x1152xf32, #tpu.memory_space<vmem>>, vector<64x128xf32>
    tpu.vector_store %arg8[%c0_19, %c256], %14 {strides = array<i32>} : memref<64x1152xf32, #tpu.memory_space<vmem>>, vector<64x128xf32>,
    %c1_20 = arith.constant 1 : index
    %c0_21 = arith.constant 0 : index
    %c0_22 = arith.constant 0 : index
    %16 = vector.load %arg7[%c1_20, %c0_21, %c0_22] : memref<10x10x128xf32, #tpu.memory_space<vmem>>, vector<8x8x128xf32>
    %17 = vector.shape_cast %16 : vector<8x8x128xf32> to vector<64x128xf32>
    %c0_23 = arith.constant 0 : index
    %c384 = arith.constant 384 : index
    %18 = vector.load %arg8[%c0_23, %c384] : memref<64x1152xf32, #tpu.memory_space<vmem>>, vector<64x128xf32>
    tpu.vector_store %arg8[%c0_23, %c384], %17 {strides = array<i32>} : memref<64x1152xf32, #tpu.memory_space<vmem>>, vector<64x128xf32>,
    %c1_24 = arith.constant 1 : index
    %c1_25 = arith.constant 1 : index
    %c0_26 = arith.constant 0 : index
    %19 = vector.load %arg7[%c1_24, %c1_25, %c0_26] : memref<10x10x128xf32, #tpu.memory_space<vmem>>, vector<8x8x128xf32>
    %20 = vector.shape_cast %19 : vector<8x8x128xf32> to vector<64x128xf32>
    %c0_27 = arith.constant 0 : index
    %c512 = arith.constant 512 : index
    %21 = vector.load %arg8[%c0_27, %c512] : memref<64x1152xf32, #tpu.memory_space<vmem>>, vector<64x128xf32>
    tpu.vector_store %arg8[%c0_27, %c512], %20 {strides = array<i32>} : memref<64x1152xf32, #tpu.memory_space<vmem>>, vector<64x128xf32>,
    %c1_28 = arith.constant 1 : index
    %c2_29 = arith.constant 2 : index
    %c0_30 = arith.constant 0 : index
    %22 = vector.load %arg7[%c1_28, %c2_29, %c0_30] : memref<10x10x128xf32, #tpu.memory_space<vmem>>, vector<8x8x128xf32>
    %23 = vector.shape_cast %22 : vector<8x8x128xf32> to vector<64x128xf32>
    %c0_31 = arith.constant 0 : index
    %c640 = arith.constant 640 : index
    %24 = vector.load %arg8[%c0_31, %c640] : memref<64x1152xf32, #tpu.memory_space<vmem>>, vector<64x128xf32>
    tpu.vector_store %arg8[%c0_31, %c640], %23 {strides = array<i32>} : memref<64x1152xf32, #tpu.memory_space<vmem>>, vector<64x128xf32>,
    %c2_32 = arith.constant 2 : index
    %c0_33 = arith.constant 0 : index
    %c0_34 = arith.constant 0 : index
    %25 = vector.load %arg7[%c2_32, %c0_33, %c0_34] : memref<10x10x128xf32, #tpu.memory_space<vmem>>, vector<8x8x128xf32>
    %26 = vector.shape_cast %25 : vector<8x8x128xf32> to vector<64x128xf32>
    %c0_35 = arith.constant 0 : index
    %c768 = arith.constant 768 : index
    %27 = vector.load %arg8[%c0_35, %c768] : memref<64x1152xf32, #tpu.memory_space<vmem>>, vector<64x128xf32>
    tpu.vector_store %arg8[%c0_35, %c768], %26 {strides = array<i32>} : memref<64x1152xf32, #tpu.memory_space<vmem>>, vector<64x128xf32>,
    %c2_36 = arith.constant 2 : index
    %c1_37 = arith.constant 1 : index
    %c0_38 = arith.constant 0 : index
    %28 = vector.load %arg7[%c2_36, %c1_37, %c0_38] : memref<10x10x128xf32, #tpu.memory_space<vmem>>, vector<8x8x128xf32>
    %29 = vector.shape_cast %28 : vector<8x8x128xf32> to vector<64x128xf32>
    %c0_39 = arith.constant 0 : index
    %c896 = arith.constant 896 : index
    %30 = vector.load %arg8[%c0_39, %c896] : memref<64x1152xf32, #tpu.memory_space<vmem>>, vector<64x128xf32>
    tpu.vector_store %arg8[%c0_39, %c896], %29 {strides = array<i32>} : memref<64x1152xf32, #tpu.memory_space<vmem>>, vector<64x128xf32>,
    %c2_40 = arith.constant 2 : index
    %c2_41 = arith.constant 2 : index
    %c0_42 = arith.constant 0 : index
    %31 = vector.load %arg7[%c2_40, %c2_41, %c0_42] : memref<10x10x128xf32, #tpu.memory_space<vmem>>, vector<8x8x128xf32>
    %32 = vector.shape_cast %31 : vector<8x8x128xf32> to vector<64x128xf32>
    %c0_43 = arith.constant 0 : index
    %c1024 = arith.constant 1024 : index
    %33 = vector.load %arg8[%c0_43, %c1024] : memref<64x1152xf32, #tpu.memory_space<vmem>>, vector<64x128xf32>
    tpu.vector_store %arg8[%c0_43, %c1024], %32 {strides = array<i32>} : memref<64x1152xf32, #tpu.memory_space<vmem>>, vector<64x128xf32>,
    %c0_44 = arith.constant 0 : index
    %c0_45 = arith.constant 0 : index
    %34 = vector.load %arg8[%c0_44, %c0_45] : memref<64x1152xf32, #tpu.memory_space<vmem>>, vector<64x1152xf32>
    %c0_46 = arith.constant 0 : index
    %c0_47 = arith.constant 0 : index
    %c0_48 = arith.constant 0 : index
    %35 = vector.load %arg3[%c0_46, %c0_47, %c0_48] : memref<1x1152x128xf32, #tpu.memory_space<vmem>>, vector<1x1152x128xf32>
    %36 = vector.shape_cast %35 : vector<1x1152x128xf32> to vector<1152x128xf32>
    %cst_49 = arith.constant dense<0.000000e+00> : vector<64x128xf32>
    %37 = tpu.matmul %34, %36, %cst_49 {dimension_numbers = #tpu.dot_dimension_numbers<[1], [0], [0], [1], [0, 0, 1, 1], [], []>} : vector<64x1152xf32>, vector<1152x128xf32>, vector<64x128xf32> -> vector<64x128xf32>
    %c0_50 = arith.constant 0 : index
    %c0_51 = arith.constant 0 : index
    %c0_52 = arith.constant 0 : index
    %38 = vector.load %arg4[%c0_50, %c0_51, %c0_52] : memref<1x1x128xf32, #tpu.memory_space<vmem>>, vector<1x1x128xf32>
    %39 = vector.shape_cast %38 : vector<1x1x128xf32> to vector<1x128xf32>
    %40 = vector.broadcast %39 : vector<1x128xf32> to vector<64x128xf32>
    %41 = arith.addf %37, %40 : vector<64x128xf32>
    %cst_53 = arith.constant 0.000000e+00 : f32
    %42 = vector.broadcast %cst_53 : f32 to vector<64x128xf32>
    %43 = arith.maximumf %41, %42 : vector<64x128xf32>
    %44 = vector.shape_cast %43 : vector<64x128xf32> to vector<8x8x128xf32>
    %cst_54 = arith.constant 0.000000e+00 : f32
    %45 = vector.broadcast %cst_54 : f32 to vector<10x10x128xf32>
    %c0_55 = arith.constant 0 : index
    %c0_56 = arith.constant 0 : index
    %c0_57 = arith.constant 0 : index
    %46 = vector.load %arg7[%c0_55, %c0_56, %c0_57] : memref<10x10x128xf32, #tpu.memory_space<vmem>>, vector<10x10x128xf32>
    tpu.vector_store %arg7[%c0_55, %c0_56, %c0_57], %45 {strides = array<i32>} : memref<10x10x128xf32, #tpu.memory_space<vmem>>, vector<10x10x128xf32>,
    %c1_58 = arith.constant 1 : index
    %c1_59 = arith.constant 1 : index
    %c0_60 = arith.constant 0 : index
    %47 = vector.load %arg7[%c1_58, %c1_59, %c0_60] : memref<10x10x128xf32, #tpu.memory_space<vmem>>, vector<8x8x128xf32>
    tpu.vector_store %arg7[%c1_58, %c1_59, %c0_60], %44 {strides = array<i32>} : memref<10x10x128xf32, #tpu.memory_space<vmem>>, vector<8x8x128xf32>,
    %c0_61 = arith.constant 0 : index
    %c0_62 = arith.constant 0 : index
    %c0_63 = arith.constant 0 : index
    %48 = vector.load %arg7[%c0_61, %c0_62, %c0_63] : memref<10x10x128xf32, #tpu.memory_space<vmem>>, vector<8x8x128xf32>
    %49 = vector.shape_cast %48 : vector<8x8x128xf32> to vector<64x128xf32>
    %c0_64 = arith.constant 0 : index
    %c0_65 = arith.constant 0 : index
    %50 = vector.load %arg8[%c0_64, %c0_65] : memref<64x1152xf32, #tpu.memory_space<vmem>>, vector<64x128xf32>
    tpu.vector_store %arg8[%c0_64, %c0_65], %49 {strides = array<i32>} : memref<64x1152xf32, #tpu.memory_space<vmem>>, vector<64x128xf32>,
    %c0_66 = arith.constant 0 : index
    %c1_67 = arith.constant 1 : index
    %c0_68 = arith.constant 0 : index
    %51 = vector.load %arg7[%c0_66, %c1_67, %c0_68] : memref<10x10x128xf32, #tpu.memory_space<vmem>>, vector<8x8x128xf32>
    %52 = vector.shape_cast %51 : vector<8x8x128xf32> to vector<64x128xf32>
    %c0_69 = arith.constant 0 : index
    %c128_70 = arith.constant 128 : index
    %53 = vector.load %arg8[%c0_69, %c128_70] : memref<64x1152xf32, #tpu.memory_space<vmem>>, vector<64x128xf32>
    tpu.vector_store %arg8[%c0_69, %c128_70], %52 {strides = array<i32>} : memref<64x1152xf32, #tpu.memory_space<vmem>>, vector<64x128xf32>,
    %c0_71 = arith.constant 0 : index
    %c2_72 = arith.constant 2 : index
    %c0_73 = arith.constant 0 : index
    %54 = vector.load %arg7[%c0_71, %c2_72, %c0_73] : memref<10x10x128xf32, #tpu.memory_space<vmem>>, vector<8x8x128xf32>
    %55 = vector.shape_cast %54 : vector<8x8x128xf32> to vector<64x128xf32>
    %c0_74 = arith.constant 0 : index
    %c256_75 = arith.constant 256 : index
    %56 = vector.load %arg8[%c0_74, %c256_75] : memref<64x1152xf32, #tpu.memory_space<vmem>>, vector<64x128xf32>
    tpu.vector_store %arg8[%c0_74, %c256_75], %55 {strides = array<i32>} : memref<64x1152xf32, #tpu.memory_space<vmem>>, vector<64x128xf32>,
    %c1_76 = arith.constant 1 : index
    %c0_77 = arith.constant 0 : index
    %c0_78 = arith.constant 0 : index
    %57 = vector.load %arg7[%c1_76, %c0_77, %c0_78] : memref<10x10x128xf32, #tpu.memory_space<vmem>>, vector<8x8x128xf32>
    %58 = vector.shape_cast %57 : vector<8x8x128xf32> to vector<64x128xf32>
    %c0_79 = arith.constant 0 : index
    %c384_80 = arith.constant 384 : index
    %59 = vector.load %arg8[%c0_79, %c384_80] : memref<64x1152xf32, #tpu.memory_space<vmem>>, vector<64x128xf32>
    tpu.vector_store %arg8[%c0_79, %c384_80], %58 {strides = array<i32>} : memref<64x1152xf32, #tpu.memory_space<vmem>>, vector<64x128xf32>,
    %c1_81 = arith.constant 1 : index
    %c1_82 = arith.constant 1 : index
    %c0_83 = arith.constant 0 : index
    %60 = vector.load %arg7[%c1_81, %c1_82, %c0_83] : memref<10x10x128xf32, #tpu.memory_space<vmem>>, vector<8x8x128xf32>
    %61 = vector.shape_cast %60 : vector<8x8x128xf32> to vector<64x128xf32>
    %c0_84 = arith.constant 0 : index
    %c512_85 = arith.constant 512 : index
    %62 = vector.load %arg8[%c0_84, %c512_85] : memref<64x1152xf32, #tpu.memory_space<vmem>>, vector<64x128xf32>
    tpu.vector_store %arg8[%c0_84, %c512_85], %61 {strides = array<i32>} : memref<64x1152xf32, #tpu.memory_space<vmem>>, vector<64x128xf32>,
    %c1_86 = arith.constant 1 : index
    %c2_87 = arith.constant 2 : index
    %c0_88 = arith.constant 0 : index
    %63 = vector.load %arg7[%c1_86, %c2_87, %c0_88] : memref<10x10x128xf32, #tpu.memory_space<vmem>>, vector<8x8x128xf32>
    %64 = vector.shape_cast %63 : vector<8x8x128xf32> to vector<64x128xf32>
    %c0_89 = arith.constant 0 : index
    %c640_90 = arith.constant 640 : index
    %65 = vector.load %arg8[%c0_89, %c640_90] : memref<64x1152xf32, #tpu.memory_space<vmem>>, vector<64x128xf32>
    tpu.vector_store %arg8[%c0_89, %c640_90], %64 {strides = array<i32>} : memref<64x1152xf32, #tpu.memory_space<vmem>>, vector<64x128xf32>,
    %c2_91 = arith.constant 2 : index
    %c0_92 = arith.constant 0 : index
    %c0_93 = arith.constant 0 : index
    %66 = vector.load %arg7[%c2_91, %c0_92, %c0_93] : memref<10x10x128xf32, #tpu.memory_space<vmem>>, vector<8x8x128xf32>
    %67 = vector.shape_cast %66 : vector<8x8x128xf32> to vector<64x128xf32>
    %c0_94 = arith.constant 0 : index
    %c768_95 = arith.constant 768 : index
    %68 = vector.load %arg8[%c0_94, %c768_95] : memref<64x1152xf32, #tpu.memory_space<vmem>>, vector<64x128xf32>
    tpu.vector_store %arg8[%c0_94, %c768_95], %67 {strides = array<i32>} : memref<64x1152xf32, #tpu.memory_space<vmem>>, vector<64x128xf32>,
    %c2_96 = arith.constant 2 : index
    %c1_97 = arith.constant 1 : index
    %c0_98 = arith.constant 0 : index
    %69 = vector.load %arg7[%c2_96, %c1_97, %c0_98] : memref<10x10x128xf32, #tpu.memory_space<vmem>>, vector<8x8x128xf32>
    %70 = vector.shape_cast %69 : vector<8x8x128xf32> to vector<64x128xf32>
    %c0_99 = arith.constant 0 : index
    %c896_100 = arith.constant 896 : index
    %71 = vector.load %arg8[%c0_99, %c896_100] : memref<64x1152xf32, #tpu.memory_space<vmem>>, vector<64x128xf32>
    tpu.vector_store %arg8[%c0_99, %c896_100], %70 {strides = array<i32>} : memref<64x1152xf32, #tpu.memory_space<vmem>>, vector<64x128xf32>,
    %c2_101 = arith.constant 2 : index
    %c2_102 = arith.constant 2 : index
    %c0_103 = arith.constant 0 : index
    %72 = vector.load %arg7[%c2_101, %c2_102, %c0_103] : memref<10x10x128xf32, #tpu.memory_space<vmem>>, vector<8x8x128xf32>
    %73 = vector.shape_cast %72 : vector<8x8x128xf32> to vector<64x128xf32>
    %c0_104 = arith.constant 0 : index
    %c1024_105 = arith.constant 1024 : index
    %74 = vector.load %arg8[%c0_104, %c1024_105] : memref<64x1152xf32, #tpu.memory_space<vmem>>, vector<64x128xf32>
    tpu.vector_store %arg8[%c0_104, %c1024_105], %73 {strides = array<i32>} : memref<64x1152xf32, #tpu.memory_space<vmem>>, vector<64x128xf32>,
    %c0_106 = arith.constant 0 : index
    %c0_107 = arith.constant 0 : index
    %75 = vector.load %arg8[%c0_106, %c0_107] : memref<64x1152xf32, #tpu.memory_space<vmem>>, vector<64x1152xf32>
    %c0_108 = arith.constant 0 : index
    %c0_109 = arith.constant 0 : index
    %c0_110 = arith.constant 0 : index
    %76 = vector.load %arg3[%c0_108, %c0_109, %c0_110] : memref<1x1152x128xf32, #tpu.memory_space<vmem>>, vector<1x1152x128xf32>
    %77 = vector.shape_cast %76 : vector<1x1152x128xf32> to vector<1152x128xf32>
    %cst_111 = arith.constant dense<0.000000e+00> : vector<64x128xf32>
    %78 = tpu.matmul %75, %77, %cst_111 {dimension_numbers = #tpu.dot_dimension_numbers<[1], [0], [0], [1], [0, 0, 1, 1], [], []>} : vector<64x1152xf32>, vector<1152x128xf32>, vector<64x128xf32> -> vector<64x128xf32>
    %c0_112 = arith.constant 0 : index
    %c0_113 = arith.constant 0 : index
    %c0_114 = arith.constant 0 : index
    %79 = vector.load %arg4[%c0_112, %c0_113, %c0_114] : memref<1x1x128xf32, #tpu.memory_space<vmem>>, vector<1x1x128xf32>
    %80 = vector.shape_cast %79 : vector<1x1x128xf32> to vector<1x128xf32>
    %81 = vector.broadcast %80 : vector<1x128xf32> to vector<64x128xf32>
    %82 = arith.addf %78, %81 : vector<64x128xf32>
    %83 = vector.shape_cast %82 : vector<64x128xf32> to vector<8x8x128xf32>
    %cst_115 = arith.constant 1.000000e-01 : f32
    %84 = vector.broadcast %cst_115 : f32 to vector<8x8x128xf32>
    %85 = arith.mulf %84, %3 : vector<8x8x128xf32>
    %86 = arith.addf %83, %85 : vector<8x8x128xf32>
    %c0_116 = arith.constant 0 : index
    %c0_117 = arith.constant 0 : index
    %c0_118 = arith.constant 0 : index
    %87 = vector.load %arg6[%c0_116, %c0_117, %c0_118] : memref<8x8x128xf32, #tpu.memory_space<vmem>>, vector<8x8x128xf32>
    tpu.vector_store %arg6[%c0_116, %c0_117, %c0_118], %86 {strides = array<i32>} : memref<8x8x128xf32, #tpu.memory_space<vmem>>, vector<8x8x128xf32>,
    %c1_i32 = arith.constant 1 : i32
    %88 = arith.cmpi eq, %arg1, %c1_i32 : i32
    %89 = arith.extui %88 : i1 to i32
    %c0_i32_119 = arith.constant 0 : i32
    %90 = arith.cmpi ne, %89, %c0_i32_119 : i32
    scf.if %90 {
      %c0_120 = arith.constant 0 : index
      %c0_121 = arith.constant 0 : index
      %c0_122 = arith.constant 0 : index
      %c0_123 = arith.constant 0 : index
      %91 = vector.load %arg2[%c0_120, %c0_121, %c0_122, %c0_123] : memref<1x8x8x128xf32, #tpu.memory_space<vmem>>, vector<1x8x8x128xf32>
      %92 = vector.shape_cast %91 : vector<1x8x8x128xf32> to vector<8x8x128xf32>
      %cst_124 = arith.constant 1.000000e-01 : f32
      %93 = vector.broadcast %cst_124 : f32 to vector<8x8x128xf32>
      %94 = arith.mulf %93, %92 : vector<8x8x128xf32>
      %95 = arith.addf %86, %94 : vector<8x8x128xf32>
      %c0_125 = arith.constant 0 : index
      %c0_126 = arith.constant 0 : index
      %c0_127 = arith.constant 0 : index
      %c0_128 = arith.constant 0 : index
      %96 = vector.load %arg5[%c0_125, %c0_126, %c0_127, %c0_128] : memref<1x8x8x128xf32, #tpu.memory_space<vmem>>, vector<1x8x8x128xf32>
      %97 = vector.shape_cast %96 : vector<1x8x8x128xf32> to vector<8x8x128xf32>
      %98 = vector.shape_cast %95 : vector<8x8x128xf32> to vector<1x8x8x128xf32>
      tpu.vector_store %arg5[%c0_125, %c0_126, %c0_127, %c0_128], %98 {strides = array<i32>} : memref<1x8x8x128xf32, #tpu.memory_space<vmem>>, vector<1x8x8x128xf32>,
    } else {
    }
    return
  }
  func.func @transform_0(%arg0: i32, %arg1: i32) -> (i32, i32, i32, i32) {
    %c0_i32 = arith.constant 0 : i32
    %c0_i32_0 = arith.constant 0 : i32
    %c0_i32_1 = arith.constant 0 : i32
    %c0_i32_2 = arith.constant 0 : i32
    return %arg0, %c0_i32, %c0_i32_0, %c0_i32_1 : i32, i32, i32, i32
  }
  func.func @transform_1(%arg0: i32, %arg1: i32) -> (i32, i32, i32) {
    %c0_i32 = arith.constant 0 : i32
    %c0_i32_0 = arith.constant 0 : i32
    %c0_i32_1 = arith.constant 0 : i32
    return %arg1, %c0_i32, %c0_i32_0 : i32, i32, i32
  }
  func.func @transform_2(%arg0: i32, %arg1: i32) -> (i32, i32, i32) {
    %c0_i32 = arith.constant 0 : i32
    %c0_i32_0 = arith.constant 0 : i32
    %c0_i32_1 = arith.constant 0 : i32
    return %arg1, %c0_i32, %c0_i32_0 : i32, i32, i32
  }
  func.func @transform_3(%arg0: i32, %arg1: i32) -> (i32, i32, i32, i32) {
    %c0_i32 = arith.constant 0 : i32
    %c0_i32_0 = arith.constant 0 : i32
    %c0_i32_1 = arith.constant 0 : i32
    %c0_i32_2 = arith.constant 0 : i32
    return %arg0, %c0_i32, %c0_i32_0, %c0_i32_1 : i32, i32, i32, i32
  }
}

module attributes {stable_mosaic.version = 11 : i64} {
  func.func @_conv3x3_kernel(%arg0: i32, %arg1: memref<1x8x8x128xf32, #tpu.memory_space<vmem>>, %arg2: memref<1152x512xf32, #tpu.memory_space<vmem>>, %arg3: memref<1x512xf32, #tpu.memory_space<vmem>>, %arg4: memref<1x8x8x512xf32, #tpu.memory_space<vmem>>, %arg5: memref<10x10x128xf32, #tpu.memory_space<vmem>>, %arg6: memref<64x1152xf32, #tpu.memory_space<vmem>>) attributes {dimension_semantics = [#tpu.dimension_semantics<parallel>], iteration_bounds = array<i64: 2>, scalar_prefetch = 0 : i64, scratch_operands = 2 : i64, tpu.core_type = #tpu.core_type<tc>, window_params = [{transform_indices = @transform_0, window_bounds = array<i64: 1, 8, 8, 128>}, {pipeline_mode = #tpu.pipeline_mode<synchronous>, transform_indices = @transform_1, window_bounds = array<i64: 1152, 512>}, {pipeline_mode = #tpu.pipeline_mode<synchronous>, transform_indices = @transform_2, window_bounds = array<i64: 1, 512>}, {transform_indices = @transform_3, window_bounds = array<i64: 1, 8, 8, 512>}]} {
    %c0 = arith.constant 0 : index
    %c0_0 = arith.constant 0 : index
    %c0_1 = arith.constant 0 : index
    %c0_2 = arith.constant 0 : index
    %0 = vector.load %arg1[%c0, %c0_0, %c0_1, %c0_2] : memref<1x8x8x128xf32, #tpu.memory_space<vmem>>, vector<1x8x8x128xf32>
    %1 = vector.shape_cast %0 : vector<1x8x8x128xf32> to vector<8x8x128xf32>
    %cst = arith.constant 0.000000e+00 : f32
    %2 = vector.broadcast %cst : f32 to vector<10x10x128xf32>
    %c0_3 = arith.constant 0 : index
    %c0_4 = arith.constant 0 : index
    %c0_5 = arith.constant 0 : index
    %3 = vector.load %arg5[%c0_3, %c0_4, %c0_5] : memref<10x10x128xf32, #tpu.memory_space<vmem>>, vector<10x10x128xf32>
    tpu.vector_store %arg5[%c0_3, %c0_4, %c0_5], %2 {strides = array<i32>} : memref<10x10x128xf32, #tpu.memory_space<vmem>>, vector<10x10x128xf32>,
    %c1 = arith.constant 1 : index
    %c1_6 = arith.constant 1 : index
    %c0_7 = arith.constant 0 : index
    %4 = vector.load %arg5[%c1, %c1_6, %c0_7] : memref<10x10x128xf32, #tpu.memory_space<vmem>>, vector<8x8x128xf32>
    tpu.vector_store %arg5[%c1, %c1_6, %c0_7], %1 {strides = array<i32>} : memref<10x10x128xf32, #tpu.memory_space<vmem>>, vector<8x8x128xf32>,
    %c0_8 = arith.constant 0 : index
    %c0_9 = arith.constant 0 : index
    %c0_10 = arith.constant 0 : index
    %5 = vector.load %arg5[%c0_8, %c0_9, %c0_10] : memref<10x10x128xf32, #tpu.memory_space<vmem>>, vector<8x8x128xf32>
    %6 = vector.shape_cast %5 : vector<8x8x128xf32> to vector<64x128xf32>
    %c0_11 = arith.constant 0 : index
    %c0_12 = arith.constant 0 : index
    %7 = vector.load %arg6[%c0_11, %c0_12] : memref<64x1152xf32, #tpu.memory_space<vmem>>, vector<64x128xf32>
    tpu.vector_store %arg6[%c0_11, %c0_12], %6 {strides = array<i32>} : memref<64x1152xf32, #tpu.memory_space<vmem>>, vector<64x128xf32>,
    %c0_13 = arith.constant 0 : index
    %c1_14 = arith.constant 1 : index
    %c0_15 = arith.constant 0 : index
    %8 = vector.load %arg5[%c0_13, %c1_14, %c0_15] : memref<10x10x128xf32, #tpu.memory_space<vmem>>, vector<8x8x128xf32>
    %9 = vector.shape_cast %8 : vector<8x8x128xf32> to vector<64x128xf32>
    %c0_16 = arith.constant 0 : index
    %c128 = arith.constant 128 : index
    %10 = vector.load %arg6[%c0_16, %c128] : memref<64x1152xf32, #tpu.memory_space<vmem>>, vector<64x128xf32>
    tpu.vector_store %arg6[%c0_16, %c128], %9 {strides = array<i32>} : memref<64x1152xf32, #tpu.memory_space<vmem>>, vector<64x128xf32>,
    %c0_17 = arith.constant 0 : index
    %c2 = arith.constant 2 : index
    %c0_18 = arith.constant 0 : index
    %11 = vector.load %arg5[%c0_17, %c2, %c0_18] : memref<10x10x128xf32, #tpu.memory_space<vmem>>, vector<8x8x128xf32>
    %12 = vector.shape_cast %11 : vector<8x8x128xf32> to vector<64x128xf32>
    %c0_19 = arith.constant 0 : index
    %c256 = arith.constant 256 : index
    %13 = vector.load %arg6[%c0_19, %c256] : memref<64x1152xf32, #tpu.memory_space<vmem>>, vector<64x128xf32>
    tpu.vector_store %arg6[%c0_19, %c256], %12 {strides = array<i32>} : memref<64x1152xf32, #tpu.memory_space<vmem>>, vector<64x128xf32>,
    %c1_20 = arith.constant 1 : index
    %c0_21 = arith.constant 0 : index
    %c0_22 = arith.constant 0 : index
    %14 = vector.load %arg5[%c1_20, %c0_21, %c0_22] : memref<10x10x128xf32, #tpu.memory_space<vmem>>, vector<8x8x128xf32>
    %15 = vector.shape_cast %14 : vector<8x8x128xf32> to vector<64x128xf32>
    %c0_23 = arith.constant 0 : index
    %c384 = arith.constant 384 : index
    %16 = vector.load %arg6[%c0_23, %c384] : memref<64x1152xf32, #tpu.memory_space<vmem>>, vector<64x128xf32>
    tpu.vector_store %arg6[%c0_23, %c384], %15 {strides = array<i32>} : memref<64x1152xf32, #tpu.memory_space<vmem>>, vector<64x128xf32>,
    %c1_24 = arith.constant 1 : index
    %c1_25 = arith.constant 1 : index
    %c0_26 = arith.constant 0 : index
    %17 = vector.load %arg5[%c1_24, %c1_25, %c0_26] : memref<10x10x128xf32, #tpu.memory_space<vmem>>, vector<8x8x128xf32>
    %18 = vector.shape_cast %17 : vector<8x8x128xf32> to vector<64x128xf32>
    %c0_27 = arith.constant 0 : index
    %c512 = arith.constant 512 : index
    %19 = vector.load %arg6[%c0_27, %c512] : memref<64x1152xf32, #tpu.memory_space<vmem>>, vector<64x128xf32>
    tpu.vector_store %arg6[%c0_27, %c512], %18 {strides = array<i32>} : memref<64x1152xf32, #tpu.memory_space<vmem>>, vector<64x128xf32>,
    %c1_28 = arith.constant 1 : index
    %c2_29 = arith.constant 2 : index
    %c0_30 = arith.constant 0 : index
    %20 = vector.load %arg5[%c1_28, %c2_29, %c0_30] : memref<10x10x128xf32, #tpu.memory_space<vmem>>, vector<8x8x128xf32>
    %21 = vector.shape_cast %20 : vector<8x8x128xf32> to vector<64x128xf32>
    %c0_31 = arith.constant 0 : index
    %c640 = arith.constant 640 : index
    %22 = vector.load %arg6[%c0_31, %c640] : memref<64x1152xf32, #tpu.memory_space<vmem>>, vector<64x128xf32>
    tpu.vector_store %arg6[%c0_31, %c640], %21 {strides = array<i32>} : memref<64x1152xf32, #tpu.memory_space<vmem>>, vector<64x128xf32>,
    %c2_32 = arith.constant 2 : index
    %c0_33 = arith.constant 0 : index
    %c0_34 = arith.constant 0 : index
    %23 = vector.load %arg5[%c2_32, %c0_33, %c0_34] : memref<10x10x128xf32, #tpu.memory_space<vmem>>, vector<8x8x128xf32>
    %24 = vector.shape_cast %23 : vector<8x8x128xf32> to vector<64x128xf32>
    %c0_35 = arith.constant 0 : index
    %c768 = arith.constant 768 : index
    %25 = vector.load %arg6[%c0_35, %c768] : memref<64x1152xf32, #tpu.memory_space<vmem>>, vector<64x128xf32>
    tpu.vector_store %arg6[%c0_35, %c768], %24 {strides = array<i32>} : memref<64x1152xf32, #tpu.memory_space<vmem>>, vector<64x128xf32>,
    %c2_36 = arith.constant 2 : index
    %c1_37 = arith.constant 1 : index
    %c0_38 = arith.constant 0 : index
    %26 = vector.load %arg5[%c2_36, %c1_37, %c0_38] : memref<10x10x128xf32, #tpu.memory_space<vmem>>, vector<8x8x128xf32>
    %27 = vector.shape_cast %26 : vector<8x8x128xf32> to vector<64x128xf32>
    %c0_39 = arith.constant 0 : index
    %c896 = arith.constant 896 : index
    %28 = vector.load %arg6[%c0_39, %c896] : memref<64x1152xf32, #tpu.memory_space<vmem>>, vector<64x128xf32>
    tpu.vector_store %arg6[%c0_39, %c896], %27 {strides = array<i32>} : memref<64x1152xf32, #tpu.memory_space<vmem>>, vector<64x128xf32>,
    %c2_40 = arith.constant 2 : index
    %c2_41 = arith.constant 2 : index
    %c0_42 = arith.constant 0 : index
    %29 = vector.load %arg5[%c2_40, %c2_41, %c0_42] : memref<10x10x128xf32, #tpu.memory_space<vmem>>, vector<8x8x128xf32>
    %30 = vector.shape_cast %29 : vector<8x8x128xf32> to vector<64x128xf32>
    %c0_43 = arith.constant 0 : index
    %c1024 = arith.constant 1024 : index
    %31 = vector.load %arg6[%c0_43, %c1024] : memref<64x1152xf32, #tpu.memory_space<vmem>>, vector<64x128xf32>
    tpu.vector_store %arg6[%c0_43, %c1024], %30 {strides = array<i32>} : memref<64x1152xf32, #tpu.memory_space<vmem>>, vector<64x128xf32>,
    %c0_44 = arith.constant 0 : index
    %c0_45 = arith.constant 0 : index
    %32 = vector.load %arg6[%c0_44, %c0_45] : memref<64x1152xf32, #tpu.memory_space<vmem>>, vector<64x1152xf32>
    %c0_46 = arith.constant 0 : index
    %c0_47 = arith.constant 0 : index
    %33 = vector.load %arg2[%c0_46, %c0_47] : memref<1152x512xf32, #tpu.memory_space<vmem>>, vector<1152x512xf32>
    %cst_48 = arith.constant dense<0.000000e+00> : vector<64x512xf32>
    %34 = tpu.matmul %32, %33, %cst_48 {dimension_numbers = #tpu.dot_dimension_numbers<[1], [0], [0], [1], [0, 0, 1, 1], [], []>} : vector<64x1152xf32>, vector<1152x512xf32>, vector<64x512xf32> -> vector<64x512xf32>
    %c0_49 = arith.constant 0 : index
    %c0_50 = arith.constant 0 : index
    %35 = vector.load %arg3[%c0_49, %c0_50] : memref<1x512xf32, #tpu.memory_space<vmem>>, vector<1x512xf32>
    %36 = vector.broadcast %35 : vector<1x512xf32> to vector<64x512xf32>
    %37 = arith.addf %34, %36 : vector<64x512xf32>
    %38 = vector.shape_cast %37 : vector<64x512xf32> to vector<8x8x512xf32>
    %c0_51 = arith.constant 0 : index
    %c0_52 = arith.constant 0 : index
    %c0_53 = arith.constant 0 : index
    %c0_54 = arith.constant 0 : index
    %39 = vector.load %arg4[%c0_51, %c0_52, %c0_53, %c0_54] : memref<1x8x8x512xf32, #tpu.memory_space<vmem>>, vector<1x8x8x512xf32>
    %40 = vector.shape_cast %39 : vector<1x8x8x512xf32> to vector<8x8x512xf32>
    %41 = vector.shape_cast %38 : vector<8x8x512xf32> to vector<1x8x8x512xf32>
    tpu.vector_store %arg4[%c0_51, %c0_52, %c0_53, %c0_54], %41 {strides = array<i32>} : memref<1x8x8x512xf32, #tpu.memory_space<vmem>>, vector<1x8x8x512xf32>,
    return
  }
  func.func @transform_0(%arg0: i32) -> (i32, i32, i32, i32) {
    %c0_i32 = arith.constant 0 : i32
    %c0_i32_0 = arith.constant 0 : i32
    %c0_i32_1 = arith.constant 0 : i32
    %c0_i32_2 = arith.constant 0 : i32
    return %arg0, %c0_i32, %c0_i32_0, %c0_i32_1 : i32, i32, i32, i32
  }
  func.func @transform_1(%arg0: i32) -> (i32, i32) {
    %c0_i32 = arith.constant 0 : i32
    %c0_i32_0 = arith.constant 0 : i32
    %c0_i32_1 = arith.constant 0 : i32
    return %c0_i32, %c0_i32_0 : i32, i32
  }
  func.func @transform_2(%arg0: i32) -> (i32, i32) {
    %c0_i32 = arith.constant 0 : i32
    %c0_i32_0 = arith.constant 0 : i32
    %c0_i32_1 = arith.constant 0 : i32
    return %c0_i32, %c0_i32_0 : i32, i32
  }
  func.func @transform_3(%arg0: i32) -> (i32, i32, i32, i32) {
    %c0_i32 = arith.constant 0 : i32
    %c0_i32_0 = arith.constant 0 : i32
    %c0_i32_1 = arith.constant 0 : i32
    %c0_i32_2 = arith.constant 0 : i32
    return %arg0, %c0_i32, %c0_i32_0, %c0_i32_1 : i32, i32, i32, i32
  }
}

module attributes {stable_mosaic.version = 11 : i64} {
  func.func @_conv3x3_kernel(%arg0: i32, %arg1: memref<1x16x16x128xf32, #tpu.memory_space<vmem>>, %arg2: memref<1152x128xf32, #tpu.memory_space<vmem>>, %arg3: memref<1x128xf32, #tpu.memory_space<vmem>>, %arg4: memref<1x16x16x128xf32, #tpu.memory_space<vmem>>, %arg5: memref<18x18x128xf32, #tpu.memory_space<vmem>>, %arg6: memref<256x1152xf32, #tpu.memory_space<vmem>>) attributes {dimension_semantics = [#tpu.dimension_semantics<parallel>], iteration_bounds = array<i64: 2>, scalar_prefetch = 0 : i64, scratch_operands = 2 : i64, tpu.core_type = #tpu.core_type<tc>, window_params = [{transform_indices = @transform_0, window_bounds = array<i64: 1, 16, 16, 128>}, {pipeline_mode = #tpu.pipeline_mode<synchronous>, transform_indices = @transform_1, window_bounds = array<i64: 1152, 128>}, {pipeline_mode = #tpu.pipeline_mode<synchronous>, transform_indices = @transform_2, window_bounds = array<i64: 1, 128>}, {transform_indices = @transform_3, window_bounds = array<i64: 1, 16, 16, 128>}]} {
    %c0 = arith.constant 0 : index
    %c0_0 = arith.constant 0 : index
    %c0_1 = arith.constant 0 : index
    %c0_2 = arith.constant 0 : index
    %0 = vector.load %arg1[%c0, %c0_0, %c0_1, %c0_2] : memref<1x16x16x128xf32, #tpu.memory_space<vmem>>, vector<1x16x16x128xf32>
    %1 = vector.shape_cast %0 : vector<1x16x16x128xf32> to vector<16x16x128xf32>
    %cst = arith.constant 0.000000e+00 : f32
    %2 = vector.broadcast %cst : f32 to vector<18x18x128xf32>
    %c0_3 = arith.constant 0 : index
    %c0_4 = arith.constant 0 : index
    %c0_5 = arith.constant 0 : index
    %3 = vector.load %arg5[%c0_3, %c0_4, %c0_5] : memref<18x18x128xf32, #tpu.memory_space<vmem>>, vector<18x18x128xf32>
    tpu.vector_store %arg5[%c0_3, %c0_4, %c0_5], %2 {strides = array<i32>} : memref<18x18x128xf32, #tpu.memory_space<vmem>>, vector<18x18x128xf32>,
    %c1 = arith.constant 1 : index
    %c1_6 = arith.constant 1 : index
    %c0_7 = arith.constant 0 : index
    %4 = vector.load %arg5[%c1, %c1_6, %c0_7] : memref<18x18x128xf32, #tpu.memory_space<vmem>>, vector<16x16x128xf32>
    tpu.vector_store %arg5[%c1, %c1_6, %c0_7], %1 {strides = array<i32>} : memref<18x18x128xf32, #tpu.memory_space<vmem>>, vector<16x16x128xf32>,
    %c0_8 = arith.constant 0 : index
    %c0_9 = arith.constant 0 : index
    %c0_10 = arith.constant 0 : index
    %5 = vector.load %arg5[%c0_8, %c0_9, %c0_10] : memref<18x18x128xf32, #tpu.memory_space<vmem>>, vector<16x16x128xf32>
    %6 = vector.shape_cast %5 : vector<16x16x128xf32> to vector<256x128xf32>
    %c0_11 = arith.constant 0 : index
    %c0_12 = arith.constant 0 : index
    %7 = vector.load %arg6[%c0_11, %c0_12] : memref<256x1152xf32, #tpu.memory_space<vmem>>, vector<256x128xf32>
    tpu.vector_store %arg6[%c0_11, %c0_12], %6 {strides = array<i32>} : memref<256x1152xf32, #tpu.memory_space<vmem>>, vector<256x128xf32>,
    %c0_13 = arith.constant 0 : index
    %c1_14 = arith.constant 1 : index
    %c0_15 = arith.constant 0 : index
    %8 = vector.load %arg5[%c0_13, %c1_14, %c0_15] : memref<18x18x128xf32, #tpu.memory_space<vmem>>, vector<16x16x128xf32>
    %9 = vector.shape_cast %8 : vector<16x16x128xf32> to vector<256x128xf32>
    %c0_16 = arith.constant 0 : index
    %c128 = arith.constant 128 : index
    %10 = vector.load %arg6[%c0_16, %c128] : memref<256x1152xf32, #tpu.memory_space<vmem>>, vector<256x128xf32>
    tpu.vector_store %arg6[%c0_16, %c128], %9 {strides = array<i32>} : memref<256x1152xf32, #tpu.memory_space<vmem>>, vector<256x128xf32>,
    %c0_17 = arith.constant 0 : index
    %c2 = arith.constant 2 : index
    %c0_18 = arith.constant 0 : index
    %11 = vector.load %arg5[%c0_17, %c2, %c0_18] : memref<18x18x128xf32, #tpu.memory_space<vmem>>, vector<16x16x128xf32>
    %12 = vector.shape_cast %11 : vector<16x16x128xf32> to vector<256x128xf32>
    %c0_19 = arith.constant 0 : index
    %c256 = arith.constant 256 : index
    %13 = vector.load %arg6[%c0_19, %c256] : memref<256x1152xf32, #tpu.memory_space<vmem>>, vector<256x128xf32>
    tpu.vector_store %arg6[%c0_19, %c256], %12 {strides = array<i32>} : memref<256x1152xf32, #tpu.memory_space<vmem>>, vector<256x128xf32>,
    %c1_20 = arith.constant 1 : index
    %c0_21 = arith.constant 0 : index
    %c0_22 = arith.constant 0 : index
    %14 = vector.load %arg5[%c1_20, %c0_21, %c0_22] : memref<18x18x128xf32, #tpu.memory_space<vmem>>, vector<16x16x128xf32>
    %15 = vector.shape_cast %14 : vector<16x16x128xf32> to vector<256x128xf32>
    %c0_23 = arith.constant 0 : index
    %c384 = arith.constant 384 : index
    %16 = vector.load %arg6[%c0_23, %c384] : memref<256x1152xf32, #tpu.memory_space<vmem>>, vector<256x128xf32>
    tpu.vector_store %arg6[%c0_23, %c384], %15 {strides = array<i32>} : memref<256x1152xf32, #tpu.memory_space<vmem>>, vector<256x128xf32>,
    %c1_24 = arith.constant 1 : index
    %c1_25 = arith.constant 1 : index
    %c0_26 = arith.constant 0 : index
    %17 = vector.load %arg5[%c1_24, %c1_25, %c0_26] : memref<18x18x128xf32, #tpu.memory_space<vmem>>, vector<16x16x128xf32>
    %18 = vector.shape_cast %17 : vector<16x16x128xf32> to vector<256x128xf32>
    %c0_27 = arith.constant 0 : index
    %c512 = arith.constant 512 : index
    %19 = vector.load %arg6[%c0_27, %c512] : memref<256x1152xf32, #tpu.memory_space<vmem>>, vector<256x128xf32>
    tpu.vector_store %arg6[%c0_27, %c512], %18 {strides = array<i32>} : memref<256x1152xf32, #tpu.memory_space<vmem>>, vector<256x128xf32>,
    %c1_28 = arith.constant 1 : index
    %c2_29 = arith.constant 2 : index
    %c0_30 = arith.constant 0 : index
    %20 = vector.load %arg5[%c1_28, %c2_29, %c0_30] : memref<18x18x128xf32, #tpu.memory_space<vmem>>, vector<16x16x128xf32>
    %21 = vector.shape_cast %20 : vector<16x16x128xf32> to vector<256x128xf32>
    %c0_31 = arith.constant 0 : index
    %c640 = arith.constant 640 : index
    %22 = vector.load %arg6[%c0_31, %c640] : memref<256x1152xf32, #tpu.memory_space<vmem>>, vector<256x128xf32>
    tpu.vector_store %arg6[%c0_31, %c640], %21 {strides = array<i32>} : memref<256x1152xf32, #tpu.memory_space<vmem>>, vector<256x128xf32>,
    %c2_32 = arith.constant 2 : index
    %c0_33 = arith.constant 0 : index
    %c0_34 = arith.constant 0 : index
    %23 = vector.load %arg5[%c2_32, %c0_33, %c0_34] : memref<18x18x128xf32, #tpu.memory_space<vmem>>, vector<16x16x128xf32>
    %24 = vector.shape_cast %23 : vector<16x16x128xf32> to vector<256x128xf32>
    %c0_35 = arith.constant 0 : index
    %c768 = arith.constant 768 : index
    %25 = vector.load %arg6[%c0_35, %c768] : memref<256x1152xf32, #tpu.memory_space<vmem>>, vector<256x128xf32>
    tpu.vector_store %arg6[%c0_35, %c768], %24 {strides = array<i32>} : memref<256x1152xf32, #tpu.memory_space<vmem>>, vector<256x128xf32>,
    %c2_36 = arith.constant 2 : index
    %c1_37 = arith.constant 1 : index
    %c0_38 = arith.constant 0 : index
    %26 = vector.load %arg5[%c2_36, %c1_37, %c0_38] : memref<18x18x128xf32, #tpu.memory_space<vmem>>, vector<16x16x128xf32>
    %27 = vector.shape_cast %26 : vector<16x16x128xf32> to vector<256x128xf32>
    %c0_39 = arith.constant 0 : index
    %c896 = arith.constant 896 : index
    %28 = vector.load %arg6[%c0_39, %c896] : memref<256x1152xf32, #tpu.memory_space<vmem>>, vector<256x128xf32>
    tpu.vector_store %arg6[%c0_39, %c896], %27 {strides = array<i32>} : memref<256x1152xf32, #tpu.memory_space<vmem>>, vector<256x128xf32>,
    %c2_40 = arith.constant 2 : index
    %c2_41 = arith.constant 2 : index
    %c0_42 = arith.constant 0 : index
    %29 = vector.load %arg5[%c2_40, %c2_41, %c0_42] : memref<18x18x128xf32, #tpu.memory_space<vmem>>, vector<16x16x128xf32>
    %30 = vector.shape_cast %29 : vector<16x16x128xf32> to vector<256x128xf32>
    %c0_43 = arith.constant 0 : index
    %c1024 = arith.constant 1024 : index
    %31 = vector.load %arg6[%c0_43, %c1024] : memref<256x1152xf32, #tpu.memory_space<vmem>>, vector<256x128xf32>
    tpu.vector_store %arg6[%c0_43, %c1024], %30 {strides = array<i32>} : memref<256x1152xf32, #tpu.memory_space<vmem>>, vector<256x128xf32>,
    %c0_44 = arith.constant 0 : index
    %c0_45 = arith.constant 0 : index
    %32 = vector.load %arg6[%c0_44, %c0_45] : memref<256x1152xf32, #tpu.memory_space<vmem>>, vector<256x1152xf32>
    %c0_46 = arith.constant 0 : index
    %c0_47 = arith.constant 0 : index
    %33 = vector.load %arg2[%c0_46, %c0_47] : memref<1152x128xf32, #tpu.memory_space<vmem>>, vector<1152x128xf32>
    %cst_48 = arith.constant dense<0.000000e+00> : vector<256x128xf32>
    %34 = tpu.matmul %32, %33, %cst_48 {dimension_numbers = #tpu.dot_dimension_numbers<[1], [0], [0], [1], [0, 0, 1, 1], [], []>} : vector<256x1152xf32>, vector<1152x128xf32>, vector<256x128xf32> -> vector<256x128xf32>
    %c0_49 = arith.constant 0 : index
    %c0_50 = arith.constant 0 : index
    %35 = vector.load %arg3[%c0_49, %c0_50] : memref<1x128xf32, #tpu.memory_space<vmem>>, vector<1x128xf32>
    %36 = vector.broadcast %35 : vector<1x128xf32> to vector<256x128xf32>
    %37 = arith.addf %34, %36 : vector<256x128xf32>
    %38 = vector.shape_cast %37 : vector<256x128xf32> to vector<16x16x128xf32>
    %c0_51 = arith.constant 0 : index
    %c0_52 = arith.constant 0 : index
    %c0_53 = arith.constant 0 : index
    %c0_54 = arith.constant 0 : index
    %39 = vector.load %arg4[%c0_51, %c0_52, %c0_53, %c0_54] : memref<1x16x16x128xf32, #tpu.memory_space<vmem>>, vector<1x16x16x128xf32>
    %40 = vector.shape_cast %39 : vector<1x16x16x128xf32> to vector<16x16x128xf32>
    %41 = vector.shape_cast %38 : vector<16x16x128xf32> to vector<1x16x16x128xf32>
    tpu.vector_store %arg4[%c0_51, %c0_52, %c0_53, %c0_54], %41 {strides = array<i32>} : memref<1x16x16x128xf32, #tpu.memory_space<vmem>>, vector<1x16x16x128xf32>,
    return
  }
  func.func @transform_0(%arg0: i32) -> (i32, i32, i32, i32) {
    %c0_i32 = arith.constant 0 : i32
    %c0_i32_0 = arith.constant 0 : i32
    %c0_i32_1 = arith.constant 0 : i32
    %c0_i32_2 = arith.constant 0 : i32
    return %arg0, %c0_i32, %c0_i32_0, %c0_i32_1 : i32, i32, i32, i32
  }
  func.func @transform_1(%arg0: i32) -> (i32, i32) {
    %c0_i32 = arith.constant 0 : i32
    %c0_i32_0 = arith.constant 0 : i32
    %c0_i32_1 = arith.constant 0 : i32
    return %c0_i32, %c0_i32_0 : i32, i32
  }
  func.func @transform_2(%arg0: i32) -> (i32, i32) {
    %c0_i32 = arith.constant 0 : i32
    %c0_i32_0 = arith.constant 0 : i32
    %c0_i32_1 = arith.constant 0 : i32
    return %c0_i32, %c0_i32_0 : i32, i32
  }
  func.func @transform_3(%arg0: i32) -> (i32, i32, i32, i32) {
    %c0_i32 = arith.constant 0 : i32
    %c0_i32_0 = arith.constant 0 : i32
    %c0_i32_1 = arith.constant 0 : i32
    %c0_i32_2 = arith.constant 0 : i32
    return %arg0, %c0_i32, %c0_i32_0, %c0_i32_1 : i32, i32, i32, i32
  }
}

</mosaic_0001>

<llo_original>
// kernel: edsr_forward.4
$region0: #{edsr_forward.4}
  #allocation0 [shape = 'u32[]', space=smem, size = 0x4, offset = 0x4, fixed_abs, tag = 'smem constant byte address 0x4 - core index']
  #allocation1 [shape = 'u32[72,128]{1,0:T(1,128)}', space=vmem, size = 0x9000, scoped, tag = 'internal scratch']
  #allocation2 [shape = 'f32[10,10,128]{2,1,0:T(8,128)}', space=vmem, size = 0x14000, scoped, tag = 'scratch operand']
  #allocation3 [shape = 'f32[64,1152]{1,0:T(8,128)}', space=vmem, size = 0x48000, scoped, tag = 'scratch operand']
  %s0 = inlined_call_operand.vmem [shape: f32[2,8,8,128], index: 0, kind: input, shape index: {}]
  %s1 = inlined_call_operand.hbm [shape: f32[1152,128], index: 1, kind: input, shape index: {}]
  %s2 = inlined_call_operand.hbm [shape: f32[1,128], index: 2, kind: input, shape index: {}]
  %s3 = inlined_call_operand.vmem [shape: f32[2,8,8,128], index: 3, kind: output, shape index: {}]
  %s4 = sld [smem:[#allocation0]]
  $region53: #{edsr_forward.4} parent=0
    _
  %s6 = ssub.s32 1, %s4
  %s7 = scalar_select 0, %s6, %s4
  $region1: #{edsr_forward.4} parent=0
    #allocation4 [shape = 'u8[589824]{0}', space=vmem, size = 0x90000, scoped, tag = 'input window, operand 1, single buffered']
    #allocation5 [shape = 's32[2]{0}', space=sflag, size = 0x8, scoped, tag = 'scoped memory for edsr_forward.4']
    #allocation6 [shape = 'u8[512]{0}', space=vmem, size = 0x400, scoped, tag = 'input window, operand 2, single buffered']
    #allocation7 [shape = 's32[1]{0}', space=sflag, size = 0x4, scoped, tag = 'scoped memory for edsr_forward.4']
    %8 = vsyncpa [#allocation5], 0
    %9 = vsyncpa [#allocation7], 0
    loop: start=0, step=1, limit=4
    $region2: #{edsr_forward.4} parent=1 // loop_pre_header
      _
    $region3: #{edsr_forward.4} parent=1 // loop_header
      %s11 = sphi 0, %s15
      %p12 = scmp.ge.s32.totalorder %s11, 4
      %s21 = sphi 0, %s23
      %s24 = sphi 0, %s21
      %s25 = sphi 0, %s24
      %s41 = sphi 0, %s25
      %s45 = sphi 0, %s45
      %s47 = sphi 0, %s45
      %s48 = sphi 0, %s47
      %s62 = sphi 0, %s48
      %s66 = sphi 0, %s66
      %s68 = sphi 0, %s66
      %s69 = sphi 0, %s68
      %s83 = sphi 0, %s69
      %s89 = sphi 0, %s91
      %s92 = sphi 0, %s89
      %s93 = sphi 0, %s92
      %s109 = sphi 0, %s93
    $region4: #{edsr_forward.4} parent=1 // loop_header_branch
      %14 = sbr.rel (%p12) target = $region8
    $region5: #{edsr_forward.4} parent=1 // loop_body
      %s16 = ssub.s32 %s11, 1
      %s17 = ssub.s32 %s11, 2
      %s18 = sadd.s32 %s11, 1
      %s19 = ssub.s32 %s11, %s18
      %p20 = scmp.eq.s32.totalorder %s19, 0
      %s22 = sadd.s32 %s21, 1
      %s23 = scalar_select %p20, %s21, %s22
      %p26 = pneg %p20
      %p27 = scmp.eq.s32.totalorder %s11, 1
      %p28 = por %p26, %p27
      %p29 = scmp.ne.s32.totalorder %s21, %s24
      %p30 = scmp.eq.s32.totalorder %s11, 0
      %p31 = por %p29, %p30
      %p32 = scmp.ne.s32.totalorder %s21, %s24
      %p33 = scmp.eq.s32.totalorder %s16, 1
      %p34 = por %p32, %p33
      %p35 = scmp.ne.s32.totalorder %s24, %s25
      %p36 = scmp.eq.s32.totalorder %s16, 0
      %p37 = por %p35, %p36
      %p38 = scmp.ne.s32.totalorder %s24, %s25
      %p39 = scmp.eq.s32.totalorder %s17, 1
      %p40 = por %p38, %p39
      %p42 = scmp.ne.s32.totalorder %s25, %s41
      %p43 = scmp.eq.s32.totalorder %s17, 0
      %p44 = por %p42, %p43
      %s46 = sadd.s32 %s45, 1
      %p49 = scmp.eq.s32.totalorder %s11, 1
      %p50 = scmp.ne.s32.totalorder %s45, %s47
      %p51 = scmp.eq.s32.totalorder %s11, 0
      %p52 = por %p50, %p51
      %p53 = scmp.ne.s32.totalorder %s45, %s47
      %p54 = scmp.eq.s32.totalorder %s16, 1
      %p55 = por %p53, %p54
      %p56 = scmp.ne.s32.totalorder %s47, %s48
      %p57 = scmp.eq.s32.totalorder %s16, 0
      %p58 = por %p56, %p57
      %p59 = scmp.ne.s32.totalorder %s47, %s48
      %p60 = scmp.eq.s32.totalorder %s17, 1
      %p61 = por %p59, %p60
      %p63 = scmp.ne.s32.totalorder %s48, %s62
      %p64 = scmp.eq.s32.totalorder %s17, 0
      %p65 = por %p63, %p64
      %s67 = sadd.s32 %s66, 1
      %p70 = scmp.eq.s32.totalorder %s11, 1
      %p71 = scmp.ne.s32.totalorder %s66, %s68
      %p72 = scmp.eq.s32.totalorder %s11, 0
      %p73 = por %p71, %p72
      %p74 = scmp.ne.s32.totalorder %s66, %s68
      %p75 = scmp.eq.s32.totalorder %s16, 1
      %p76 = por %p74, %p75
      %p77 = scmp.ne.s32.totalorder %s68, %s69
      %p78 = scmp.eq.s32.totalorder %s16, 0
      %p79 = por %p77, %p78
      %p80 = scmp.ne.s32.totalorder %s68, %s69
      %p81 = scmp.eq.s32.totalorder %s17, 1
      %p82 = por %p80, %p81
      %p84 = scmp.ne.s32.totalorder %s69, %s83
      %p85 = scmp.eq.s32.totalorder %s17, 0
      %p86 = por %p84, %p85
      %s87 = ssub.s32 %s11, %s18
      %p88 = scmp.eq.s32.totalorder %s87, 0
      %s90 = sadd.s32 %s89, 1
      %s91 = scalar_select %p88, %s89, %s90
      %p94 = pneg %p88
      %p95 = scmp.eq.s32.totalorder %s11, 1
      %p96 = por %p94, %p95
      %p97 = scmp.ne.s32.totalorder %s89, %s92
      %p98 = scmp.eq.s32.totalorder %s11, 0
      %p99 = por %p97, %p98
      %p100 = scmp.ne.s32.totalorder %s89, %s92
      %p101 = scmp.eq.s32.totalorder %s16, 1
      %p102 = por %p100, %p101
      %p103 = scmp.ne.s32.totalorder %s92, %s93
      %p104 = scmp.eq.s32.totalorder %s16, 0
      %p105 = por %p103, %p104
      %p106 = scmp.ne.s32.totalorder %s92, %s93
      %p107 = scmp.eq.s32.totalorder %s17, 1
      %p108 = por %p106, %p107
      %p110 = scmp.ne.s32.totalorder %s93, %s109
      %p111 = scmp.eq.s32.totalorder %s17, 0
      %p112 = por %p110, %p111
      %p113 = scmp.le.s32.totalorder 1, %s11
      %p114 = scmp.lt.s32.totalorder %s11, 3
      %p115 = pnand %p113, %p114
      %p116 = pneg %p115
      // Predicated region
      $region9: #{edsr_forward.4} parent=5 // pred_check
        _
      $region10: #{edsr_forward.4} parent=5 // pred_check_branch
        %118 = sbr.rel (%p115) target = $region12
      $region11: #{edsr_forward.4} parent=5 // pred_region
        %s119 = ssub.s32 %s11, 1
        // Predicated region
        $region13: #{edsr_forward.4} parent=11 // pred_check
          %p120 = pneg %p58
        $region14: #{edsr_forward.4} parent=11 // pred_check_branch
          %122 = sbr.rel (%p120) target = $region16
        $region15: #{edsr_forward.4} parent=11 // pred_region
          %124 = vsyncadd [#allocation5], 0
          %s125 = sshll.u32 %s1, 4
          %s126 = int_to_ptr.hbm [resolvable:$true] %s125
          %s127 = sshll.u32 [#allocation4], 4
          %s128 = int_to_ptr.vmem [resolvable:$true] %s127
          %133 = dma.hbm_to_vmem [thread:$0]  %s126, 18432, %s128, [#allocation5], 128, 128, 8
        $region16: #{edsr_forward.4} parent=11 // pred_fallthru
          _
        // Predicated region
        $region17: #{edsr_forward.4} parent=11 // pred_check
          %p134 = pneg %p79
        $region18: #{edsr_forward.4} parent=11 // pred_check_branch
          %136 = sbr.rel (%p134) target = $region20
        $region19: #{edsr_forward.4} parent=11 // pred_region
          %138 = vsyncadd [#allocation7], 0
          %s140 = sshll.u32 %s2, 4
          %s141 = int_to_ptr.hbm [resolvable:$true] %s140
          %s142 = sshll.u32 [#allocation6], 4
          %s143 = int_to_ptr.vmem [resolvable:$true] %s142
          %145 = dma.hbm_to_vmem [thread:$0]  %s141, 16, %s143, [#allocation7]
        $region20: #{edsr_forward.4} parent=11 // pred_fallthru
          _
      $region12: #{edsr_forward.4} parent=5 // pred_fallthru
        _
      %p146 = scmp.lt.s32.totalorder %s11, 2
      // Predicated region
      $region21: #{edsr_forward.4} parent=5 // pred_check
        %p147 = pneg %p146
      $region22: #{edsr_forward.4} parent=5 // pred_check_branch
        %149 = sbr.rel (%p147) target = $region24
      $region23: #{edsr_forward.4} parent=5 // pred_region
        // Predicated region
        $region25: #{edsr_forward.4} parent=23 // pred_check
          %p150 = pneg %p31
        $region26: #{edsr_forward.4} parent=23 // pred_check_branch
          %152 = sbr.rel (%p150) target = $region28
        $region27: #{edsr_forward.4} parent=23 // pred_region
          %p153 = scmp.lt.s32.totalorder %s11, 1
          %s154 = scalar_select %p153, %s11, 1
          %s155 = smul.addr %s154, 8
          %s156 = smul.addr %s155, 8
          %s157 = scalar_lea.vmem %s0, %s156
        $region28: #{edsr_forward.4} parent=23 // pred_fallthru
          _
      $region24: #{edsr_forward.4} parent=5 // pred_fallthru
        _
      %p158 = scmp.le.s32.totalorder 1, %s11
      %p159 = scmp.lt.s32.totalorder %s11, 3
      %p160 = pnand %p158, %p159
      %p161 = pneg %p160
      // Predicated region
      $region29: #{edsr_forward.4} parent=5 // pred_check
        _
      $region30: #{edsr_forward.4} parent=5 // pred_check_branch
        %163 = sbr.rel (%p160) target = $region32
      $region31: #{edsr_forward.4} parent=5 // pred_region
        %s164 = ssub.s32 %s11, 1
        // Predicated region
        $region33: #{edsr_forward.4} parent=31 // pred_check
          %p165 = pneg %p58
        $region34: #{edsr_forward.4} parent=31 // pred_check_branch
          %167 = sbr.rel (%p165) target = $region36
        $region35: #{edsr_forward.4} parent=31 // pred_region
          %169 = dma.done [#allocation5], 18432
        $region36: #{edsr_forward.4} parent=31 // pred_fallthru
          _
        // Predicated region
        $region37: #{edsr_forward.4} parent=31 // pred_check
          %p170 = pneg %p79
        $region38: #{edsr_forward.4} parent=31 // pred_check_branch
          %172 = sbr.rel (%p170) target = $region40
        $region39: #{edsr_forward.4} parent=31 // pred_region
          %174 = dma.done [#allocation7], 16
        $region40: #{edsr_forward.4} parent=31 // pred_fallthru
          _
        %p175 = scmp.lt.s32.totalorder %s16, 1
        %s176 = scalar_select %p175, %s16, 1
        %s177 = smul.addr %s176, 8
        %s178 = smul.addr %s177, 8
        %s179 = scalar_lea.vmem %s0, %s178
        %p180 = pneg %p37
        %p181 = pneg %p34
        %p182 = pneg %p58
        %p183 = pneg %p55
        %p184 = pneg %p79
        %p185 = pneg %p76
        %p186 = pneg %p105
        %p187 = pneg %p102
        %p188 = scmp.lt.s32.totalorder %s16, 1
        %s189 = scalar_select %p188, %s16, 1
        %s190 = smul.addr %s189, 8
        %s191 = smul.addr %s190, 8
        %s192 = scalar_lea.vmem %s3, %s191
        %p193 = scmp.lt.s32.totalorder %s16, 1
        %s194 = scalar_select %p193, %s16, 1
        %s195 = smul.addr %s194, 8
        %s196 = smul.addr %s195, 8
        %s197 = scalar_lea.vmem %s0, %s196
        %p198 = scmp.lt.s32.totalorder %s16, 1
        %s199 = scalar_select %p198, %s16, 1
        %s200 = smul.addr %s199, 8
        %s201 = smul.addr %s200, 8
        %s202 = scalar_lea.vmem %s3, %s201
        %v203 = vld [vmem:[%s197] sm:$0xff]
        %v204 = vld [vmem:[%s197 + $0x8] sm:$0xff]
        %v205 = vld [vmem:[%s197 + $0x10] sm:$0xff]
        %v206 = vld [vmem:[%s197 + $0x18] sm:$0xff]
        %v207 = vld [vmem:[%s197 + $0x20] sm:$0xff]
        %v208 = vld [vmem:[%s197 + $0x28] sm:$0xff]
        %v209 = vld [vmem:[%s197 + $0x30] sm:$0xff]
        %v210 = vld [vmem:[%s197 + $0x38] sm:$0xff]
        %211 = vst [vmem:[#allocation2] sm:$0xff] 0.0
        %212 = vst [vmem:[#allocation2 + $0x8] sm:$0x3] 0.0
        %213 = vst [vmem:[#allocation2 + $0x10] sm:$0xff] 0.0
        %214 = vst [vmem:[#allocation2 + $0x18] sm:$0x3] 0.0
        %215 = vst [vmem:[#allocation2 + $0x20] sm:$0xff] 0.0
        %216 = vst [vmem:[#allocation2 + $0x28] sm:$0x3] 0.0
        %217 = vst [vmem:[#allocation2 + $0x30] sm:$0xff] 0.0
        %218 = vst [vmem:[#allocation2 + $0x38] sm:$0x3] 0.0
        %219 = vst [vmem:[#allocation2 + $0x40] sm:$0xff] 0.0
        %220 = vst [vmem:[#allocation2 + $0x48] sm:$0x3] 0.0
        %221 = vst [vmem:[#allocation2 + $0x50] sm:$0xff] 0.0
        %222 = vst [vmem:[#allocation2 + $0x58] sm:$0x3] 0.0
        %223 = vst [vmem:[#allocation2 + $0x60] sm:$0xff] 0.0
        %224 = vst [vmem:[#allocation2 + $0x68] sm:$0x3] 0.0
        %225 = vst [vmem:[#allocation2 + $0x70] sm:$0xff] 0.0
        %226 = vst [vmem:[#allocation2 + $0x78] sm:$0x3] 0.0
        %227 = vst [vmem:[#allocation2 + $0x80] sm:$0xff] 0.0
        %228 = vst [vmem:[#allocation2 + $0x88] sm:$0x3] 0.0
        %229 = vst [vmem:[#allocation2 + $0x90] sm:$0xff] 0.0
        %230 = vst [vmem:[#allocation2 + $0x98] sm:$0x3] 0.0
        %s231 = scalar_lea.vmem [#allocation2], 16
        %232 = vst [vmem:[%s231 + $0x1] sm:$0xff] %v203
        %233 = vst [vmem:[%s231 + $0x11] sm:$0xff] %v204
        %234 = vst [vmem:[%s231 + $0x21] sm:$0xff] %v205
        %235 = vst [vmem:[%s231 + $0x31] sm:$0xff] %v206
        %236 = vst [vmem:[%s231 + $0x41] sm:$0xff] %v207
        %237 = vst [vmem:[%s231 + $0x51] sm:$0xff] %v208
        %238 = vst [vmem:[%s231 + $0x61] sm:$0xff] %v209
        %239 = vst [vmem:[%s231 + $0x71] sm:$0xff] %v210
        %v240 = vld [vmem:[#allocation2] sm:$0xff]
        %v241 = vld [vmem:[#allocation2 + $0x10] sm:$0xff]
        %v242 = vld [vmem:[#allocation2 + $0x20] sm:$0xff]
        %v243 = vld [vmem:[#allocation2 + $0x30] sm:$0xff]
        %v244 = vld [vmem:[#allocation2 + $0x40] sm:$0xff]
        %v245 = vld [vmem:[#allocation2 + $0x50] sm:$0xff]
        %v246 = vld [vmem:[#allocation2 + $0x60] sm:$0xff]
        %v247 = vld [vmem:[#allocation2 + $0x70] sm:$0xff]
        %248 = vst [vmem:[#allocation3] sm:$0xff] %v240
        %249 = vst [vmem:[#allocation3 + $0x48] sm:$0xff] %v241
        %250 = vst [vmem:[#allocation3 + $0x90] sm:$0xff] %v242
        %251 = vst [vmem:[#allocation3 + $0xd8] sm:$0xff] %v243
        %252 = vst [vmem:[#allocation3 + $0x120] sm:$0xff] %v244
        %253 = vst [vmem:[#allocation3 + $0x168] sm:$0xff] %v245
        %254 = vst [vmem:[#allocation3 + $0x1b0] sm:$0xff] %v246
        %255 = vst [vmem:[#allocation3 + $0x1f8] sm:$0xff] %v247
        %v256 = vld [vmem:[#allocation2 + $0x1] sm:$0xff]
        %v257 = vld [vmem:[#allocation2 + $0x11] sm:$0xff]
        %v258 = vld [vmem:[#allocation2 + $0x21] sm:$0xff]
        %v259 = vld [vmem:[#allocation2 + $0x31] sm:$0xff]
        %v260 = vld [vmem:[#allocation2 + $0x41] sm:$0xff]
        %v261 = vld [vmem:[#allocation2 + $0x51] sm:$0xff]
        %v262 = vld [vmem:[#allocation2 + $0x61] sm:$0xff]
        %v263 = vld [vmem:[#allocation2 + $0x71] sm:$0xff]
        %264 = vst [vmem:[#allocation3 + $0x8] sm:$0xff] %v256
        %265 = vst [vmem:[#allocation3 + $0x50] sm:$0xff] %v257
        %266 = vst [vmem:[#allocation3 + $0x98] sm:$0xff] %v258
        %267 = vst [vmem:[#allocation3 + $0xe0] sm:$0xff] %v259
        %268 = vst [vmem:[#allocation3 + $0x128] sm:$0xff] %v260
        %269 = vst [vmem:[#allocation3 + $0x170] sm:$0xff] %v261
        %270 = vst [vmem:[#allocation3 + $0x1b8] sm:$0xff] %v262
        %271 = vst [vmem:[#allocation3 + $0x200] sm:$0xff] %v263
        %v272 = vld [vmem:[#allocation2 + $0x2] sm:$0xff]
        %v273 = vld [vmem:[#allocation2 + $0x12] sm:$0xff]
        %v274 = vld [vmem:[#allocation2 + $0x22] sm:$0xff]
        %v275 = vld [vmem:[#allocation2 + $0x32] sm:$0xff]
        %v276 = vld [vmem:[#allocation2 + $0x42] sm:$0xff]
        %v277 = vld [vmem:[#allocation2 + $0x52] sm:$0xff]
        %v278 = vld [vmem:[#allocation2 + $0x62] sm:$0xff]
        %v279 = vld [vmem:[#allocation2 + $0x72] sm:$0xff]
        %280 = vst [vmem:[#allocation3 + $0x10] sm:$0xff] %v272
        %281 = vst [vmem:[#allocation3 + $0x58] sm:$0xff] %v273
        %282 = vst [vmem:[#allocation3 + $0xa0] sm:$0xff] %v274
        %283 = vst [vmem:[#allocation3 + $0xe8] sm:$0xff] %v275
        %284 = vst [vmem:[#allocation3 + $0x130] sm:$0xff] %v276
        %285 = vst [vmem:[#allocation3 + $0x178] sm:$0xff] %v277
        %286 = vst [vmem:[#allocation3 + $0x1c0] sm:$0xff] %v278
        %287 = vst [vmem:[#allocation3 + $0x208] sm:$0xff] %v279
        %v288 = vld [vmem:[%s231] sm:$0xff]
        %v289 = vld [vmem:[%s231 + $0x10] sm:$0xff]
        %v290 = vld [vmem:[%s231 + $0x20] sm:$0xff]
        %v291 = vld [vmem:[%s231 + $0x30] sm:$0xff]
        %v292 = vld [vmem:[%s231 + $0x40] sm:$0xff]
        %v293 = vld [vmem:[%s231 + $0x50] sm:$0xff]
        %v294 = vld [vmem:[%s231 + $0x60] sm:$0xff]
        %v295 = vld [vmem:[%s231 + $0x70] sm:$0xff]
        %296 = vst [vmem:[#allocation3 + $0x18] sm:$0xff] %v288
        %297 = vst [vmem:[#allocation3 + $0x60] sm:$0xff] %v289
        %298 = vst [vmem:[#allocation3 + $0xa8] sm:$0xff] %v290
        %299 = vst [vmem:[#allocation3 + $0xf0] sm:$0xff] %v291
        %300 = vst [vmem:[#allocation3 + $0x138] sm:$0xff] %v292
        %301 = vst [vmem:[#allocation3 + $0x180] sm:$0xff] %v293
        %302 = vst [vmem:[#allocation3 + $0x1c8] sm:$0xff] %v294
        %303 = vst [vmem:[#allocation3 + $0x210] sm:$0xff] %v295
        %v304 = vld [vmem:[%s231 + $0x1] sm:$0xff]
        %v305 = vld [vmem:[%s231 + $0x11] sm:$0xff]
        %v306 = vld [vmem:[%s231 + $0x21] sm:$0xff]
        %v307 = vld [vmem:[%s231 + $0x31] sm:$0xff]
        %v308 = vld [vmem:[%s231 + $0x41] sm:$0xff]
        %v309 = vld [vmem:[%s231 + $0x51] sm:$0xff]
        %v310 = vld [vmem:[%s231 + $0x61] sm:$0xff]
        %v311 = vld [vmem:[%s231 + $0x71] sm:$0xff]
        %312 = vst [vmem:[#allocation3 + $0x20] sm:$0xff] %v304
        %313 = vst [vmem:[#allocation3 + $0x68] sm:$0xff] %v305
        %314 = vst [vmem:[#allocation3 + $0xb0] sm:$0xff] %v306
        %315 = vst [vmem:[#allocation3 + $0xf8] sm:$0xff] %v307
        %316 = vst [vmem:[#allocation3 + $0x140] sm:$0xff] %v308
        %317 = vst [vmem:[#allocation3 + $0x188] sm:$0xff] %v309
        %318 = vst [vmem:[#allocation3 + $0x1d0] sm:$0xff] %v310
        %319 = vst [vmem:[#allocation3 + $0x218] sm:$0xff] %v311
        %v320 = vld [vmem:[%s231 + $0x2] sm:$0xff]
        %v321 = vld [vmem:[%s231 + $0x12] sm:$0xff]
        %v322 = vld [vmem:[%s231 + $0x22] sm:$0xff]
        %v323 = vld [vmem:[%s231 + $0x32] sm:$0xff]
        %v324 = vld [vmem:[%s231 + $0x42] sm:$0xff]
        %v325 = vld [vmem:[%s231 + $0x52] sm:$0xff]
        %v326 = vld [vmem:[%s231 + $0x62] sm:$0xff]
        %v327 = vld [vmem:[%s231 + $0x72] sm:$0xff]
        %328 = vst [vmem:[#allocation3 + $0x28] sm:$0xff] %v320
        %329 = vst [vmem:[#allocation3 + $0x70] sm:$0xff] %v321
        %330 = vst [vmem:[#allocation3 + $0xb8] sm:$0xff] %v322
        %331 = vst [vmem:[#allocation3 + $0x100] sm:$0xff] %v323
        %332 = vst [vmem:[#allocation3 + $0x148] sm:$0xff] %v324
        %333 = vst [vmem:[#allocation3 + $0x190] sm:$0xff] %v325
        %334 = vst [vmem:[#allocation3 + $0x1d8] sm:$0xff] %v326
        %335 = vst [vmem:[#allocation3 + $0x220] sm:$0xff] %v327
        %s336 = scalar_lea.vmem [#allocation2], 32
        %v337 = vld [vmem:[%s336] sm:$0xff]
        %v338 = vld [vmem:[%s336 + $0x10] sm:$0xff]
        %v339 = vld [vmem:[%s336 + $0x20] sm:$0xff]
        %v340 = vld [vmem:[%s336 + $0x30] sm:$0xff]
        %v341 = vld [vmem:[%s336 + $0x40] sm:$0xff]
        %v342 = vld [vmem:[%s336 + $0x50] sm:$0xff]
        %v343 = vld [vmem:[%s336 + $0x60] sm:$0xff]
        %v344 = vld [vmem:[%s336 + $0x70] sm:$0xff]
        %345 = vst [vmem:[#allocation3 + $0x30] sm:$0xff] %v337
        %346 = vst [vmem:[#allocation3 + $0x78] sm:$0xff] %v338
        %347 = vst [vmem:[#allocation3 + $0xc0] sm:$0xff] %v339
        %348 = vst [vmem:[#allocation3 + $0x108] sm:$0xff] %v340
        %349 = vst [vmem:[#allocation3 + $0x150] sm:$0xff] %v341
        %350 = vst [vmem:[#allocation3 + $0x198] sm:$0xff] %v342
        %351 = vst [vmem:[#allocation3 + $0x1e0] sm:$0xff] %v343
        %352 = vst [vmem:[#allocation3 + $0x228] sm:$0xff] %v344
        %v353 = vld [vmem:[%s336 + $0x1] sm:$0xff]
        %v354 = vld [vmem:[%s336 + $0x11] sm:$0xff]
        %v355 = vld [vmem:[%s336 + $0x21] sm:$0xff]
        %v356 = vld [vmem:[%s336 + $0x31] sm:$0xff]
        %v357 = vld [vmem:[%s336 + $0x41] sm:$0xff]
        %v358 = vld [vmem:[%s336 + $0x51] sm:$0xff]
        %v359 = vld [vmem:[%s336 + $0x61] sm:$0xff]
        %v360 = vld [vmem:[%s336 + $0x71] sm:$0xff]
        %361 = vst [vmem:[#allocation3 + $0x38] sm:$0xff] %v353
        %362 = vst [vmem:[#allocation3 + $0x80] sm:$0xff] %v354
        %363 = vst [vmem:[#allocation3 + $0xc8] sm:$0xff] %v355
        %364 = vst [vmem:[#allocation3 + $0x110] sm:$0xff] %v356
        %365 = vst [vmem:[#allocation3 + $0x158] sm:$0xff] %v357
        %366 = vst [vmem:[#allocation3 + $0x1a0] sm:$0xff] %v358
        %367 = vst [vmem:[#allocation3 + $0x1e8] sm:$0xff] %v359
        %368 = vst [vmem:[#allocation3 + $0x230] sm:$0xff] %v360
        %v369 = vld [vmem:[%s336 + $0x2] sm:$0xff]
        %v370 = vld [vmem:[%s336 + $0x12] sm:$0xff]
        %v371 = vld [vmem:[%s336 + $0x22] sm:$0xff]
        %v372 = vld [vmem:[%s336 + $0x32] sm:$0xff]
        %v373 = vld [vmem:[%s336 + $0x42] sm:$0xff]
        %v374 = vld [vmem:[%s336 + $0x52] sm:$0xff]
        %v375 = vld [vmem:[%s336 + $0x62] sm:$0xff]
        %v376 = vld [vmem:[%s336 + $0x72] sm:$0xff]
        %377 = vst [vmem:[#allocation3 + $0x40] sm:$0xff] %v369
        %378 = vst [vmem:[#allocation3 + $0x88] sm:$0xff] %v370
        %379 = vst [vmem:[#allocation3 + $0xd0] sm:$0xff] %v371
        %380 = vst [vmem:[#allocation3 + $0x118] sm:$0xff] %v372
        %381 = vst [vmem:[#allocation3 + $0x160] sm:$0xff] %v373
        %382 = vst [vmem:[#allocation3 + $0x1a8] sm:$0xff] %v374
        %383 = vst [vmem:[#allocation3 + $0x1f0] sm:$0xff] %v375
        %384 = vst [vmem:[#allocation3 + $0x238] sm:$0xff] %v376
        %v385 = vld [vmem:[#allocation3] sm:$0xff]
        %v386 = vld [vmem:[#allocation3 + $0x8] sm:$0xff]
        %v387 = vld [vmem:[#allocation3 + $0x10] sm:$0xff]
        %v388 = vld [vmem:[#allocation3 + $0x18] sm:$0xff]
        %v389 = vld [vmem:[#allocation3 + $0x20] sm:$0xff]
        %v390 = vld [vmem:[#allocation3 + $0x28] sm:$0xff]
        %v391 = vld [vmem:[#allocation3 + $0x30] sm:$0xff]
        %v392 = vld [vmem:[#allocation3 + $0x38] sm:$0xff]
        %v393 = vld [vmem:[#allocation3 + $0x40] sm:$0xff]
        %v394 = vld [vmem:[#allocation3 + $0x48] sm:$0xff]
        %v395 = vld [vmem:[#allocation3 + $0x50] sm:$0xff]
        %v396 = vld [vmem:[#allocation3 + $0x58] sm:$0xff]
        %v397 = vld [vmem:[#allocation3 + $0x60] sm:$0xff]
        %v398 = vld [vmem:[#allocation3 + $0x68] sm:$0xff]
        %v399 = vld [vmem:[#allocation3 + $0x70] sm:$0xff]
        %v400 = vld [vmem:[#allocation3 + $0x78] sm:$0xff]
        %v401 = vld [vmem:[#allocation3 + $0x80] sm:$0xff]
        %v402 = vld [vmem:[#allocation3 + $0x88] sm:$0xff]
        %v403 = vld [vmem:[#allocation3 + $0x90] sm:$0xff]
        %v404 = vld [vmem:[#allocation3 + $0x98] sm:$0xff]
        %v405 = vld [vmem:[#allocation3 + $0xa0] sm:$0xff]
        %v406 = vld [vmem:[#allocation3 + $0xa8] sm:$0xff]
        %v407 = vld [vmem:[#allocation3 + $0xb0] sm:$0xff]
        %v408 = vld [vmem:[#allocation3 + $0xb8] sm:$0xff]
        %v409 = vld [vmem:[#allocation3 + $0xc0] sm:$0xff]
        %v410 = vld [vmem:[#allocation3 + $0xc8] sm:$0xff]
        %v411 = vld [vmem:[#allocation3 + $0xd0] sm:$0xff]
        %v412 = vld [vmem:[#allocation3 + $0xd8] sm:$0xff]
        %v413 = vld [vmem:[#allocation3 + $0xe0] sm:$0xff]
        %v414 = vld [vmem:[#allocation3 + $0xe8] sm:$0xff]
        %v415 = vld [vmem:[#allocation3 + $0xf0] sm:$0xff]
        %v416 = vld [vmem:[#allocation3 + $0xf8] sm:$0xff]
        %v417 = vld [vmem:[#allocation3 + $0x100] sm:$0xff]
        %v418 = vld [vmem:[#allocation3 + $0x108] sm:$0xff]
        %v419 = vld [vmem:[#allocation3 + $0x110] sm:$0xff]
        %v420 = vld [vmem:[#allocation3 + $0x118] sm:$0xff]
        %v421 = vld [vmem:[#allocation3 + $0x120] sm:$0xff]
        %v422 = vld [vmem:[#allocation3 + $0x128] sm:$0xff]
        %v423 = vld [vmem:[#allocation3 + $0x130] sm:$0xff]
        %v424 = vld [vmem:[#allocation3 + $0x138] sm:$0xff]
        %v425 = vld [vmem:[#allocation3 + $0x140] sm:$0xff]
        %v426 = vld [vmem:[#allocation3 + $0x148] sm:$0xff]
        %v427 = vld [vmem:[#allocation3 + $0x150] sm:$0xff]
        %v428 = vld [vmem:[#allocation3 + $0x158] sm:$0xff]
        %v429 = vld [vmem:[#allocation3 + $0x160] sm:$0xff]
        %v430 = vld [vmem:[#allocation3 + $0x168] sm:$0xff]
        %v431 = vld [vmem:[#allocation3 + $0x170] sm:$0xff]
        %v432 = vld [vmem:[#allocation3 + $0x178] sm:$0xff]
        %v433 = vld [vmem:[#allocation3 + $0x180] sm:$0xff]
        %v434 = vld [vmem:[#allocation3 + $0x188] sm:$0xff]
        %v435 = vld [vmem:[#allocation3 + $0x190] sm:$0xff]
        %v436 = vld [vmem:[#allocation3 + $0x198] sm:$0xff]
        %v437 = vld [vmem:[#allocation3 + $0x1a0] sm:$0xff]
        %v438 = vld [vmem:[#allocation3 + $0x1a8] sm:$0xff]
        %v439 = vld [vmem:[#allocation3 + $0x1b0] sm:$0xff]
        %v440 = vld [vmem:[#allocation3 + $0x1b8] sm:$0xff]
        %v441 = vld [vmem:[#allocation3 + $0x1c0] sm:$0xff]
        %v442 = vld [vmem:[#allocation3 + $0x1c8] sm:$0xff]
        %v443 = vld [vmem:[#allocation3 + $0x1d0] sm:$0xff]
        %v444 = vld [vmem:[#allocation3 + $0x1d8] sm:$0xff]
        %v445 = vld [vmem:[#allocation3 + $0x1e0] sm:$0xff]
        %v446 = vld [vmem:[#allocation3 + $0x1e8] sm:$0xff]
        %v447 = vld [vmem:[#allocation3 + $0x1f0] sm:$0xff]
        %v448 = vld [vmem:[#allocation3 + $0x1f8] sm:$0xff]
        %v449 = vld [vmem:[#allocation3 + $0x200] sm:$0xff]
        %v450 = vld [vmem:[#allocation3 + $0x208] sm:$0xff]
        %v451 = vld [vmem:[#allocation3 + $0x210] sm:$0xff]
        %v452 = vld [vmem:[#allocation3 + $0x218] sm:$0xff]
        %v453 = vld [vmem:[#allocation3 + $0x220] sm:$0xff]
        %v454 = vld [vmem:[#allocation3 + $0x228] sm:$0xff]
        %v455 = vld [vmem:[#allocation3 + $0x230] sm:$0xff]
        %v456 = vld [vmem:[#allocation3 + $0x238] sm:$0xff]
        %v457 = vld [vmem:[#allocation4] sm:$0xff]
        %v458 = vld [vmem:[#allocation4 + $0x8] sm:$0xff]
        %v459 = vld [vmem:[#allocation4 + $0x10] sm:$0xff]
        %v460 = vld [vmem:[#allocation4 + $0x18] sm:$0xff]
        %v461 = vld [vmem:[#allocation4 + $0x20] sm:$0xff]
        %v462 = vld [vmem:[#allocation4 + $0x28] sm:$0xff]
        %v463 = vld [vmem:[#allocation4 + $0x30] sm:$0xff]
        %v464 = vld [vmem:[#allocation4 + $0x38] sm:$0xff]
        %v465 = vld [vmem:[#allocation4 + $0x40] sm:$0xff]
        %v466 = vld [vmem:[#allocation4 + $0x48] sm:$0xff]
        %v467 = vld [vmem:[#allocation4 + $0x50] sm:$0xff]
        %v468 = vld [vmem:[#allocation4 + $0x58] sm:$0xff]
        %v469 = vld [vmem:[#allocation4 + $0x60] sm:$0xff]
        %v470 = vld [vmem:[#allocation4 + $0x68] sm:$0xff]
        %v471 = vld [vmem:[#allocation4 + $0x70] sm:$0xff]
        %v472 = vld [vmem:[#allocation4 + $0x78] sm:$0xff]
        %v473 = vld [vmem:[#allocation4 + $0x80] sm:$0xff]
        %v474 = vld [vmem:[#allocation4 + $0x88] sm:$0xff]
        %v475 = vld [vmem:[#allocation4 + $0x90] sm:$0xff]
        %v476 = vld [vmem:[#allocation4 + $0x98] sm:$0xff]
        %v477 = vld [vmem:[#allocation4 + $0xa0] sm:$0xff]
        %v478 = vld [vmem:[#allocation4 + $0xa8] sm:$0xff]
        %v479 = vld [vmem:[#allocation4 + $0xb0] sm:$0xff]
        %v480 = vld [vmem:[#allocation4 + $0xb8] sm:$0xff]
        %v481 = vld [vmem:[#allocation4 + $0xc0] sm:$0xff]
        %v482 = vld [vmem:[#allocation4 + $0xc8] sm:$0xff]
        %v483 = vld [vmem:[#allocation4 + $0xd0] sm:$0xff]
        %v484 = vld [vmem:[#allocation4 + $0xd8] sm:$0xff]
        %v485 = vld [vmem:[#allocation4 + $0xe0] sm:$0xff]
        %v486 = vld [vmem:[#allocation4 + $0xe8] sm:$0xff]
        %v487 = vld [vmem:[#allocation4 + $0xf0] sm:$0xff]
        %v488 = vld [vmem:[#allocation4 + $0xf8] sm:$0xff]
        %v489 = vld [vmem:[#allocation4 + $0x100] sm:$0xff]
        %v490 = vld [vmem:[#allocation4 + $0x108] sm:$0xff]
        %v491 = vld [vmem:[#allocation4 + $0x110] sm:$0xff]
        %v492 = vld [vmem:[#allocation4 + $0x118] sm:$0xff]
        %v493 = vld [vmem:[#allocation4 + $0x120] sm:$0xff]
        %v494 = vld [vmem:[#allocation4 + $0x128] sm:$0xff]
        %v495 = vld [vmem:[#allocation4 + $0x130] sm:$0xff]
        %v496 = vld [vmem:[#allocation4 + $0x138] sm:$0xff]
        %v497 = vld [vmem:[#allocation4 + $0x140] sm:$0xff]
        %v498 = vld [vmem:[#allocation4 + $0x148] sm:$0xff]
        %v499 = vld [vmem:[#allocation4 + $0x150] sm:$0xff]
        %v500 = vld [vmem:[#allocation4 + $0x158] sm:$0xff]
        %v501 = vld [vmem:[#allocation4 + $0x160] sm:$0xff]
        %v502 = vld [vmem:[#allocation4 + $0x168] sm:$0xff]
        %v503 = vld [vmem:[#allocation4 + $0x170] sm:$0xff]
        %v504 = vld [vmem:[#allocation4 + $0x178] sm:$0xff]
        %v505 = vld [vmem:[#allocation4 + $0x180] sm:$0xff]
        %v506 = vld [vmem:[#allocation4 + $0x188] sm:$0xff]
        %v507 = vld [vmem:[#allocation4 + $0x190] sm:$0xff]
        %v508 = vld [vmem:[#allocation4 + $0x198] sm:$0xff]
        %v509 = vld [vmem:[#allocation4 + $0x1a0] sm:$0xff]
        %v510 = vld [vmem:[#allocation4 + $0x1a8] sm:$0xff]
        %v511 = vld [vmem:[#allocation4 + $0x1b0] sm:$0xff]
        %v512 = vld [vmem:[#allocation4 + $0x1b8] sm:$0xff]
        %v513 = vld [vmem:[#allocation4 + $0x1c0] sm:$0xff]
        %v514 = vld [vmem:[#allocation4 + $0x1c8] sm:$0xff]
        %v515 = vld [vmem:[#allocation4 + $0x1d0] sm:$0xff]
        %v516 = vld [vmem:[#allocation4 + $0x1d8] sm:$0xff]
        %v517 = vld [vmem:[#allocation4 + $0x1e0] sm:$0xff]
        %v518 = vld [vmem:[#allocation4 + $0x1e8] sm:$0xff]
        %v519 = vld [vmem:[#allocation4 + $0x1f0] sm:$0xff]
        %v520 = vld [vmem:[#allocation4 + $0x1f8] sm:$0xff]
        %v521 = vld [vmem:[#allocation4 + $0x200] sm:$0xff]
        %v522 = vld [vmem:[#allocation4 + $0x208] sm:$0xff]
        %v523 = vld [vmem:[#allocation4 + $0x210] sm:$0xff]
        %v524 = vld [vmem:[#allocation4 + $0x218] sm:$0xff]
        %v525 = vld [vmem:[#allocation4 + $0x220] sm:$0xff]
        %v526 = vld [vmem:[#allocation4 + $0x228] sm:$0xff]
        %v527 = vld [vmem:[#allocation4 + $0x230] sm:$0xff]
        %v528 = vld [vmem:[#allocation4 + $0x238] sm:$0xff]
        %v529 = vld [vmem:[#allocation4 + $0x240] sm:$0xff]
        %v530 = vld [vmem:[#allocation4 + $0x248] sm:$0xff]
        %v531 = vld [vmem:[#allocation4 + $0x250] sm:$0xff]
        %v532 = vld [vmem:[#allocation4 + $0x258] sm:$0xff]
        %v533 = vld [vmem:[#allocation4 + $0x260] sm:$0xff]
        %v534 = vld [vmem:[#allocation4 + $0x268] sm:$0xff]
        %v535 = vld [vmem:[#allocation4 + $0x270] sm:$0xff]
        %v536 = vld [vmem:[#allocation4 + $0x278] sm:$0xff]
        %v537 = vld [vmem:[#allocation4 + $0x280] sm:$0xff]
        %v538 = vld [vmem:[#allocation4 + $0x288] sm:$0xff]
        %v539 = vld [vmem:[#allocation4 + $0x290] sm:$0xff]
        %v540 = vld [vmem:[#allocation4 + $0x298] sm:$0xff]
        %v541 = vld [vmem:[#allocation4 + $0x2a0] sm:$0xff]
        %v542 = vld [vmem:[#allocation4 + $0x2a8] sm:$0xff]
        %v543 = vld [vmem:[#allocation4 + $0x2b0] sm:$0xff]
        %v544 = vld [vmem:[#allocation4 + $0x2b8] sm:$0xff]
        %v545 = vld [vmem:[#allocation4 + $0x2c0] sm:$0xff]
        %v546 = vld [vmem:[#allocation4 + $0x2c8] sm:$0xff]
        %v547 = vld [vmem:[#allocation4 + $0x2d0] sm:$0xff]
        %v548 = vld [vmem:[#allocation4 + $0x2d8] sm:$0xff]
        %v549 = vld [vmem:[#allocation4 + $0x2e0] sm:$0xff]
        %v550 = vld [vmem:[#allocation4 + $0x2e8] sm:$0xff]
        %v551 = vld [vmem:[#allocation4 + $0x2f0] sm:$0xff]
        %v552 = vld [vmem:[#allocation4 + $0x2f8] sm:$0xff]
        %v553 = vld [vmem:[#allocation4 + $0x300] sm:$0xff]
        %v554 = vld [vmem:[#allocation4 + $0x308] sm:$0xff]
        %v555 = vld [vmem:[#allocation4 + $0x310] sm:$0xff]
        %v556 = vld [vmem:[#allocation4 + $0x318] sm:$0xff]
        %v557 = vld [vmem:[#allocation4 + $0x320] sm:$0xff]
        %v558 = vld [vmem:[#allocation4 + $0x328] sm:$0xff]
        %v559 = vld [vmem:[#allocation4 + $0x330] sm:$0xff]
        %v560 = vld [vmem:[#allocation4 + $0x338] sm:$0xff]
        %v561 = vld [vmem:[#allocation4 + $0x340] sm:$0xff]
        %v562 = vld [vmem:[#allocation4 + $0x348] sm:$0xff]
        %v563 = vld [vmem:[#allocation4 + $0x350] sm:$0xff]
        %v564 = vld [vmem:[#allocation4 + $0x358] sm:$0xff]
        %v565 = vld [vmem:[#allocation4 + $0x360] sm:$0xff]
        %v566 = vld [vmem:[#allocation4 + $0x368] sm:$0xff]
        %v567 = vld [vmem:[#allocation4 + $0x370] sm:$0xff]
        %v568 = vld [vmem:[#allocation4 + $0x378] sm:$0xff]
        %v569 = vld [vmem:[#allocation4 + $0x380] sm:$0xff]
        %v570 = vld [vmem:[#allocation4 + $0x388] sm:$0xff]
        %v571 = vld [vmem:[#allocation4 + $0x390] sm:$0xff]
        %v572 = vld [vmem:[#allocation4 + $0x398] sm:$0xff]
        %v573 = vld [vmem:[#allocation4 + $0x3a0] sm:$0xff]
        %v574 = vld [vmem:[#allocation4 + $0x3a8] sm:$0xff]
        %v575 = vld [vmem:[#allocation4 + $0x3b0] sm:$0xff]
        %v576 = vld [vmem:[#allocation4 + $0x3b8] sm:$0xff]
        %v577 = vld [vmem:[#allocation4 + $0x3c0] sm:$0xff]
        %v578 = vld [vmem:[#allocation4 + $0x3c8] sm:$0xff]
        %v579 = vld [vmem:[#allocation4 + $0x3d0] sm:$0xff]
        %v580 = vld [vmem:[#allocation4 + $0x3d8] sm:$0xff]
        %v581 = vld [vmem:[#allocation4 + $0x3e0] sm:$0xff]
        %v582 = vld [vmem:[#allocation4 + $0x3e8] sm:$0xff]
        %v583 = vld [vmem:[#allocation4 + $0x3f0] sm:$0xff]
        %v584 = vld [vmem:[#allocation4 + $0x3f8] sm:$0xff]
        %v585 = vld [vmem:[#allocation4 + $0x400] sm:$0xff]
        %v586 = vld [vmem:[#allocation4 + $0x408] sm:$0xff]
        %v587 = vld [vmem:[#allocation4 + $0x410] sm:$0xff]
        %v588 = vld [vmem:[#allocation4 + $0x418] sm:$0xff]
        %v589 = vld [vmem:[#allocation4 + $0x420] sm:$0xff]
        %v590 = vld [vmem:[#allocation4 + $0x428] sm:$0xff]
        %v591 = vld [vmem:[#allocation4 + $0x430] sm:$0xff]
        %v592 = vld [vmem:[#allocation4 + $0x438] sm:$0xff]
        %v593 = vld [vmem:[#allocation4 + $0x440] sm:$0xff]
        %v594 = vld [vmem:[#allocation4 + $0x448] sm:$0xff]
        %v595 = vld [vmem:[#allocation4 + $0x450] sm:$0xff]
        %v596 = vld [vmem:[#allocation4 + $0x458] sm:$0xff]
        %v597 = vld [vmem:[#allocation4 + $0x460] sm:$0xff]
        %v598 = vld [vmem:[#allocation4 + $0x468] sm:$0xff]
        %v599 = vld [vmem:[#allocation4 + $0x470] sm:$0xff]
        %v600 = vld [vmem:[#allocation4 + $0x478] sm:$0xff]
        %v601 = vld [vmem:[#allocation6] sm:$0x1]
        %v603 = vperm.slane %v601, 0
        %605 = vmatpush.msra.mxu0 %v472
        %606 = vmatpush.msra.mxu0 %v471
        %607 = vmatpush.msra.mxu0 %v470
        %608 = vmatpush.msra.mxu0 %v469
        %609 = vmatpush.msra.mxu0 %v468
        %610 = vmatpush.msra.mxu0 %v467
        %611 = vmatpush.msra.mxu0 %v466
        %612 = vmatpush.msra.mxu0 %v465
        %613 = vmatpush.msra.mxu0 %v464
        %614 = vmatpush.msra.mxu0 %v463
        %615 = vmatpush.msra.mxu0 %v462
        %616 = vmatpush.msra.mxu0 %v461
        %617 = vmatpush.msra.mxu0 %v460
        %618 = vmatpush.msra.mxu0 %v459
        %619 = vmatpush.msra.mxu0 %v458
        %620 = vmatpush.msra.mxu0 %v457
        %621 = vmatmul.f32.gmra.mxu0 %v385
        %v622 = vpop.f32.mrf.mxu0
        %v623 = vadd.f32 %v603, %v622
        %624 = vmatmul.f32.gmra.mxu0 %v394
        %v625 = vpop.f32.mrf.mxu0
        %v626 = vadd.f32 %v603, %v625
        %627 = vmatmul.f32.gmra.mxu0 %v403
        %v628 = vpop.f32.mrf.mxu0
        %v629 = vadd.f32 %v603, %v628
        %630 = vmatmul.f32.gmra.mxu0 %v412
        %v631 = vpop.f32.mrf.mxu0
        %v632 = vadd.f32 %v603, %v631
        %633 = vmatmul.f32.gmra.mxu0 %v421
        %v634 = vpop.f32.mrf.mxu0
        %v635 = vadd.f32 %v603, %v634
        %636 = vmatmul.f32.gmra.mxu0 %v430
        %v637 = vpop.f32.mrf.mxu0
        %v638 = vadd.f32 %v603, %v637
        %639 = vmatmul.f32.gmra.mxu0 %v439
        %v640 = vpop.f32.mrf.mxu0
        %v641 = vadd.f32 %v603, %v640
        %642 = vmatmul.f32.gmra.mxu0 %v448
        %v643 = vpop.f32.mrf.mxu0
        %v644 = vadd.f32 %v603, %v643
        %645 = vdwg.mxu0
        %646 = vmatpush.msra.mxu0 %v488
        %647 = vmatpush.msra.mxu0 %v487
        %648 = vmatpush.msra.mxu0 %v486
        %649 = vmatpush.msra.mxu0 %v485
        %650 = vmatpush.msra.mxu0 %v484
        %651 = vmatpush.msra.mxu0 %v483
        %652 = vmatpush.msra.mxu0 %v482
        %653 = vmatpush.msra.mxu0 %v481
        %654 = vmatpush.msra.mxu0 %v480
        %655 = vmatpush.msra.mxu0 %v479
        %656 = vmatpush.msra.mxu0 %v478
        %657 = vmatpush.msra.mxu0 %v477
        %658 = vmatpush.msra.mxu0 %v476
        %659 = vmatpush.msra.mxu0 %v475
        %660 = vmatpush.msra.mxu0 %v474
        %661 = vmatpush.msra.mxu0 %v473
        %662 = vmatmul.f32.gmra.mxu0 %v386
        %v663 = vpop.f32.mrf.mxu0
        %v664 = vadd.f32 %v623, %v663
        %665 = vmatmul.f32.gmra.mxu0 %v395
        %v666 = vpop.f32.mrf.mxu0
        %v667 = vadd.f32 %v626, %v666
        %668 = vmatmul.f32.gmra.mxu0 %v404
        %v669 = vpop.f32.mrf.mxu0
        %v670 = vadd.f32 %v629, %v669
        %671 = vmatmul.f32.gmra.mxu0 %v413
        %v672 = vpop.f32.mrf.mxu0
        %v673 = vadd.f32 %v632, %v672
        %674 = vmatmul.f32.gmra.mxu0 %v422
        %v675 = vpop.f32.mrf.mxu0
        %v676 = vadd.f32 %v635, %v675
        %677 = vmatmul.f32.gmra.mxu0 %v431
        %v678 = vpop.f32.mrf.mxu0
        %v679 = vadd.f32 %v638, %v678
        %680 = vmatmul.f32.gmra.mxu0 %v440
        %v681 = vpop.f32.mrf.mxu0
        %v682 = vadd.f32 %v641, %v681
        %683 = vmatmul.f32.gmra.mxu0 %v449
        %v684 = vpop.f32.mrf.mxu0
        %v685 = vadd.f32 %v644, %v684
        %686 = vdwg.mxu0
        %687 = vmatpush.msra.mxu0 %v504
        %688 = vmatpush.msra.mxu0 %v503
        %689 = vmatpush.msra.mxu0 %v502
        %690 = vmatpush.msra.mxu0 %v501
        %691 = vmatpush.msra.mxu0 %v500
        %692 = vmatpush.msra.mxu0 %v499
        %693 = vmatpush.msra.mxu0 %v498
        %694 = vmatpush.msra.mxu0 %v497
        %695 = vmatpush.msra.mxu0 %v496
        %696 = vmatpush.msra.mxu0 %v495
        %697 = vmatpush.msra.mxu0 %v494
        %698 = vmatpush.msra.mxu0 %v493
        %699 = vmatpush.msra.mxu0 %v492
        %700 = vmatpush.msra.mxu0 %v491
        %701 = vmatpush.msra.mxu0 %v490
        %702 = vmatpush.msra.mxu0 %v489
        %703 = vmatmul.f32.gmra.mxu0 %v387
        %v704 = vpop.f32.mrf.mxu0
        %v705 = vadd.f32 %v664, %v704
        %706 = vmatmul.f32.gmra.mxu0 %v396
        %v707 = vpop.f32.mrf.mxu0
        %v708 = vadd.f32 %v667, %v707
        %709 = vmatmul.f32.gmra.mxu0 %v405
        %v710 = vpop.f32.mrf.mxu0
        %v711 = vadd.f32 %v670, %v710
        %712 = vmatmul.f32.gmra.mxu0 %v414
        %v713 = vpop.f32.mrf.mxu0
        %v714 = vadd.f32 %v673, %v713
        %715 = vmatmul.f32.gmra.mxu0 %v423
        %v716 = vpop.f32.mrf.mxu0
        %v717 = vadd.f32 %v676, %v716
        %718 = vmatmul.f32.gmra.mxu0 %v432
        %v719 = vpop.f32.mrf.mxu0
        %v720 = vadd.f32 %v679, %v719
        %721 = vmatmul.f32.gmra.mxu0 %v441
        %v722 = vpop.f32.mrf.mxu0
        %v723 = vadd.f32 %v682, %v722
        %724 = vmatmul.f32.gmra.mxu0 %v450
        %v725 = vpop.f32.mrf.mxu0
        %v726 = vadd.f32 %v685, %v725
        %727 = vdwg.mxu0
        %728 = vmatpush.msra.mxu0 %v520
        %729 = vmatpush.msra.mxu0 %v519
        %730 = vmatpush.msra.mxu0 %v518
        %731 = vmatpush.msra.mxu0 %v517
        %732 = vmatpush.msra.mxu0 %v516
        %733 = vmatpush.msra.mxu0 %v515
        %734 = vmatpush.msra.mxu0 %v514
        %735 = vmatpush.msra.mxu0 %v513
        %736 = vmatpush.msra.mxu0 %v512
        %737 = vmatpush.msra.mxu0 %v511
        %738 = vmatpush.msra.mxu0 %v510
        %739 = vmatpush.msra.mxu0 %v509
        %740 = vmatpush.msra.mxu0 %v508
        %741 = vmatpush.msra.mxu0 %v507
        %742 = vmatpush.msra.mxu0 %v506
        %743 = vmatpush.msra.mxu0 %v505
        %744 = vmatmul.f32.gmra.mxu0 %v388
        %v745 = vpop.f32.mrf.mxu0
        %v746 = vadd.f32 %v705, %v745
        %747 = vmatmul.f32.gmra.mxu0 %v397
        %v748 = vpop.f32.mrf.mxu0
        %v749 = vadd.f32 %v708, %v748
        %750 = vmatmul.f32.gmra.mxu0 %v406
        %v751 = vpop.f32.mrf.mxu0
        %v752 = vadd.f32 %v711, %v751
        %753 = vmatmul.f32.gmra.mxu0 %v415
        %v754 = vpop.f32.mrf.mxu0
        %v755 = vadd.f32 %v714, %v754
        %756 = vmatmul.f32.gmra.mxu0 %v424
        %v757 = vpop.f32.mrf.mxu0
        %v758 = vadd.f32 %v717, %v757
        %759 = vmatmul.f32.gmra.mxu0 %v433
        %v760 = vpop.f32.mrf.mxu0
        %v761 = vadd.f32 %v720, %v760
        %762 = vmatmul.f32.gmra.mxu0 %v442
        %v763 = vpop.f32.mrf.mxu0
        %v764 = vadd.f32 %v723, %v763
        %765 = vmatmul.f32.gmra.mxu0 %v451
        %v766 = vpop.f32.mrf.mxu0
        %v767 = vadd.f32 %v726, %v766
        %768 = vdwg.mxu0
        %769 = vmatpush.msra.mxu0 %v536
        %770 = vmatpush.msra.mxu0 %v535
        %771 = vmatpush.msra.mxu0 %v534
        %772 = vmatpush.msra.mxu0 %v533
        %773 = vmatpush.msra.mxu0 %v532
        %774 = vmatpush.msra.mxu0 %v531
        %775 = vmatpush.msra.mxu0 %v530
        %776 = vmatpush.msra.mxu0 %v529
        %777 = vmatpush.msra.mxu0 %v528
        %778 = vmatpush.msra.mxu0 %v527
        %779 = vmatpush.msra.mxu0 %v526
        %780 = vmatpush.msra.mxu0 %v525
        %781 = vmatpush.msra.mxu0 %v524
        %782 = vmatpush.msra.mxu0 %v523
        %783 = vmatpush.msra.mxu0 %v522
        %784 = vmatpush.msra.mxu0 %v521
        %785 = vmatmul.f32.gmra.mxu0 %v389
        %v786 = vpop.f32.mrf.mxu0
        %v787 = vadd.f32 %v746, %v786
        %788 = vmatmul.f32.gmra.mxu0 %v398
        %v789 = vpop.f32.mrf.mxu0
        %v790 = vadd.f32 %v749, %v789
        %791 = vmatmul.f32.gmra.mxu0 %v407
        %v792 = vpop.f32.mrf.mxu0
        %v793 = vadd.f32 %v752, %v792
        %794 = vmatmul.f32.gmra.mxu0 %v416
        %v795 = vpop.f32.mrf.mxu0
        %v796 = vadd.f32 %v755, %v795
        %797 = vmatmul.f32.gmra.mxu0 %v425
        %v798 = vpop.f32.mrf.mxu0
        %v799 = vadd.f32 %v758, %v798
        %800 = vmatmul.f32.gmra.mxu0 %v434
        %v801 = vpop.f32.mrf.mxu0
        %v802 = vadd.f32 %v761, %v801
        %803 = vmatmul.f32.gmra.mxu0 %v443
        %v804 = vpop.f32.mrf.mxu0
        %v805 = vadd.f32 %v764, %v804
        %806 = vmatmul.f32.gmra.mxu0 %v452
        %v807 = vpop.f32.mrf.mxu0
        %v808 = vadd.f32 %v767, %v807
        %809 = vdwg.mxu0
        %810 = vmatpush.msra.mxu0 %v552
        %811 = vmatpush.msra.mxu0 %v551
        %812 = vmatpush.msra.mxu0 %v550
        %813 = vmatpush.msra.mxu0 %v549
        %814 = vmatpush.msra.mxu0 %v548
        %815 = vmatpush.msra.mxu0 %v547
        %816 = vmatpush.msra.mxu0 %v546
        %817 = vmatpush.msra.mxu0 %v545
        %818 = vmatpush.msra.mxu0 %v544
        %819 = vmatpush.msra.mxu0 %v543
        %820 = vmatpush.msra.mxu0 %v542
        %821 = vmatpush.msra.mxu0 %v541
        %822 = vmatpush.msra.mxu0 %v540
        %823 = vmatpush.msra.mxu0 %v539
        %824 = vmatpush.msra.mxu0 %v538
        %825 = vmatpush.msra.mxu0 %v537
        %826 = vmatmul.f32.gmra.mxu0 %v390
        %v827 = vpop.f32.mrf.mxu0
        %v828 = vadd.f32 %v787, %v827
        %829 = vmatmul.f32.gmra.mxu0 %v399
        %v830 = vpop.f32.mrf.mxu0
        %v831 = vadd.f32 %v790, %v830
        %832 = vmatmul.f32.gmra.mxu0 %v408
        %v833 = vpop.f32.mrf.mxu0
        %v834 = vadd.f32 %v793, %v833
        %835 = vmatmul.f32.gmra.mxu0 %v417
        %v836 = vpop.f32.mrf.mxu0
        %v837 = vadd.f32 %v796, %v836
        %838 = vmatmul.f32.gmra.mxu0 %v426
        %v839 = vpop.f32.mrf.mxu0
        %v840 = vadd.f32 %v799, %v839
        %841 = vmatmul.f32.gmra.mxu0 %v435
        %v842 = vpop.f32.mrf.mxu0
        %v843 = vadd.f32 %v802, %v842
        %844 = vmatmul.f32.gmra.mxu0 %v444
        %v845 = vpop.f32.mrf.mxu0
        %v846 = vadd.f32 %v805, %v845
        %847 = vmatmul.f32.gmra.mxu0 %v453
        %v848 = vpop.f32.mrf.mxu0
        %v849 = vadd.f32 %v808, %v848
        %850 = vdwg.mxu0
        %851 = vmatpush.msra.mxu0 %v568
        %852 = vmatpush.msra.mxu0 %v567
        %853 = vmatpush.msra.mxu0 %v566
        %854 = vmatpush.msra.mxu0 %v565
        %855 = vmatpush.msra.mxu0 %v564
        %856 = vmatpush.msra.mxu0 %v563
        %857 = vmatpush.msra.mxu0 %v562
        %858 = vmatpush.msra.mxu0 %v561
        %859 = vmatpush.msra.mxu0 %v560
        %860 = vmatpush.msra.mxu0 %v559
        %861 = vmatpush.msra.mxu0 %v558
        %862 = vmatpush.msra.mxu0 %v557
        %863 = vmatpush.msra.mxu0 %v556
        %864 = vmatpush.msra.mxu0 %v555
        %865 = vmatpush.msra.mxu0 %v554
        %866 = vmatpush.msra.mxu0 %v553
        %867 = vmatmul.f32.gmra.mxu0 %v391
        %v868 = vpop.f32.mrf.mxu0
        %v869 = vadd.f32 %v828, %v868
        %870 = vmatmul.f32.gmra.mxu0 %v400
        %v871 = vpop.f32.mrf.mxu0
        %v872 = vadd.f32 %v831, %v871
        %873 = vmatmul.f32.gmra.mxu0 %v409
        %v874 = vpop.f32.mrf.mxu0
        %v875 = vadd.f32 %v834, %v874
        %876 = vmatmul.f32.gmra.mxu0 %v418
        %v877 = vpop.f32.mrf.mxu0
        %v878 = vadd.f32 %v837, %v877
        %879 = vmatmul.f32.gmra.mxu0 %v427
        %v880 = vpop.f32.mrf.mxu0
        %v881 = vadd.f32 %v840, %v880
        %882 = vmatmul.f32.gmra.mxu0 %v436
        %v883 = vpop.f32.mrf.mxu0
        %v884 = vadd.f32 %v843, %v883
        %885 = vmatmul.f32.gmra.mxu0 %v445
        %v886 = vpop.f32.mrf.mxu0
        %v887 = vadd.f32 %v846, %v886
        %888 = vmatmul.f32.gmra.mxu0 %v454
        %v889 = vpop.f32.mrf.mxu0
        %v890 = vadd.f32 %v849, %v889
        %891 = vdwg.mxu0
        %892 = vmatpush.msra.mxu0 %v584
        %893 = vmatpush.msra.mxu0 %v583
        %894 = vmatpush.msra.mxu0 %v582
        %895 = vmatpush.msra.mxu0 %v581
        %896 = vmatpush.msra.mxu0 %v580
        %897 = vmatpush.msra.mxu0 %v579
        %898 = vmatpush.msra.mxu0 %v578
        %899 = vmatpush.msra.mxu0 %v577
        %900 = vmatpush.msra.mxu0 %v576
        %901 = vmatpush.msra.mxu0 %v575
        %902 = vmatpush.msra.mxu0 %v574
        %903 = vmatpush.msra.mxu0 %v573
        %904 = vmatpush.msra.mxu0 %v572
        %905 = vmatpush.msra.mxu0 %v571
        %906 = vmatpush.msra.mxu0 %v570
        %907 = vmatpush.msra.mxu0 %v569
        %908 = vmatmul.f32.gmra.mxu0 %v392
        %v909 = vpop.f32.mrf.mxu0
        %v910 = vadd.f32 %v869, %v909
        %911 = vmatmul.f32.gmra.mxu0 %v401
        %v912 = vpop.f32.mrf.mxu0
        %v913 = vadd.f32 %v872, %v912
        %914 = vmatmul.f32.gmra.mxu0 %v410
        %v915 = vpop.f32.mrf.mxu0
        %v916 = vadd.f32 %v875, %v915
        %917 = vmatmul.f32.gmra.mxu0 %v419
        %v918 = vpop.f32.mrf.mxu0
        %v919 = vadd.f32 %v878, %v918
        %920 = vmatmul.f32.gmra.mxu0 %v428
        %v921 = vpop.f32.mrf.mxu0
        %v922 = vadd.f32 %v881, %v921
        %923 = vmatmul.f32.gmra.mxu0 %v437
        %v924 = vpop.f32.mrf.mxu0
        %v925 = vadd.f32 %v884, %v924
        %926 = vmatmul.f32.gmra.mxu0 %v446
        %v927 = vpop.f32.mrf.mxu0
        %v928 = vadd.f32 %v887, %v927
        %929 = vmatmul.f32.gmra.mxu0 %v455
        %v930 = vpop.f32.mrf.mxu0
        %v931 = vadd.f32 %v890, %v930
        %932 = vdwg.mxu0
        %933 = vmatpush.msra.mxu0 %v600
        %934 = vmatpush.msra.mxu0 %v599
        %935 = vmatpush.msra.mxu0 %v598
        %936 = vmatpush.msra.mxu0 %v597
        %937 = vmatpush.msra.mxu0 %v596
        %938 = vmatpush.msra.mxu0 %v595
        %939 = vmatpush.msra.mxu0 %v594
        %940 = vmatpush.msra.mxu0 %v593
        %941 = vmatpush.msra.mxu0 %v592
        %942 = vmatpush.msra.mxu0 %v591
        %943 = vmatpush.msra.mxu0 %v590
        %944 = vmatpush.msra.mxu0 %v589
        %945 = vmatpush.msra.mxu0 %v588
        %946 = vmatpush.msra.mxu0 %v587
        %947 = vmatpush.msra.mxu0 %v586
        %948 = vmatpush.msra.mxu0 %v585
        %949 = vmatmul.f32.gmra.mxu0 %v393
        %v950 = vpop.f32.mrf.mxu0
        %v951 = vadd.f32 %v910, %v950
        %952 = vmatmul.f32.gmra.mxu0 %v402
        %v953 = vpop.f32.mrf.mxu0
        %v954 = vadd.f32 %v913, %v953
        %955 = vmatmul.f32.gmra.mxu0 %v411
        %v956 = vpop.f32.mrf.mxu0
        %v957 = vadd.f32 %v916, %v956
        %958 = vmatmul.f32.gmra.mxu0 %v420
        %v959 = vpop.f32.mrf.mxu0
        %v960 = vadd.f32 %v919, %v959
        %961 = vmatmul.f32.gmra.mxu0 %v429
        %v962 = vpop.f32.mrf.mxu0
        %v963 = vadd.f32 %v922, %v962
        %964 = vmatmul.f32.gmra.mxu0 %v438
        %v965 = vpop.f32.mrf.mxu0
        %v966 = vadd.f32 %v925, %v965
        %967 = vmatmul.f32.gmra.mxu0 %v447
        %v968 = vpop.f32.mrf.mxu0
        %v969 = vadd.f32 %v928, %v968
        %970 = vmatmul.f32.gmra.mxu0 %v456
        %v971 = vpop.f32.mrf.mxu0
        %v972 = vadd.f32 %v931, %v971
        %973 = vdwg.mxu0
        %974 = vst [vmem:[%s202] sm:$0xff] %v951
        %975 = vst [vmem:[%s202 + $0x8] sm:$0xff] %v954
        %976 = vst [vmem:[%s202 + $0x10] sm:$0xff] %v957
        %977 = vst [vmem:[%s202 + $0x18] sm:$0xff] %v960
        %978 = vst [vmem:[%s202 + $0x20] sm:$0xff] %v963
        %979 = vst [vmem:[%s202 + $0x28] sm:$0xff] %v966
        %980 = vst [vmem:[%s202 + $0x30] sm:$0xff] %v969
        %981 = vst [vmem:[%s202 + $0x38] sm:$0xff] %v972
        %p982 = scmp.lt.s32.totalorder %s16, 1
        %s983 = scalar_select %p982, %s16, 1
        %s984 = smul.addr %s983, 8
        %s985 = smul.addr %s984, 8
        %s986 = scalar_lea.vmem %s3, %s985
        // Predicated region
        $region41: #{edsr_forward.4} parent=31 // pred_check
          %p987 = pneg %p102
        $region42: #{edsr_forward.4} parent=31 // pred_check_branch
          %989 = sbr.rel (%p987) target = $region44
        $region43: #{edsr_forward.4} parent=31 // pred_region
          _
        $region44: #{edsr_forward.4} parent=31 // pred_fallthru
          _
      $region32: #{edsr_forward.4} parent=5 // pred_fallthru
        _
      %p990 = scmp.le.s32.totalorder 2, %s11
      // Predicated region
      $region45: #{edsr_forward.4} parent=5 // pred_check
        %p991 = pneg %p990
      $region46: #{edsr_forward.4} parent=5 // pred_check_branch
        %993 = sbr.rel (%p991) target = $region48
      $region47: #{edsr_forward.4} parent=5 // pred_region
        %s994 = ssub.s32 %s11, 2
        // Predicated region
        $region49: #{edsr_forward.4} parent=47 // pred_check
          %p995 = pneg %p108
        $region50: #{edsr_forward.4} parent=47 // pred_check_branch
          %997 = sbr.rel (%p995) target = $region52
        $region51: #{edsr_forward.4} parent=47 // pred_region
          %p998 = scmp.lt.s32.totalorder %s17, 1
          %s999 = scalar_select %p998, %s17, 1
          %s1000 = smul.addr %s999, 8
          %s1001 = smul.addr %s1000, 8
          %s1002 = scalar_lea.vmem %s3, %s1001
        $region52: #{edsr_forward.4} parent=47 // pred_fallthru
          _
      $region48: #{edsr_forward.4} parent=5 // pred_fallthru
        _
    $region6: #{edsr_forward.4} parent=1 // loop_footer
      %s15 = sadd.s32 1, %s11
    $region7: #{edsr_forward.4} parent=1 // loop_footer_branch
      %10 = sbr.rel target = $region3
    $region8: #{edsr_forward.4} parent=1 // loop_exit
      _
    %1003 = vsyncpa [#allocation5], 1
    %s1004 = scalar_lea.sflag [#allocation5], 1
    %1005 = vsyncpa %s1004, 1
    %1006 = vsyncpa [#allocation7], 1

// kernel: edsr_forward.5
$region0: #{edsr_forward.5}
  #allocation0 [shape = 'u32[]', space=smem, size = 0x4, offset = 0x4, fixed_abs, tag = 'smem constant byte address 0x4 - core index']
  #allocation1 [shape = 'u32[72,128]{1,0:T(1,128)}', space=vmem, size = 0x9000, scoped, tag = 'internal scratch']
  #allocation2 [shape = 'f32[8,8,128]{2,1,0:T(8,128)}', space=vmem, size = 0x8000, scoped, tag = 'scratch operand']
  #allocation3 [shape = 'f32[10,10,128]{2,1,0:T(8,128)}', space=vmem, size = 0x14000, scoped, tag = 'scratch operand']
  #allocation4 [shape = 'f32[64,1152]{1,0:T(8,128)}', space=vmem, size = 0x48000, scoped, tag = 'scratch operand']
  %s0 = inlined_call_operand.vmem [shape: f32[2,8,8,128], index: 0, kind: input, shape index: {}]
  %s1 = inlined_call_operand.hbm [shape: f32[2,1152,128], index: 1, kind: input, shape index: {}]
  %s2 = inlined_call_operand.hbm [shape: f32[2,1,128], index: 2, kind: input, shape index: {}]
  %s3 = inlined_call_operand.vmem [shape: f32[2,8,8,128], index: 3, kind: output, shape index: {}]
  %s4 = sld [smem:[#allocation0]]
  $region61: #{edsr_forward.5} parent=0
    _
  %s6 = ssub.s32 1, %s4
  %s7 = scalar_select 0, %s6, %s4
  $region1: #{edsr_forward.5} parent=0
    #allocation5 [shape = 'u8[1179648]{0}', space=vmem, size = 0x120000, scoped, tag = 'input window, operand 1']
    #allocation6 [shape = 's32[2]{0}', space=sflag, size = 0x8, scoped, tag = 'scoped memory for edsr_forward.5']
    #allocation7 [shape = 'u8[1024]{0}', space=vmem, size = 0x400, scoped, tag = 'input window, operand 2']
    #allocation8 [shape = 's32[2]{0}', space=sflag, size = 0x8, scoped, tag = 'scoped memory for edsr_forward.5']
    %8 = vsyncpa [#allocation6], 0
    %s9 = scalar_lea.sflag [#allocation6], 1
    %10 = vsyncpa %s9, 0
    %11 = vsyncpa [#allocation8], 0
    %s12 = scalar_lea.sflag [#allocation8], 1
    %13 = vsyncpa %s12, 0
    loop: start=0, step=1, limit=6
    $region2: #{edsr_forward.5} parent=1 // loop_pre_header
      _
    $region3: #{edsr_forward.5} parent=1 // loop_header
      %s15 = sphi 0, %s19
      %p16 = scmp.ge.s32.totalorder %s15, 6
      %s22 = sphi 0, %s34
      %s23 = sphi 0, %s30
      %s24 = sphi 0, %s22
      %s25 = sphi 0, %s23
      %s26 = sphi 0, %s24
      %s27 = sphi 0, %s25
      %s37 = sphi 0, %s39
      %s40 = sphi 0, %s37
      %s41 = sphi 0, %s40
      %s57 = sphi 0, %s41
      %s63 = sphi 0, %s65
      %s66 = sphi 0, %s63
      %s67 = sphi 0, %s66
      %s83 = sphi 0, %s67
      %s89 = sphi 0, %s91
      %s92 = sphi 0, %s89
      %s93 = sphi 0, %s92
      %s109 = sphi 0, %s93
      %s115 = sphi 0, %s117
      %s118 = sphi 0, %s115
      %s119 = sphi 0, %s118
      %s135 = sphi 0, %s119
    $region4: #{edsr_forward.5} parent=1 // loop_header_branch
      %18 = sbr.rel (%p16) target = $region8
    $region5: #{edsr_forward.5} parent=1 // loop_body
      %s20 = ssub.s32 %s15, 1
      %s21 = ssub.s32 %s15, 2
      %s28 = sadd.s32 1, %s23
      %p29 = scmp.ge.s32.totalorder %s28, 2
      %s30 = scalar_select %p29, 0, %s28
      %s31 = sadd.s32 1, %s22
      %s32 = scalar_select %p29, %s31, %s22
      %p33 = scmp.ge.s32.totalorder %s32, 2
      %s34 = scalar_select %p33, 0, %s32
      %s35 = ssub.s32 %s22, %s34
      %p36 = scmp.eq.s32.totalorder %s35, 0
      %s38 = sadd.s32 %s37, 1
      %s39 = scalar_select %p36, %s37, %s38
      %p42 = pneg %p36
      %p43 = scmp.eq.s32.totalorder %s15, 3
      %p44 = por %p42, %p43
      %p45 = scmp.ne.s32.totalorder %s37, %s40
      %p46 = scmp.eq.s32.totalorder %s15, 0
      %p47 = por %p45, %p46
      %p48 = scmp.ne.s32.totalorder %s37, %s40
      %p49 = scmp.eq.s32.totalorder %s20, 3
      %p50 = por %p48, %p49
      %p51 = scmp.ne.s32.totalorder %s40, %s41
      %p52 = scmp.eq.s32.totalorder %s20, 0
      %p53 = por %p51, %p52
      %p54 = scmp.ne.s32.totalorder %s40, %s41
      %p55 = scmp.eq.s32.totalorder %s21, 3
      %p56 = por %p54, %p55
      %p58 = scmp.ne.s32.totalorder %s41, %s57
      %p59 = scmp.eq.s32.totalorder %s21, 0
      %p60 = por %p58, %p59
      %s61 = ssub.s32 %s23, %s30
      %p62 = scmp.eq.s32.totalorder %s61, 0
      %s64 = sadd.s32 %s63, 1
      %s65 = scalar_select %p62, %s63, %s64
      %p68 = pneg %p62
      %p69 = scmp.eq.s32.totalorder %s15, 3
      %p70 = por %p68, %p69
      %p71 = scmp.ne.s32.totalorder %s63, %s66
      %p72 = scmp.eq.s32.totalorder %s15, 0
      %p73 = por %p71, %p72
      %p74 = scmp.ne.s32.totalorder %s63, %s66
      %p75 = scmp.eq.s32.totalorder %s20, 3
      %p76 = por %p74, %p75
      %p77 = scmp.ne.s32.totalorder %s66, %s67
      %p78 = scmp.eq.s32.totalorder %s20, 0
      %p79 = por %p77, %p78
      %p80 = scmp.ne.s32.totalorder %s66, %s67
      %p81 = scmp.eq.s32.totalorder %s21, 3
      %p82 = por %p80, %p81
      %p84 = scmp.ne.s32.totalorder %s67, %s83
      %p85 = scmp.eq.s32.totalorder %s21, 0
      %p86 = por %p84, %p85
      %s87 = ssub.s32 %s23, %s30
      %p88 = scmp.eq.s32.totalorder %s87, 0
      %s90 = sadd.s32 %s89, 1
      %s91 = scalar_select %p88, %s89, %s90
      %p94 = pneg %p88
      %p95 = scmp.eq.s32.totalorder %s15, 3
      %p96 = por %p94, %p95
      %p97 = scmp.ne.s32.totalorder %s89, %s92
      %p98 = scmp.eq.s32.totalorder %s15, 0
      %p99 = por %p97, %p98
      %p100 = scmp.ne.s32.totalorder %s89, %s92
      %p101 = scmp.eq.s32.totalorder %s20, 3
      %p102 = por %p100, %p101
      %p103 = scmp.ne.s32.totalorder %s92, %s93
      %p104 = scmp.eq.s32.totalorder %s20, 0
      %p105 = por %p103, %p104
      %p106 = scmp.ne.s32.totalorder %s92, %s93
      %p107 = scmp.eq.s32.totalorder %s21, 3
      %p108 = por %p106, %p107
      %p110 = scmp.ne.s32.totalorder %s93, %s109
      %p111 = scmp.eq.s32.totalorder %s21, 0
      %p112 = por %p110, %p111
      %s113 = ssub.s32 %s22, %s34
      %p114 = scmp.eq.s32.totalorder %s113, 0
      %s116 = sadd.s32 %s115, 1
      %s117 = scalar_select %p114, %s115, %s116
      %p120 = pneg %p114
      %p121 = scmp.eq.s32.totalorder %s15, 3
      %p122 = por %p120, %p121
      %p123 = scmp.ne.s32.totalorder %s115, %s118
      %p124 = scmp.eq.s32.totalorder %s15, 0
      %p125 = por %p123, %p124
      %p126 = scmp.ne.s32.totalorder %s115, %s118
      %p127 = scmp.eq.s32.totalorder %s20, 3
      %p128 = por %p126, %p127
      %p129 = scmp.ne.s32.totalorder %s118, %s119
      %p130 = scmp.eq.s32.totalorder %s20, 0
      %p131 = por %p129, %p130
      %p132 = scmp.ne.s32.totalorder %s118, %s119
      %p133 = scmp.eq.s32.totalorder %s21, 3
      %p134 = por %p132, %p133
      %p136 = scmp.ne.s32.totalorder %s119, %s135
      %p137 = scmp.eq.s32.totalorder %s21, 0
      %p138 = por %p136, %p137
      %p139 = scmp.le.s32.totalorder 1, %s15
      %p140 = scmp.lt.s32.totalorder %s15, 5
      %p141 = pnand %p139, %p140
      %p142 = pneg %p141
      // Predicated region
      $region9: #{edsr_forward.5} parent=5 // pred_check
        _
      $region10: #{edsr_forward.5} parent=5 // pred_check_branch
        %144 = sbr.rel (%p141) target = $region12
      $region11: #{edsr_forward.5} parent=5 // pred_region
        %s145 = ssub.s32 %s15, 1
      $region12: #{edsr_forward.5} parent=5 // pred_fallthru
        _
      %p146 = scmp.lt.s32.totalorder %s15, 4
      // Predicated region
      $region13: #{edsr_forward.5} parent=5 // pred_check
        %p147 = pneg %p146
      $region14: #{edsr_forward.5} parent=5 // pred_check_branch
        %149 = sbr.rel (%p147) target = $region16
      $region15: #{edsr_forward.5} parent=5 // pred_region
        // Predicated region
        $region17: #{edsr_forward.5} parent=15 // pred_check
          %p150 = pneg %p47
        $region18: #{edsr_forward.5} parent=15 // pred_check_branch
          %152 = sbr.rel (%p150) target = $region20
        $region19: #{edsr_forward.5} parent=15 // pred_region
          %p153 = scmp.lt.s32.totalorder %s22, 1
          %s154 = scalar_select %p153, %s22, 1
          %s155 = smul.addr %s154, 8
          %s156 = smul.addr %s155, 8
          %s157 = scalar_lea.vmem %s0, %s156
        $region20: #{edsr_forward.5} parent=15 // pred_fallthru
          _
        // Predicated region
        $region21: #{edsr_forward.5} parent=15 // pred_check
          %p158 = pneg %p73
        $region22: #{edsr_forward.5} parent=15 // pred_check_branch
          %160 = sbr.rel (%p158) target = $region24
        $region23: #{edsr_forward.5} parent=15 // pred_region
          %s161 = sand.u32 %s63, 1
          %s162 = scalar_lea.sflag [#allocation6], %s161
          %s163 = sand.u32 %s63, 1
          %s164 = smul.addr %s163, 1152
          %s165 = scalar_lea.vmem [#allocation5], %s164
          %167 = vsyncadd %s162, 0
          %s168 = smul.addr %s23, 144
          %s169 = smul.addr %s168, 8
          %s170 = scalar_lea.hbm %s1, %s169
          %s171 = sshll.u32 %s170, 4
          %s172 = int_to_ptr.hbm [resolvable:$true] %s171
          %s173 = sshll.u32 %s165, 4
          %s174 = int_to_ptr.vmem [resolvable:$true] %s173
          %179 = dma.hbm_to_vmem [thread:$0]  %s172, 18432, %s174, %s162, 128, 128, 8
        $region24: #{edsr_forward.5} parent=15 // pred_fallthru
          _
        // Predicated region
        $region25: #{edsr_forward.5} parent=15 // pred_check
          %p180 = pneg %p99
        $region26: #{edsr_forward.5} parent=15 // pred_check_branch
          %182 = sbr.rel (%p180) target = $region28
        $region27: #{edsr_forward.5} parent=15 // pred_region
          %s183 = sand.u32 %s89, 1
          %s184 = scalar_lea.sflag [#allocation8], %s183
          %s185 = sand.u32 %s89, 1
          %s186 = scalar_lea.vmem [#allocation7], %s185
          %188 = vsyncadd %s184, 0
          %s189 = scalar_lea.hbm %s2, %s23
          %s191 = sshll.u32 %s189, 4
          %s192 = int_to_ptr.hbm [resolvable:$true] %s191
          %s193 = sshll.u32 %s186, 4
          %s194 = int_to_ptr.vmem [resolvable:$true] %s193
          %196 = dma.hbm_to_vmem [thread:$0]  %s192, 16, %s194, %s184
        $region28: #{edsr_forward.5} parent=15 // pred_fallthru
          _
      $region16: #{edsr_forward.5} parent=5 // pred_fallthru
        _
      %p197 = scmp.le.s32.totalorder 1, %s15
      %p198 = scmp.lt.s32.totalorder %s15, 5
      %p199 = pnand %p197, %p198
      %p200 = pneg %p199
      // Predicated region
      $region29: #{edsr_forward.5} parent=5 // pred_check
        _
      $region30: #{edsr_forward.5} parent=5 // pred_check_branch
        %202 = sbr.rel (%p199) target = $region32
      $region31: #{edsr_forward.5} parent=5 // pred_region
        %s203 = ssub.s32 %s15, 1
        %s204 = sand.u32 %s66, 1
        %s205 = scalar_lea.sflag [#allocation6], %s204
        %s206 = sand.u32 %s66, 1
        %s207 = smul.addr %s206, 1152
        %s208 = scalar_lea.vmem [#allocation5], %s207
        // Predicated region
        $region33: #{edsr_forward.5} parent=31 // pred_check
          %p209 = pneg %p79
        $region34: #{edsr_forward.5} parent=31 // pred_check_branch
          %211 = sbr.rel (%p209) target = $region36
        $region35: #{edsr_forward.5} parent=31 // pred_region
          %213 = dma.done %s205, 18432
        $region36: #{edsr_forward.5} parent=31 // pred_fallthru
          _
        %s214 = sand.u32 %s92, 1
        %s215 = scalar_lea.sflag [#allocation8], %s214
        %s216 = sand.u32 %s92, 1
        %s217 = scalar_lea.vmem [#allocation7], %s216
        // Predicated region
        $region37: #{edsr_forward.5} parent=31 // pred_check
          %p218 = pneg %p105
        $region38: #{edsr_forward.5} parent=31 // pred_check_branch
          %220 = sbr.rel (%p218) target = $region40
        $region39: #{edsr_forward.5} parent=31 // pred_region
          %222 = dma.done %s215, 16
        $region40: #{edsr_forward.5} parent=31 // pred_fallthru
          _
        %p223 = scmp.lt.s32.totalorder %s24, 1
        %s224 = scalar_select %p223, %s24, 1
        %s225 = smul.addr %s224, 8
        %s226 = smul.addr %s225, 8
        %s227 = scalar_lea.vmem %s0, %s226
        %p228 = pneg %p53
        %p229 = pneg %p50
        %s230 = sand.u32 %s66, 1
        %s231 = scalar_lea.sflag [#allocation6], %s230
        %s232 = sand.u32 %s66, 1
        %s233 = smul.addr %s232, 1152
        %s234 = scalar_lea.vmem [#allocation5], %s233
        %p235 = pneg %p79
        %p236 = pneg %p76
        %s237 = sand.u32 %s92, 1
        %s238 = scalar_lea.sflag [#allocation8], %s237
        %s239 = sand.u32 %s92, 1
        %s240 = scalar_lea.vmem [#allocation7], %s239
        %p241 = pneg %p105
        %p242 = pneg %p102
        %p243 = pneg %p131
        %p244 = pneg %p128
        %p245 = scmp.lt.s32.totalorder %s24, 1
        %s246 = scalar_select %p245, %s24, 1
        %s247 = smul.addr %s246, 8
        %s248 = smul.addr %s247, 8
        %s249 = scalar_lea.vmem %s3, %s248
        %p250 = scmp.lt.s32.totalorder %s24, 1
        %s251 = scalar_select %p250, %s24, 1
        %s252 = smul.addr %s251, 8
        %s253 = smul.addr %s252, 8
        %s254 = scalar_lea.vmem %s0, %s253
        %p255 = scmp.lt.s32.totalorder %s24, 1
        %s256 = scalar_select %p255, %s24, 1
        %s257 = smul.addr %s256, 8
        %s258 = smul.addr %s257, 8
        %s259 = scalar_lea.vmem %s3, %s258
        %p260 = scmp.eq.s32.totalorder %s25, 0
        // Predicated region
        $region41: #{edsr_forward.5} parent=31 // pred_check
          %p261 = pneg %p260
        $region42: #{edsr_forward.5} parent=31 // pred_check_branch
          %263 = sbr.rel (%p261) target = $region44
        $region43: #{edsr_forward.5} parent=31 // pred_region
          %v264 = vld [vmem:[%s254] sm:$0xff]
          %v265 = vld [vmem:[%s254 + $0x8] sm:$0xff]
          %v266 = vld [vmem:[%s254 + $0x10] sm:$0xff]
          %v267 = vld [vmem:[%s254 + $0x18] sm:$0xff]
          %v268 = vld [vmem:[%s254 + $0x20] sm:$0xff]
          %v269 = vld [vmem:[%s254 + $0x28] sm:$0xff]
          %v270 = vld [vmem:[%s254 + $0x30] sm:$0xff]
          %v271 = vld [vmem:[%s254 + $0x38] sm:$0xff]
          %272 = vst [vmem:[#allocation2] sm:$0xff] %v264
          %273 = vst [vmem:[#allocation2 + $0x8] sm:$0xff] %v265
          %274 = vst [vmem:[#allocation2 + $0x10] sm:$0xff] %v266
          %275 = vst [vmem:[#allocation2 + $0x18] sm:$0xff] %v267
          %276 = vst [vmem:[#allocation2 + $0x20] sm:$0xff] %v268
          %277 = vst [vmem:[#allocation2 + $0x28] sm:$0xff] %v269
          %278 = vst [vmem:[#allocation2 + $0x30] sm:$0xff] %v270
          %279 = vst [vmem:[#allocation2 + $0x38] sm:$0xff] %v271
        $region44: #{edsr_forward.5} parent=31 // pred_fallthru
          _
        %v280 = vld [vmem:[#allocation2] sm:$0xff]
        %v281 = vld [vmem:[#allocation2 + $0x8] sm:$0xff]
        %v282 = vld [vmem:[#allocation2 + $0x10] sm:$0xff]
        %v283 = vld [vmem:[#allocation2 + $0x18] sm:$0xff]
        %v284 = vld [vmem:[#allocation2 + $0x20] sm:$0xff]
        %v285 = vld [vmem:[#allocation2 + $0x28] sm:$0xff]
        %v286 = vld [vmem:[#allocation2 + $0x30] sm:$0xff]
        %v287 = vld [vmem:[#allocation2 + $0x38] sm:$0xff]
        %288 = vst [vmem:[#allocation3] sm:$0xff] 0.0
        %289 = vst [vmem:[#allocation3 + $0x8] sm:$0x3] 0.0
        %290 = vst [vmem:[#allocation3 + $0x10] sm:$0xff] 0.0
        %291 = vst [vmem:[#allocation3 + $0x18] sm:$0x3] 0.0
        %292 = vst [vmem:[#allocation3 + $0x20] sm:$0xff] 0.0
        %293 = vst [vmem:[#allocation3 + $0x28] sm:$0x3] 0.0
        %294 = vst [vmem:[#allocation3 + $0x30] sm:$0xff] 0.0
        %295 = vst [vmem:[#allocation3 + $0x38] sm:$0x3] 0.0
        %296 = vst [vmem:[#allocation3 + $0x40] sm:$0xff] 0.0
        %297 = vst [vmem:[#allocation3 + $0x48] sm:$0x3] 0.0
        %298 = vst [vmem:[#allocation3 + $0x50] sm:$0xff] 0.0
        %299 = vst [vmem:[#allocation3 + $0x58] sm:$0x3] 0.0
        %300 = vst [vmem:[#allocation3 + $0x60] sm:$0xff] 0.0
        %301 = vst [vmem:[#allocation3 + $0x68] sm:$0x3] 0.0
        %302 = vst [vmem:[#allocation3 + $0x70] sm:$0xff] 0.0
        %303 = vst [vmem:[#allocation3 + $0x78] sm:$0x3] 0.0
        %304 = vst [vmem:[#allocation3 + $0x80] sm:$0xff] 0.0
        %305 = vst [vmem:[#allocation3 + $0x88] sm:$0x3] 0.0
        %306 = vst [vmem:[#allocation3 + $0x90] sm:$0xff] 0.0
        %307 = vst [vmem:[#allocation3 + $0x98] sm:$0x3] 0.0
        %s308 = scalar_lea.vmem [#allocation3], 16
        %309 = vst [vmem:[%s308 + $0x1] sm:$0xff] %v280
        %310 = vst [vmem:[%s308 + $0x11] sm:$0xff] %v281
        %311 = vst [vmem:[%s308 + $0x21] sm:$0xff] %v282
        %312 = vst [vmem:[%s308 + $0x31] sm:$0xff] %v283
        %313 = vst [vmem:[%s308 + $0x41] sm:$0xff] %v284
        %314 = vst [vmem:[%s308 + $0x51] sm:$0xff] %v285
        %315 = vst [vmem:[%s308 + $0x61] sm:$0xff] %v286
        %316 = vst [vmem:[%s308 + $0x71] sm:$0xff] %v287
        %v317 = vld [vmem:[#allocation3] sm:$0xff]
        %v318 = vld [vmem:[#allocation3 + $0x10] sm:$0xff]
        %v319 = vld [vmem:[#allocation3 + $0x20] sm:$0xff]
        %v320 = vld [vmem:[#allocation3 + $0x30] sm:$0xff]
        %v321 = vld [vmem:[#allocation3 + $0x40] sm:$0xff]
        %v322 = vld [vmem:[#allocation3 + $0x50] sm:$0xff]
        %v323 = vld [vmem:[#allocation3 + $0x60] sm:$0xff]
        %v324 = vld [vmem:[#allocation3 + $0x70] sm:$0xff]
        %325 = vst [vmem:[#allocation4] sm:$0xff] %v317
        %326 = vst [vmem:[#allocation4 + $0x48] sm:$0xff] %v318
        %327 = vst [vmem:[#allocation4 + $0x90] sm:$0xff] %v319
        %328 = vst [vmem:[#allocation4 + $0xd8] sm:$0xff] %v320
        %329 = vst [vmem:[#allocation4 + $0x120] sm:$0xff] %v321
        %330 = vst [vmem:[#allocation4 + $0x168] sm:$0xff] %v322
        %331 = vst [vmem:[#allocation4 + $0x1b0] sm:$0xff] %v323
        %332 = vst [vmem:[#allocation4 + $0x1f8] sm:$0xff] %v324
        %v333 = vld [vmem:[#allocation3 + $0x1] sm:$0xff]
        %v334 = vld [vmem:[#allocation3 + $0x11] sm:$0xff]
        %v335 = vld [vmem:[#allocation3 + $0x21] sm:$0xff]
        %v336 = vld [vmem:[#allocation3 + $0x31] sm:$0xff]
        %v337 = vld [vmem:[#allocation3 + $0x41] sm:$0xff]
        %v338 = vld [vmem:[#allocation3 + $0x51] sm:$0xff]
        %v339 = vld [vmem:[#allocation3 + $0x61] sm:$0xff]
        %v340 = vld [vmem:[#allocation3 + $0x71] sm:$0xff]
        %341 = vst [vmem:[#allocation4 + $0x8] sm:$0xff] %v333
        %342 = vst [vmem:[#allocation4 + $0x50] sm:$0xff] %v334
        %343 = vst [vmem:[#allocation4 + $0x98] sm:$0xff] %v335
        %344 = vst [vmem:[#allocation4 + $0xe0] sm:$0xff] %v336
        %345 = vst [vmem:[#allocation4 + $0x128] sm:$0xff] %v337
        %346 = vst [vmem:[#allocation4 + $0x170] sm:$0xff] %v338
        %347 = vst [vmem:[#allocation4 + $0x1b8] sm:$0xff] %v339
        %348 = vst [vmem:[#allocation4 + $0x200] sm:$0xff] %v340
        %v349 = vld [vmem:[#allocation3 + $0x2] sm:$0xff]
        %v350 = vld [vmem:[#allocation3 + $0x12] sm:$0xff]
        %v351 = vld [vmem:[#allocation3 + $0x22] sm:$0xff]
        %v352 = vld [vmem:[#allocation3 + $0x32] sm:$0xff]
        %v353 = vld [vmem:[#allocation3 + $0x42] sm:$0xff]
        %v354 = vld [vmem:[#allocation3 + $0x52] sm:$0xff]
        %v355 = vld [vmem:[#allocation3 + $0x62] sm:$0xff]
        %v356 = vld [vmem:[#allocation3 + $0x72] sm:$0xff]
        %357 = vst [vmem:[#allocation4 + $0x10] sm:$0xff] %v349
        %358 = vst [vmem:[#allocation4 + $0x58] sm:$0xff] %v350
        %359 = vst [vmem:[#allocation4 + $0xa0] sm:$0xff] %v351
        %360 = vst [vmem:[#allocation4 + $0xe8] sm:$0xff] %v352
        %361 = vst [vmem:[#allocation4 + $0x130] sm:$0xff] %v353
        %362 = vst [vmem:[#allocation4 + $0x178] sm:$0xff] %v354
        %363 = vst [vmem:[#allocation4 + $0x1c0] sm:$0xff] %v355
        %364 = vst [vmem:[#allocation4 + $0x208] sm:$0xff] %v356
        %v365 = vld [vmem:[%s308] sm:$0xff]
        %v366 = vld [vmem:[%s308 + $0x10] sm:$0xff]
        %v367 = vld [vmem:[%s308 + $0x20] sm:$0xff]
        %v368 = vld [vmem:[%s308 + $0x30] sm:$0xff]
        %v369 = vld [vmem:[%s308 + $0x40] sm:$0xff]
        %v370 = vld [vmem:[%s308 + $0x50] sm:$0xff]
        %v371 = vld [vmem:[%s308 + $0x60] sm:$0xff]
        %v372 = vld [vmem:[%s308 + $0x70] sm:$0xff]
        %373 = vst [vmem:[#allocation4 + $0x18] sm:$0xff] %v365
        %374 = vst [vmem:[#allocation4 + $0x60] sm:$0xff] %v366
        %375 = vst [vmem:[#allocation4 + $0xa8] sm:$0xff] %v367
        %376 = vst [vmem:[#allocation4 + $0xf0] sm:$0xff] %v368
        %377 = vst [vmem:[#allocation4 + $0x138] sm:$0xff] %v369
        %378 = vst [vmem:[#allocation4 + $0x180] sm:$0xff] %v370
        %379 = vst [vmem:[#allocation4 + $0x1c8] sm:$0xff] %v371
        %380 = vst [vmem:[#allocation4 + $0x210] sm:$0xff] %v372
        %v381 = vld [vmem:[%s308 + $0x1] sm:$0xff]
        %v382 = vld [vmem:[%s308 + $0x11] sm:$0xff]
        %v383 = vld [vmem:[%s308 + $0x21] sm:$0xff]
        %v384 = vld [vmem:[%s308 + $0x31] sm:$0xff]
        %v385 = vld [vmem:[%s308 + $0x41] sm:$0xff]
        %v386 = vld [vmem:[%s308 + $0x51] sm:$0xff]
        %v387 = vld [vmem:[%s308 + $0x61] sm:$0xff]
        %v388 = vld [vmem:[%s308 + $0x71] sm:$0xff]
        %389 = vst [vmem:[#allocation4 + $0x20] sm:$0xff] %v381
        %390 = vst [vmem:[#allocation4 + $0x68] sm:$0xff] %v382
        %391 = vst [vmem:[#allocation4 + $0xb0] sm:$0xff] %v383
        %392 = vst [vmem:[#allocation4 + $0xf8] sm:$0xff] %v384
        %393 = vst [vmem:[#allocation4 + $0x140] sm:$0xff] %v385
        %394 = vst [vmem:[#allocation4 + $0x188] sm:$0xff] %v386
        %395 = vst [vmem:[#allocation4 + $0x1d0] sm:$0xff] %v387
        %396 = vst [vmem:[#allocation4 + $0x218] sm:$0xff] %v388
        %v397 = vld [vmem:[%s308 + $0x2] sm:$0xff]
        %v398 = vld [vmem:[%s308 + $0x12] sm:$0xff]
        %v399 = vld [vmem:[%s308 + $0x22] sm:$0xff]
        %v400 = vld [vmem:[%s308 + $0x32] sm:$0xff]
        %v401 = vld [vmem:[%s308 + $0x42] sm:$0xff]
        %v402 = vld [vmem:[%s308 + $0x52] sm:$0xff]
        %v403 = vld [vmem:[%s308 + $0x62] sm:$0xff]
        %v404 = vld [vmem:[%s308 + $0x72] sm:$0xff]
        %405 = vst [vmem:[#allocation4 + $0x28] sm:$0xff] %v397
        %406 = vst [vmem:[#allocation4 + $0x70] sm:$0xff] %v398
        %407 = vst [vmem:[#allocation4 + $0xb8] sm:$0xff] %v399
        %408 = vst [vmem:[#allocation4 + $0x100] sm:$0xff] %v400
        %409 = vst [vmem:[#allocation4 + $0x148] sm:$0xff] %v401
        %410 = vst [vmem:[#allocation4 + $0x190] sm:$0xff] %v402
        %411 = vst [vmem:[#allocation4 + $0x1d8] sm:$0xff] %v403
        %412 = vst [vmem:[#allocation4 + $0x220] sm:$0xff] %v404
        %s413 = scalar_lea.vmem [#allocation3], 32
        %v414 = vld [vmem:[%s413] sm:$0xff]
        %v415 = vld [vmem:[%s413 + $0x10] sm:$0xff]
        %v416 = vld [vmem:[%s413 + $0x20] sm:$0xff]
        %v417 = vld [vmem:[%s413 + $0x30] sm:$0xff]
        %v418 = vld [vmem:[%s413 + $0x40] sm:$0xff]
        %v419 = vld [vmem:[%s413 + $0x50] sm:$0xff]
        %v420 = vld [vmem:[%s413 + $0x60] sm:$0xff]
        %v421 = vld [vmem:[%s413 + $0x70] sm:$0xff]
        %422 = vst [vmem:[#allocation4 + $0x30] sm:$0xff] %v414
        %423 = vst [vmem:[#allocation4 + $0x78] sm:$0xff] %v415
        %424 = vst [vmem:[#allocation4 + $0xc0] sm:$0xff] %v416
        %425 = vst [vmem:[#allocation4 + $0x108] sm:$0xff] %v417
        %426 = vst [vmem:[#allocation4 + $0x150] sm:$0xff] %v418
        %427 = vst [vmem:[#allocation4 + $0x198] sm:$0xff] %v419
        %428 = vst [vmem:[#allocation4 + $0x1e0] sm:$0xff] %v420
        %429 = vst [vmem:[#allocation4 + $0x228] sm:$0xff] %v421
        %v430 = vld [vmem:[%s413 + $0x1] sm:$0xff]
        %v431 = vld [vmem:[%s413 + $0x11] sm:$0xff]
        %v432 = vld [vmem:[%s413 + $0x21] sm:$0xff]
        %v433 = vld [vmem:[%s413 + $0x31] sm:$0xff]
        %v434 = vld [vmem:[%s413 + $0x41] sm:$0xff]
        %v435 = vld [vmem:[%s413 + $0x51] sm:$0xff]
        %v436 = vld [vmem:[%s413 + $0x61] sm:$0xff]
        %v437 = vld [vmem:[%s413 + $0x71] sm:$0xff]
        %438 = vst [vmem:[#allocation4 + $0x38] sm:$0xff] %v430
        %439 = vst [vmem:[#allocation4 + $0x80] sm:$0xff] %v431
        %440 = vst [vmem:[#allocation4 + $0xc8] sm:$0xff] %v432
        %441 = vst [vmem:[#allocation4 + $0x110] sm:$0xff] %v433
        %442 = vst [vmem:[#allocation4 + $0x158] sm:$0xff] %v434
        %443 = vst [vmem:[#allocation4 + $0x1a0] sm:$0xff] %v435
        %444 = vst [vmem:[#allocation4 + $0x1e8] sm:$0xff] %v436
        %445 = vst [vmem:[#allocation4 + $0x230] sm:$0xff] %v437
        %v446 = vld [vmem:[%s413 + $0x2] sm:$0xff]
        %v447 = vld [vmem:[%s413 + $0x12] sm:$0xff]
        %v448 = vld [vmem:[%s413 + $0x22] sm:$0xff]
        %v449 = vld [vmem:[%s413 + $0x32] sm:$0xff]
        %v450 = vld [vmem:[%s413 + $0x42] sm:$0xff]
        %v451 = vld [vmem:[%s413 + $0x52] sm:$0xff]
        %v452 = vld [vmem:[%s413 + $0x62] sm:$0xff]
        %v453 = vld [vmem:[%s413 + $0x72] sm:$0xff]
        %454 = vst [vmem:[#allocation4 + $0x40] sm:$0xff] %v446
        %455 = vst [vmem:[#allocation4 + $0x88] sm:$0xff] %v447
        %456 = vst [vmem:[#allocation4 + $0xd0] sm:$0xff] %v448
        %457 = vst [vmem:[#allocation4 + $0x118] sm:$0xff] %v449
        %458 = vst [vmem:[#allocation4 + $0x160] sm:$0xff] %v450
        %459 = vst [vmem:[#allocation4 + $0x1a8] sm:$0xff] %v451
        %460 = vst [vmem:[#allocation4 + $0x1f0] sm:$0xff] %v452
        %461 = vst [vmem:[#allocation4 + $0x238] sm:$0xff] %v453
        %v462 = vld [vmem:[#allocation4] sm:$0xff]
        %v463 = vld [vmem:[#allocation4 + $0x8] sm:$0xff]
        %v464 = vld [vmem:[#allocation4 + $0x10] sm:$0xff]
        %v465 = vld [vmem:[#allocation4 + $0x18] sm:$0xff]
        %v466 = vld [vmem:[#allocation4 + $0x20] sm:$0xff]
        %v467 = vld [vmem:[#allocation4 + $0x28] sm:$0xff]
        %v468 = vld [vmem:[#allocation4 + $0x30] sm:$0xff]
        %v469 = vld [vmem:[#allocation4 + $0x38] sm:$0xff]
        %v470 = vld [vmem:[#allocation4 + $0x40] sm:$0xff]
        %v471 = vld [vmem:[#allocation4 + $0x48] sm:$0xff]
        %v472 = vld [vmem:[#allocation4 + $0x50] sm:$0xff]
        %v473 = vld [vmem:[#allocation4 + $0x58] sm:$0xff]
        %v474 = vld [vmem:[#allocation4 + $0x60] sm:$0xff]
        %v475 = vld [vmem:[#allocation4 + $0x68] sm:$0xff]
        %v476 = vld [vmem:[#allocation4 + $0x70] sm:$0xff]
        %v477 = vld [vmem:[#allocation4 + $0x78] sm:$0xff]
        %v478 = vld [vmem:[#allocation4 + $0x80] sm:$0xff]
        %v479 = vld [vmem:[#allocation4 + $0x88] sm:$0xff]
        %v480 = vld [vmem:[#allocation4 + $0x90] sm:$0xff]
        %v481 = vld [vmem:[#allocation4 + $0x98] sm:$0xff]
        %v482 = vld [vmem:[#allocation4 + $0xa0] sm:$0xff]
        %v483 = vld [vmem:[#allocation4 + $0xa8] sm:$0xff]
        %v484 = vld [vmem:[#allocation4 + $0xb0] sm:$0xff]
        %v485 = vld [vmem:[#allocation4 + $0xb8] sm:$0xff]
        %v486 = vld [vmem:[#allocation4 + $0xc0] sm:$0xff]
        %v487 = vld [vmem:[#allocation4 + $0xc8] sm:$0xff]
        %v488 = vld [vmem:[#allocation4 + $0xd0] sm:$0xff]
        %v489 = vld [vmem:[#allocation4 + $0xd8] sm:$0xff]
        %v490 = vld [vmem:[#allocation4 + $0xe0] sm:$0xff]
        %v491 = vld [vmem:[#allocation4 + $0xe8] sm:$0xff]
        %v492 = vld [vmem:[#allocation4 + $0xf0] sm:$0xff]
        %v493 = vld [vmem:[#allocation4 + $0xf8] sm:$0xff]
        %v494 = vld [vmem:[#allocation4 + $0x100] sm:$0xff]
        %v495 = vld [vmem:[#allocation4 + $0x108] sm:$0xff]
        %v496 = vld [vmem:[#allocation4 + $0x110] sm:$0xff]
        %v497 = vld [vmem:[#allocation4 + $0x118] sm:$0xff]
        %v498 = vld [vmem:[#allocation4 + $0x120] sm:$0xff]
        %v499 = vld [vmem:[#allocation4 + $0x128] sm:$0xff]
        %v500 = vld [vmem:[#allocation4 + $0x130] sm:$0xff]
        %v501 = vld [vmem:[#allocation4 + $0x138] sm:$0xff]
        %v502 = vld [vmem:[#allocation4 + $0x140] sm:$0xff]
        %v503 = vld [vmem:[#allocation4 + $0x148] sm:$0xff]
        %v504 = vld [vmem:[#allocation4 + $0x150] sm:$0xff]
        %v505 = vld [vmem:[#allocation4 + $0x158] sm:$0xff]
        %v506 = vld [vmem:[#allocation4 + $0x160] sm:$0xff]
        %v507 = vld [vmem:[#allocation4 + $0x168] sm:$0xff]
        %v508 = vld [vmem:[#allocation4 + $0x170] sm:$0xff]
        %v509 = vld [vmem:[#allocation4 + $0x178] sm:$0xff]
        %v510 = vld [vmem:[#allocation4 + $0x180] sm:$0xff]
        %v511 = vld [vmem:[#allocation4 + $0x188] sm:$0xff]
        %v512 = vld [vmem:[#allocation4 + $0x190] sm:$0xff]
        %v513 = vld [vmem:[#allocation4 + $0x198] sm:$0xff]
        %v514 = vld [vmem:[#allocation4 + $0x1a0] sm:$0xff]
        %v515 = vld [vmem:[#allocation4 + $0x1a8] sm:$0xff]
        %v516 = vld [vmem:[#allocation4 + $0x1b0] sm:$0xff]
        %v517 = vld [vmem:[#allocation4 + $0x1b8] sm:$0xff]
        %v518 = vld [vmem:[#allocation4 + $0x1c0] sm:$0xff]
        %v519 = vld [vmem:[#allocation4 + $0x1c8] sm:$0xff]
        %v520 = vld [vmem:[#allocation4 + $0x1d0] sm:$0xff]
        %v521 = vld [vmem:[#allocation4 + $0x1d8] sm:$0xff]
        %v522 = vld [vmem:[#allocation4 + $0x1e0] sm:$0xff]
        %v523 = vld [vmem:[#allocation4 + $0x1e8] sm:$0xff]
        %v524 = vld [vmem:[#allocation4 + $0x1f0] sm:$0xff]
        %v525 = vld [vmem:[#allocation4 + $0x1f8] sm:$0xff]
        %v526 = vld [vmem:[#allocation4 + $0x200] sm:$0xff]
        %v527 = vld [vmem:[#allocation4 + $0x208] sm:$0xff]
        %v528 = vld [vmem:[#allocation4 + $0x210] sm:$0xff]
        %v529 = vld [vmem:[#allocation4 + $0x218] sm:$0xff]
        %v530 = vld [vmem:[#allocation4 + $0x220] sm:$0xff]
        %v531 = vld [vmem:[#allocation4 + $0x228] sm:$0xff]
        %v532 = vld [vmem:[#allocation4 + $0x230] sm:$0xff]
        %v533 = vld [vmem:[#allocation4 + $0x238] sm:$0xff]
        %v534 = vld [vmem:[%s208] sm:$0xff]
        %v535 = vld [vmem:[%s208 + $0x8] sm:$0xff]
        %v536 = vld [vmem:[%s208 + $0x10] sm:$0xff]
        %v537 = vld [vmem:[%s208 + $0x18] sm:$0xff]
        %v538 = vld [vmem:[%s208 + $0x20] sm:$0xff]
        %v539 = vld [vmem:[%s208 + $0x28] sm:$0xff]
        %v540 = vld [vmem:[%s208 + $0x30] sm:$0xff]
        %v541 = vld [vmem:[%s208 + $0x38] sm:$0xff]
        %v542 = vld [vmem:[%s208 + $0x40] sm:$0xff]
        %v543 = vld [vmem:[%s208 + $0x48] sm:$0xff]
        %v544 = vld [vmem:[%s208 + $0x50] sm:$0xff]
        %v545 = vld [vmem:[%s208 + $0x58] sm:$0xff]
        %v546 = vld [vmem:[%s208 + $0x60] sm:$0xff]
        %v547 = vld [vmem:[%s208 + $0x68] sm:$0xff]
        %v548 = vld [vmem:[%s208 + $0x70] sm:$0xff]
        %v549 = vld [vmem:[%s208 + $0x78] sm:$0xff]
        %v550 = vld [vmem:[%s208 + $0x80] sm:$0xff]
        %v551 = vld [vmem:[%s208 + $0x88] sm:$0xff]
        %v552 = vld [vmem:[%s208 + $0x90] sm:$0xff]
        %v553 = vld [vmem:[%s208 + $0x98] sm:$0xff]
        %v554 = vld [vmem:[%s208 + $0xa0] sm:$0xff]
        %v555 = vld [vmem:[%s208 + $0xa8] sm:$0xff]
        %v556 = vld [vmem:[%s208 + $0xb0] sm:$0xff]
        %v557 = vld [vmem:[%s208 + $0xb8] sm:$0xff]
        %v558 = vld [vmem:[%s208 + $0xc0] sm:$0xff]
        %v559 = vld [vmem:[%s208 + $0xc8] sm:$0xff]
        %v560 = vld [vmem:[%s208 + $0xd0] sm:$0xff]
        %v561 = vld [vmem:[%s208 + $0xd8] sm:$0xff]
        %v562 = vld [vmem:[%s208 + $0xe0] sm:$0xff]
        %v563 = vld [vmem:[%s208 + $0xe8] sm:$0xff]
        %v564 = vld [vmem:[%s208 + $0xf0] sm:$0xff]
        %v565 = vld [vmem:[%s208 + $0xf8] sm:$0xff]
        %v566 = vld [vmem:[%s208 + $0x100] sm:$0xff]
        %v567 = vld [vmem:[%s208 + $0x108] sm:$0xff]
        %v568 = vld [vmem:[%s208 + $0x110] sm:$0xff]
        %v569 = vld [vmem:[%s208 + $0x118] sm:$0xff]
        %v570 = vld [vmem:[%s208 + $0x120] sm:$0xff]
        %v571 = vld [vmem:[%s208 + $0x128] sm:$0xff]
        %v572 = vld [vmem:[%s208 + $0x130] sm:$0xff]
        %v573 = vld [vmem:[%s208 + $0x138] sm:$0xff]
        %v574 = vld [vmem:[%s208 + $0x140] sm:$0xff]
        %v575 = vld [vmem:[%s208 + $0x148] sm:$0xff]
        %v576 = vld [vmem:[%s208 + $0x150] sm:$0xff]
        %v577 = vld [vmem:[%s208 + $0x158] sm:$0xff]
        %v578 = vld [vmem:[%s208 + $0x160] sm:$0xff]
        %v579 = vld [vmem:[%s208 + $0x168] sm:$0xff]
        %v580 = vld [vmem:[%s208 + $0x170] sm:$0xff]
        %v581 = vld [vmem:[%s208 + $0x178] sm:$0xff]
        %v582 = vld [vmem:[%s208 + $0x180] sm:$0xff]
        %v583 = vld [vmem:[%s208 + $0x188] sm:$0xff]
        %v584 = vld [vmem:[%s208 + $0x190] sm:$0xff]
        %v585 = vld [vmem:[%s208 + $0x198] sm:$0xff]
        %v586 = vld [vmem:[%s208 + $0x1a0] sm:$0xff]
        %v587 = vld [vmem:[%s208 + $0x1a8] sm:$0xff]
        %v588 = vld [vmem:[%s208 + $0x1b0] sm:$0xff]
        %v589 = vld [vmem:[%s208 + $0x1b8] sm:$0xff]
        %v590 = vld [vmem:[%s208 + $0x1c0] sm:$0xff]
        %v591 = vld [vmem:[%s208 + $0x1c8] sm:$0xff]
        %v592 = vld [vmem:[%s208 + $0x1d0] sm:$0xff]
        %v593 = vld [vmem:[%s208 + $0x1d8] sm:$0xff]
        %v594 = vld [vmem:[%s208 + $0x1e0] sm:$0xff]
        %v595 = vld [vmem:[%s208 + $0x1e8] sm:$0xff]
        %v596 = vld [vmem:[%s208 + $0x1f0] sm:$0xff]
        %v597 = vld [vmem:[%s208 + $0x1f8] sm:$0xff]
        %v598 = vld [vmem:[%s208 + $0x200] sm:$0xff]
        %v599 = vld [vmem:[%s208 + $0x208] sm:$0xff]
        %v600 = vld [vmem:[%s208 + $0x210] sm:$0xff]
        %v601 = vld [vmem:[%s208 + $0x218] sm:$0xff]
        %v602 = vld [vmem:[%s208 + $0x220] sm:$0xff]
        %v603 = vld [vmem:[%s208 + $0x228] sm:$0xff]
        %v604 = vld [vmem:[%s208 + $0x230] sm:$0xff]
        %v605 = vld [vmem:[%s208 + $0x238] sm:$0xff]
        %v606 = vld [vmem:[%s208 + $0x240] sm:$0xff]
        %v607 = vld [vmem:[%s208 + $0x248] sm:$0xff]
        %v608 = vld [vmem:[%s208 + $0x250] sm:$0xff]
        %v609 = vld [vmem:[%s208 + $0x258] sm:$0xff]
        %v610 = vld [vmem:[%s208 + $0x260] sm:$0xff]
        %v611 = vld [vmem:[%s208 + $0x268] sm:$0xff]
        %v612 = vld [vmem:[%s208 + $0x270] sm:$0xff]
        %v613 = vld [vmem:[%s208 + $0x278] sm:$0xff]
        %v614 = vld [vmem:[%s208 + $0x280] sm:$0xff]
        %v615 = vld [vmem:[%s208 + $0x288] sm:$0xff]
        %v616 = vld [vmem:[%s208 + $0x290] sm:$0xff]
        %v617 = vld [vmem:[%s208 + $0x298] sm:$0xff]
        %v618 = vld [vmem:[%s208 + $0x2a0] sm:$0xff]
        %v619 = vld [vmem:[%s208 + $0x2a8] sm:$0xff]
        %v620 = vld [vmem:[%s208 + $0x2b0] sm:$0xff]
        %v621 = vld [vmem:[%s208 + $0x2b8] sm:$0xff]
        %v622 = vld [vmem:[%s208 + $0x2c0] sm:$0xff]
        %v623 = vld [vmem:[%s208 + $0x2c8] sm:$0xff]
        %v624 = vld [vmem:[%s208 + $0x2d0] sm:$0xff]
        %v625 = vld [vmem:[%s208 + $0x2d8] sm:$0xff]
        %v626 = vld [vmem:[%s208 + $0x2e0] sm:$0xff]
        %v627 = vld [vmem:[%s208 + $0x2e8] sm:$0xff]
        %v628 = vld [vmem:[%s208 + $0x2f0] sm:$0xff]
        %v629 = vld [vmem:[%s208 + $0x2f8] sm:$0xff]
        %v630 = vld [vmem:[%s208 + $0x300] sm:$0xff]
        %v631 = vld [vmem:[%s208 + $0x308] sm:$0xff]
        %v632 = vld [vmem:[%s208 + $0x310] sm:$0xff]
        %v633 = vld [vmem:[%s208 + $0x318] sm:$0xff]
        %v634 = vld [vmem:[%s208 + $0x320] sm:$0xff]
        %v635 = vld [vmem:[%s208 + $0x328] sm:$0xff]
        %v636 = vld [vmem:[%s208 + $0x330] sm:$0xff]
        %v637 = vld [vmem:[%s208 + $0x338] sm:$0xff]
        %v638 = vld [vmem:[%s208 + $0x340] sm:$0xff]
        %v639 = vld [vmem:[%s208 + $0x348] sm:$0xff]
        %v640 = vld [vmem:[%s208 + $0x350] sm:$0xff]
        %v641 = vld [vmem:[%s208 + $0x358] sm:$0xff]
        %v642 = vld [vmem:[%s208 + $0x360] sm:$0xff]
        %v643 = vld [vmem:[%s208 + $0x368] sm:$0xff]
        %v644 = vld [vmem:[%s208 + $0x370] sm:$0xff]
        %v645 = vld [vmem:[%s208 + $0x378] sm:$0xff]
        %v646 = vld [vmem:[%s208 + $0x380] sm:$0xff]
        %v647 = vld [vmem:[%s208 + $0x388] sm:$0xff]
        %v648 = vld [vmem:[%s208 + $0x390] sm:$0xff]
        %v649 = vld [vmem:[%s208 + $0x398] sm:$0xff]
        %v650 = vld [vmem:[%s208 + $0x3a0] sm:$0xff]
        %v651 = vld [vmem:[%s208 + $0x3a8] sm:$0xff]
        %v652 = vld [vmem:[%s208 + $0x3b0] sm:$0xff]
        %v653 = vld [vmem:[%s208 + $0x3b8] sm:$0xff]
        %v654 = vld [vmem:[%s208 + $0x3c0] sm:$0xff]
        %v655 = vld [vmem:[%s208 + $0x3c8] sm:$0xff]
        %v656 = vld [vmem:[%s208 + $0x3d0] sm:$0xff]
        %v657 = vld [vmem:[%s208 + $0x3d8] sm:$0xff]
        %v658 = vld [vmem:[%s208 + $0x3e0] sm:$0xff]
        %v659 = vld [vmem:[%s208 + $0x3e8] sm:$0xff]
        %v660 = vld [vmem:[%s208 + $0x3f0] sm:$0xff]
        %v661 = vld [vmem:[%s208 + $0x3f8] sm:$0xff]
        %v662 = vld [vmem:[%s208 + $0x400] sm:$0xff]
        %v663 = vld [vmem:[%s208 + $0x408] sm:$0xff]
        %v664 = vld [vmem:[%s208 + $0x410] sm:$0xff]
        %v665 = vld [vmem:[%s208 + $0x418] sm:$0xff]
        %v666 = vld [vmem:[%s208 + $0x420] sm:$0xff]
        %v667 = vld [vmem:[%s208 + $0x428] sm:$0xff]
        %v668 = vld [vmem:[%s208 + $0x430] sm:$0xff]
        %v669 = vld [vmem:[%s208 + $0x438] sm:$0xff]
        %v670 = vld [vmem:[%s208 + $0x440] sm:$0xff]
        %v671 = vld [vmem:[%s208 + $0x448] sm:$0xff]
        %v672 = vld [vmem:[%s208 + $0x450] sm:$0xff]
        %v673 = vld [vmem:[%s208 + $0x458] sm:$0xff]
        %v674 = vld [vmem:[%s208 + $0x460] sm:$0xff]
        %v675 = vld [vmem:[%s208 + $0x468] sm:$0xff]
        %v676 = vld [vmem:[%s208 + $0x470] sm:$0xff]
        %v677 = vld [vmem:[%s208 + $0x478] sm:$0xff]
        %v678 = vld [vmem:[%s217] sm:$0x1]
        %v680 = vperm.slane %v678, 0
        %682 = vmatpush.msra.mxu0 %v549
        %683 = vmatpush.msra.mxu0 %v548
        %684 = vmatpush.msra.mxu0 %v547
        %685 = vmatpush.msra.mxu0 %v546
        %686 = vmatpush.msra.mxu0 %v545
        %687 = vmatpush.msra.mxu0 %v544
        %688 = vmatpush.msra.mxu0 %v543
        %689 = vmatpush.msra.mxu0 %v542
        %690 = vmatpush.msra.mxu0 %v541
        %691 = vmatpush.msra.mxu0 %v540
        %692 = vmatpush.msra.mxu0 %v539
        %693 = vmatpush.msra.mxu0 %v538
        %694 = vmatpush.msra.mxu0 %v537
        %695 = vmatpush.msra.mxu0 %v536
        %696 = vmatpush.msra.mxu0 %v535
        %697 = vmatpush.msra.mxu0 %v534
        %698 = vmatmul.f32.gmra.mxu0 %v462
        %v699 = vpop.f32.mrf.mxu0
        %v700 = vadd.f32 %v680, %v699
        %701 = vmatmul.f32.gmra.mxu0 %v471
        %v702 = vpop.f32.mrf.mxu0
        %v703 = vadd.f32 %v680, %v702
        %704 = vmatmul.f32.gmra.mxu0 %v480
        %v705 = vpop.f32.mrf.mxu0
        %v706 = vadd.f32 %v680, %v705
        %707 = vmatmul.f32.gmra.mxu0 %v489
        %v708 = vpop.f32.mrf.mxu0
        %v709 = vadd.f32 %v680, %v708
        %710 = vmatmul.f32.gmra.mxu0 %v498
        %v711 = vpop.f32.mrf.mxu0
        %v712 = vadd.f32 %v680, %v711
        %713 = vmatmul.f32.gmra.mxu0 %v507
        %v714 = vpop.f32.mrf.mxu0
        %v715 = vadd.f32 %v680, %v714
        %716 = vmatmul.f32.gmra.mxu0 %v516
        %v717 = vpop.f32.mrf.mxu0
        %v718 = vadd.f32 %v680, %v717
        %719 = vmatmul.f32.gmra.mxu0 %v525
        %v720 = vpop.f32.mrf.mxu0
        %v721 = vadd.f32 %v680, %v720
        %722 = vdwg.mxu0
        %723 = vmatpush.msra.mxu0 %v565
        %724 = vmatpush.msra.mxu0 %v564
        %725 = vmatpush.msra.mxu0 %v563
        %726 = vmatpush.msra.mxu0 %v562
        %727 = vmatpush.msra.mxu0 %v561
        %728 = vmatpush.msra.mxu0 %v560
        %729 = vmatpush.msra.mxu0 %v559
        %730 = vmatpush.msra.mxu0 %v558
        %731 = vmatpush.msra.mxu0 %v557
        %732 = vmatpush.msra.mxu0 %v556
        %733 = vmatpush.msra.mxu0 %v555
        %734 = vmatpush.msra.mxu0 %v554
        %735 = vmatpush.msra.mxu0 %v553
        %736 = vmatpush.msra.mxu0 %v552
        %737 = vmatpush.msra.mxu0 %v551
        %738 = vmatpush.msra.mxu0 %v550
        %739 = vmatmul.f32.gmra.mxu0 %v463
        %v740 = vpop.f32.mrf.mxu0
        %v741 = vadd.f32 %v700, %v740
        %742 = vmatmul.f32.gmra.mxu0 %v472
        %v743 = vpop.f32.mrf.mxu0
        %v744 = vadd.f32 %v703, %v743
        %745 = vmatmul.f32.gmra.mxu0 %v481
        %v746 = vpop.f32.mrf.mxu0
        %v747 = vadd.f32 %v706, %v746
        %748 = vmatmul.f32.gmra.mxu0 %v490
        %v749 = vpop.f32.mrf.mxu0
        %v750 = vadd.f32 %v709, %v749
        %751 = vmatmul.f32.gmra.mxu0 %v499
        %v752 = vpop.f32.mrf.mxu0
        %v753 = vadd.f32 %v712, %v752
        %754 = vmatmul.f32.gmra.mxu0 %v508
        %v755 = vpop.f32.mrf.mxu0
        %v756 = vadd.f32 %v715, %v755
        %757 = vmatmul.f32.gmra.mxu0 %v517
        %v758 = vpop.f32.mrf.mxu0
        %v759 = vadd.f32 %v718, %v758
        %760 = vmatmul.f32.gmra.mxu0 %v526
        %v761 = vpop.f32.mrf.mxu0
        %v762 = vadd.f32 %v721, %v761
        %763 = vdwg.mxu0
        %764 = vmatpush.msra.mxu0 %v581
        %765 = vmatpush.msra.mxu0 %v580
        %766 = vmatpush.msra.mxu0 %v579
        %767 = vmatpush.msra.mxu0 %v578
        %768 = vmatpush.msra.mxu0 %v577
        %769 = vmatpush.msra.mxu0 %v576
        %770 = vmatpush.msra.mxu0 %v575
        %771 = vmatpush.msra.mxu0 %v574
        %772 = vmatpush.msra.mxu0 %v573
        %773 = vmatpush.msra.mxu0 %v572
        %774 = vmatpush.msra.mxu0 %v571
        %775 = vmatpush.msra.mxu0 %v570
        %776 = vmatpush.msra.mxu0 %v569
        %777 = vmatpush.msra.mxu0 %v568
        %778 = vmatpush.msra.mxu0 %v567
        %779 = vmatpush.msra.mxu0 %v566
        %780 = vmatmul.f32.gmra.mxu0 %v464
        %v781 = vpop.f32.mrf.mxu0
        %v782 = vadd.f32 %v741, %v781
        %783 = vmatmul.f32.gmra.mxu0 %v473
        %v784 = vpop.f32.mrf.mxu0
        %v785 = vadd.f32 %v744, %v784
        %786 = vmatmul.f32.gmra.mxu0 %v482
        %v787 = vpop.f32.mrf.mxu0
        %v788 = vadd.f32 %v747, %v787
        %789 = vmatmul.f32.gmra.mxu0 %v491
        %v790 = vpop.f32.mrf.mxu0
        %v791 = vadd.f32 %v750, %v790
        %792 = vmatmul.f32.gmra.mxu0 %v500
        %v793 = vpop.f32.mrf.mxu0
        %v794 = vadd.f32 %v753, %v793
        %795 = vmatmul.f32.gmra.mxu0 %v509
        %v796 = vpop.f32.mrf.mxu0
        %v797 = vadd.f32 %v756, %v796
        %798 = vmatmul.f32.gmra.mxu0 %v518
        %v799 = vpop.f32.mrf.mxu0
        %v800 = vadd.f32 %v759, %v799
        %801 = vmatmul.f32.gmra.mxu0 %v527
        %v802 = vpop.f32.mrf.mxu0
        %v803 = vadd.f32 %v762, %v802
        %804 = vdwg.mxu0
        %805 = vmatpush.msra.mxu0 %v597
        %806 = vmatpush.msra.mxu0 %v596
        %807 = vmatpush.msra.mxu0 %v595
        %808 = vmatpush.msra.mxu0 %v594
        %809 = vmatpush.msra.mxu0 %v593
        %810 = vmatpush.msra.mxu0 %v592
        %811 = vmatpush.msra.mxu0 %v591
        %812 = vmatpush.msra.mxu0 %v590
        %813 = vmatpush.msra.mxu0 %v589
        %814 = vmatpush.msra.mxu0 %v588
        %815 = vmatpush.msra.mxu0 %v587
        %816 = vmatpush.msra.mxu0 %v586
        %817 = vmatpush.msra.mxu0 %v585
        %818 = vmatpush.msra.mxu0 %v584
        %819 = vmatpush.msra.mxu0 %v583
        %820 = vmatpush.msra.mxu0 %v582
        %821 = vmatmul.f32.gmra.mxu0 %v465
        %v822 = vpop.f32.mrf.mxu0
        %v823 = vadd.f32 %v782, %v822
        %824 = vmatmul.f32.gmra.mxu0 %v474
        %v825 = vpop.f32.mrf.mxu0
        %v826 = vadd.f32 %v785, %v825
        %827 = vmatmul.f32.gmra.mxu0 %v483
        %v828 = vpop.f32.mrf.mxu0
        %v829 = vadd.f32 %v788, %v828
        %830 = vmatmul.f32.gmra.mxu0 %v492
        %v831 = vpop.f32.mrf.mxu0
        %v832 = vadd.f32 %v791, %v831
        %833 = vmatmul.f32.gmra.mxu0 %v501
        %v834 = vpop.f32.mrf.mxu0
        %v835 = vadd.f32 %v794, %v834
        %836 = vmatmul.f32.gmra.mxu0 %v510
        %v837 = vpop.f32.mrf.mxu0
        %v838 = vadd.f32 %v797, %v837
        %839 = vmatmul.f32.gmra.mxu0 %v519
        %v840 = vpop.f32.mrf.mxu0
        %v841 = vadd.f32 %v800, %v840
        %842 = vmatmul.f32.gmra.mxu0 %v528
        %v843 = vpop.f32.mrf.mxu0
        %v844 = vadd.f32 %v803, %v843
        %845 = vdwg.mxu0
        %846 = vmatpush.msra.mxu0 %v613
        %847 = vmatpush.msra.mxu0 %v612
        %848 = vmatpush.msra.mxu0 %v611
        %849 = vmatpush.msra.mxu0 %v610
        %850 = vmatpush.msra.mxu0 %v609
        %851 = vmatpush.msra.mxu0 %v608
        %852 = vmatpush.msra.mxu0 %v607
        %853 = vmatpush.msra.mxu0 %v606
        %854 = vmatpush.msra.mxu0 %v605
        %855 = vmatpush.msra.mxu0 %v604
        %856 = vmatpush.msra.mxu0 %v603
        %857 = vmatpush.msra.mxu0 %v602
        %858 = vmatpush.msra.mxu0 %v601
        %859 = vmatpush.msra.mxu0 %v600
        %860 = vmatpush.msra.mxu0 %v599
        %861 = vmatpush.msra.mxu0 %v598
        %862 = vmatmul.f32.gmra.mxu0 %v466
        %v863 = vpop.f32.mrf.mxu0
        %v864 = vadd.f32 %v823, %v863
        %865 = vmatmul.f32.gmra.mxu0 %v475
        %v866 = vpop.f32.mrf.mxu0
        %v867 = vadd.f32 %v826, %v866
        %868 = vmatmul.f32.gmra.mxu0 %v484
        %v869 = vpop.f32.mrf.mxu0
        %v870 = vadd.f32 %v829, %v869
        %871 = vmatmul.f32.gmra.mxu0 %v493
        %v872 = vpop.f32.mrf.mxu0
        %v873 = vadd.f32 %v832, %v872
        %874 = vmatmul.f32.gmra.mxu0 %v502
        %v875 = vpop.f32.mrf.mxu0
        %v876 = vadd.f32 %v835, %v875
        %877 = vmatmul.f32.gmra.mxu0 %v511
        %v878 = vpop.f32.mrf.mxu0
        %v879 = vadd.f32 %v838, %v878
        %880 = vmatmul.f32.gmra.mxu0 %v520
        %v881 = vpop.f32.mrf.mxu0
        %v882 = vadd.f32 %v841, %v881
        %883 = vmatmul.f32.gmra.mxu0 %v529
        %v884 = vpop.f32.mrf.mxu0
        %v885 = vadd.f32 %v844, %v884
        %886 = vdwg.mxu0
        %887 = vmatpush.msra.mxu0 %v629
        %888 = vmatpush.msra.mxu0 %v628
        %889 = vmatpush.msra.mxu0 %v627
        %890 = vmatpush.msra.mxu0 %v626
        %891 = vmatpush.msra.mxu0 %v625
        %892 = vmatpush.msra.mxu0 %v624
        %893 = vmatpush.msra.mxu0 %v623
        %894 = vmatpush.msra.mxu0 %v622
        %895 = vmatpush.msra.mxu0 %v621
        %896 = vmatpush.msra.mxu0 %v620
        %897 = vmatpush.msra.mxu0 %v619
        %898 = vmatpush.msra.mxu0 %v618
        %899 = vmatpush.msra.mxu0 %v617
        %900 = vmatpush.msra.mxu0 %v616
        %901 = vmatpush.msra.mxu0 %v615
        %902 = vmatpush.msra.mxu0 %v614
        %903 = vmatmul.f32.gmra.mxu0 %v467
        %v904 = vpop.f32.mrf.mxu0
        %v905 = vadd.f32 %v864, %v904
        %906 = vmatmul.f32.gmra.mxu0 %v476
        %v907 = vpop.f32.mrf.mxu0
        %v908 = vadd.f32 %v867, %v907
        %909 = vmatmul.f32.gmra.mxu0 %v485
        %v910 = vpop.f32.mrf.mxu0
        %v911 = vadd.f32 %v870, %v910
        %912 = vmatmul.f32.gmra.mxu0 %v494
        %v913 = vpop.f32.mrf.mxu0
        %v914 = vadd.f32 %v873, %v913
        %915 = vmatmul.f32.gmra.mxu0 %v503
        %v916 = vpop.f32.mrf.mxu0
        %v917 = vadd.f32 %v876, %v916
        %918 = vmatmul.f32.gmra.mxu0 %v512
        %v919 = vpop.f32.mrf.mxu0
        %v920 = vadd.f32 %v879, %v919
        %921 = vmatmul.f32.gmra.mxu0 %v521
        %v922 = vpop.f32.mrf.mxu0
        %v923 = vadd.f32 %v882, %v922
        %924 = vmatmul.f32.gmra.mxu0 %v530
        %v925 = vpop.f32.mrf.mxu0
        %v926 = vadd.f32 %v885, %v925
        %927 = vdwg.mxu0
        %928 = vmatpush.msra.mxu0 %v645
        %929 = vmatpush.msra.mxu0 %v644
        %930 = vmatpush.msra.mxu0 %v643
        %931 = vmatpush.msra.mxu0 %v642
        %932 = vmatpush.msra.mxu0 %v641
        %933 = vmatpush.msra.mxu0 %v640
        %934 = vmatpush.msra.mxu0 %v639
        %935 = vmatpush.msra.mxu0 %v638
        %936 = vmatpush.msra.mxu0 %v637
        %937 = vmatpush.msra.mxu0 %v636
        %938 = vmatpush.msra.mxu0 %v635
        %939 = vmatpush.msra.mxu0 %v634
        %940 = vmatpush.msra.mxu0 %v633
        %941 = vmatpush.msra.mxu0 %v632
        %942 = vmatpush.msra.mxu0 %v631
        %943 = vmatpush.msra.mxu0 %v630
        %944 = vmatmul.f32.gmra.mxu0 %v468
        %v945 = vpop.f32.mrf.mxu0
        %v946 = vadd.f32 %v905, %v945
        %947 = vmatmul.f32.gmra.mxu0 %v477
        %v948 = vpop.f32.mrf.mxu0
        %v949 = vadd.f32 %v908, %v948
        %950 = vmatmul.f32.gmra.mxu0 %v486
        %v951 = vpop.f32.mrf.mxu0
        %v952 = vadd.f32 %v911, %v951
        %953 = vmatmul.f32.gmra.mxu0 %v495
        %v954 = vpop.f32.mrf.mxu0
        %v955 = vadd.f32 %v914, %v954
        %956 = vmatmul.f32.gmra.mxu0 %v504
        %v957 = vpop.f32.mrf.mxu0
        %v958 = vadd.f32 %v917, %v957
        %959 = vmatmul.f32.gmra.mxu0 %v513
        %v960 = vpop.f32.mrf.mxu0
        %v961 = vadd.f32 %v920, %v960
        %962 = vmatmul.f32.gmra.mxu0 %v522
        %v963 = vpop.f32.mrf.mxu0
        %v964 = vadd.f32 %v923, %v963
        %965 = vmatmul.f32.gmra.mxu0 %v531
        %v966 = vpop.f32.mrf.mxu0
        %v967 = vadd.f32 %v926, %v966
        %968 = vdwg.mxu0
        %969 = vmatpush.msra.mxu0 %v661
        %970 = vmatpush.msra.mxu0 %v660
        %971 = vmatpush.msra.mxu0 %v659
        %972 = vmatpush.msra.mxu0 %v658
        %973 = vmatpush.msra.mxu0 %v657
        %974 = vmatpush.msra.mxu0 %v656
        %975 = vmatpush.msra.mxu0 %v655
        %976 = vmatpush.msra.mxu0 %v654
        %977 = vmatpush.msra.mxu0 %v653
        %978 = vmatpush.msra.mxu0 %v652
        %979 = vmatpush.msra.mxu0 %v651
        %980 = vmatpush.msra.mxu0 %v650
        %981 = vmatpush.msra.mxu0 %v649
        %982 = vmatpush.msra.mxu0 %v648
        %983 = vmatpush.msra.mxu0 %v647
        %984 = vmatpush.msra.mxu0 %v646
        %985 = vmatmul.f32.gmra.mxu0 %v469
        %v986 = vpop.f32.mrf.mxu0
        %v987 = vadd.f32 %v946, %v986
        %988 = vmatmul.f32.gmra.mxu0 %v478
        %v989 = vpop.f32.mrf.mxu0
        %v990 = vadd.f32 %v949, %v989
        %991 = vmatmul.f32.gmra.mxu0 %v487
        %v992 = vpop.f32.mrf.mxu0
        %v993 = vadd.f32 %v952, %v992
        %994 = vmatmul.f32.gmra.mxu0 %v496
        %v995 = vpop.f32.mrf.mxu0
        %v996 = vadd.f32 %v955, %v995
        %997 = vmatmul.f32.gmra.mxu0 %v505
        %v998 = vpop.f32.mrf.mxu0
        %v999 = vadd.f32 %v958, %v998
        %1000 = vmatmul.f32.gmra.mxu0 %v514
        %v1001 = vpop.f32.mrf.mxu0
        %v1002 = vadd.f32 %v961, %v1001
        %1003 = vmatmul.f32.gmra.mxu0 %v523
        %v1004 = vpop.f32.mrf.mxu0
        %v1005 = vadd.f32 %v964, %v1004
        %1006 = vmatmul.f32.gmra.mxu0 %v532
        %v1007 = vpop.f32.mrf.mxu0
        %v1008 = vadd.f32 %v967, %v1007
        %1009 = vdwg.mxu0
        %1010 = vmatpush.msra.mxu0 %v677
        %1011 = vmatpush.msra.mxu0 %v676
        %1012 = vmatpush.msra.mxu0 %v675
        %1013 = vmatpush.msra.mxu0 %v674
        %1014 = vmatpush.msra.mxu0 %v673
        %1015 = vmatpush.msra.mxu0 %v672
        %1016 = vmatpush.msra.mxu0 %v671
        %1017 = vmatpush.msra.mxu0 %v670
        %1018 = vmatpush.msra.mxu0 %v669
        %1019 = vmatpush.msra.mxu0 %v668
        %1020 = vmatpush.msra.mxu0 %v667
        %1021 = vmatpush.msra.mxu0 %v666
        %1022 = vmatpush.msra.mxu0 %v665
        %1023 = vmatpush.msra.mxu0 %v664
        %1024 = vmatpush.msra.mxu0 %v663
        %1025 = vmatpush.msra.mxu0 %v662
        %1026 = vmatmul.f32.gmra.mxu0 %v470
        %v1027 = vpop.f32.mrf.mxu0
        %v1028 = vadd.f32 %v987, %v1027
        %1029 = vmatmul.f32.gmra.mxu0 %v479
        %v1030 = vpop.f32.mrf.mxu0
        %v1031 = vadd.f32 %v990, %v1030
        %1032 = vmatmul.f32.gmra.mxu0 %v488
        %v1033 = vpop.f32.mrf.mxu0
        %v1034 = vadd.f32 %v993, %v1033
        %1035 = vmatmul.f32.gmra.mxu0 %v497
        %v1036 = vpop.f32.mrf.mxu0
        %v1037 = vadd.f32 %v996, %v1036
        %1038 = vmatmul.f32.gmra.mxu0 %v506
        %v1039 = vpop.f32.mrf.mxu0
        %v1040 = vadd.f32 %v999, %v1039
        %1041 = vmatmul.f32.gmra.mxu0 %v515
        %v1042 = vpop.f32.mrf.mxu0
        %v1043 = vadd.f32 %v1002, %v1042
        %1044 = vmatmul.f32.gmra.mxu0 %v524
        %v1045 = vpop.f32.mrf.mxu0
        %v1046 = vadd.f32 %v1005, %v1045
        %1047 = vmatmul.f32.gmra.mxu0 %v533
        %v1048 = vpop.f32.mrf.mxu0
        %v1049 = vadd.f32 %v1008, %v1048
        %1050 = vdwg.mxu0
        %v1051 = vmax.f32 %v1028, 0.0
        %v1052 = vmax.f32 %v1031, 0.0
        %v1053 = vmax.f32 %v1034, 0.0
        %v1054 = vmax.f32 %v1037, 0.0
        %v1055 = vmax.f32 %v1040, 0.0
        %v1056 = vmax.f32 %v1043, 0.0
        %v1057 = vmax.f32 %v1046, 0.0
        %v1058 = vmax.f32 %v1049, 0.0
        %1059 = vst [vmem:[#allocation3] sm:$0xff] 0.0
        %1060 = vst [vmem:[#allocation3 + $0x8] sm:$0x3] 0.0
        %1061 = vst [vmem:[#allocation3 + $0x10] sm:$0xff] 0.0
        %1062 = vst [vmem:[#allocation3 + $0x18] sm:$0x3] 0.0
        %1063 = vst [vmem:[#allocation3 + $0x20] sm:$0xff] 0.0
        %1064 = vst [vmem:[#allocation3 + $0x28] sm:$0x3] 0.0
        %1065 = vst [vmem:[#allocation3 + $0x30] sm:$0xff] 0.0
        %1066 = vst [vmem:[#allocation3 + $0x38] sm:$0x3] 0.0
        %1067 = vst [vmem:[#allocation3 + $0x40] sm:$0xff] 0.0
        %1068 = vst [vmem:[#allocation3 + $0x48] sm:$0x3] 0.0
        %1069 = vst [vmem:[#allocation3 + $0x50] sm:$0xff] 0.0
        %1070 = vst [vmem:[#allocation3 + $0x58] sm:$0x3] 0.0
        %1071 = vst [vmem:[#allocation3 + $0x60] sm:$0xff] 0.0
        %1072 = vst [vmem:[#allocation3 + $0x68] sm:$0x3] 0.0
        %1073 = vst [vmem:[#allocation3 + $0x70] sm:$0xff] 0.0
        %1074 = vst [vmem:[#allocation3 + $0x78] sm:$0x3] 0.0
        %1075 = vst [vmem:[#allocation3 + $0x80] sm:$0xff] 0.0
        %1076 = vst [vmem:[#allocation3 + $0x88] sm:$0x3] 0.0
        %1077 = vst [vmem:[#allocation3 + $0x90] sm:$0xff] 0.0
        %1078 = vst [vmem:[#allocation3 + $0x98] sm:$0x3] 0.0
        %1079 = vst [vmem:[%s308 + $0x1] sm:$0xff] %v1051
        %1080 = vst [vmem:[%s308 + $0x11] sm:$0xff] %v1052
        %1081 = vst [vmem:[%s308 + $0x21] sm:$0xff] %v1053
        %1082 = vst [vmem:[%s308 + $0x31] sm:$0xff] %v1054
        %1083 = vst [vmem:[%s308 + $0x41] sm:$0xff] %v1055
        %1084 = vst [vmem:[%s308 + $0x51] sm:$0xff] %v1056
        %1085 = vst [vmem:[%s308 + $0x61] sm:$0xff] %v1057
        %1086 = vst [vmem:[%s308 + $0x71] sm:$0xff] %v1058
        %v1087 = vld [vmem:[#allocation3] sm:$0xff]
        %v1088 = vld [vmem:[#allocation3 + $0x10] sm:$0xff]
        %v1089 = vld [vmem:[#allocation3 + $0x20] sm:$0xff]
        %v1090 = vld [vmem:[#allocation3 + $0x30] sm:$0xff]
        %v1091 = vld [vmem:[#allocation3 + $0x40] sm:$0xff]
        %v1092 = vld [vmem:[#allocation3 + $0x50] sm:$0xff]
        %v1093 = vld [vmem:[#allocation3 + $0x60] sm:$0xff]
        %v1094 = vld [vmem:[#allocation3 + $0x70] sm:$0xff]
        %1095 = vst [vmem:[#allocation4] sm:$0xff] %v1087
        %1096 = vst [vmem:[#allocation4 + $0x48] sm:$0xff] %v1088
        %1097 = vst [vmem:[#allocation4 + $0x90] sm:$0xff] %v1089
        %1098 = vst [vmem:[#allocation4 + $0xd8] sm:$0xff] %v1090
        %1099 = vst [vmem:[#allocation4 + $0x120] sm:$0xff] %v1091
        %1100 = vst [vmem:[#allocation4 + $0x168] sm:$0xff] %v1092
        %1101 = vst [vmem:[#allocation4 + $0x1b0] sm:$0xff] %v1093
        %1102 = vst [vmem:[#allocation4 + $0x1f8] sm:$0xff] %v1094
        %v1103 = vld [vmem:[#allocation3 + $0x1] sm:$0xff]
        %v1104 = vld [vmem:[#allocation3 + $0x11] sm:$0xff]
        %v1105 = vld [vmem:[#allocation3 + $0x21] sm:$0xff]
        %v1106 = vld [vmem:[#allocation3 + $0x31] sm:$0xff]
        %v1107 = vld [vmem:[#allocation3 + $0x41] sm:$0xff]
        %v1108 = vld [vmem:[#allocation3 + $0x51] sm:$0xff]
        %v1109 = vld [vmem:[#allocation3 + $0x61] sm:$0xff]
        %v1110 = vld [vmem:[#allocation3 + $0x71] sm:$0xff]
        %1111 = vst [vmem:[#allocation4 + $0x8] sm:$0xff] %v1103
        %1112 = vst [vmem:[#allocation4 + $0x50] sm:$0xff] %v1104
        %1113 = vst [vmem:[#allocation4 + $0x98] sm:$0xff] %v1105
        %1114 = vst [vmem:[#allocation4 + $0xe0] sm:$0xff] %v1106
        %1115 = vst [vmem:[#allocation4 + $0x128] sm:$0xff] %v1107
        %1116 = vst [vmem:[#allocation4 + $0x170] sm:$0xff] %v1108
        %1117 = vst [vmem:[#allocation4 + $0x1b8] sm:$0xff] %v1109
        %1118 = vst [vmem:[#allocation4 + $0x200] sm:$0xff] %v1110
        %v1119 = vld [vmem:[#allocation3 + $0x2] sm:$0xff]
        %v1120 = vld [vmem:[#allocation3 + $0x12] sm:$0xff]
        %v1121 = vld [vmem:[#allocation3 + $0x22] sm:$0xff]
        %v1122 = vld [vmem:[#allocation3 + $0x32] sm:$0xff]
        %v1123 = vld [vmem:[#allocation3 + $0x42] sm:$0xff]
        %v1124 = vld [vmem:[#allocation3 + $0x52] sm:$0xff]
        %v1125 = vld [vmem:[#allocation3 + $0x62] sm:$0xff]
        %v1126 = vld [vmem:[#allocation3 + $0x72] sm:$0xff]
        %1127 = vst [vmem:[#allocation4 + $0x10] sm:$0xff] %v1119
        %1128 = vst [vmem:[#allocation4 + $0x58] sm:$0xff] %v1120
        %1129 = vst [vmem:[#allocation4 + $0xa0] sm:$0xff] %v1121
        %1130 = vst [vmem:[#allocation4 + $0xe8] sm:$0xff] %v1122
        %1131 = vst [vmem:[#allocation4 + $0x130] sm:$0xff] %v1123
        %1132 = vst [vmem:[#allocation4 + $0x178] sm:$0xff] %v1124
        %1133 = vst [vmem:[#allocation4 + $0x1c0] sm:$0xff] %v1125
        %1134 = vst [vmem:[#allocation4 + $0x208] sm:$0xff] %v1126
        %v1135 = vld [vmem:[%s308] sm:$0xff]
        %v1136 = vld [vmem:[%s308 + $0x10] sm:$0xff]
        %v1137 = vld [vmem:[%s308 + $0x20] sm:$0xff]
        %v1138 = vld [vmem:[%s308 + $0x30] sm:$0xff]
        %v1139 = vld [vmem:[%s308 + $0x40] sm:$0xff]
        %v1140 = vld [vmem:[%s308 + $0x50] sm:$0xff]
        %v1141 = vld [vmem:[%s308 + $0x60] sm:$0xff]
        %v1142 = vld [vmem:[%s308 + $0x70] sm:$0xff]
        %1143 = vst [vmem:[#allocation4 + $0x18] sm:$0xff] %v1135
        %1144 = vst [vmem:[#allocation4 + $0x60] sm:$0xff] %v1136
        %1145 = vst [vmem:[#allocation4 + $0xa8] sm:$0xff] %v1137
        %1146 = vst [vmem:[#allocation4 + $0xf0] sm:$0xff] %v1138
        %1147 = vst [vmem:[#allocation4 + $0x138] sm:$0xff] %v1139
        %1148 = vst [vmem:[#allocation4 + $0x180] sm:$0xff] %v1140
        %1149 = vst [vmem:[#allocation4 + $0x1c8] sm:$0xff] %v1141
        %1150 = vst [vmem:[#allocation4 + $0x210] sm:$0xff] %v1142
        %v1151 = vld [vmem:[%s308 + $0x1] sm:$0xff]
        %v1152 = vld [vmem:[%s308 + $0x11] sm:$0xff]
        %v1153 = vld [vmem:[%s308 + $0x21] sm:$0xff]
        %v1154 = vld [vmem:[%s308 + $0x31] sm:$0xff]
        %v1155 = vld [vmem:[%s308 + $0x41] sm:$0xff]
        %v1156 = vld [vmem:[%s308 + $0x51] sm:$0xff]
        %v1157 = vld [vmem:[%s308 + $0x61] sm:$0xff]
        %v1158 = vld [vmem:[%s308 + $0x71] sm:$0xff]
        %1159 = vst [vmem:[#allocation4 + $0x20] sm:$0xff] %v1151
        %1160 = vst [vmem:[#allocation4 + $0x68] sm:$0xff] %v1152
        %1161 = vst [vmem:[#allocation4 + $0xb0] sm:$0xff] %v1153
        %1162 = vst [vmem:[#allocation4 + $0xf8] sm:$0xff] %v1154
        %1163 = vst [vmem:[#allocation4 + $0x140] sm:$0xff] %v1155
        %1164 = vst [vmem:[#allocation4 + $0x188] sm:$0xff] %v1156
        %1165 = vst [vmem:[#allocation4 + $0x1d0] sm:$0xff] %v1157
        %1166 = vst [vmem:[#allocation4 + $0x218] sm:$0xff] %v1158
        %v1167 = vld [vmem:[%s308 + $0x2] sm:$0xff]
        %v1168 = vld [vmem:[%s308 + $0x12] sm:$0xff]
        %v1169 = vld [vmem:[%s308 + $0x22] sm:$0xff]
        %v1170 = vld [vmem:[%s308 + $0x32] sm:$0xff]
        %v1171 = vld [vmem:[%s308 + $0x42] sm:$0xff]
        %v1172 = vld [vmem:[%s308 + $0x52] sm:$0xff]
        %v1173 = vld [vmem:[%s308 + $0x62] sm:$0xff]
        %v1174 = vld [vmem:[%s308 + $0x72] sm:$0xff]
        %1175 = vst [vmem:[#allocation4 + $0x28] sm:$0xff] %v1167
        %1176 = vst [vmem:[#allocation4 + $0x70] sm:$0xff] %v1168
        %1177 = vst [vmem:[#allocation4 + $0xb8] sm:$0xff] %v1169
        %1178 = vst [vmem:[#allocation4 + $0x100] sm:$0xff] %v1170
        %1179 = vst [vmem:[#allocation4 + $0x148] sm:$0xff] %v1171
        %1180 = vst [vmem:[#allocation4 + $0x190] sm:$0xff] %v1172
        %1181 = vst [vmem:[#allocation4 + $0x1d8] sm:$0xff] %v1173
        %1182 = vst [vmem:[#allocation4 + $0x220] sm:$0xff] %v1174
        %v1183 = vld [vmem:[%s413] sm:$0xff]
        %v1184 = vld [vmem:[%s413 + $0x10] sm:$0xff]
        %v1185 = vld [vmem:[%s413 + $0x20] sm:$0xff]
        %v1186 = vld [vmem:[%s413 + $0x30] sm:$0xff]
        %v1187 = vld [vmem:[%s413 + $0x40] sm:$0xff]
        %v1188 = vld [vmem:[%s413 + $0x50] sm:$0xff]
        %v1189 = vld [vmem:[%s413 + $0x60] sm:$0xff]
        %v1190 = vld [vmem:[%s413 + $0x70] sm:$0xff]
        %1191 = vst [vmem:[#allocation4 + $0x30] sm:$0xff] %v1183
        %1192 = vst [vmem:[#allocation4 + $0x78] sm:$0xff] %v1184
        %1193 = vst [vmem:[#allocation4 + $0xc0] sm:$0xff] %v1185
        %1194 = vst [vmem:[#allocation4 + $0x108] sm:$0xff] %v1186
        %1195 = vst [vmem:[#allocation4 + $0x150] sm:$0xff] %v1187
        %1196 = vst [vmem:[#allocation4 + $0x198] sm:$0xff] %v1188
        %1197 = vst [vmem:[#allocation4 + $0x1e0] sm:$0xff] %v1189
        %1198 = vst [vmem:[#allocation4 + $0x228] sm:$0xff] %v1190
        %v1199 = vld [vmem:[%s413 + $0x1] sm:$0xff]
        %v1200 = vld [vmem:[%s413 + $0x11] sm:$0xff]
        %v1201 = vld [vmem:[%s413 + $0x21] sm:$0xff]
        %v1202 = vld [vmem:[%s413 + $0x31] sm:$0xff]
        %v1203 = vld [vmem:[%s413 + $0x41] sm:$0xff]
        %v1204 = vld [vmem:[%s413 + $0x51] sm:$0xff]
        %v1205 = vld [vmem:[%s413 + $0x61] sm:$0xff]
        %v1206 = vld [vmem:[%s413 + $0x71] sm:$0xff]
        %1207 = vst [vmem:[#allocation4 + $0x38] sm:$0xff] %v1199
        %1208 = vst [vmem:[#allocation4 + $0x80] sm:$0xff] %v1200
        %1209 = vst [vmem:[#allocation4 + $0xc8] sm:$0xff] %v1201
        %1210 = vst [vmem:[#allocation4 + $0x110] sm:$0xff] %v1202
        %1211 = vst [vmem:[#allocation4 + $0x158] sm:$0xff] %v1203
        %1212 = vst [vmem:[#allocation4 + $0x1a0] sm:$0xff] %v1204
        %1213 = vst [vmem:[#allocation4 + $0x1e8] sm:$0xff] %v1205
        %1214 = vst [vmem:[#allocation4 + $0x230] sm:$0xff] %v1206
        %v1215 = vld [vmem:[%s413 + $0x2] sm:$0xff]
        %v1216 = vld [vmem:[%s413 + $0x12] sm:$0xff]
        %v1217 = vld [vmem:[%s413 + $0x22] sm:$0xff]
        %v1218 = vld [vmem:[%s413 + $0x32] sm:$0xff]
        %v1219 = vld [vmem:[%s413 + $0x42] sm:$0xff]
        %v1220 = vld [vmem:[%s413 + $0x52] sm:$0xff]
        %v1221 = vld [vmem:[%s413 + $0x62] sm:$0xff]
        %v1222 = vld [vmem:[%s413 + $0x72] sm:$0xff]
        %1223 = vst [vmem:[#allocation4 + $0x40] sm:$0xff] %v1215
        %1224 = vst [vmem:[#allocation4 + $0x88] sm:$0xff] %v1216
        %1225 = vst [vmem:[#allocation4 + $0xd0] sm:$0xff] %v1217
        %1226 = vst [vmem:[#allocation4 + $0x118] sm:$0xff] %v1218
        %1227 = vst [vmem:[#allocation4 + $0x160] sm:$0xff] %v1219
        %1228 = vst [vmem:[#allocation4 + $0x1a8] sm:$0xff] %v1220
        %1229 = vst [vmem:[#allocation4 + $0x1f0] sm:$0xff] %v1221
        %1230 = vst [vmem:[#allocation4 + $0x238] sm:$0xff] %v1222
        %v1231 = vld [vmem:[#allocation4] sm:$0xff]
        %v1232 = vld [vmem:[#allocation4 + $0x8] sm:$0xff]
        %v1233 = vld [vmem:[#allocation4 + $0x10] sm:$0xff]
        %v1234 = vld [vmem:[#allocation4 + $0x18] sm:$0xff]
        %v1235 = vld [vmem:[#allocation4 + $0x20] sm:$0xff]
        %v1236 = vld [vmem:[#allocation4 + $0x28] sm:$0xff]
        %v1237 = vld [vmem:[#allocation4 + $0x30] sm:$0xff]
        %v1238 = vld [vmem:[#allocation4 + $0x38] sm:$0xff]
        %v1239 = vld [vmem:[#allocation4 + $0x40] sm:$0xff]
        %v1240 = vld [vmem:[#allocation4 + $0x48] sm:$0xff]
        %v1241 = vld [vmem:[#allocation4 + $0x50] sm:$0xff]
        %v1242 = vld [vmem:[#allocation4 + $0x58] sm:$0xff]
        %v1243 = vld [vmem:[#allocation4 + $0x60] sm:$0xff]
        %v1244 = vld [vmem:[#allocation4 + $0x68] sm:$0xff]
        %v1245 = vld [vmem:[#allocation4 + $0x70] sm:$0xff]
        %v1246 = vld [vmem:[#allocation4 + $0x78] sm:$0xff]
        %v1247 = vld [vmem:[#allocation4 + $0x80] sm:$0xff]
        %v1248 = vld [vmem:[#allocation4 + $0x88] sm:$0xff]
        %v1249 = vld [vmem:[#allocation4 + $0x90] sm:$0xff]
        %v1250 = vld [vmem:[#allocation4 + $0x98] sm:$0xff]
        %v1251 = vld [vmem:[#allocation4 + $0xa0] sm:$0xff]
        %v1252 = vld [vmem:[#allocation4 + $0xa8] sm:$0xff]
        %v1253 = vld [vmem:[#allocation4 + $0xb0] sm:$0xff]
        %v1254 = vld [vmem:[#allocation4 + $0xb8] sm:$0xff]
        %v1255 = vld [vmem:[#allocation4 + $0xc0] sm:$0xff]
        %v1256 = vld [vmem:[#allocation4 + $0xc8] sm:$0xff]
        %v1257 = vld [vmem:[#allocation4 + $0xd0] sm:$0xff]
        %v1258 = vld [vmem:[#allocation4 + $0xd8] sm:$0xff]
        %v1259 = vld [vmem:[#allocation4 + $0xe0] sm:$0xff]
        %v1260 = vld [vmem:[#allocation4 + $0xe8] sm:$0xff]
        %v1261 = vld [vmem:[#allocation4 + $0xf0] sm:$0xff]
        %v1262 = vld [vmem:[#allocation4 + $0xf8] sm:$0xff]
        %v1263 = vld [vmem:[#allocation4 + $0x100] sm:$0xff]
        %v1264 = vld [vmem:[#allocation4 + $0x108] sm:$0xff]
        %v1265 = vld [vmem:[#allocation4 + $0x110] sm:$0xff]
        %v1266 = vld [vmem:[#allocation4 + $0x118] sm:$0xff]
        %v1267 = vld [vmem:[#allocation4 + $0x120] sm:$0xff]
        %v1268 = vld [vmem:[#allocation4 + $0x128] sm:$0xff]
        %v1269 = vld [vmem:[#allocation4 + $0x130] sm:$0xff]
        %v1270 = vld [vmem:[#allocation4 + $0x138] sm:$0xff]
        %v1271 = vld [vmem:[#allocation4 + $0x140] sm:$0xff]
        %v1272 = vld [vmem:[#allocation4 + $0x148] sm:$0xff]
        %v1273 = vld [vmem:[#allocation4 + $0x150] sm:$0xff]
        %v1274 = vld [vmem:[#allocation4 + $0x158] sm:$0xff]
        %v1275 = vld [vmem:[#allocation4 + $0x160] sm:$0xff]
        %v1276 = vld [vmem:[#allocation4 + $0x168] sm:$0xff]
        %v1277 = vld [vmem:[#allocation4 + $0x170] sm:$0xff]
        %v1278 = vld [vmem:[#allocation4 + $0x178] sm:$0xff]
        %v1279 = vld [vmem:[#allocation4 + $0x180] sm:$0xff]
        %v1280 = vld [vmem:[#allocation4 + $0x188] sm:$0xff]
        %v1281 = vld [vmem:[#allocation4 + $0x190] sm:$0xff]
        %v1282 = vld [vmem:[#allocation4 + $0x198] sm:$0xff]
        %v1283 = vld [vmem:[#allocation4 + $0x1a0] sm:$0xff]
        %v1284 = vld [vmem:[#allocation4 + $0x1a8] sm:$0xff]
        %v1285 = vld [vmem:[#allocation4 + $0x1b0] sm:$0xff]
        %v1286 = vld [vmem:[#allocation4 + $0x1b8] sm:$0xff]
        %v1287 = vld [vmem:[#allocation4 + $0x1c0] sm:$0xff]
        %v1288 = vld [vmem:[#allocation4 + $0x1c8] sm:$0xff]
        %v1289 = vld [vmem:[#allocation4 + $0x1d0] sm:$0xff]
        %v1290 = vld [vmem:[#allocation4 + $0x1d8] sm:$0xff]
        %v1291 = vld [vmem:[#allocation4 + $0x1e0] sm:$0xff]
        %v1292 = vld [vmem:[#allocation4 + $0x1e8] sm:$0xff]
        %v1293 = vld [vmem:[#allocation4 + $0x1f0] sm:$0xff]
        %v1294 = vld [vmem:[#allocation4 + $0x1f8] sm:$0xff]
        %v1295 = vld [vmem:[#allocation4 + $0x200] sm:$0xff]
        %v1296 = vld [vmem:[#allocation4 + $0x208] sm:$0xff]
        %v1297 = vld [vmem:[#allocation4 + $0x210] sm:$0xff]
        %v1298 = vld [vmem:[#allocation4 + $0x218] sm:$0xff]
        %v1299 = vld [vmem:[#allocation4 + $0x220] sm:$0xff]
        %v1300 = vld [vmem:[#allocation4 + $0x228] sm:$0xff]
        %v1301 = vld [vmem:[#allocation4 + $0x230] sm:$0xff]
        %v1302 = vld [vmem:[#allocation4 + $0x238] sm:$0xff]
        %v1303 = vld [vmem:[%s208] sm:$0xff]
        %v1304 = vld [vmem:[%s208 + $0x8] sm:$0xff]
        %v1305 = vld [vmem:[%s208 + $0x10] sm:$0xff]
        %v1306 = vld [vmem:[%s208 + $0x18] sm:$0xff]
        %v1307 = vld [vmem:[%s208 + $0x20] sm:$0xff]
        %v1308 = vld [vmem:[%s208 + $0x28] sm:$0xff]
        %v1309 = vld [vmem:[%s208 + $0x30] sm:$0xff]
        %v1310 = vld [vmem:[%s208 + $0x38] sm:$0xff]
        %v1311 = vld [vmem:[%s208 + $0x40] sm:$0xff]
        %v1312 = vld [vmem:[%s208 + $0x48] sm:$0xff]
        %v1313 = vld [vmem:[%s208 + $0x50] sm:$0xff]
        %v1314 = vld [vmem:[%s208 + $0x58] sm:$0xff]
        %v1315 = vld [vmem:[%s208 + $0x60] sm:$0xff]
        %v1316 = vld [vmem:[%s208 + $0x68] sm:$0xff]
        %v1317 = vld [vmem:[%s208 + $0x70] sm:$0xff]
        %v1318 = vld [vmem:[%s208 + $0x78] sm:$0xff]
        %v1319 = vld [vmem:[%s208 + $0x80] sm:$0xff]
        %v1320 = vld [vmem:[%s208 + $0x88] sm:$0xff]
        %v1321 = vld [vmem:[%s208 + $0x90] sm:$0xff]
        %v1322 = vld [vmem:[%s208 + $0x98] sm:$0xff]
        %v1323 = vld [vmem:[%s208 + $0xa0] sm:$0xff]
        %v1324 = vld [vmem:[%s208 + $0xa8] sm:$0xff]
        %v1325 = vld [vmem:[%s208 + $0xb0] sm:$0xff]
        %v1326 = vld [vmem:[%s208 + $0xb8] sm:$0xff]
        %v1327 = vld [vmem:[%s208 + $0xc0] sm:$0xff]
        %v1328 = vld [vmem:[%s208 + $0xc8] sm:$0xff]
        %v1329 = vld [vmem:[%s208 + $0xd0] sm:$0xff]
        %v1330 = vld [vmem:[%s208 + $0xd8] sm:$0xff]
        %v1331 = vld [vmem:[%s208 + $0xe0] sm:$0xff]
        %v1332 = vld [vmem:[%s208 + $0xe8] sm:$0xff]
        %v1333 = vld [vmem:[%s208 + $0xf0] sm:$0xff]
        %v1334 = vld [vmem:[%s208 + $0xf8] sm:$0xff]
        %v1335 = vld [vmem:[%s208 + $0x100] sm:$0xff]
        %v1336 = vld [vmem:[%s208 + $0x108] sm:$0xff]
        %v1337 = vld [vmem:[%s208 + $0x110] sm:$0xff]
        %v1338 = vld [vmem:[%s208 + $0x118] sm:$0xff]
        %v1339 = vld [vmem:[%s208 + $0x120] sm:$0xff]
        %v1340 = vld [vmem:[%s208 + $0x128] sm:$0xff]
        %v1341 = vld [vmem:[%s208 + $0x130] sm:$0xff]
        %v1342 = vld [vmem:[%s208 + $0x138] sm:$0xff]
        %v1343 = vld [vmem:[%s208 + $0x140] sm:$0xff]
        %v1344 = vld [vmem:[%s208 + $0x148] sm:$0xff]
        %v1345 = vld [vmem:[%s208 + $0x150] sm:$0xff]
        %v1346 = vld [vmem:[%s208 + $0x158] sm:$0xff]
        %v1347 = vld [vmem:[%s208 + $0x160] sm:$0xff]
        %v1348 = vld [vmem:[%s208 + $0x168] sm:$0xff]
        %v1349 = vld [vmem:[%s208 + $0x170] sm:$0xff]
        %v1350 = vld [vmem:[%s208 + $0x178] sm:$0xff]
        %v1351 = vld [vmem:[%s208 + $0x180] sm:$0xff]
        %v1352 = vld [vmem:[%s208 + $0x188] sm:$0xff]
        %v1353 = vld [vmem:[%s208 + $0x190] sm:$0xff]
        %v1354 = vld [vmem:[%s208 + $0x198] sm:$0xff]
        %v1355 = vld [vmem:[%s208 + $0x1a0] sm:$0xff]
        %v1356 = vld [vmem:[%s208 + $0x1a8] sm:$0xff]
        %v1357 = vld [vmem:[%s208 + $0x1b0] sm:$0xff]
        %v1358 = vld [vmem:[%s208 + $0x1b8] sm:$0xff]
        %v1359 = vld [vmem:[%s208 + $0x1c0] sm:$0xff]
        %v1360 = vld [vmem:[%s208 + $0x1c8] sm:$0xff]
        %v1361 = vld [vmem:[%s208 + $0x1d0] sm:$0xff]
        %v1362 = vld [vmem:[%s208 + $0x1d8] sm:$0xff]
        %v1363 = vld [vmem:[%s208 + $0x1e0] sm:$0xff]
        %v1364 = vld [vmem:[%s208 + $0x1e8] sm:$0xff]
        %v1365 = vld [vmem:[%s208 + $0x1f0] sm:$0xff]
        %v1366 = vld [vmem:[%s208 + $0x1f8] sm:$0xff]
        %v1367 = vld [vmem:[%s208 + $0x200] sm:$0xff]
        %v1368 = vld [vmem:[%s208 + $0x208] sm:$0xff]
        %v1369 = vld [vmem:[%s208 + $0x210] sm:$0xff]
        %v1370 = vld [vmem:[%s208 + $0x218] sm:$0xff]
        %v1371 = vld [vmem:[%s208 + $0x220] sm:$0xff]
        %v1372 = vld [vmem:[%s208 + $0x228] sm:$0xff]
        %v1373 = vld [vmem:[%s208 + $0x230] sm:$0xff]
        %v1374 = vld [vmem:[%s208 + $0x238] sm:$0xff]
        %v1375 = vld [vmem:[%s208 + $0x240] sm:$0xff]
        %v1376 = vld [vmem:[%s208 + $0x248] sm:$0xff]
        %v1377 = vld [vmem:[%s208 + $0x250] sm:$0xff]
        %v1378 = vld [vmem:[%s208 + $0x258] sm:$0xff]
        %v1379 = vld [vmem:[%s208 + $0x260] sm:$0xff]
        %v1380 = vld [vmem:[%s208 + $0x268] sm:$0xff]
        %v1381 = vld [vmem:[%s208 + $0x270] sm:$0xff]
        %v1382 = vld [vmem:[%s208 + $0x278] sm:$0xff]
        %v1383 = vld [vmem:[%s208 + $0x280] sm:$0xff]
        %v1384 = vld [vmem:[%s208 + $0x288] sm:$0xff]
        %v1385 = vld [vmem:[%s208 + $0x290] sm:$0xff]
        %v1386 = vld [vmem:[%s208 + $0x298] sm:$0xff]
        %v1387 = vld [vmem:[%s208 + $0x2a0] sm:$0xff]
        %v1388 = vld [vmem:[%s208 + $0x2a8] sm:$0xff]
        %v1389 = vld [vmem:[%s208 + $0x2b0] sm:$0xff]
        %v1390 = vld [vmem:[%s208 + $0x2b8] sm:$0xff]
        %v1391 = vld [vmem:[%s208 + $0x2c0] sm:$0xff]
        %v1392 = vld [vmem:[%s208 + $0x2c8] sm:$0xff]
        %v1393 = vld [vmem:[%s208 + $0x2d0] sm:$0xff]
        %v1394 = vld [vmem:[%s208 + $0x2d8] sm:$0xff]
        %v1395 = vld [vmem:[%s208 + $0x2e0] sm:$0xff]
        %v1396 = vld [vmem:[%s208 + $0x2e8] sm:$0xff]
        %v1397 = vld [vmem:[%s208 + $0x2f0] sm:$0xff]
        %v1398 = vld [vmem:[%s208 + $0x2f8] sm:$0xff]
        %v1399 = vld [vmem:[%s208 + $0x300] sm:$0xff]
        %v1400 = vld [vmem:[%s208 + $0x308] sm:$0xff]
        %v1401 = vld [vmem:[%s208 + $0x310] sm:$0xff]
        %v1402 = vld [vmem:[%s208 + $0x318] sm:$0xff]
        %v1403 = vld [vmem:[%s208 + $0x320] sm:$0xff]
        %v1404 = vld [vmem:[%s208 + $0x328] sm:$0xff]
        %v1405 = vld [vmem:[%s208 + $0x330] sm:$0xff]
        %v1406 = vld [vmem:[%s208 + $0x338] sm:$0xff]
        %v1407 = vld [vmem:[%s208 + $0x340] sm:$0xff]
        %v1408 = vld [vmem:[%s208 + $0x348] sm:$0xff]
        %v1409 = vld [vmem:[%s208 + $0x350] sm:$0xff]
        %v1410 = vld [vmem:[%s208 + $0x358] sm:$0xff]
        %v1411 = vld [vmem:[%s208 + $0x360] sm:$0xff]
        %v1412 = vld [vmem:[%s208 + $0x368] sm:$0xff]
        %v1413 = vld [vmem:[%s208 + $0x370] sm:$0xff]
        %v1414 = vld [vmem:[%s208 + $0x378] sm:$0xff]
        %v1415 = vld [vmem:[%s208 + $0x380] sm:$0xff]
        %v1416 = vld [vmem:[%s208 + $0x388] sm:$0xff]
        %v1417 = vld [vmem:[%s208 + $0x390] sm:$0xff]
        %v1418 = vld [vmem:[%s208 + $0x398] sm:$0xff]
        %v1419 = vld [vmem:[%s208 + $0x3a0] sm:$0xff]
        %v1420 = vld [vmem:[%s208 + $0x3a8] sm:$0xff]
        %v1421 = vld [vmem:[%s208 + $0x3b0] sm:$0xff]
        %v1422 = vld [vmem:[%s208 + $0x3b8] sm:$0xff]
        %v1423 = vld [vmem:[%s208 + $0x3c0] sm:$0xff]
        %v1424 = vld [vmem:[%s208 + $0x3c8] sm:$0xff]
        %v1425 = vld [vmem:[%s208 + $0x3d0] sm:$0xff]
        %v1426 = vld [vmem:[%s208 + $0x3d8] sm:$0xff]
        %v1427 = vld [vmem:[%s208 + $0x3e0] sm:$0xff]
        %v1428 = vld [vmem:[%s208 + $0x3e8] sm:$0xff]
        %v1429 = vld [vmem:[%s208 + $0x3f0] sm:$0xff]
        %v1430 = vld [vmem:[%s208 + $0x3f8] sm:$0xff]
        %v1431 = vld [vmem:[%s208 + $0x400] sm:$0xff]
        %v1432 = vld [vmem:[%s208 + $0x408] sm:$0xff]
        %v1433 = vld [vmem:[%s208 + $0x410] sm:$0xff]
        %v1434 = vld [vmem:[%s208 + $0x418] sm:$0xff]
        %v1435 = vld [vmem:[%s208 + $0x420] sm:$0xff]
        %v1436 = vld [vmem:[%s208 + $0x428] sm:$0xff]
        %v1437 = vld [vmem:[%s208 + $0x430] sm:$0xff]
        %v1438 = vld [vmem:[%s208 + $0x438] sm:$0xff]
        %v1439 = vld [vmem:[%s208 + $0x440] sm:$0xff]
        %v1440 = vld [vmem:[%s208 + $0x448] sm:$0xff]
        %v1441 = vld [vmem:[%s208 + $0x450] sm:$0xff]
        %v1442 = vld [vmem:[%s208 + $0x458] sm:$0xff]
        %v1443 = vld [vmem:[%s208 + $0x460] sm:$0xff]
        %v1444 = vld [vmem:[%s208 + $0x468] sm:$0xff]
        %v1445 = vld [vmem:[%s208 + $0x470] sm:$0xff]
        %v1446 = vld [vmem:[%s208 + $0x478] sm:$0xff]
        %v1447 = vld [vmem:[%s217] sm:$0x1]
        %v1449 = vperm.slane %v1447, 0
        %1451 = vmatpush.msra.mxu0 %v1318
        %1452 = vmatpush.msra.mxu0 %v1317
        %1453 = vmatpush.msra.mxu0 %v1316
        %1454 = vmatpush.msra.mxu0 %v1315
        %1455 = vmatpush.msra.mxu0 %v1314
        %1456 = vmatpush.msra.mxu0 %v1313
        %1457 = vmatpush.msra.mxu0 %v1312
        %1458 = vmatpush.msra.mxu0 %v1311
        %1459 = vmatpush.msra.mxu0 %v1310
        %1460 = vmatpush.msra.mxu0 %v1309
        %1461 = vmatpush.msra.mxu0 %v1308
        %1462 = vmatpush.msra.mxu0 %v1307
        %1463 = vmatpush.msra.mxu0 %v1306
        %1464 = vmatpush.msra.mxu0 %v1305
        %1465 = vmatpush.msra.mxu0 %v1304
        %1466 = vmatpush.msra.mxu0 %v1303
        %1467 = vmatmul.f32.gmra.mxu0 %v1231
        %v1468 = vpop.f32.mrf.mxu0
        %v1469 = vadd.f32 %v1449, %v1468
        %1470 = vmatmul.f32.gmra.mxu0 %v1240
        %v1471 = vpop.f32.mrf.mxu0
        %v1472 = vadd.f32 %v1449, %v1471
        %1473 = vmatmul.f32.gmra.mxu0 %v1249
        %v1474 = vpop.f32.mrf.mxu0
        %v1475 = vadd.f32 %v1449, %v1474
        %1476 = vmatmul.f32.gmra.mxu0 %v1258
        %v1477 = vpop.f32.mrf.mxu0
        %v1478 = vadd.f32 %v1449, %v1477
        %1479 = vmatmul.f32.gmra.mxu0 %v1267
        %v1480 = vpop.f32.mrf.mxu0
        %v1481 = vadd.f32 %v1449, %v1480
        %1482 = vmatmul.f32.gmra.mxu0 %v1276
        %v1483 = vpop.f32.mrf.mxu0
        %v1484 = vadd.f32 %v1449, %v1483
        %1485 = vmatmul.f32.gmra.mxu0 %v1285
        %v1486 = vpop.f32.mrf.mxu0
        %v1487 = vadd.f32 %v1449, %v1486
        %1488 = vmatmul.f32.gmra.mxu0 %v1294
        %v1489 = vpop.f32.mrf.mxu0
        %v1490 = vadd.f32 %v1449, %v1489
        %1491 = vdwg.mxu0
        %1492 = vmatpush.msra.mxu0 %v1334
        %1493 = vmatpush.msra.mxu0 %v1333
        %1494 = vmatpush.msra.mxu0 %v1332
        %1495 = vmatpush.msra.mxu0 %v1331
        %1496 = vmatpush.msra.mxu0 %v1330
        %1497 = vmatpush.msra.mxu0 %v1329
        %1498 = vmatpush.msra.mxu0 %v1328
        %1499 = vmatpush.msra.mxu0 %v1327
        %1500 = vmatpush.msra.mxu0 %v1326
        %1501 = vmatpush.msra.mxu0 %v1325
        %1502 = vmatpush.msra.mxu0 %v1324
        %1503 = vmatpush.msra.mxu0 %v1323
        %1504 = vmatpush.msra.mxu0 %v1322
        %1505 = vmatpush.msra.mxu0 %v1321
        %1506 = vmatpush.msra.mxu0 %v1320
        %1507 = vmatpush.msra.mxu0 %v1319
        %1508 = vmatmul.f32.gmra.mxu0 %v1232
        %v1509 = vpop.f32.mrf.mxu0
        %v1510 = vadd.f32 %v1469, %v1509
        %1511 = vmatmul.f32.gmra.mxu0 %v1241
        %v1512 = vpop.f32.mrf.mxu0
        %v1513 = vadd.f32 %v1472, %v1512
        %1514 = vmatmul.f32.gmra.mxu0 %v1250
        %v1515 = vpop.f32.mrf.mxu0
        %v1516 = vadd.f32 %v1475, %v1515
        %1517 = vmatmul.f32.gmra.mxu0 %v1259
        %v1518 = vpop.f32.mrf.mxu0
        %v1519 = vadd.f32 %v1478, %v1518
        %1520 = vmatmul.f32.gmra.mxu0 %v1268
        %v1521 = vpop.f32.mrf.mxu0
        %v1522 = vadd.f32 %v1481, %v1521
        %1523 = vmatmul.f32.gmra.mxu0 %v1277
        %v1524 = vpop.f32.mrf.mxu0
        %v1525 = vadd.f32 %v1484, %v1524
        %1526 = vmatmul.f32.gmra.mxu0 %v1286
        %v1527 = vpop.f32.mrf.mxu0
        %v1528 = vadd.f32 %v1487, %v1527
        %1529 = vmatmul.f32.gmra.mxu0 %v1295
        %v1530 = vpop.f32.mrf.mxu0
        %v1531 = vadd.f32 %v1490, %v1530
        %1532 = vdwg.mxu0
        %1533 = vmatpush.msra.mxu0 %v1350
        %1534 = vmatpush.msra.mxu0 %v1349
        %1535 = vmatpush.msra.mxu0 %v1348
        %1536 = vmatpush.msra.mxu0 %v1347
        %1537 = vmatpush.msra.mxu0 %v1346
        %1538 = vmatpush.msra.mxu0 %v1345
        %1539 = vmatpush.msra.mxu0 %v1344
        %1540 = vmatpush.msra.mxu0 %v1343
        %1541 = vmatpush.msra.mxu0 %v1342
        %1542 = vmatpush.msra.mxu0 %v1341
        %1543 = vmatpush.msra.mxu0 %v1340
        %1544 = vmatpush.msra.mxu0 %v1339
        %1545 = vmatpush.msra.mxu0 %v1338
        %1546 = vmatpush.msra.mxu0 %v1337
        %1547 = vmatpush.msra.mxu0 %v1336
        %1548 = vmatpush.msra.mxu0 %v1335
        %1549 = vmatmul.f32.gmra.mxu0 %v1233
        %v1550 = vpop.f32.mrf.mxu0
        %v1551 = vadd.f32 %v1510, %v1550
        %1552 = vmatmul.f32.gmra.mxu0 %v1242
        %v1553 = vpop.f32.mrf.mxu0
        %v1554 = vadd.f32 %v1513, %v1553
        %1555 = vmatmul.f32.gmra.mxu0 %v1251
        %v1556 = vpop.f32.mrf.mxu0
        %v1557 = vadd.f32 %v1516, %v1556
        %1558 = vmatmul.f32.gmra.mxu0 %v1260
        %v1559 = vpop.f32.mrf.mxu0
        %v1560 = vadd.f32 %v1519, %v1559
        %1561 = vmatmul.f32.gmra.mxu0 %v1269
        %v1562 = vpop.f32.mrf.mxu0
        %v1563 = vadd.f32 %v1522, %v1562
        %1564 = vmatmul.f32.gmra.mxu0 %v1278
        %v1565 = vpop.f32.mrf.mxu0
        %v1566 = vadd.f32 %v1525, %v1565
        %1567 = vmatmul.f32.gmra.mxu0 %v1287
        %v1568 = vpop.f32.mrf.mxu0
        %v1569 = vadd.f32 %v1528, %v1568
        %1570 = vmatmul.f32.gmra.mxu0 %v1296
        %v1571 = vpop.f32.mrf.mxu0
        %v1572 = vadd.f32 %v1531, %v1571
        %1573 = vdwg.mxu0
        %1574 = vmatpush.msra.mxu0 %v1366
        %1575 = vmatpush.msra.mxu0 %v1365
        %1576 = vmatpush.msra.mxu0 %v1364
        %1577 = vmatpush.msra.mxu0 %v1363
        %1578 = vmatpush.msra.mxu0 %v1362
        %1579 = vmatpush.msra.mxu0 %v1361
        %1580 = vmatpush.msra.mxu0 %v1360
        %1581 = vmatpush.msra.mxu0 %v1359
        %1582 = vmatpush.msra.mxu0 %v1358
        %1583 = vmatpush.msra.mxu0 %v1357
        %1584 = vmatpush.msra.mxu0 %v1356
        %1585 = vmatpush.msra.mxu0 %v1355
        %1586 = vmatpush.msra.mxu0 %v1354
        %1587 = vmatpush.msra.mxu0 %v1353
        %1588 = vmatpush.msra.mxu0 %v1352
        %1589 = vmatpush.msra.mxu0 %v1351
        %1590 = vmatmul.f32.gmra.mxu0 %v1234
        %v1591 = vpop.f32.mrf.mxu0
        %v1592 = vadd.f32 %v1551, %v1591
        %1593 = vmatmul.f32.gmra.mxu0 %v1243
        %v1594 = vpop.f32.mrf.mxu0
        %v1595 = vadd.f32 %v1554, %v1594
        %1596 = vmatmul.f32.gmra.mxu0 %v1252
        %v1597 = vpop.f32.mrf.mxu0
        %v1598 = vadd.f32 %v1557, %v1597
        %1599 = vmatmul.f32.gmra.mxu0 %v1261
        %v1600 = vpop.f32.mrf.mxu0
        %v1601 = vadd.f32 %v1560, %v1600
        %1602 = vmatmul.f32.gmra.mxu0 %v1270
        %v1603 = vpop.f32.mrf.mxu0
        %v1604 = vadd.f32 %v1563, %v1603
        %1605 = vmatmul.f32.gmra.mxu0 %v1279
        %v1606 = vpop.f32.mrf.mxu0
        %v1607 = vadd.f32 %v1566, %v1606
        %1608 = vmatmul.f32.gmra.mxu0 %v1288
        %v1609 = vpop.f32.mrf.mxu0
        %v1610 = vadd.f32 %v1569, %v1609
        %1611 = vmatmul.f32.gmra.mxu0 %v1297
        %v1612 = vpop.f32.mrf.mxu0
        %v1613 = vadd.f32 %v1572, %v1612
        %1614 = vdwg.mxu0
        %1615 = vmatpush.msra.mxu0 %v1382
        %1616 = vmatpush.msra.mxu0 %v1381
        %1617 = vmatpush.msra.mxu0 %v1380
        %1618 = vmatpush.msra.mxu0 %v1379
        %1619 = vmatpush.msra.mxu0 %v1378
        %1620 = vmatpush.msra.mxu0 %v1377
        %1621 = vmatpush.msra.mxu0 %v1376
        %1622 = vmatpush.msra.mxu0 %v1375
        %1623 = vmatpush.msra.mxu0 %v1374
        %1624 = vmatpush.msra.mxu0 %v1373
        %1625 = vmatpush.msra.mxu0 %v1372
        %1626 = vmatpush.msra.mxu0 %v1371
        %1627 = vmatpush.msra.mxu0 %v1370
        %1628 = vmatpush.msra.mxu0 %v1369
        %1629 = vmatpush.msra.mxu0 %v1368
        %1630 = vmatpush.msra.mxu0 %v1367
        %1631 = vmatmul.f32.gmra.mxu0 %v1235
        %v1632 = vpop.f32.mrf.mxu0
        %v1633 = vadd.f32 %v1592, %v1632
        %1634 = vmatmul.f32.gmra.mxu0 %v1244
        %v1635 = vpop.f32.mrf.mxu0
        %v1636 = vadd.f32 %v1595, %v1635
        %1637 = vmatmul.f32.gmra.mxu0 %v1253
        %v1638 = vpop.f32.mrf.mxu0
        %v1639 = vadd.f32 %v1598, %v1638
        %1640 = vmatmul.f32.gmra.mxu0 %v1262
        %v1641 = vpop.f32.mrf.mxu0
        %v1642 = vadd.f32 %v1601, %v1641
        %1643 = vmatmul.f32.gmra.mxu0 %v1271
        %v1644 = vpop.f32.mrf.mxu0
        %v1645 = vadd.f32 %v1604, %v1644
        %1646 = vmatmul.f32.gmra.mxu0 %v1280
        %v1647 = vpop.f32.mrf.mxu0
        %v1648 = vadd.f32 %v1607, %v1647
        %1649 = vmatmul.f32.gmra.mxu0 %v1289
        %v1650 = vpop.f32.mrf.mxu0
        %v1651 = vadd.f32 %v1610, %v1650
        %1652 = vmatmul.f32.gmra.mxu0 %v1298
        %v1653 = vpop.f32.mrf.mxu0
        %v1654 = vadd.f32 %v1613, %v1653
        %1655 = vdwg.mxu0
        %1656 = vmatpush.msra.mxu0 %v1398
        %1657 = vmatpush.msra.mxu0 %v1397
        %1658 = vmatpush.msra.mxu0 %v1396
        %1659 = vmatpush.msra.mxu0 %v1395
        %1660 = vmatpush.msra.mxu0 %v1394
        %1661 = vmatpush.msra.mxu0 %v1393
        %1662 = vmatpush.msra.mxu0 %v1392
        %1663 = vmatpush.msra.mxu0 %v1391
        %1664 = vmatpush.msra.mxu0 %v1390
        %1665 = vmatpush.msra.mxu0 %v1389
        %1666 = vmatpush.msra.mxu0 %v1388
        %1667 = vmatpush.msra.mxu0 %v1387
        %1668 = vmatpush.msra.mxu0 %v1386
        %1669 = vmatpush.msra.mxu0 %v1385
        %1670 = vmatpush.msra.mxu0 %v1384
        %1671 = vmatpush.msra.mxu0 %v1383
        %1672 = vmatmul.f32.gmra.mxu0 %v1236
        %v1673 = vpop.f32.mrf.mxu0
        %v1674 = vadd.f32 %v1633, %v1673
        %1675 = vmatmul.f32.gmra.mxu0 %v1245
        %v1676 = vpop.f32.mrf.mxu0
        %v1677 = vadd.f32 %v1636, %v1676
        %1678 = vmatmul.f32.gmra.mxu0 %v1254
        %v1679 = vpop.f32.mrf.mxu0
        %v1680 = vadd.f32 %v1639, %v1679
        %1681 = vmatmul.f32.gmra.mxu0 %v1263
        %v1682 = vpop.f32.mrf.mxu0
        %v1683 = vadd.f32 %v1642, %v1682
        %1684 = vmatmul.f32.gmra.mxu0 %v1272
        %v1685 = vpop.f32.mrf.mxu0
        %v1686 = vadd.f32 %v1645, %v1685
        %1687 = vmatmul.f32.gmra.mxu0 %v1281
        %v1688 = vpop.f32.mrf.mxu0
        %v1689 = vadd.f32 %v1648, %v1688
        %1690 = vmatmul.f32.gmra.mxu0 %v1290
        %v1691 = vpop.f32.mrf.mxu0
        %v1692 = vadd.f32 %v1651, %v1691
        %1693 = vmatmul.f32.gmra.mxu0 %v1299
        %v1694 = vpop.f32.mrf.mxu0
        %v1695 = vadd.f32 %v1654, %v1694
        %1696 = vdwg.mxu0
        %1697 = vmatpush.msra.mxu0 %v1414
        %1698 = vmatpush.msra.mxu0 %v1413
        %1699 = vmatpush.msra.mxu0 %v1412
        %1700 = vmatpush.msra.mxu0 %v1411
        %1701 = vmatpush.msra.mxu0 %v1410
        %1702 = vmatpush.msra.mxu0 %v1409
        %1703 = vmatpush.msra.mxu0 %v1408
        %1704 = vmatpush.msra.mxu0 %v1407
        %1705 = vmatpush.msra.mxu0 %v1406
        %1706 = vmatpush.msra.mxu0 %v1405
        %1707 = vmatpush.msra.mxu0 %v1404
        %1708 = vmatpush.msra.mxu0 %v1403
        %1709 = vmatpush.msra.mxu0 %v1402
        %1710 = vmatpush.msra.mxu0 %v1401
        %1711 = vmatpush.msra.mxu0 %v1400
        %1712 = vmatpush.msra.mxu0 %v1399
        %1713 = vmatmul.f32.gmra.mxu0 %v1237
        %v1714 = vpop.f32.mrf.mxu0
        %v1715 = vadd.f32 %v1674, %v1714
        %1716 = vmatmul.f32.gmra.mxu0 %v1246
        %v1717 = vpop.f32.mrf.mxu0
        %v1718 = vadd.f32 %v1677, %v1717
        %1719 = vmatmul.f32.gmra.mxu0 %v1255
        %v1720 = vpop.f32.mrf.mxu0
        %v1721 = vadd.f32 %v1680, %v1720
        %1722 = vmatmul.f32.gmra.mxu0 %v1264
        %v1723 = vpop.f32.mrf.mxu0
        %v1724 = vadd.f32 %v1683, %v1723
        %1725 = vmatmul.f32.gmra.mxu0 %v1273
        %v1726 = vpop.f32.mrf.mxu0
        %v1727 = vadd.f32 %v1686, %v1726
        %1728 = vmatmul.f32.gmra.mxu0 %v1282
        %v1729 = vpop.f32.mrf.mxu0
        %v1730 = vadd.f32 %v1689, %v1729
        %1731 = vmatmul.f32.gmra.mxu0 %v1291
        %v1732 = vpop.f32.mrf.mxu0
        %v1733 = vadd.f32 %v1692, %v1732
        %1734 = vmatmul.f32.gmra.mxu0 %v1300
        %v1735 = vpop.f32.mrf.mxu0
        %v1736 = vadd.f32 %v1695, %v1735
        %1737 = vdwg.mxu0
        %1738 = vmatpush.msra.mxu0 %v1430
        %1739 = vmatpush.msra.mxu0 %v1429
        %1740 = vmatpush.msra.mxu0 %v1428
        %1741 = vmatpush.msra.mxu0 %v1427
        %1742 = vmatpush.msra.mxu0 %v1426
        %1743 = vmatpush.msra.mxu0 %v1425
        %1744 = vmatpush.msra.mxu0 %v1424
        %1745 = vmatpush.msra.mxu0 %v1423
        %1746 = vmatpush.msra.mxu0 %v1422
        %1747 = vmatpush.msra.mxu0 %v1421
        %1748 = vmatpush.msra.mxu0 %v1420
        %1749 = vmatpush.msra.mxu0 %v1419
        %1750 = vmatpush.msra.mxu0 %v1418
        %1751 = vmatpush.msra.mxu0 %v1417
        %1752 = vmatpush.msra.mxu0 %v1416
        %1753 = vmatpush.msra.mxu0 %v1415
        %1754 = vmatmul.f32.gmra.mxu0 %v1238
        %v1755 = vpop.f32.mrf.mxu0
        %v1756 = vadd.f32 %v1715, %v1755
        %1757 = vmatmul.f32.gmra.mxu0 %v1247
        %v1758 = vpop.f32.mrf.mxu0
        %v1759 = vadd.f32 %v1718, %v1758
        %1760 = vmatmul.f32.gmra.mxu0 %v1256
        %v1761 = vpop.f32.mrf.mxu0
        %v1762 = vadd.f32 %v1721, %v1761
        %1763 = vmatmul.f32.gmra.mxu0 %v1265
        %v1764 = vpop.f32.mrf.mxu0
        %v1765 = vadd.f32 %v1724, %v1764
        %1766 = vmatmul.f32.gmra.mxu0 %v1274
        %v1767 = vpop.f32.mrf.mxu0
        %v1768 = vadd.f32 %v1727, %v1767
        %1769 = vmatmul.f32.gmra.mxu0 %v1283
        %v1770 = vpop.f32.mrf.mxu0
        %v1771 = vadd.f32 %v1730, %v1770
        %1772 = vmatmul.f32.gmra.mxu0 %v1292
        %v1773 = vpop.f32.mrf.mxu0
        %v1774 = vadd.f32 %v1733, %v1773
        %1775 = vmatmul.f32.gmra.mxu0 %v1301
        %v1776 = vpop.f32.mrf.mxu0
        %v1777 = vadd.f32 %v1736, %v1776
        %1778 = vdwg.mxu0
        %1779 = vmatpush.msra.mxu0 %v1446
        %1780 = vmatpush.msra.mxu0 %v1445
        %1781 = vmatpush.msra.mxu0 %v1444
        %1782 = vmatpush.msra.mxu0 %v1443
        %1783 = vmatpush.msra.mxu0 %v1442
        %1784 = vmatpush.msra.mxu0 %v1441
        %1785 = vmatpush.msra.mxu0 %v1440
        %1786 = vmatpush.msra.mxu0 %v1439
        %1787 = vmatpush.msra.mxu0 %v1438
        %1788 = vmatpush.msra.mxu0 %v1437
        %1789 = vmatpush.msra.mxu0 %v1436
        %1790 = vmatpush.msra.mxu0 %v1435
        %1791 = vmatpush.msra.mxu0 %v1434
        %1792 = vmatpush.msra.mxu0 %v1433
        %1793 = vmatpush.msra.mxu0 %v1432
        %1794 = vmatpush.msra.mxu0 %v1431
        %1795 = vmatmul.f32.gmra.mxu0 %v1239
        %v1796 = vpop.f32.mrf.mxu0
        %v1797 = vadd.f32 %v1756, %v1796
        %1798 = vmatmul.f32.gmra.mxu0 %v1248
        %v1799 = vpop.f32.mrf.mxu0
        %v1800 = vadd.f32 %v1759, %v1799
        %1801 = vmatmul.f32.gmra.mxu0 %v1257
        %v1802 = vpop.f32.mrf.mxu0
        %v1803 = vadd.f32 %v1762, %v1802
        %1804 = vmatmul.f32.gmra.mxu0 %v1266
        %v1805 = vpop.f32.mrf.mxu0
        %v1806 = vadd.f32 %v1765, %v1805
        %1807 = vmatmul.f32.gmra.mxu0 %v1275
        %v1808 = vpop.f32.mrf.mxu0
        %v1809 = vadd.f32 %v1768, %v1808
        %1810 = vmatmul.f32.gmra.mxu0 %v1284
        %v1811 = vpop.f32.mrf.mxu0
        %v1812 = vadd.f32 %v1771, %v1811
        %1813 = vmatmul.f32.gmra.mxu0 %v1293
        %v1814 = vpop.f32.mrf.mxu0
        %v1815 = vadd.f32 %v1774, %v1814
        %1816 = vmatmul.f32.gmra.mxu0 %v1302
        %v1817 = vpop.f32.mrf.mxu0
        %v1818 = vadd.f32 %v1777, %v1817
        %1819 = vdwg.mxu0
        %v1820 = vmul.f32 %v280, 0.1
        %v1821 = vmul.f32 %v281, 0.1
        %v1822 = vmul.f32 %v282, 0.1
        %v1823 = vmul.f32 %v283, 0.1
        %v1824 = vmul.f32 %v284, 0.1
        %v1825 = vmul.f32 %v285, 0.1
        %v1826 = vmul.f32 %v286, 0.1
        %v1827 = vmul.f32 %v287, 0.1
        %v1828 = vadd.f32 %v1797, %v1820
        %v1829 = vadd.f32 %v1800, %v1821
        %v1830 = vadd.f32 %v1803, %v1822
        %v1831 = vadd.f32 %v1806, %v1823
        %v1832 = vadd.f32 %v1809, %v1824
        %v1833 = vadd.f32 %v1812, %v1825
        %v1834 = vadd.f32 %v1815, %v1826
        %v1835 = vadd.f32 %v1818, %v1827
        %1836 = vst [vmem:[#allocation2] sm:$0xff] %v1828
        %1837 = vst [vmem:[#allocation2 + $0x8] sm:$0xff] %v1829
        %1838 = vst [vmem:[#allocation2 + $0x10] sm:$0xff] %v1830
        %1839 = vst [vmem:[#allocation2 + $0x18] sm:$0xff] %v1831
        %1840 = vst [vmem:[#allocation2 + $0x20] sm:$0xff] %v1832
        %1841 = vst [vmem:[#allocation2 + $0x28] sm:$0xff] %v1833
        %1842 = vst [vmem:[#allocation2 + $0x30] sm:$0xff] %v1834
        %1843 = vst [vmem:[#allocation2 + $0x38] sm:$0xff] %v1835
        %p1844 = scmp.eq.s32.totalorder %s25, 1
        // Predicated region
        $region45: #{edsr_forward.5} parent=31 // pred_check
          %p1845 = pneg %p1844
        $region46: #{edsr_forward.5} parent=31 // pred_check_branch
          %1847 = sbr.rel (%p1845) target = $region48
        $region47: #{edsr_forward.5} parent=31 // pred_region
          %v1848 = vld [vmem:[%s254] sm:$0xff]
          %v1849 = vld [vmem:[%s254 + $0x8] sm:$0xff]
          %v1850 = vld [vmem:[%s254 + $0x10] sm:$0xff]
          %v1851 = vld [vmem:[%s254 + $0x18] sm:$0xff]
          %v1852 = vld [vmem:[%s254 + $0x20] sm:$0xff]
          %v1853 = vld [vmem:[%s254 + $0x28] sm:$0xff]
          %v1854 = vld [vmem:[%s254 + $0x30] sm:$0xff]
          %v1855 = vld [vmem:[%s254 + $0x38] sm:$0xff]
          %v1856 = vmul.f32 %v1848, 0.1
          %v1857 = vmul.f32 %v1849, 0.1
          %v1858 = vmul.f32 %v1850, 0.1
          %v1859 = vmul.f32 %v1851, 0.1
          %v1860 = vmul.f32 %v1852, 0.1
          %v1861 = vmul.f32 %v1853, 0.1
          %v1862 = vmul.f32 %v1854, 0.1
          %v1863 = vmul.f32 %v1855, 0.1
          %v1864 = vadd.f32 %v1828, %v1856
          %v1865 = vadd.f32 %v1829, %v1857
          %v1866 = vadd.f32 %v1830, %v1858
          %v1867 = vadd.f32 %v1831, %v1859
          %v1868 = vadd.f32 %v1832, %v1860
          %v1869 = vadd.f32 %v1833, %v1861
          %v1870 = vadd.f32 %v1834, %v1862
          %v1871 = vadd.f32 %v1835, %v1863
          %1872 = vst [vmem:[%s259] sm:$0xff] %v1864
          %1873 = vst [vmem:[%s259 + $0x8] sm:$0xff] %v1865
          %1874 = vst [vmem:[%s259 + $0x10] sm:$0xff] %v1866
          %1875 = vst [vmem:[%s259 + $0x18] sm:$0xff] %v1867
          %1876 = vst [vmem:[%s259 + $0x20] sm:$0xff] %v1868
          %1877 = vst [vmem:[%s259 + $0x28] sm:$0xff] %v1869
          %1878 = vst [vmem:[%s259 + $0x30] sm:$0xff] %v1870
          %1879 = vst [vmem:[%s259 + $0x38] sm:$0xff] %v1871
        $region48: #{edsr_forward.5} parent=31 // pred_fallthru
          _
        %p1880 = scmp.lt.s32.totalorder %s24, 1
        %s1881 = scalar_select %p1880, %s24, 1
        %s1882 = smul.addr %s1881, 8
        %s1883 = smul.addr %s1882, 8
        %s1884 = scalar_lea.vmem %s3, %s1883
        // Predicated region
        $region49: #{edsr_forward.5} parent=31 // pred_check
          %p1885 = pneg %p128
        $region50: #{edsr_forward.5} parent=31 // pred_check_branch
          %1887 = sbr.rel (%p1885) target = $region52
        $region51: #{edsr_forward.5} parent=31 // pred_region
          _
        $region52: #{edsr_forward.5} parent=31 // pred_fallthru
          _
      $region32: #{edsr_forward.5} parent=5 // pred_fallthru
        _
      %p1888 = scmp.le.s32.totalorder 2, %s15
      // Predicated region
      $region53: #{edsr_forward.5} parent=5 // pred_check
        %p1889 = pneg %p1888
      $region54: #{edsr_forward.5} parent=5 // pred_check_branch
        %1891 = sbr.rel (%p1889) target = $region56
      $region55: #{edsr_forward.5} parent=5 // pred_region
        %s1892 = ssub.s32 %s15, 2
        // Predicated region
        $region57: #{edsr_forward.5} parent=55 // pred_check
          %p1893 = pneg %p134
        $region58: #{edsr_forward.5} parent=55 // pred_check_branch
          %1895 = sbr.rel (%p1893) target = $region60
        $region59: #{edsr_forward.5} parent=55 // pred_region
          %p1896 = scmp.lt.s32.totalorder %s26, 1
          %s1897 = scalar_select %p1896, %s26, 1
          %s1898 = smul.addr %s1897, 8
          %s1899 = smul.addr %s1898, 8
          %s1900 = scalar_lea.vmem %s3, %s1899
        $region60: #{edsr_forward.5} parent=55 // pred_fallthru
          _
      $region56: #{edsr_forward.5} parent=5 // pred_fallthru
        _
    $region6: #{edsr_forward.5} parent=1 // loop_footer
      %s19 = sadd.s32 1, %s15
    $region7: #{edsr_forward.5} parent=1 // loop_footer_branch
      %14 = sbr.rel target = $region3
    $region8: #{edsr_forward.5} parent=1 // loop_exit
      _
    %1901 = vsyncpa [#allocation6], 1
    %s1902 = scalar_lea.sflag [#allocation6], 1
    %1903 = vsyncpa %s1902, 1
    %1904 = vsyncpa [#allocation8], 1
    %s1905 = scalar_lea.sflag [#allocation8], 1
    %1906 = vsyncpa %s1905, 1

// kernel: edsr_forward.6
$region0: #{edsr_forward.6}
  #allocation0 [shape = 'u32[]', space=smem, size = 0x4, offset = 0x4, fixed_abs, tag = 'smem constant byte address 0x4 - core index']
  #allocation1 [shape = 'u32[72,128]{1,0:T(1,128)}', space=vmem, size = 0x9000, scoped, tag = 'internal scratch']
  #allocation2 [shape = 'f32[10,10,128]{2,1,0:T(8,128)}', space=vmem, size = 0x14000, scoped, tag = 'scratch operand']
  #allocation3 [shape = 'f32[64,1152]{1,0:T(8,128)}', space=vmem, size = 0x48000, scoped, tag = 'scratch operand']
  %s0 = inlined_call_operand.vmem [shape: f32[2,8,8,128], index: 0, kind: input, shape index: {}]
  %s1 = inlined_call_operand.hbm [shape: f32[1152,512], index: 1, kind: input, shape index: {}]
  %s2 = inlined_call_operand.hbm [shape: f32[1,512], index: 2, kind: input, shape index: {}]
  %s3 = inlined_call_operand.vmem [shape: f32[2,8,8,512], index: 3, kind: output, shape index: {}]
  %s4 = sld [smem:[#allocation0]]
  $region53: #{edsr_forward.6} parent=0
    _
  %s6 = ssub.s32 1, %s4
  %s7 = scalar_select 0, %s6, %s4
  $region1: #{edsr_forward.6} parent=0
    #allocation4 [shape = 'u8[2359296]{0}', space=vmem, size = 0x240000, scoped, tag = 'input window, operand 1, single buffered']
    #allocation5 [shape = 's32[2]{0}', space=sflag, size = 0x8, scoped, tag = 'scoped memory for edsr_forward.6']
    #allocation6 [shape = 'u8[2048]{0}', space=vmem, size = 0x800, scoped, tag = 'input window, operand 2, single buffered']
    #allocation7 [shape = 's32[1]{0}', space=sflag, size = 0x4, scoped, tag = 'scoped memory for edsr_forward.6']
    %8 = vsyncpa [#allocation5], 0
    %9 = vsyncpa [#allocation7], 0
    loop: start=0, step=1, limit=4
    $region2: #{edsr_forward.6} parent=1 // loop_pre_header
      _
    $region3: #{edsr_forward.6} parent=1 // loop_header
      %s11 = sphi 0, %s15
      %p12 = scmp.ge.s32.totalorder %s11, 4
      %s21 = sphi 0, %s23
      %s24 = sphi 0, %s21
      %s25 = sphi 0, %s24
      %s41 = sphi 0, %s25
      %s45 = sphi 0, %s45
      %s47 = sphi 0, %s45
      %s48 = sphi 0, %s47
      %s62 = sphi 0, %s48
      %s66 = sphi 0, %s66
      %s68 = sphi 0, %s66
      %s69 = sphi 0, %s68
      %s83 = sphi 0, %s69
      %s89 = sphi 0, %s91
      %s92 = sphi 0, %s89
      %s93 = sphi 0, %s92
      %s109 = sphi 0, %s93
    $region4: #{edsr_forward.6} parent=1 // loop_header_branch
      %14 = sbr.rel (%p12) target = $region8
    $region5: #{edsr_forward.6} parent=1 // loop_body
      %s16 = ssub.s32 %s11, 1
      %s17 = ssub.s32 %s11, 2
      %s18 = sadd.s32 %s11, 1
      %s19 = ssub.s32 %s11, %s18
      %p20 = scmp.eq.s32.totalorder %s19, 0
      %s22 = sadd.s32 %s21, 1
      %s23 = scalar_select %p20, %s21, %s22
      %p26 = pneg %p20
      %p27 = scmp.eq.s32.totalorder %s11, 1
      %p28 = por %p26, %p27
      %p29 = scmp.ne.s32.totalorder %s21, %s24
      %p30 = scmp.eq.s32.totalorder %s11, 0
      %p31 = por %p29, %p30
      %p32 = scmp.ne.s32.totalorder %s21, %s24
      %p33 = scmp.eq.s32.totalorder %s16, 1
      %p34 = por %p32, %p33
      %p35 = scmp.ne.s32.totalorder %s24, %s25
      %p36 = scmp.eq.s32.totalorder %s16, 0
      %p37 = por %p35, %p36
      %p38 = scmp.ne.s32.totalorder %s24, %s25
      %p39 = scmp.eq.s32.totalorder %s17, 1
      %p40 = por %p38, %p39
      %p42 = scmp.ne.s32.totalorder %s25, %s41
      %p43 = scmp.eq.s32.totalorder %s17, 0
      %p44 = por %p42, %p43
      %s46 = sadd.s32 %s45, 1
      %p49 = scmp.eq.s32.totalorder %s11, 1
      %p50 = scmp.ne.s32.totalorder %s45, %s47
      %p51 = scmp.eq.s32.totalorder %s11, 0
      %p52 = por %p50, %p51
      %p53 = scmp.ne.s32.totalorder %s45, %s47
      %p54 = scmp.eq.s32.totalorder %s16, 1
      %p55 = por %p53, %p54
      %p56 = scmp.ne.s32.totalorder %s47, %s48
      %p57 = scmp.eq.s32.totalorder %s16, 0
      %p58 = por %p56, %p57
      %p59 = scmp.ne.s32.totalorder %s47, %s48
      %p60 = scmp.eq.s32.totalorder %s17, 1
      %p61 = por %p59, %p60
      %p63 = scmp.ne.s32.totalorder %s48, %s62
      %p64 = scmp.eq.s32.totalorder %s17, 0
      %p65 = por %p63, %p64
      %s67 = sadd.s32 %s66, 1
      %p70 = scmp.eq.s32.totalorder %s11, 1
      %p71 = scmp.ne.s32.totalorder %s66, %s68
      %p72 = scmp.eq.s32.totalorder %s11, 0
      %p73 = por %p71, %p72
      %p74 = scmp.ne.s32.totalorder %s66, %s68
      %p75 = scmp.eq.s32.totalorder %s16, 1
      %p76 = por %p74, %p75
      %p77 = scmp.ne.s32.totalorder %s68, %s69
      %p78 = scmp.eq.s32.totalorder %s16, 0
      %p79 = por %p77, %p78
      %p80 = scmp.ne.s32.totalorder %s68, %s69
      %p81 = scmp.eq.s32.totalorder %s17, 1
      %p82 = por %p80, %p81
      %p84 = scmp.ne.s32.totalorder %s69, %s83
      %p85 = scmp.eq.s32.totalorder %s17, 0
      %p86 = por %p84, %p85
      %s87 = ssub.s32 %s11, %s18
      %p88 = scmp.eq.s32.totalorder %s87, 0
      %s90 = sadd.s32 %s89, 1
      %s91 = scalar_select %p88, %s89, %s90
      %p94 = pneg %p88
      %p95 = scmp.eq.s32.totalorder %s11, 1
      %p96 = por %p94, %p95
      %p97 = scmp.ne.s32.totalorder %s89, %s92
      %p98 = scmp.eq.s32.totalorder %s11, 0
      %p99 = por %p97, %p98
      %p100 = scmp.ne.s32.totalorder %s89, %s92
      %p101 = scmp.eq.s32.totalorder %s16, 1
      %p102 = por %p100, %p101
      %p103 = scmp.ne.s32.totalorder %s92, %s93
      %p104 = scmp.eq.s32.totalorder %s16, 0
      %p105 = por %p103, %p104
      %p106 = scmp.ne.s32.totalorder %s92, %s93
      %p107 = scmp.eq.s32.totalorder %s17, 1
      %p108 = por %p106, %p107
      %p110 = scmp.ne.s32.totalorder %s93, %s109
      %p111 = scmp.eq.s32.totalorder %s17, 0
      %p112 = por %p110, %p111
      %p113 = scmp.le.s32.totalorder 1, %s11
      %p114 = scmp.lt.s32.totalorder %s11, 3
      %p115 = pnand %p113, %p114
      %p116 = pneg %p115
      // Predicated region
      $region9: #{edsr_forward.6} parent=5 // pred_check
        _
      $region10: #{edsr_forward.6} parent=5 // pred_check_branch
        %118 = sbr.rel (%p115) target = $region12
      $region11: #{edsr_forward.6} parent=5 // pred_region
        %s119 = ssub.s32 %s11, 1
        // Predicated region
        $region13: #{edsr_forward.6} parent=11 // pred_check
          %p120 = pneg %p58
        $region14: #{edsr_forward.6} parent=11 // pred_check_branch
          %122 = sbr.rel (%p120) target = $region16
        $region15: #{edsr_forward.6} parent=11 // pred_region
          %124 = vsyncadd [#allocation5], 0
          %s125 = sshll.u32 %s1, 4
          %s126 = int_to_ptr.hbm [resolvable:$true] %s125
          %s127 = sshll.u32 [#allocation4], 4
          %s128 = int_to_ptr.vmem [resolvable:$true] %s127
          %133 = dma.hbm_to_vmem [thread:$0]  %s126, 73728, %s128, [#allocation5], 512, 512, 32
        $region16: #{edsr_forward.6} parent=11 // pred_fallthru
          _
        // Predicated region
        $region17: #{edsr_forward.6} parent=11 // pred_check
          %p134 = pneg %p79
        $region18: #{edsr_forward.6} parent=11 // pred_check_branch
          %136 = sbr.rel (%p134) target = $region20
        $region19: #{edsr_forward.6} parent=11 // pred_region
          %138 = vsyncadd [#allocation7], 0
          %s140 = sshll.u32 %s2, 4
          %s141 = int_to_ptr.hbm [resolvable:$true] %s140
          %s142 = sshll.u32 [#allocation6], 4
          %s143 = int_to_ptr.vmem [resolvable:$true] %s142
          %145 = dma.hbm_to_vmem [thread:$0]  %s141, 64, %s143, [#allocation7]
        $region20: #{edsr_forward.6} parent=11 // pred_fallthru
          _
      $region12: #{edsr_forward.6} parent=5 // pred_fallthru
        _
      %p146 = scmp.lt.s32.totalorder %s11, 2
      // Predicated region
      $region21: #{edsr_forward.6} parent=5 // pred_check
        %p147 = pneg %p146
      $region22: #{edsr_forward.6} parent=5 // pred_check_branch
        %149 = sbr.rel (%p147) target = $region24
      $region23: #{edsr_forward.6} parent=5 // pred_region
        // Predicated region
        $region25: #{edsr_forward.6} parent=23 // pred_check
          %p150 = pneg %p31
        $region26: #{edsr_forward.6} parent=23 // pred_check_branch
          %152 = sbr.rel (%p150) target = $region28
        $region27: #{edsr_forward.6} parent=23 // pred_region
          %p153 = scmp.lt.s32.totalorder %s11, 1
          %s154 = scalar_select %p153, %s11, 1
          %s155 = smul.addr %s154, 8
          %s156 = smul.addr %s155, 8
          %s157 = scalar_lea.vmem %s0, %s156
        $region28: #{edsr_forward.6} parent=23 // pred_fallthru
          _
      $region24: #{edsr_forward.6} parent=5 // pred_fallthru
        _
      %p158 = scmp.le.s32.totalorder 1, %s11
      %p159 = scmp.lt.s32.totalorder %s11, 3
      %p160 = pnand %p158, %p159
      %p161 = pneg %p160
      // Predicated region
      $region29: #{edsr_forward.6} parent=5 // pred_check
        _
      $region30: #{edsr_forward.6} parent=5 // pred_check_branch
        %163 = sbr.rel (%p160) target = $region32
      $region31: #{edsr_forward.6} parent=5 // pred_region
        %s164 = ssub.s32 %s11, 1
        // Predicated region
        $region33: #{edsr_forward.6} parent=31 // pred_check
          %p165 = pneg %p58
        $region34: #{edsr_forward.6} parent=31 // pred_check_branch
          %167 = sbr.rel (%p165) target = $region36
        $region35: #{edsr_forward.6} parent=31 // pred_region
          %169 = dma.done [#allocation5], 73728
        $region36: #{edsr_forward.6} parent=31 // pred_fallthru
          _
        // Predicated region
        $region37: #{edsr_forward.6} parent=31 // pred_check
          %p170 = pneg %p79
        $region38: #{edsr_forward.6} parent=31 // pred_check_branch
          %172 = sbr.rel (%p170) target = $region40
        $region39: #{edsr_forward.6} parent=31 // pred_region
          %174 = dma.done [#allocation7], 64
        $region40: #{edsr_forward.6} parent=31 // pred_fallthru
          _
        %p175 = scmp.lt.s32.totalorder %s16, 1
        %s176 = scalar_select %p175, %s16, 1
        %s177 = smul.addr %s176, 8
        %s178 = smul.addr %s177, 8
        %s179 = scalar_lea.vmem %s0, %s178
        %p180 = pneg %p37
        %p181 = pneg %p34
        %p182 = pneg %p58
        %p183 = pneg %p55
        %p184 = pneg %p79
        %p185 = pneg %p76
        %p186 = pneg %p105
        %p187 = pneg %p102
        %p188 = scmp.lt.s32.totalorder %s16, 1
        %s189 = scalar_select %p188, %s16, 1
        %s190 = smul.addr %s189, 32
        %s191 = smul.addr %s190, 8
        %s192 = scalar_lea.vmem %s3, %s191
        %p193 = scmp.lt.s32.totalorder %s16, 1
        %s194 = scalar_select %p193, %s16, 1
        %s195 = smul.addr %s194, 8
        %s196 = smul.addr %s195, 8
        %s197 = scalar_lea.vmem %s0, %s196
        %p198 = scmp.lt.s32.totalorder %s16, 1
        %s199 = scalar_select %p198, %s16, 1
        %s200 = smul.addr %s199, 32
        %s201 = smul.addr %s200, 8
        %s202 = scalar_lea.vmem %s3, %s201
        %v203 = vld [vmem:[%s197] sm:$0xff]
        %v204 = vld [vmem:[%s197 + $0x8] sm:$0xff]
        %v205 = vld [vmem:[%s197 + $0x10] sm:$0xff]
        %v206 = vld [vmem:[%s197 + $0x18] sm:$0xff]
        %v207 = vld [vmem:[%s197 + $0x20] sm:$0xff]
        %v208 = vld [vmem:[%s197 + $0x28] sm:$0xff]
        %v209 = vld [vmem:[%s197 + $0x30] sm:$0xff]
        %v210 = vld [vmem:[%s197 + $0x38] sm:$0xff]
        %211 = vst [vmem:[#allocation2] sm:$0xff] 0.0
        %212 = vst [vmem:[#allocation2 + $0x8] sm:$0x3] 0.0
        %213 = vst [vmem:[#allocation2 + $0x10] sm:$0xff] 0.0
        %214 = vst [vmem:[#allocation2 + $0x18] sm:$0x3] 0.0
        %215 = vst [vmem:[#allocation2 + $0x20] sm:$0xff] 0.0
        %216 = vst [vmem:[#allocation2 + $0x28] sm:$0x3] 0.0
        %217 = vst [vmem:[#allocation2 + $0x30] sm:$0xff] 0.0
        %218 = vst [vmem:[#allocation2 + $0x38] sm:$0x3] 0.0
        %219 = vst [vmem:[#allocation2 + $0x40] sm:$0xff] 0.0
        %220 = vst [vmem:[#allocation2 + $0x48] sm:$0x3] 0.0
        %221 = vst [vmem:[#allocation2 + $0x50] sm:$0xff] 0.0
        %222 = vst [vmem:[#allocation2 + $0x58] sm:$0x3] 0.0
        %223 = vst [vmem:[#allocation2 + $0x60] sm:$0xff] 0.0
        %224 = vst [vmem:[#allocation2 + $0x68] sm:$0x3] 0.0
        %225 = vst [vmem:[#allocation2 + $0x70] sm:$0xff] 0.0
        %226 = vst [vmem:[#allocation2 + $0x78] sm:$0x3] 0.0
        %227 = vst [vmem:[#allocation2 + $0x80] sm:$0xff] 0.0
        %228 = vst [vmem:[#allocation2 + $0x88] sm:$0x3] 0.0
        %229 = vst [vmem:[#allocation2 + $0x90] sm:$0xff] 0.0
        %230 = vst [vmem:[#allocation2 + $0x98] sm:$0x3] 0.0
        %s231 = scalar_lea.vmem [#allocation2], 16
        %232 = vst [vmem:[%s231 + $0x1] sm:$0xff] %v203
        %233 = vst [vmem:[%s231 + $0x11] sm:$0xff] %v204
        %234 = vst [vmem:[%s231 + $0x21] sm:$0xff] %v205
        %235 = vst [vmem:[%s231 + $0x31] sm:$0xff] %v206
        %236 = vst [vmem:[%s231 + $0x41] sm:$0xff] %v207
        %237 = vst [vmem:[%s231 + $0x51] sm:$0xff] %v208
        %238 = vst [vmem:[%s231 + $0x61] sm:$0xff] %v209
        %239 = vst [vmem:[%s231 + $0x71] sm:$0xff] %v210
        %v240 = vld [vmem:[#allocation2] sm:$0xff]
        %v241 = vld [vmem:[#allocation2 + $0x10] sm:$0xff]
        %v242 = vld [vmem:[#allocation2 + $0x20] sm:$0xff]
        %v243 = vld [vmem:[#allocation2 + $0x30] sm:$0xff]
        %v244 = vld [vmem:[#allocation2 + $0x40] sm:$0xff]
        %v245 = vld [vmem:[#allocation2 + $0x50] sm:$0xff]
        %v246 = vld [vmem:[#allocation2 + $0x60] sm:$0xff]
        %v247 = vld [vmem:[#allocation2 + $0x70] sm:$0xff]
        %248 = vst [vmem:[#allocation3] sm:$0xff] %v240
        %249 = vst [vmem:[#allocation3 + $0x48] sm:$0xff] %v241
        %250 = vst [vmem:[#allocation3 + $0x90] sm:$0xff] %v242
        %251 = vst [vmem:[#allocation3 + $0xd8] sm:$0xff] %v243
        %252 = vst [vmem:[#allocation3 + $0x120] sm:$0xff] %v244
        %253 = vst [vmem:[#allocation3 + $0x168] sm:$0xff] %v245
        %254 = vst [vmem:[#allocation3 + $0x1b0] sm:$0xff] %v246
        %255 = vst [vmem:[#allocation3 + $0x1f8] sm:$0xff] %v247
        %v256 = vld [vmem:[#allocation2 + $0x1] sm:$0xff]
        %v257 = vld [vmem:[#allocation2 + $0x11] sm:$0xff]
        %v258 = vld [vmem:[#allocation2 + $0x21] sm:$0xff]
        %v259 = vld [vmem:[#allocation2 + $0x31] sm:$0xff]
        %v260 = vld [vmem:[#allocation2 + $0x41] sm:$0xff]
        %v261 = vld [vmem:[#allocation2 + $0x51] sm:$0xff]
        %v262 = vld [vmem:[#allocation2 + $0x61] sm:$0xff]
        %v263 = vld [vmem:[#allocation2 + $0x71] sm:$0xff]
        %264 = vst [vmem:[#allocation3 + $0x8] sm:$0xff] %v256
        %265 = vst [vmem:[#allocation3 + $0x50] sm:$0xff] %v257
        %266 = vst [vmem:[#allocation3 + $0x98] sm:$0xff] %v258
        %267 = vst [vmem:[#allocation3 + $0xe0] sm:$0xff] %v259
        %268 = vst [vmem:[#allocation3 + $0x128] sm:$0xff] %v260
        %269 = vst [vmem:[#allocation3 + $0x170] sm:$0xff] %v261
        %270 = vst [vmem:[#allocation3 + $0x1b8] sm:$0xff] %v262
        %271 = vst [vmem:[#allocation3 + $0x200] sm:$0xff] %v263
        %v272 = vld [vmem:[#allocation2 + $0x2] sm:$0xff]
        %v273 = vld [vmem:[#allocation2 + $0x12] sm:$0xff]
        %v274 = vld [vmem:[#allocation2 + $0x22] sm:$0xff]
        %v275 = vld [vmem:[#allocation2 + $0x32] sm:$0xff]
        %v276 = vld [vmem:[#allocation2 + $0x42] sm:$0xff]
        %v277 = vld [vmem:[#allocation2 + $0x52] sm:$0xff]
        %v278 = vld [vmem:[#allocation2 + $0x62] sm:$0xff]
        %v279 = vld [vmem:[#allocation2 + $0x72] sm:$0xff]
        %280 = vst [vmem:[#allocation3 + $0x10] sm:$0xff] %v272
        %281 = vst [vmem:[#allocation3 + $0x58] sm:$0xff] %v273
        %282 = vst [vmem:[#allocation3 + $0xa0] sm:$0xff] %v274
        %283 = vst [vmem:[#allocation3 + $0xe8] sm:$0xff] %v275
        %284 = vst [vmem:[#allocation3 + $0x130] sm:$0xff] %v276
        %285 = vst [vmem:[#allocation3 + $0x178] sm:$0xff] %v277
        %286 = vst [vmem:[#allocation3 + $0x1c0] sm:$0xff] %v278
        %287 = vst [vmem:[#allocation3 + $0x208] sm:$0xff] %v279
        %v288 = vld [vmem:[%s231] sm:$0xff]
        %v289 = vld [vmem:[%s231 + $0x10] sm:$0xff]
        %v290 = vld [vmem:[%s231 + $0x20] sm:$0xff]
        %v291 = vld [vmem:[%s231 + $0x30] sm:$0xff]
        %v292 = vld [vmem:[%s231 + $0x40] sm:$0xff]
        %v293 = vld [vmem:[%s231 + $0x50] sm:$0xff]
        %v294 = vld [vmem:[%s231 + $0x60] sm:$0xff]
        %v295 = vld [vmem:[%s231 + $0x70] sm:$0xff]
        %296 = vst [vmem:[#allocation3 + $0x18] sm:$0xff] %v288
        %297 = vst [vmem:[#allocation3 + $0x60] sm:$0xff] %v289
        %298 = vst [vmem:[#allocation3 + $0xa8] sm:$0xff] %v290
        %299 = vst [vmem:[#allocation3 + $0xf0] sm:$0xff] %v291
        %300 = vst [vmem:[#allocation3 + $0x138] sm:$0xff] %v292
        %301 = vst [vmem:[#allocation3 + $0x180] sm:$0xff] %v293
        %302 = vst [vmem:[#allocation3 + $0x1c8] sm:$0xff] %v294
        %303 = vst [vmem:[#allocation3 + $0x210] sm:$0xff] %v295
        %v304 = vld [vmem:[%s231 + $0x1] sm:$0xff]
        %v305 = vld [vmem:[%s231 + $0x11] sm:$0xff]
        %v306 = vld [vmem:[%s231 + $0x21] sm:$0xff]
        %v307 = vld [vmem:[%s231 + $0x31] sm:$0xff]
        %v308 = vld [vmem:[%s231 + $0x41] sm:$0xff]
        %v309 = vld [vmem:[%s231 + $0x51] sm:$0xff]
        %v310 = vld [vmem:[%s231 + $0x61] sm:$0xff]
        %v311 = vld [vmem:[%s231 + $0x71] sm:$0xff]
        %312 = vst [vmem:[#allocation3 + $0x20] sm:$0xff] %v304
        %313 = vst [vmem:[#allocation3 + $0x68] sm:$0xff] %v305
        %314 = vst [vmem:[#allocation3 + $0xb0] sm:$0xff] %v306
        %315 = vst [vmem:[#allocation3 + $0xf8] sm:$0xff] %v307
        %316 = vst [vmem:[#allocation3 + $0x140] sm:$0xff] %v308
        %317 = vst [vmem:[#allocation3 + $0x188] sm:$0xff] %v309
        %318 = vst [vmem:[#allocation3 + $0x1d0] sm:$0xff] %v310
        %319 = vst [vmem:[#allocation3 + $0x218] sm:$0xff] %v311
        %v320 = vld [vmem:[%s231 + $0x2] sm:$0xff]
        %v321 = vld [vmem:[%s231 + $0x12] sm:$0xff]
        %v322 = vld [vmem:[%s231 + $0x22] sm:$0xff]
        %v323 = vld [vmem:[%s231 + $0x32] sm:$0xff]
        %v324 = vld [vmem:[%s231 + $0x42] sm:$0xff]
        %v325 = vld [vmem:[%s231 + $0x52] sm:$0xff]
        %v326 = vld [vmem:[%s231 + $0x62] sm:$0xff]
        %v327 = vld [vmem:[%s231 + $0x72] sm:$0xff]
        %328 = vst [vmem:[#allocation3 + $0x28] sm:$0xff] %v320
        %329 = vst [vmem:[#allocation3 + $0x70] sm:$0xff] %v321
        %330 = vst [vmem:[#allocation3 + $0xb8] sm:$0xff] %v322
        %331 = vst [vmem:[#allocation3 + $0x100] sm:$0xff] %v323
        %332 = vst [vmem:[#allocation3 + $0x148] sm:$0xff] %v324
        %333 = vst [vmem:[#allocation3 + $0x190] sm:$0xff] %v325
        %334 = vst [vmem:[#allocation3 + $0x1d8] sm:$0xff] %v326
        %335 = vst [vmem:[#allocation3 + $0x220] sm:$0xff] %v327
        %s336 = scalar_lea.vmem [#allocation2], 32
        %v337 = vld [vmem:[%s336] sm:$0xff]
        %v338 = vld [vmem:[%s336 + $0x10] sm:$0xff]
        %v339 = vld [vmem:[%s336 + $0x20] sm:$0xff]
        %v340 = vld [vmem:[%s336 + $0x30] sm:$0xff]
        %v341 = vld [vmem:[%s336 + $0x40] sm:$0xff]
        %v342 = vld [vmem:[%s336 + $0x50] sm:$0xff]
        %v343 = vld [vmem:[%s336 + $0x60] sm:$0xff]
        %v344 = vld [vmem:[%s336 + $0x70] sm:$0xff]
        %345 = vst [vmem:[#allocation3 + $0x30] sm:$0xff] %v337
        %346 = vst [vmem:[#allocation3 + $0x78] sm:$0xff] %v338
        %347 = vst [vmem:[#allocation3 + $0xc0] sm:$0xff] %v339
        %348 = vst [vmem:[#allocation3 + $0x108] sm:$0xff] %v340
        %349 = vst [vmem:[#allocation3 + $0x150] sm:$0xff] %v341
        %350 = vst [vmem:[#allocation3 + $0x198] sm:$0xff] %v342
        %351 = vst [vmem:[#allocation3 + $0x1e0] sm:$0xff] %v343
        %352 = vst [vmem:[#allocation3 + $0x228] sm:$0xff] %v344
        %v353 = vld [vmem:[%s336 + $0x1] sm:$0xff]
        %v354 = vld [vmem:[%s336 + $0x11] sm:$0xff]
        %v355 = vld [vmem:[%s336 + $0x21] sm:$0xff]
        %v356 = vld [vmem:[%s336 + $0x31] sm:$0xff]
        %v357 = vld [vmem:[%s336 + $0x41] sm:$0xff]
        %v358 = vld [vmem:[%s336 + $0x51] sm:$0xff]
        %v359 = vld [vmem:[%s336 + $0x61] sm:$0xff]
        %v360 = vld [vmem:[%s336 + $0x71] sm:$0xff]
        %361 = vst [vmem:[#allocation3 + $0x38] sm:$0xff] %v353
        %362 = vst [vmem:[#allocation3 + $0x80] sm:$0xff] %v354
        %363 = vst [vmem:[#allocation3 + $0xc8] sm:$0xff] %v355
        %364 = vst [vmem:[#allocation3 + $0x110] sm:$0xff] %v356
        %365 = vst [vmem:[#allocation3 + $0x158] sm:$0xff] %v357
        %366 = vst [vmem:[#allocation3 + $0x1a0] sm:$0xff] %v358
        %367 = vst [vmem:[#allocation3 + $0x1e8] sm:$0xff] %v359
        %368 = vst [vmem:[#allocation3 + $0x230] sm:$0xff] %v360
        %v369 = vld [vmem:[%s336 + $0x2] sm:$0xff]
        %v370 = vld [vmem:[%s336 + $0x12] sm:$0xff]
        %v371 = vld [vmem:[%s336 + $0x22] sm:$0xff]
        %v372 = vld [vmem:[%s336 + $0x32] sm:$0xff]
        %v373 = vld [vmem:[%s336 + $0x42] sm:$0xff]
        %v374 = vld [vmem:[%s336 + $0x52] sm:$0xff]
        %v375 = vld [vmem:[%s336 + $0x62] sm:$0xff]
        %v376 = vld [vmem:[%s336 + $0x72] sm:$0xff]
        %377 = vst [vmem:[#allocation3 + $0x40] sm:$0xff] %v369
        %378 = vst [vmem:[#allocation3 + $0x88] sm:$0xff] %v370
        %379 = vst [vmem:[#allocation3 + $0xd0] sm:$0xff] %v371
        %380 = vst [vmem:[#allocation3 + $0x118] sm:$0xff] %v372
        %381 = vst [vmem:[#allocation3 + $0x160] sm:$0xff] %v373
        %382 = vst [vmem:[#allocation3 + $0x1a8] sm:$0xff] %v374
        %383 = vst [vmem:[#allocation3 + $0x1f0] sm:$0xff] %v375
        %384 = vst [vmem:[#allocation3 + $0x238] sm:$0xff] %v376
        %v385 = vld [vmem:[#allocation3] sm:$0xff]
        %v386 = vld [vmem:[#allocation3 + $0x8] sm:$0xff]
        %v387 = vld [vmem:[#allocation3 + $0x10] sm:$0xff]
        %v388 = vld [vmem:[#allocation3 + $0x18] sm:$0xff]
        %v389 = vld [vmem:[#allocation3 + $0x20] sm:$0xff]
        %v390 = vld [vmem:[#allocation3 + $0x28] sm:$0xff]
        %v391 = vld [vmem:[#allocation3 + $0x30] sm:$0xff]
        %v392 = vld [vmem:[#allocation3 + $0x38] sm:$0xff]
        %v393 = vld [vmem:[#allocation3 + $0x40] sm:$0xff]
        %v394 = vld [vmem:[#allocation3 + $0x48] sm:$0xff]
        %v395 = vld [vmem:[#allocation3 + $0x50] sm:$0xff]
        %v396 = vld [vmem:[#allocation3 + $0x58] sm:$0xff]
        %v397 = vld [vmem:[#allocation3 + $0x60] sm:$0xff]
        %v398 = vld [vmem:[#allocation3 + $0x68] sm:$0xff]
        %v399 = vld [vmem:[#allocation3 + $0x70] sm:$0xff]
        %v400 = vld [vmem:[#allocation3 + $0x78] sm:$0xff]
        %v401 = vld [vmem:[#allocation3 + $0x80] sm:$0xff]
        %v402 = vld [vmem:[#allocation3 + $0x88] sm:$0xff]
        %v403 = vld [vmem:[#allocation3 + $0x90] sm:$0xff]
        %v404 = vld [vmem:[#allocation3 + $0x98] sm:$0xff]
        %v405 = vld [vmem:[#allocation3 + $0xa0] sm:$0xff]
        %v406 = vld [vmem:[#allocation3 + $0xa8] sm:$0xff]
        %v407 = vld [vmem:[#allocation3 + $0xb0] sm:$0xff]
        %v408 = vld [vmem:[#allocation3 + $0xb8] sm:$0xff]
        %v409 = vld [vmem:[#allocation3 + $0xc0] sm:$0xff]
        %v410 = vld [vmem:[#allocation3 + $0xc8] sm:$0xff]
        %v411 = vld [vmem:[#allocation3 + $0xd0] sm:$0xff]
        %v412 = vld [vmem:[#allocation3 + $0xd8] sm:$0xff]
        %v413 = vld [vmem:[#allocation3 + $0xe0] sm:$0xff]
        %v414 = vld [vmem:[#allocation3 + $0xe8] sm:$0xff]
        %v415 = vld [vmem:[#allocation3 + $0xf0] sm:$0xff]
        %v416 = vld [vmem:[#allocation3 + $0xf8] sm:$0xff]
        %v417 = vld [vmem:[#allocation3 + $0x100] sm:$0xff]
        %v418 = vld [vmem:[#allocation3 + $0x108] sm:$0xff]
        %v419 = vld [vmem:[#allocation3 + $0x110] sm:$0xff]
        %v420 = vld [vmem:[#allocation3 + $0x118] sm:$0xff]
        %v421 = vld [vmem:[#allocation3 + $0x120] sm:$0xff]
        %v422 = vld [vmem:[#allocation3 + $0x128] sm:$0xff]
        %v423 = vld [vmem:[#allocation3 + $0x130] sm:$0xff]
        %v424 = vld [vmem:[#allocation3 + $0x138] sm:$0xff]
        %v425 = vld [vmem:[#allocation3 + $0x140] sm:$0xff]
        %v426 = vld [vmem:[#allocation3 + $0x148] sm:$0xff]
        %v427 = vld [vmem:[#allocation3 + $0x150] sm:$0xff]
        %v428 = vld [vmem:[#allocation3 + $0x158] sm:$0xff]
        %v429 = vld [vmem:[#allocation3 + $0x160] sm:$0xff]
        %v430 = vld [vmem:[#allocation3 + $0x168] sm:$0xff]
        %v431 = vld [vmem:[#allocation3 + $0x170] sm:$0xff]
        %v432 = vld [vmem:[#allocation3 + $0x178] sm:$0xff]
        %v433 = vld [vmem:[#allocation3 + $0x180] sm:$0xff]
        %v434 = vld [vmem:[#allocation3 + $0x188] sm:$0xff]
        %v435 = vld [vmem:[#allocation3 + $0x190] sm:$0xff]
        %v436 = vld [vmem:[#allocation3 + $0x198] sm:$0xff]
        %v437 = vld [vmem:[#allocation3 + $0x1a0] sm:$0xff]
        %v438 = vld [vmem:[#allocation3 + $0x1a8] sm:$0xff]
        %v439 = vld [vmem:[#allocation3 + $0x1b0] sm:$0xff]
        %v440 = vld [vmem:[#allocation3 + $0x1b8] sm:$0xff]
        %v441 = vld [vmem:[#allocation3 + $0x1c0] sm:$0xff]
        %v442 = vld [vmem:[#allocation3 + $0x1c8] sm:$0xff]
        %v443 = vld [vmem:[#allocation3 + $0x1d0] sm:$0xff]
        %v444 = vld [vmem:[#allocation3 + $0x1d8] sm:$0xff]
        %v445 = vld [vmem:[#allocation3 + $0x1e0] sm:$0xff]
        %v446 = vld [vmem:[#allocation3 + $0x1e8] sm:$0xff]
        %v447 = vld [vmem:[#allocation3 + $0x1f0] sm:$0xff]
        %v448 = vld [vmem:[#allocation3 + $0x1f8] sm:$0xff]
        %v449 = vld [vmem:[#allocation3 + $0x200] sm:$0xff]
        %v450 = vld [vmem:[#allocation3 + $0x208] sm:$0xff]
        %v451 = vld [vmem:[#allocation3 + $0x210] sm:$0xff]
        %v452 = vld [vmem:[#allocation3 + $0x218] sm:$0xff]
        %v453 = vld [vmem:[#allocation3 + $0x220] sm:$0xff]
        %v454 = vld [vmem:[#allocation3 + $0x228] sm:$0xff]
        %v455 = vld [vmem:[#allocation3 + $0x230] sm:$0xff]
        %v456 = vld [vmem:[#allocation3 + $0x238] sm:$0xff]
        %v457 = vld [vmem:[#allocation4] sm:$0xff]
        %v458 = vld [vmem:[#allocation4 + $0x8] sm:$0xff]
        %v459 = vld [vmem:[#allocation4 + $0x10] sm:$0xff]
        %v460 = vld [vmem:[#allocation4 + $0x18] sm:$0xff]
        %v461 = vld [vmem:[#allocation4 + $0x20] sm:$0xff]
        %v462 = vld [vmem:[#allocation4 + $0x28] sm:$0xff]
        %v463 = vld [vmem:[#allocation4 + $0x30] sm:$0xff]
        %v464 = vld [vmem:[#allocation4 + $0x38] sm:$0xff]
        %v465 = vld [vmem:[#allocation4 + $0x40] sm:$0xff]
        %v466 = vld [vmem:[#allocation4 + $0x48] sm:$0xff]
        %v467 = vld [vmem:[#allocation4 + $0x50] sm:$0xff]
        %v468 = vld [vmem:[#allocation4 + $0x58] sm:$0xff]
        %v469 = vld [vmem:[#allocation4 + $0x60] sm:$0xff]
        %v470 = vld [vmem:[#allocation4 + $0x68] sm:$0xff]
        %v471 = vld [vmem:[#allocation4 + $0x70] sm:$0xff]
        %v472 = vld [vmem:[#allocation4 + $0x78] sm:$0xff]
        %v473 = vld [vmem:[#allocation4 + $0x80] sm:$0xff]
        %v474 = vld [vmem:[#allocation4 + $0x88] sm:$0xff]
        %v475 = vld [vmem:[#allocation4 + $0x90] sm:$0xff]
        %v476 = vld [vmem:[#allocation4 + $0x98] sm:$0xff]
        %v477 = vld [vmem:[#allocation4 + $0xa0] sm:$0xff]
        %v478 = vld [vmem:[#allocation4 + $0xa8] sm:$0xff]
        %v479 = vld [vmem:[#allocation4 + $0xb0] sm:$0xff]
        %v480 = vld [vmem:[#allocation4 + $0xb8] sm:$0xff]
        %v481 = vld [vmem:[#allocation4 + $0xc0] sm:$0xff]
        %v482 = vld [vmem:[#allocation4 + $0xc8] sm:$0xff]
        %v483 = vld [vmem:[#allocation4 + $0xd0] sm:$0xff]
        %v484 = vld [vmem:[#allocation4 + $0xd8] sm:$0xff]
        %v485 = vld [vmem:[#allocation4 + $0xe0] sm:$0xff]
        %v486 = vld [vmem:[#allocation4 + $0xe8] sm:$0xff]
        %v487 = vld [vmem:[#allocation4 + $0xf0] sm:$0xff]
        %v488 = vld [vmem:[#allocation4 + $0xf8] sm:$0xff]
        %v489 = vld [vmem:[#allocation4 + $0x100] sm:$0xff]
        %v490 = vld [vmem:[#allocation4 + $0x108] sm:$0xff]
        %v491 = vld [vmem:[#allocation4 + $0x110] sm:$0xff]
        %v492 = vld [vmem:[#allocation4 + $0x118] sm:$0xff]
        %v493 = vld [vmem:[#allocation4 + $0x120] sm:$0xff]
        %v494 = vld [vmem:[#allocation4 + $0x128] sm:$0xff]
        %v495 = vld [vmem:[#allocation4 + $0x130] sm:$0xff]
        %v496 = vld [vmem:[#allocation4 + $0x138] sm:$0xff]
        %v497 = vld [vmem:[#allocation4 + $0x140] sm:$0xff]
        %v498 = vld [vmem:[#allocation4 + $0x148] sm:$0xff]
        %v499 = vld [vmem:[#allocation4 + $0x150] sm:$0xff]
        %v500 = vld [vmem:[#allocation4 + $0x158] sm:$0xff]
        %v501 = vld [vmem:[#allocation4 + $0x160] sm:$0xff]
        %v502 = vld [vmem:[#allocation4 + $0x168] sm:$0xff]
        %v503 = vld [vmem:[#allocation4 + $0x170] sm:$0xff]
        %v504 = vld [vmem:[#allocation4 + $0x178] sm:$0xff]
        %v505 = vld [vmem:[#allocation4 + $0x180] sm:$0xff]
        %v506 = vld [vmem:[#allocation4 + $0x188] sm:$0xff]
        %v507 = vld [vmem:[#allocation4 + $0x190] sm:$0xff]
        %v508 = vld [vmem:[#allocation4 + $0x198] sm:$0xff]
        %v509 = vld [vmem:[#allocation4 + $0x1a0] sm:$0xff]
        %v510 = vld [vmem:[#allocation4 + $0x1a8] sm:$0xff]
        %v511 = vld [vmem:[#allocation4 + $0x1b0] sm:$0xff]
        %v512 = vld [vmem:[#allocation4 + $0x1b8] sm:$0xff]
        %v513 = vld [vmem:[#allocation4 + $0x1c0] sm:$0xff]
        %v514 = vld [vmem:[#allocation4 + $0x1c8] sm:$0xff]
        %v515 = vld [vmem:[#allocation4 + $0x1d0] sm:$0xff]
        %v516 = vld [vmem:[#allocation4 + $0x1d8] sm:$0xff]
        %v517 = vld [vmem:[#allocation4 + $0x1e0] sm:$0xff]
        %v518 = vld [vmem:[#allocation4 + $0x1e8] sm:$0xff]
        %v519 = vld [vmem:[#allocation4 + $0x1f0] sm:$0xff]
        %v520 = vld [vmem:[#allocation4 + $0x1f8] sm:$0xff]
        %v521 = vld [vmem:[#allocation4 + $0x200] sm:$0xff]
        %v522 = vld [vmem:[#allocation4 + $0x208] sm:$0xff]
        %v523 = vld [vmem:[#allocation4 + $0x210] sm:$0xff]
        %v524 = vld [vmem:[#allocation4 + $0x218] sm:$0xff]
        %v525 = vld [vmem:[#allocation4 + $0x220] sm:$0xff]
        %v526 = vld [vmem:[#allocation4 + $0x228] sm:$0xff]
        %v527 = vld [vmem:[#allocation4 + $0x230] sm:$0xff]
        %v528 = vld [vmem:[#allocation4 + $0x238] sm:$0xff]
        %v529 = vld [vmem:[#allocation4 + $0x240] sm:$0xff]
        %v530 = vld [vmem:[#allocation4 + $0x248] sm:$0xff]
        %v531 = vld [vmem:[#allocation4 + $0x250] sm:$0xff]
        %v532 = vld [vmem:[#allocation4 + $0x258] sm:$0xff]
        %v533 = vld [vmem:[#allocation4 + $0x260] sm:$0xff]
        %v534 = vld [vmem:[#allocation4 + $0x268] sm:$0xff]
        %v535 = vld [vmem:[#allocation4 + $0x270] sm:$0xff]
        %v536 = vld [vmem:[#allocation4 + $0x278] sm:$0xff]
        %v537 = vld [vmem:[#allocation4 + $0x280] sm:$0xff]
        %v538 = vld [vmem:[#allocation4 + $0x288] sm:$0xff]
        %v539 = vld [vmem:[#allocation4 + $0x290] sm:$0xff]
        %v540 = vld [vmem:[#allocation4 + $0x298] sm:$0xff]
        %v541 = vld [vmem:[#allocation4 + $0x2a0] sm:$0xff]
        %v542 = vld [vmem:[#allocation4 + $0x2a8] sm:$0xff]
        %v543 = vld [vmem:[#allocation4 + $0x2b0] sm:$0xff]
        %v544 = vld [vmem:[#allocation4 + $0x2b8] sm:$0xff]
        %v545 = vld [vmem:[#allocation4 + $0x2c0] sm:$0xff]
        %v546 = vld [vmem:[#allocation4 + $0x2c8] sm:$0xff]
        %v547 = vld [vmem:[#allocation4 + $0x2d0] sm:$0xff]
        %v548 = vld [vmem:[#allocation4 + $0x2d8] sm:$0xff]
        %v549 = vld [vmem:[#allocation4 + $0x2e0] sm:$0xff]
        %v550 = vld [vmem:[#allocation4 + $0x2e8] sm:$0xff]
        %v551 = vld [vmem:[#allocation4 + $0x2f0] sm:$0xff]
        %v552 = vld [vmem:[#allocation4 + $0x2f8] sm:$0xff]
        %v553 = vld [vmem:[#allocation4 + $0x300] sm:$0xff]
        %v554 = vld [vmem:[#allocation4 + $0x308] sm:$0xff]
        %v555 = vld [vmem:[#allocation4 + $0x310] sm:$0xff]
        %v556 = vld [vmem:[#allocation4 + $0x318] sm:$0xff]
        %v557 = vld [vmem:[#allocation4 + $0x320] sm:$0xff]
        %v558 = vld [vmem:[#allocation4 + $0x328] sm:$0xff]
        %v559 = vld [vmem:[#allocation4 + $0x330] sm:$0xff]
        %v560 = vld [vmem:[#allocation4 + $0x338] sm:$0xff]
        %v561 = vld [vmem:[#allocation4 + $0x340] sm:$0xff]
        %v562 = vld [vmem:[#allocation4 + $0x348] sm:$0xff]
        %v563 = vld [vmem:[#allocation4 + $0x350] sm:$0xff]
        %v564 = vld [vmem:[#allocation4 + $0x358] sm:$0xff]
        %v565 = vld [vmem:[#allocation4 + $0x360] sm:$0xff]
        %v566 = vld [vmem:[#allocation4 + $0x368] sm:$0xff]
        %v567 = vld [vmem:[#allocation4 + $0x370] sm:$0xff]
        %v568 = vld [vmem:[#allocation4 + $0x378] sm:$0xff]
        %v569 = vld [vmem:[#allocation4 + $0x380] sm:$0xff]
        %v570 = vld [vmem:[#allocation4 + $0x388] sm:$0xff]
        %v571 = vld [vmem:[#allocation4 + $0x390] sm:$0xff]
        %v572 = vld [vmem:[#allocation4 + $0x398] sm:$0xff]
        %v573 = vld [vmem:[#allocation4 + $0x3a0] sm:$0xff]
        %v574 = vld [vmem:[#allocation4 + $0x3a8] sm:$0xff]
        %v575 = vld [vmem:[#allocation4 + $0x3b0] sm:$0xff]
        %v576 = vld [vmem:[#allocation4 + $0x3b8] sm:$0xff]
        %v577 = vld [vmem:[#allocation4 + $0x3c0] sm:$0xff]
        %v578 = vld [vmem:[#allocation4 + $0x3c8] sm:$0xff]
        %v579 = vld [vmem:[#allocation4 + $0x3d0] sm:$0xff]
        %v580 = vld [vmem:[#allocation4 + $0x3d8] sm:$0xff]
        %v581 = vld [vmem:[#allocation4 + $0x3e0] sm:$0xff]
        %v582 = vld [vmem:[#allocation4 + $0x3e8] sm:$0xff]
        %v583 = vld [vmem:[#allocation4 + $0x3f0] sm:$0xff]
        %v584 = vld [vmem:[#allocation4 + $0x3f8] sm:$0xff]
        %v585 = vld [vmem:[#allocation4 + $0x400] sm:$0xff]
        %v586 = vld [vmem:[#allocation4 + $0x408] sm:$0xff]
        %v587 = vld [vmem:[#allocation4 + $0x410] sm:$0xff]
        %v588 = vld [vmem:[#allocation4 + $0x418] sm:$0xff]
        %v589 = vld [vmem:[#allocation4 + $0x420] sm:$0xff]
        %v590 = vld [vmem:[#allocation4 + $0x428] sm:$0xff]
        %v591 = vld [vmem:[#allocation4 + $0x430] sm:$0xff]
        %v592 = vld [vmem:[#allocation4 + $0x438] sm:$0xff]
        %v593 = vld [vmem:[#allocation4 + $0x440] sm:$0xff]
        %v594 = vld [vmem:[#allocation4 + $0x448] sm:$0xff]
        %v595 = vld [vmem:[#allocation4 + $0x450] sm:$0xff]
        %v596 = vld [vmem:[#allocation4 + $0x458] sm:$0xff]
        %v597 = vld [vmem:[#allocation4 + $0x460] sm:$0xff]
        %v598 = vld [vmem:[#allocation4 + $0x468] sm:$0xff]
        %v599 = vld [vmem:[#allocation4 + $0x470] sm:$0xff]
        %v600 = vld [vmem:[#allocation4 + $0x478] sm:$0xff]
        %v601 = vld [vmem:[#allocation4 + $0x480] sm:$0xff]
        %v602 = vld [vmem:[#allocation4 + $0x488] sm:$0xff]
        %v603 = vld [vmem:[#allocation4 + $0x490] sm:$0xff]
        %v604 = vld [vmem:[#allocation4 + $0x498] sm:$0xff]
        %v605 = vld [vmem:[#allocation4 + $0x4a0] sm:$0xff]
        %v606 = vld [vmem:[#allocation4 + $0x4a8] sm:$0xff]
        %v607 = vld [vmem:[#allocation4 + $0x4b0] sm:$0xff]
        %v608 = vld [vmem:[#allocation4 + $0x4b8] sm:$0xff]
        %v609 = vld [vmem:[#allocation4 + $0x4c0] sm:$0xff]
        %v610 = vld [vmem:[#allocation4 + $0x4c8] sm:$0xff]
        %v611 = vld [vmem:[#allocation4 + $0x4d0] sm:$0xff]
        %v612 = vld [vmem:[#allocation4 + $0x4d8] sm:$0xff]
        %v613 = vld [vmem:[#allocation4 + $0x4e0] sm:$0xff]
        %v614 = vld [vmem:[#allocation4 + $0x4e8] sm:$0xff]
        %v615 = vld [vmem:[#allocation4 + $0x4f0] sm:$0xff]
        %v616 = vld [vmem:[#allocation4 + $0x4f8] sm:$0xff]
        %v617 = vld [vmem:[#allocation4 + $0x500] sm:$0xff]
        %v618 = vld [vmem:[#allocation4 + $0x508] sm:$0xff]
        %v619 = vld [vmem:[#allocation4 + $0x510] sm:$0xff]
        %v620 = vld [vmem:[#allocation4 + $0x518] sm:$0xff]
        %v621 = vld [vmem:[#allocation4 + $0x520] sm:$0xff]
        %v622 = vld [vmem:[#allocation4 + $0x528] sm:$0xff]
        %v623 = vld [vmem:[#allocation4 + $0x530] sm:$0xff]
        %v624 = vld [vmem:[#allocation4 + $0x538] sm:$0xff]
        %v625 = vld [vmem:[#allocation4 + $0x540] sm:$0xff]
        %v626 = vld [vmem:[#allocation4 + $0x548] sm:$0xff]
        %v627 = vld [vmem:[#allocation4 + $0x550] sm:$0xff]
        %v628 = vld [vmem:[#allocation4 + $0x558] sm:$0xff]
        %v629 = vld [vmem:[#allocation4 + $0x560] sm:$0xff]
        %v630 = vld [vmem:[#allocation4 + $0x568] sm:$0xff]
        %v631 = vld [vmem:[#allocation4 + $0x570] sm:$0xff]
        %v632 = vld [vmem:[#allocation4 + $0x578] sm:$0xff]
        %v633 = vld [vmem:[#allocation4 + $0x580] sm:$0xff]
        %v634 = vld [vmem:[#allocation4 + $0x588] sm:$0xff]
        %v635 = vld [vmem:[#allocation4 + $0x590] sm:$0xff]
        %v636 = vld [vmem:[#allocation4 + $0x598] sm:$0xff]
        %v637 = vld [vmem:[#allocation4 + $0x5a0] sm:$0xff]
        %v638 = vld [vmem:[#allocation4 + $0x5a8] sm:$0xff]
        %v639 = vld [vmem:[#allocation4 + $0x5b0] sm:$0xff]
        %v640 = vld [vmem:[#allocation4 + $0x5b8] sm:$0xff]
        %v641 = vld [vmem:[#allocation4 + $0x5c0] sm:$0xff]
        %v642 = vld [vmem:[#allocation4 + $0x5c8] sm:$0xff]
        %v643 = vld [vmem:[#allocation4 + $0x5d0] sm:$0xff]
        %v644 = vld [vmem:[#allocation4 + $0x5d8] sm:$0xff]
        %v645 = vld [vmem:[#allocation4 + $0x5e0] sm:$0xff]
        %v646 = vld [vmem:[#allocation4 + $0x5e8] sm:$0xff]
        %v647 = vld [vmem:[#allocation4 + $0x5f0] sm:$0xff]
        %v648 = vld [vmem:[#allocation4 + $0x5f8] sm:$0xff]
        %v649 = vld [vmem:[#allocation4 + $0x600] sm:$0xff]
        %v650 = vld [vmem:[#allocation4 + $0x608] sm:$0xff]
        %v651 = vld [vmem:[#allocation4 + $0x610] sm:$0xff]
        %v652 = vld [vmem:[#allocation4 + $0x618] sm:$0xff]
        %v653 = vld [vmem:[#allocation4 + $0x620] sm:$0xff]
        %v654 = vld [vmem:[#allocation4 + $0x628] sm:$0xff]
        %v655 = vld [vmem:[#allocation4 + $0x630] sm:$0xff]
        %v656 = vld [vmem:[#allocation4 + $0x638] sm:$0xff]
        %v657 = vld [vmem:[#allocation4 + $0x640] sm:$0xff]
        %v658 = vld [vmem:[#allocation4 + $0x648] sm:$0xff]
        %v659 = vld [vmem:[#allocation4 + $0x650] sm:$0xff]
        %v660 = vld [vmem:[#allocation4 + $0x658] sm:$0xff]
        %v661 = vld [vmem:[#allocation4 + $0x660] sm:$0xff]
        %v662 = vld [vmem:[#allocation4 + $0x668] sm:$0xff]
        %v663 = vld [vmem:[#allocation4 + $0x670] sm:$0xff]
        %v664 = vld [vmem:[#allocation4 + $0x678] sm:$0xff]
        %v665 = vld [vmem:[#allocation4 + $0x680] sm:$0xff]
        %v666 = vld [vmem:[#allocation4 + $0x688] sm:$0xff]
        %v667 = vld [vmem:[#allocation4 + $0x690] sm:$0xff]
        %v668 = vld [vmem:[#allocation4 + $0x698] sm:$0xff]
        %v669 = vld [vmem:[#allocation4 + $0x6a0] sm:$0xff]
        %v670 = vld [vmem:[#allocation4 + $0x6a8] sm:$0xff]
        %v671 = vld [vmem:[#allocation4 + $0x6b0] sm:$0xff]
        %v672 = vld [vmem:[#allocation4 + $0x6b8] sm:$0xff]
        %v673 = vld [vmem:[#allocation4 + $0x6c0] sm:$0xff]
        %v674 = vld [vmem:[#allocation4 + $0x6c8] sm:$0xff]
        %v675 = vld [vmem:[#allocation4 + $0x6d0] sm:$0xff]
        %v676 = vld [vmem:[#allocation4 + $0x6d8] sm:$0xff]
        %v677 = vld [vmem:[#allocation4 + $0x6e0] sm:$0xff]
        %v678 = vld [vmem:[#allocation4 + $0x6e8] sm:$0xff]
        %v679 = vld [vmem:[#allocation4 + $0x6f0] sm:$0xff]
        %v680 = vld [vmem:[#allocation4 + $0x6f8] sm:$0xff]
        %v681 = vld [vmem:[#allocation4 + $0x700] sm:$0xff]
        %v682 = vld [vmem:[#allocation4 + $0x708] sm:$0xff]
        %v683 = vld [vmem:[#allocation4 + $0x710] sm:$0xff]
        %v684 = vld [vmem:[#allocation4 + $0x718] sm:$0xff]
        %v685 = vld [vmem:[#allocation4 + $0x720] sm:$0xff]
        %v686 = vld [vmem:[#allocation4 + $0x728] sm:$0xff]
        %v687 = vld [vmem:[#allocation4 + $0x730] sm:$0xff]
        %v688 = vld [vmem:[#allocation4 + $0x738] sm:$0xff]
        %v689 = vld [vmem:[#allocation4 + $0x740] sm:$0xff]
        %v690 = vld [vmem:[#allocation4 + $0x748] sm:$0xff]
        %v691 = vld [vmem:[#allocation4 + $0x750] sm:$0xff]
        %v692 = vld [vmem:[#allocation4 + $0x758] sm:$0xff]
        %v693 = vld [vmem:[#allocation4 + $0x760] sm:$0xff]
        %v694 = vld [vmem:[#allocation4 + $0x768] sm:$0xff]
        %v695 = vld [vmem:[#allocation4 + $0x770] sm:$0xff]
        %v696 = vld [vmem:[#allocation4 + $0x778] sm:$0xff]
        %v697 = vld [vmem:[#allocation4 + $0x780] sm:$0xff]
        %v698 = vld [vmem:[#allocation4 + $0x788] sm:$0xff]
        %v699 = vld [vmem:[#allocation4 + $0x790] sm:$0xff]
        %v700 = vld [vmem:[#allocation4 + $0x798] sm:$0xff]
        %v701 = vld [vmem:[#allocation4 + $0x7a0] sm:$0xff]
        %v702 = vld [vmem:[#allocation4 + $0x7a8] sm:$0xff]
        %v703 = vld [vmem:[#allocation4 + $0x7b0] sm:$0xff]
        %v704 = vld [vmem:[#allocation4 + $0x7b8] sm:$0xff]
        %v705 = vld [vmem:[#allocation4 + $0x7c0] sm:$0xff]
        %v706 = vld [vmem:[#allocation4 + $0x7c8] sm:$0xff]
        %v707 = vld [vmem:[#allocation4 + $0x7d0] sm:$0xff]
        %v708 = vld [vmem:[#allocation4 + $0x7d8] sm:$0xff]
        %v709 = vld [vmem:[#allocation4 + $0x7e0] sm:$0xff]
        %v710 = vld [vmem:[#allocation4 + $0x7e8] sm:$0xff]
        %v711 = vld [vmem:[#allocation4 + $0x7f0] sm:$0xff]
        %v712 = vld [vmem:[#allocation4 + $0x7f8] sm:$0xff]
        %v713 = vld [vmem:[#allocation4 + $0x800] sm:$0xff]
        %v714 = vld [vmem:[#allocation4 + $0x808] sm:$0xff]
        %v715 = vld [vmem:[#allocation4 + $0x810] sm:$0xff]
        %v716 = vld [vmem:[#allocation4 + $0x818] sm:$0xff]
        %v717 = vld [vmem:[#allocation4 + $0x820] sm:$0xff]
        %v718 = vld [vmem:[#allocation4 + $0x828] sm:$0xff]
        %v719 = vld [vmem:[#allocation4 + $0x830] sm:$0xff]
        %v720 = vld [vmem:[#allocation4 + $0x838] sm:$0xff]
        %v721 = vld [vmem:[#allocation4 + $0x840] sm:$0xff]
        %v722 = vld [vmem:[#allocation4 + $0x848] sm:$0xff]
        %v723 = vld [vmem:[#allocation4 + $0x850] sm:$0xff]
        %v724 = vld [vmem:[#allocation4 + $0x858] sm:$0xff]
        %v725 = vld [vmem:[#allocation4 + $0x860] sm:$0xff]
        %v726 = vld [vmem:[#allocation4 + $0x868] sm:$0xff]
        %v727 = vld [vmem:[#allocation4 + $0x870] sm:$0xff]
        %v728 = vld [vmem:[#allocation4 + $0x878] sm:$0xff]
        %v729 = vld [vmem:[#allocation4 + $0x880] sm:$0xff]
        %v730 = vld [vmem:[#allocation4 + $0x888] sm:$0xff]
        %v731 = vld [vmem:[#allocation4 + $0x890] sm:$0xff]
        %v732 = vld [vmem:[#allocation4 + $0x898] sm:$0xff]
        %v733 = vld [vmem:[#allocation4 + $0x8a0] sm:$0xff]
        %v734 = vld [vmem:[#allocation4 + $0x8a8] sm:$0xff]
        %v735 = vld [vmem:[#allocation4 + $0x8b0] sm:$0xff]
        %v736 = vld [vmem:[#allocation4 + $0x8b8] sm:$0xff]
        %v737 = vld [vmem:[#allocation4 + $0x8c0] sm:$0xff]
        %v738 = vld [vmem:[#allocation4 + $0x8c8] sm:$0xff]
        %v739 = vld [vmem:[#allocation4 + $0x8d0] sm:$0xff]
        %v740 = vld [vmem:[#allocation4 + $0x8d8] sm:$0xff]
        %v741 = vld [vmem:[#allocation4 + $0x8e0] sm:$0xff]
        %v742 = vld [vmem:[#allocation4 + $0x8e8] sm:$0xff]
        %v743 = vld [vmem:[#allocation4 + $0x8f0] sm:$0xff]
        %v744 = vld [vmem:[#allocation4 + $0x8f8] sm:$0xff]
        %v745 = vld [vmem:[#allocation4 + $0x900] sm:$0xff]
        %v746 = vld [vmem:[#allocation4 + $0x908] sm:$0xff]
        %v747 = vld [vmem:[#allocation4 + $0x910] sm:$0xff]
        %v748 = vld [vmem:[#allocation4 + $0x918] sm:$0xff]
        %v749 = vld [vmem:[#allocation4 + $0x920] sm:$0xff]
        %v750 = vld [vmem:[#allocation4 + $0x928] sm:$0xff]
        %v751 = vld [vmem:[#allocation4 + $0x930] sm:$0xff]
        %v752 = vld [vmem:[#allocation4 + $0x938] sm:$0xff]
        %v753 = vld [vmem:[#allocation4 + $0x940] sm:$0xff]
        %v754 = vld [vmem:[#allocation4 + $0x948] sm:$0xff]
        %v755 = vld [vmem:[#allocation4 + $0x950] sm:$0xff]
        %v756 = vld [vmem:[#allocation4 + $0x958] sm:$0xff]
        %v757 = vld [vmem:[#allocation4 + $0x960] sm:$0xff]
        %v758 = vld [vmem:[#allocation4 + $0x968] sm:$0xff]
        %v759 = vld [vmem:[#allocation4 + $0x970] sm:$0xff]
        %v760 = vld [vmem:[#allocation4 + $0x978] sm:$0xff]
        %v761 = vld [vmem:[#allocation4 + $0x980] sm:$0xff]
        %v762 = vld [vmem:[#allocation4 + $0x988] sm:$0xff]
        %v763 = vld [vmem:[#allocation4 + $0x990] sm:$0xff]
        %v764 = vld [vmem:[#allocation4 + $0x998] sm:$0xff]
        %v765 = vld [vmem:[#allocation4 + $0x9a0] sm:$0xff]
        %v766 = vld [vmem:[#allocation4 + $0x9a8] sm:$0xff]
        %v767 = vld [vmem:[#allocation4 + $0x9b0] sm:$0xff]
        %v768 = vld [vmem:[#allocation4 + $0x9b8] sm:$0xff]
        %v769 = vld [vmem:[#allocation4 + $0x9c0] sm:$0xff]
        %v770 = vld [vmem:[#allocation4 + $0x9c8] sm:$0xff]
        %v771 = vld [vmem:[#allocation4 + $0x9d0] sm:$0xff]
        %v772 = vld [vmem:[#allocation4 + $0x9d8] sm:$0xff]
        %v773 = vld [vmem:[#allocation4 + $0x9e0] sm:$0xff]
        %v774 = vld [vmem:[#allocation4 + $0x9e8] sm:$0xff]
        %v775 = vld [vmem:[#allocation4 + $0x9f0] sm:$0xff]
        %v776 = vld [vmem:[#allocation4 + $0x9f8] sm:$0xff]
        %v777 = vld [vmem:[#allocation4 + $0xa00] sm:$0xff]
        %v778 = vld [vmem:[#allocation4 + $0xa08] sm:$0xff]
        %v779 = vld [vmem:[#allocation4 + $0xa10] sm:$0xff]
        %v780 = vld [vmem:[#allocation4 + $0xa18] sm:$0xff]
        %v781 = vld [vmem:[#allocation4 + $0xa20] sm:$0xff]
        %v782 = vld [vmem:[#allocation4 + $0xa28] sm:$0xff]
        %v783 = vld [vmem:[#allocation4 + $0xa30] sm:$0xff]
        %v784 = vld [vmem:[#allocation4 + $0xa38] sm:$0xff]
        %v785 = vld [vmem:[#allocation4 + $0xa40] sm:$0xff]
        %v786 = vld [vmem:[#allocation4 + $0xa48] sm:$0xff]
        %v787 = vld [vmem:[#allocation4 + $0xa50] sm:$0xff]
        %v788 = vld [vmem:[#allocation4 + $0xa58] sm:$0xff]
        %v789 = vld [vmem:[#allocation4 + $0xa60] sm:$0xff]
        %v790 = vld [vmem:[#allocation4 + $0xa68] sm:$0xff]
        %v791 = vld [vmem:[#allocation4 + $0xa70] sm:$0xff]
        %v792 = vld [vmem:[#allocation4 + $0xa78] sm:$0xff]
        %v793 = vld [vmem:[#allocation4 + $0xa80] sm:$0xff]
        %v794 = vld [vmem:[#allocation4 + $0xa88] sm:$0xff]
        %v795 = vld [vmem:[#allocation4 + $0xa90] sm:$0xff]
        %v796 = vld [vmem:[#allocation4 + $0xa98] sm:$0xff]
        %v797 = vld [vmem:[#allocation4 + $0xaa0] sm:$0xff]
        %v798 = vld [vmem:[#allocation4 + $0xaa8] sm:$0xff]
        %v799 = vld [vmem:[#allocation4 + $0xab0] sm:$0xff]
        %v800 = vld [vmem:[#allocation4 + $0xab8] sm:$0xff]
        %v801 = vld [vmem:[#allocation4 + $0xac0] sm:$0xff]
        %v802 = vld [vmem:[#allocation4 + $0xac8] sm:$0xff]
        %v803 = vld [vmem:[#allocation4 + $0xad0] sm:$0xff]
        %v804 = vld [vmem:[#allocation4 + $0xad8] sm:$0xff]
        %v805 = vld [vmem:[#allocation4 + $0xae0] sm:$0xff]
        %v806 = vld [vmem:[#allocation4 + $0xae8] sm:$0xff]
        %v807 = vld [vmem:[#allocation4 + $0xaf0] sm:$0xff]
        %v808 = vld [vmem:[#allocation4 + $0xaf8] sm:$0xff]
        %v809 = vld [vmem:[#allocation4 + $0xb00] sm:$0xff]
        %v810 = vld [vmem:[#allocation4 + $0xb08] sm:$0xff]
        %v811 = vld [vmem:[#allocation4 + $0xb10] sm:$0xff]
        %v812 = vld [vmem:[#allocation4 + $0xb18] sm:$0xff]
        %v813 = vld [vmem:[#allocation4 + $0xb20] sm:$0xff]
        %v814 = vld [vmem:[#allocation4 + $0xb28] sm:$0xff]
        %v815 = vld [vmem:[#allocation4 + $0xb30] sm:$0xff]
        %v816 = vld [vmem:[#allocation4 + $0xb38] sm:$0xff]
        %v817 = vld [vmem:[#allocation4 + $0xb40] sm:$0xff]
        %v818 = vld [vmem:[#allocation4 + $0xb48] sm:$0xff]
        %v819 = vld [vmem:[#allocation4 + $0xb50] sm:$0xff]
        %v820 = vld [vmem:[#allocation4 + $0xb58] sm:$0xff]
        %v821 = vld [vmem:[#allocation4 + $0xb60] sm:$0xff]
        %v822 = vld [vmem:[#allocation4 + $0xb68] sm:$0xff]
        %v823 = vld [vmem:[#allocation4 + $0xb70] sm:$0xff]
        %v824 = vld [vmem:[#allocation4 + $0xb78] sm:$0xff]
        %v825 = vld [vmem:[#allocation4 + $0xb80] sm:$0xff]
        %v826 = vld [vmem:[#allocation4 + $0xb88] sm:$0xff]
        %v827 = vld [vmem:[#allocation4 + $0xb90] sm:$0xff]
        %v828 = vld [vmem:[#allocation4 + $0xb98] sm:$0xff]
        %v829 = vld [vmem:[#allocation4 + $0xba0] sm:$0xff]
        %v830 = vld [vmem:[#allocation4 + $0xba8] sm:$0xff]
        %v831 = vld [vmem:[#allocation4 + $0xbb0] sm:$0xff]
        %v832 = vld [vmem:[#allocation4 + $0xbb8] sm:$0xff]
        %v833 = vld [vmem:[#allocation4 + $0xbc0] sm:$0xff]
        %v834 = vld [vmem:[#allocation4 + $0xbc8] sm:$0xff]
        %v835 = vld [vmem:[#allocation4 + $0xbd0] sm:$0xff]
        %v836 = vld [vmem:[#allocation4 + $0xbd8] sm:$0xff]
        %v837 = vld [vmem:[#allocation4 + $0xbe0] sm:$0xff]
        %v838 = vld [vmem:[#allocation4 + $0xbe8] sm:$0xff]
        %v839 = vld [vmem:[#allocation4 + $0xbf0] sm:$0xff]
        %v840 = vld [vmem:[#allocation4 + $0xbf8] sm:$0xff]
        %v841 = vld [vmem:[#allocation4 + $0xc00] sm:$0xff]
        %v842 = vld [vmem:[#allocation4 + $0xc08] sm:$0xff]
        %v843 = vld [vmem:[#allocation4 + $0xc10] sm:$0xff]
        %v844 = vld [vmem:[#allocation4 + $0xc18] sm:$0xff]
        %v845 = vld [vmem:[#allocation4 + $0xc20] sm:$0xff]
        %v846 = vld [vmem:[#allocation4 + $0xc28] sm:$0xff]
        %v847 = vld [vmem:[#allocation4 + $0xc30] sm:$0xff]
        %v848 = vld [vmem:[#allocation4 + $0xc38] sm:$0xff]
        %v849 = vld [vmem:[#allocation4 + $0xc40] sm:$0xff]
        %v850 = vld [vmem:[#allocation4 + $0xc48] sm:$0xff]
        %v851 = vld [vmem:[#allocation4 + $0xc50] sm:$0xff]
        %v852 = vld [vmem:[#allocation4 + $0xc58] sm:$0xff]
        %v853 = vld [vmem:[#allocation4 + $0xc60] sm:$0xff]
        %v854 = vld [vmem:[#allocation4 + $0xc68] sm:$0xff]
        %v855 = vld [vmem:[#allocation4 + $0xc70] sm:$0xff]
        %v856 = vld [vmem:[#allocation4 + $0xc78] sm:$0xff]
        %v857 = vld [vmem:[#allocation4 + $0xc80] sm:$0xff]
        %v858 = vld [vmem:[#allocation4 + $0xc88] sm:$0xff]
        %v859 = vld [vmem:[#allocation4 + $0xc90] sm:$0xff]
        %v860 = vld [vmem:[#allocation4 + $0xc98] sm:$0xff]
        %v861 = vld [vmem:[#allocation4 + $0xca0] sm:$0xff]
        %v862 = vld [vmem:[#allocation4 + $0xca8] sm:$0xff]
        %v863 = vld [vmem:[#allocation4 + $0xcb0] sm:$0xff]
        %v864 = vld [vmem:[#allocation4 + $0xcb8] sm:$0xff]
        %v865 = vld [vmem:[#allocation4 + $0xcc0] sm:$0xff]
        %v866 = vld [vmem:[#allocation4 + $0xcc8] sm:$0xff]
        %v867 = vld [vmem:[#allocation4 + $0xcd0] sm:$0xff]
        %v868 = vld [vmem:[#allocation4 + $0xcd8] sm:$0xff]
        %v869 = vld [vmem:[#allocation4 + $0xce0] sm:$0xff]
        %v870 = vld [vmem:[#allocation4 + $0xce8] sm:$0xff]
        %v871 = vld [vmem:[#allocation4 + $0xcf0] sm:$0xff]
        %v872 = vld [vmem:[#allocation4 + $0xcf8] sm:$0xff]
        %v873 = vld [vmem:[#allocation4 + $0xd00] sm:$0xff]
        %v874 = vld [vmem:[#allocation4 + $0xd08] sm:$0xff]
        %v875 = vld [vmem:[#allocation4 + $0xd10] sm:$0xff]
        %v876 = vld [vmem:[#allocation4 + $0xd18] sm:$0xff]
        %v877 = vld [vmem:[#allocation4 + $0xd20] sm:$0xff]
        %v878 = vld [vmem:[#allocation4 + $0xd28] sm:$0xff]
        %v879 = vld [vmem:[#allocation4 + $0xd30] sm:$0xff]
        %v880 = vld [vmem:[#allocation4 + $0xd38] sm:$0xff]
        %v881 = vld [vmem:[#allocation4 + $0xd40] sm:$0xff]
        %v882 = vld [vmem:[#allocation4 + $0xd48] sm:$0xff]
        %v883 = vld [vmem:[#allocation4 + $0xd50] sm:$0xff]
        %v884 = vld [vmem:[#allocation4 + $0xd58] sm:$0xff]
        %v885 = vld [vmem:[#allocation4 + $0xd60] sm:$0xff]
        %v886 = vld [vmem:[#allocation4 + $0xd68] sm:$0xff]
        %v887 = vld [vmem:[#allocation4 + $0xd70] sm:$0xff]
        %v888 = vld [vmem:[#allocation4 + $0xd78] sm:$0xff]
        %v889 = vld [vmem:[#allocation4 + $0xd80] sm:$0xff]
        %v890 = vld [vmem:[#allocation4 + $0xd88] sm:$0xff]
        %v891 = vld [vmem:[#allocation4 + $0xd90] sm:$0xff]
        %v892 = vld [vmem:[#allocation4 + $0xd98] sm:$0xff]
        %v893 = vld [vmem:[#allocation4 + $0xda0] sm:$0xff]
        %v894 = vld [vmem:[#allocation4 + $0xda8] sm:$0xff]
        %v895 = vld [vmem:[#allocation4 + $0xdb0] sm:$0xff]
        %v896 = vld [vmem:[#allocation4 + $0xdb8] sm:$0xff]
        %v897 = vld [vmem:[#allocation4 + $0xdc0] sm:$0xff]
        %v898 = vld [vmem:[#allocation4 + $0xdc8] sm:$0xff]
        %v899 = vld [vmem:[#allocation4 + $0xdd0] sm:$0xff]
        %v900 = vld [vmem:[#allocation4 + $0xdd8] sm:$0xff]
        %v901 = vld [vmem:[#allocation4 + $0xde0] sm:$0xff]
        %v902 = vld [vmem:[#allocation4 + $0xde8] sm:$0xff]
        %v903 = vld [vmem:[#allocation4 + $0xdf0] sm:$0xff]
        %v904 = vld [vmem:[#allocation4 + $0xdf8] sm:$0xff]
        %v905 = vld [vmem:[#allocation4 + $0xe00] sm:$0xff]
        %v906 = vld [vmem:[#allocation4 + $0xe08] sm:$0xff]
        %v907 = vld [vmem:[#allocation4 + $0xe10] sm:$0xff]
        %v908 = vld [vmem:[#allocation4 + $0xe18] sm:$0xff]
        %v909 = vld [vmem:[#allocation4 + $0xe20] sm:$0xff]
        %v910 = vld [vmem:[#allocation4 + $0xe28] sm:$0xff]
        %v911 = vld [vmem:[#allocation4 + $0xe30] sm:$0xff]
        %v912 = vld [vmem:[#allocation4 + $0xe38] sm:$0xff]
        %v913 = vld [vmem:[#allocation4 + $0xe40] sm:$0xff]
        %v914 = vld [vmem:[#allocation4 + $0xe48] sm:$0xff]
        %v915 = vld [vmem:[#allocation4 + $0xe50] sm:$0xff]
        %v916 = vld [vmem:[#allocation4 + $0xe58] sm:$0xff]
        %v917 = vld [vmem:[#allocation4 + $0xe60] sm:$0xff]
        %v918 = vld [vmem:[#allocation4 + $0xe68] sm:$0xff]
        %v919 = vld [vmem:[#allocation4 + $0xe70] sm:$0xff]
        %v920 = vld [vmem:[#allocation4 + $0xe78] sm:$0xff]
        %v921 = vld [vmem:[#allocation4 + $0xe80] sm:$0xff]
        %v922 = vld [vmem:[#allocation4 + $0xe88] sm:$0xff]
        %v923 = vld [vmem:[#allocation4 + $0xe90] sm:$0xff]
        %v924 = vld [vmem:[#allocation4 + $0xe98] sm:$0xff]
        %v925 = vld [vmem:[#allocation4 + $0xea0] sm:$0xff]
        %v926 = vld [vmem:[#allocation4 + $0xea8] sm:$0xff]
        %v927 = vld [vmem:[#allocation4 + $0xeb0] sm:$0xff]
        %v928 = vld [vmem:[#allocation4 + $0xeb8] sm:$0xff]
        %v929 = vld [vmem:[#allocation4 + $0xec0] sm:$0xff]
        %v930 = vld [vmem:[#allocation4 + $0xec8] sm:$0xff]
        %v931 = vld [vmem:[#allocation4 + $0xed0] sm:$0xff]
        %v932 = vld [vmem:[#allocation4 + $0xed8] sm:$0xff]
        %v933 = vld [vmem:[#allocation4 + $0xee0] sm:$0xff]
        %v934 = vld [vmem:[#allocation4 + $0xee8] sm:$0xff]
        %v935 = vld [vmem:[#allocation4 + $0xef0] sm:$0xff]
        %v936 = vld [vmem:[#allocation4 + $0xef8] sm:$0xff]
        %v937 = vld [vmem:[#allocation4 + $0xf00] sm:$0xff]
        %v938 = vld [vmem:[#allocation4 + $0xf08] sm:$0xff]
        %v939 = vld [vmem:[#allocation4 + $0xf10] sm:$0xff]
        %v940 = vld [vmem:[#allocation4 + $0xf18] sm:$0xff]
        %v941 = vld [vmem:[#allocation4 + $0xf20] sm:$0xff]
        %v942 = vld [vmem:[#allocation4 + $0xf28] sm:$0xff]
        %v943 = vld [vmem:[#allocation4 + $0xf30] sm:$0xff]
        %v944 = vld [vmem:[#allocation4 + $0xf38] sm:$0xff]
        %v945 = vld [vmem:[#allocation4 + $0xf40] sm:$0xff]
        %v946 = vld [vmem:[#allocation4 + $0xf48] sm:$0xff]
        %v947 = vld [vmem:[#allocation4 + $0xf50] sm:$0xff]
        %v948 = vld [vmem:[#allocation4 + $0xf58] sm:$0xff]
        %v949 = vld [vmem:[#allocation4 + $0xf60] sm:$0xff]
        %v950 = vld [vmem:[#allocation4 + $0xf68] sm:$0xff]
        %v951 = vld [vmem:[#allocation4 + $0xf70] sm:$0xff]
        %v952 = vld [vmem:[#allocation4 + $0xf78] sm:$0xff]
        %v953 = vld [vmem:[#allocation4 + $0xf80] sm:$0xff]
        %v954 = vld [vmem:[#allocation4 + $0xf88] sm:$0xff]
        %v955 = vld [vmem:[#allocation4 + $0xf90] sm:$0xff]
        %v956 = vld [vmem:[#allocation4 + $0xf98] sm:$0xff]
        %v957 = vld [vmem:[#allocation4 + $0xfa0] sm:$0xff]
        %v958 = vld [vmem:[#allocation4 + $0xfa8] sm:$0xff]
        %v959 = vld [vmem:[#allocation4 + $0xfb0] sm:$0xff]
        %v960 = vld [vmem:[#allocation4 + $0xfb8] sm:$0xff]
        %v961 = vld [vmem:[#allocation4 + $0xfc0] sm:$0xff]
        %v962 = vld [vmem:[#allocation4 + $0xfc8] sm:$0xff]
        %v963 = vld [vmem:[#allocation4 + $0xfd0] sm:$0xff]
        %v964 = vld [vmem:[#allocation4 + $0xfd8] sm:$0xff]
        %v965 = vld [vmem:[#allocation4 + $0xfe0] sm:$0xff]
        %v966 = vld [vmem:[#allocation4 + $0xfe8] sm:$0xff]
        %v967 = vld [vmem:[#allocation4 + $0xff0] sm:$0xff]
        %v968 = vld [vmem:[#allocation4 + $0xff8] sm:$0xff]
        %v969 = vld [vmem:[#allocation4 + $0x1000] sm:$0xff]
        %v970 = vld [vmem:[#allocation4 + $0x1008] sm:$0xff]
        %v971 = vld [vmem:[#allocation4 + $0x1010] sm:$0xff]
        %v972 = vld [vmem:[#allocation4 + $0x1018] sm:$0xff]
        %v973 = vld [vmem:[#allocation4 + $0x1020] sm:$0xff]
        %v974 = vld [vmem:[#allocation4 + $0x1028] sm:$0xff]
        %v975 = vld [vmem:[#allocation4 + $0x1030] sm:$0xff]
        %v976 = vld [vmem:[#allocation4 + $0x1038] sm:$0xff]
        %v977 = vld [vmem:[#allocation4 + $0x1040] sm:$0xff]
        %v978 = vld [vmem:[#allocation4 + $0x1048] sm:$0xff]
        %v979 = vld [vmem:[#allocation4 + $0x1050] sm:$0xff]
        %v980 = vld [vmem:[#allocation4 + $0x1058] sm:$0xff]
        %v981 = vld [vmem:[#allocation4 + $0x1060] sm:$0xff]
        %v982 = vld [vmem:[#allocation4 + $0x1068] sm:$0xff]
        %v983 = vld [vmem:[#allocation4 + $0x1070] sm:$0xff]
        %v984 = vld [vmem:[#allocation4 + $0x1078] sm:$0xff]
        %v985 = vld [vmem:[#allocation4 + $0x1080] sm:$0xff]
        %v986 = vld [vmem:[#allocation4 + $0x1088] sm:$0xff]
        %v987 = vld [vmem:[#allocation4 + $0x1090] sm:$0xff]
        %v988 = vld [vmem:[#allocation4 + $0x1098] sm:$0xff]
        %v989 = vld [vmem:[#allocation4 + $0x10a0] sm:$0xff]
        %v990 = vld [vmem:[#allocation4 + $0x10a8] sm:$0xff]
        %v991 = vld [vmem:[#allocation4 + $0x10b0] sm:$0xff]
        %v992 = vld [vmem:[#allocation4 + $0x10b8] sm:$0xff]
        %v993 = vld [vmem:[#allocation4 + $0x10c0] sm:$0xff]
        %v994 = vld [vmem:[#allocation4 + $0x10c8] sm:$0xff]
        %v995 = vld [vmem:[#allocation4 + $0x10d0] sm:$0xff]
        %v996 = vld [vmem:[#allocation4 + $0x10d8] sm:$0xff]
        %v997 = vld [vmem:[#allocation4 + $0x10e0] sm:$0xff]
        %v998 = vld [vmem:[#allocation4 + $0x10e8] sm:$0xff]
        %v999 = vld [vmem:[#allocation4 + $0x10f0] sm:$0xff]
        %v1000 = vld [vmem:[#allocation4 + $0x10f8] sm:$0xff]
        %v1001 = vld [vmem:[#allocation4 + $0x1100] sm:$0xff]
        %v1002 = vld [vmem:[#allocation4 + $0x1108] sm:$0xff]
        %v1003 = vld [vmem:[#allocation4 + $0x1110] sm:$0xff]
        %v1004 = vld [vmem:[#allocation4 + $0x1118] sm:$0xff]
        %v1005 = vld [vmem:[#allocation4 + $0x1120] sm:$0xff]
        %v1006 = vld [vmem:[#allocation4 + $0x1128] sm:$0xff]
        %v1007 = vld [vmem:[#allocation4 + $0x1130] sm:$0xff]
        %v1008 = vld [vmem:[#allocation4 + $0x1138] sm:$0xff]
        %v1009 = vld [vmem:[#allocation4 + $0x1140] sm:$0xff]
        %v1010 = vld [vmem:[#allocation4 + $0x1148] sm:$0xff]
        %v1011 = vld [vmem:[#allocation4 + $0x1150] sm:$0xff]
        %v1012 = vld [vmem:[#allocation4 + $0x1158] sm:$0xff]
        %v1013 = vld [vmem:[#allocation4 + $0x1160] sm:$0xff]
        %v1014 = vld [vmem:[#allocation4 + $0x1168] sm:$0xff]
        %v1015 = vld [vmem:[#allocation4 + $0x1170] sm:$0xff]
        %v1016 = vld [vmem:[#allocation4 + $0x1178] sm:$0xff]
        %v1017 = vld [vmem:[#allocation4 + $0x1180] sm:$0xff]
        %v1018 = vld [vmem:[#allocation4 + $0x1188] sm:$0xff]
        %v1019 = vld [vmem:[#allocation4 + $0x1190] sm:$0xff]
        %v1020 = vld [vmem:[#allocation4 + $0x1198] sm:$0xff]
        %v1021 = vld [vmem:[#allocation4 + $0x11a0] sm:$0xff]
        %v1022 = vld [vmem:[#allocation4 + $0x11a8] sm:$0xff]
        %v1023 = vld [vmem:[#allocation4 + $0x11b0] sm:$0xff]
        %v1024 = vld [vmem:[#allocation4 + $0x11b8] sm:$0xff]
        %v1025 = vld [vmem:[#allocation4 + $0x11c0] sm:$0xff]
        %v1026 = vld [vmem:[#allocation4 + $0x11c8] sm:$0xff]
        %v1027 = vld [vmem:[#allocation4 + $0x11d0] sm:$0xff]
        %v1028 = vld [vmem:[#allocation4 + $0x11d8] sm:$0xff]
        %v1029 = vld [vmem:[#allocation4 + $0x11e0] sm:$0xff]
        %v1030 = vld [vmem:[#allocation4 + $0x11e8] sm:$0xff]
        %v1031 = vld [vmem:[#allocation4 + $0x11f0] sm:$0xff]
        %v1032 = vld [vmem:[#allocation4 + $0x11f8] sm:$0xff]
        %v1033 = vld [vmem:[#allocation6] sm:$0xf]
        %v1035 = vperm.slane %v1033, 0
        %v1036 = vperm.slane %v1033, 1
        %v1037 = vperm.slane %v1033, 2
        %v1038 = vperm.slane %v1033, 3
        %1043 = vmatpush.msra.mxu0 %v517
        %1044 = vmatpush.msra.mxu0 %v513
        %1045 = vmatpush.msra.mxu0 %v509
        %1046 = vmatpush.msra.mxu0 %v505
        %1047 = vmatpush.msra.mxu0 %v501
        %1048 = vmatpush.msra.mxu0 %v497
        %1049 = vmatpush.msra.mxu0 %v493
        %1050 = vmatpush.msra.mxu0 %v489
        %1051 = vmatpush.msra.mxu0 %v485
        %1052 = vmatpush.msra.mxu0 %v481
        %1053 = vmatpush.msra.mxu0 %v477
        %1054 = vmatpush.msra.mxu0 %v473
        %1055 = vmatpush.msra.mxu0 %v469
        %1056 = vmatpush.msra.mxu0 %v465
        %1057 = vmatpush.msra.mxu0 %v461
        %1058 = vmatpush.msra.mxu0 %v457
        %1059 = vmatmul.f32.gmra.mxu0 %v385
        %v1060 = vpop.f32.mrf.mxu0
        %v1061 = vadd.f32 %v1035, %v1060
        %1062 = vmatmul.f32.gmra.mxu0 %v394
        %v1063 = vpop.f32.mrf.mxu0
        %v1064 = vadd.f32 %v1035, %v1063
        %1065 = vmatmul.f32.gmra.mxu0 %v403
        %v1066 = vpop.f32.mrf.mxu0
        %v1067 = vadd.f32 %v1035, %v1066
        %1068 = vmatmul.f32.gmra.mxu0 %v412
        %v1069 = vpop.f32.mrf.mxu0
        %v1070 = vadd.f32 %v1035, %v1069
        %1071 = vmatmul.f32.gmra.mxu0 %v421
        %v1072 = vpop.f32.mrf.mxu0
        %v1073 = vadd.f32 %v1035, %v1072
        %1074 = vmatmul.f32.gmra.mxu0 %v430
        %v1075 = vpop.f32.mrf.mxu0
        %v1076 = vadd.f32 %v1035, %v1075
        %1077 = vmatmul.f32.gmra.mxu0 %v439
        %v1078 = vpop.f32.mrf.mxu0
        %v1079 = vadd.f32 %v1035, %v1078
        %1080 = vmatmul.f32.gmra.mxu0 %v448
        %v1081 = vpop.f32.mrf.mxu0
        %v1082 = vadd.f32 %v1035, %v1081
        %1083 = vdwg.mxu0
        %1084 = vmatpush.msra.mxu0 %v581
        %1085 = vmatpush.msra.mxu0 %v577
        %1086 = vmatpush.msra.mxu0 %v573
        %1087 = vmatpush.msra.mxu0 %v569
        %1088 = vmatpush.msra.mxu0 %v565
        %1089 = vmatpush.msra.mxu0 %v561
        %1090 = vmatpush.msra.mxu0 %v557
        %1091 = vmatpush.msra.mxu0 %v553
        %1092 = vmatpush.msra.mxu0 %v549
        %1093 = vmatpush.msra.mxu0 %v545
        %1094 = vmatpush.msra.mxu0 %v541
        %1095 = vmatpush.msra.mxu0 %v537
        %1096 = vmatpush.msra.mxu0 %v533
        %1097 = vmatpush.msra.mxu0 %v529
        %1098 = vmatpush.msra.mxu0 %v525
        %1099 = vmatpush.msra.mxu0 %v521
        %1100 = vmatmul.f32.gmra.mxu0 %v386
        %v1101 = vpop.f32.mrf.mxu0
        %v1102 = vadd.f32 %v1061, %v1101
        %1103 = vmatmul.f32.gmra.mxu0 %v395
        %v1104 = vpop.f32.mrf.mxu0
        %v1105 = vadd.f32 %v1064, %v1104
        %1106 = vmatmul.f32.gmra.mxu0 %v404
        %v1107 = vpop.f32.mrf.mxu0
        %v1108 = vadd.f32 %v1067, %v1107
        %1109 = vmatmul.f32.gmra.mxu0 %v413
        %v1110 = vpop.f32.mrf.mxu0
        %v1111 = vadd.f32 %v1070, %v1110
        %1112 = vmatmul.f32.gmra.mxu0 %v422
        %v1113 = vpop.f32.mrf.mxu0
        %v1114 = vadd.f32 %v1073, %v1113
        %1115 = vmatmul.f32.gmra.mxu0 %v431
        %v1116 = vpop.f32.mrf.mxu0
        %v1117 = vadd.f32 %v1076, %v1116
        %1118 = vmatmul.f32.gmra.mxu0 %v440
        %v1119 = vpop.f32.mrf.mxu0
        %v1120 = vadd.f32 %v1079, %v1119
        %1121 = vmatmul.f32.gmra.mxu0 %v449
        %v1122 = vpop.f32.mrf.mxu0
        %v1123 = vadd.f32 %v1082, %v1122
        %1124 = vdwg.mxu0
        %1125 = vmatpush.msra.mxu0 %v645
        %1126 = vmatpush.msra.mxu0 %v641
        %1127 = vmatpush.msra.mxu0 %v637
        %1128 = vmatpush.msra.mxu0 %v633
        %1129 = vmatpush.msra.mxu0 %v629
        %1130 = vmatpush.msra.mxu0 %v625
        %1131 = vmatpush.msra.mxu0 %v621
        %1132 = vmatpush.msra.mxu0 %v617
        %1133 = vmatpush.msra.mxu0 %v613
        %1134 = vmatpush.msra.mxu0 %v609
        %1135 = vmatpush.msra.mxu0 %v605
        %1136 = vmatpush.msra.mxu0 %v601
        %1137 = vmatpush.msra.mxu0 %v597
        %1138 = vmatpush.msra.mxu0 %v593
        %1139 = vmatpush.msra.mxu0 %v589
        %1140 = vmatpush.msra.mxu0 %v585
        %1141 = vmatmul.f32.gmra.mxu0 %v387
        %v1142 = vpop.f32.mrf.mxu0
        %v1143 = vadd.f32 %v1102, %v1142
        %1144 = vmatmul.f32.gmra.mxu0 %v396
        %v1145 = vpop.f32.mrf.mxu0
        %v1146 = vadd.f32 %v1105, %v1145
        %1147 = vmatmul.f32.gmra.mxu0 %v405
        %v1148 = vpop.f32.mrf.mxu0
        %v1149 = vadd.f32 %v1108, %v1148
        %1150 = vmatmul.f32.gmra.mxu0 %v414
        %v1151 = vpop.f32.mrf.mxu0
        %v1152 = vadd.f32 %v1111, %v1151
        %1153 = vmatmul.f32.gmra.mxu0 %v423
        %v1154 = vpop.f32.mrf.mxu0
        %v1155 = vadd.f32 %v1114, %v1154
        %1156 = vmatmul.f32.gmra.mxu0 %v432
        %v1157 = vpop.f32.mrf.mxu0
        %v1158 = vadd.f32 %v1117, %v1157
        %1159 = vmatmul.f32.gmra.mxu0 %v441
        %v1160 = vpop.f32.mrf.mxu0
        %v1161 = vadd.f32 %v1120, %v1160
        %1162 = vmatmul.f32.gmra.mxu0 %v450
        %v1163 = vpop.f32.mrf.mxu0
        %v1164 = vadd.f32 %v1123, %v1163
        %1165 = vdwg.mxu0
        %1166 = vmatpush.msra.mxu0 %v709
        %1167 = vmatpush.msra.mxu0 %v705
        %1168 = vmatpush.msra.mxu0 %v701
        %1169 = vmatpush.msra.mxu0 %v697
        %1170 = vmatpush.msra.mxu0 %v693
        %1171 = vmatpush.msra.mxu0 %v689
        %1172 = vmatpush.msra.mxu0 %v685
        %1173 = vmatpush.msra.mxu0 %v681
        %1174 = vmatpush.msra.mxu0 %v677
        %1175 = vmatpush.msra.mxu0 %v673
        %1176 = vmatpush.msra.mxu0 %v669
        %1177 = vmatpush.msra.mxu0 %v665
        %1178 = vmatpush.msra.mxu0 %v661
        %1179 = vmatpush.msra.mxu0 %v657
        %1180 = vmatpush.msra.mxu0 %v653
        %1181 = vmatpush.msra.mxu0 %v649
        %1182 = vmatmul.f32.gmra.mxu0 %v388
        %v1183 = vpop.f32.mrf.mxu0
        %v1184 = vadd.f32 %v1143, %v1183
        %1185 = vmatmul.f32.gmra.mxu0 %v397
        %v1186 = vpop.f32.mrf.mxu0
        %v1187 = vadd.f32 %v1146, %v1186
        %1188 = vmatmul.f32.gmra.mxu0 %v406
        %v1189 = vpop.f32.mrf.mxu0
        %v1190 = vadd.f32 %v1149, %v1189
        %1191 = vmatmul.f32.gmra.mxu0 %v415
        %v1192 = vpop.f32.mrf.mxu0
        %v1193 = vadd.f32 %v1152, %v1192
        %1194 = vmatmul.f32.gmra.mxu0 %v424
        %v1195 = vpop.f32.mrf.mxu0
        %v1196 = vadd.f32 %v1155, %v1195
        %1197 = vmatmul.f32.gmra.mxu0 %v433
        %v1198 = vpop.f32.mrf.mxu0
        %v1199 = vadd.f32 %v1158, %v1198
        %1200 = vmatmul.f32.gmra.mxu0 %v442
        %v1201 = vpop.f32.mrf.mxu0
        %v1202 = vadd.f32 %v1161, %v1201
        %1203 = vmatmul.f32.gmra.mxu0 %v451
        %v1204 = vpop.f32.mrf.mxu0
        %v1205 = vadd.f32 %v1164, %v1204
        %1206 = vdwg.mxu0
        %1207 = vmatpush.msra.mxu0 %v773
        %1208 = vmatpush.msra.mxu0 %v769
        %1209 = vmatpush.msra.mxu0 %v765
        %1210 = vmatpush.msra.mxu0 %v761
        %1211 = vmatpush.msra.mxu0 %v757
        %1212 = vmatpush.msra.mxu0 %v753
        %1213 = vmatpush.msra.mxu0 %v749
        %1214 = vmatpush.msra.mxu0 %v745
        %1215 = vmatpush.msra.mxu0 %v741
        %1216 = vmatpush.msra.mxu0 %v737
        %1217 = vmatpush.msra.mxu0 %v733
        %1218 = vmatpush.msra.mxu0 %v729
        %1219 = vmatpush.msra.mxu0 %v725
        %1220 = vmatpush.msra.mxu0 %v721
        %1221 = vmatpush.msra.mxu0 %v717
        %1222 = vmatpush.msra.mxu0 %v713
        %1223 = vmatmul.f32.gmra.mxu0 %v389
        %v1224 = vpop.f32.mrf.mxu0
        %v1225 = vadd.f32 %v1184, %v1224
        %1226 = vmatmul.f32.gmra.mxu0 %v398
        %v1227 = vpop.f32.mrf.mxu0
        %v1228 = vadd.f32 %v1187, %v1227
        %1229 = vmatmul.f32.gmra.mxu0 %v407
        %v1230 = vpop.f32.mrf.mxu0
        %v1231 = vadd.f32 %v1190, %v1230
        %1232 = vmatmul.f32.gmra.mxu0 %v416
        %v1233 = vpop.f32.mrf.mxu0
        %v1234 = vadd.f32 %v1193, %v1233
        %1235 = vmatmul.f32.gmra.mxu0 %v425
        %v1236 = vpop.f32.mrf.mxu0
        %v1237 = vadd.f32 %v1196, %v1236
        %1238 = vmatmul.f32.gmra.mxu0 %v434
        %v1239 = vpop.f32.mrf.mxu0
        %v1240 = vadd.f32 %v1199, %v1239
        %1241 = vmatmul.f32.gmra.mxu0 %v443
        %v1242 = vpop.f32.mrf.mxu0
        %v1243 = vadd.f32 %v1202, %v1242
        %1244 = vmatmul.f32.gmra.mxu0 %v452
        %v1245 = vpop.f32.mrf.mxu0
        %v1246 = vadd.f32 %v1205, %v1245
        %1247 = vdwg.mxu0
        %1248 = vmatpush.msra.mxu0 %v837
        %1249 = vmatpush.msra.mxu0 %v833
        %1250 = vmatpush.msra.mxu0 %v829
        %1251 = vmatpush.msra.mxu0 %v825
        %1252 = vmatpush.msra.mxu0 %v821
        %1253 = vmatpush.msra.mxu0 %v817
        %1254 = vmatpush.msra.mxu0 %v813
        %1255 = vmatpush.msra.mxu0 %v809
        %1256 = vmatpush.msra.mxu0 %v805
        %1257 = vmatpush.msra.mxu0 %v801
        %1258 = vmatpush.msra.mxu0 %v797
        %1259 = vmatpush.msra.mxu0 %v793
        %1260 = vmatpush.msra.mxu0 %v789
        %1261 = vmatpush.msra.mxu0 %v785
        %1262 = vmatpush.msra.mxu0 %v781
        %1263 = vmatpush.msra.mxu0 %v777
        %1264 = vmatmul.f32.gmra.mxu0 %v390
        %v1265 = vpop.f32.mrf.mxu0
        %v1266 = vadd.f32 %v1225, %v1265
        %1267 = vmatmul.f32.gmra.mxu0 %v399
        %v1268 = vpop.f32.mrf.mxu0
        %v1269 = vadd.f32 %v1228, %v1268
        %1270 = vmatmul.f32.gmra.mxu0 %v408
        %v1271 = vpop.f32.mrf.mxu0
        %v1272 = vadd.f32 %v1231, %v1271
        %1273 = vmatmul.f32.gmra.mxu0 %v417
        %v1274 = vpop.f32.mrf.mxu0
        %v1275 = vadd.f32 %v1234, %v1274
        %1276 = vmatmul.f32.gmra.mxu0 %v426
        %v1277 = vpop.f32.mrf.mxu0
        %v1278 = vadd.f32 %v1237, %v1277
        %1279 = vmatmul.f32.gmra.mxu0 %v435
        %v1280 = vpop.f32.mrf.mxu0
        %v1281 = vadd.f32 %v1240, %v1280
        %1282 = vmatmul.f32.gmra.mxu0 %v444
        %v1283 = vpop.f32.mrf.mxu0
        %v1284 = vadd.f32 %v1243, %v1283
        %1285 = vmatmul.f32.gmra.mxu0 %v453
        %v1286 = vpop.f32.mrf.mxu0
        %v1287 = vadd.f32 %v1246, %v1286
        %1288 = vdwg.mxu0
        %1289 = vmatpush.msra.mxu0 %v901
        %1290 = vmatpush.msra.mxu0 %v897
        %1291 = vmatpush.msra.mxu0 %v893
        %1292 = vmatpush.msra.mxu0 %v889
        %1293 = vmatpush.msra.mxu0 %v885
        %1294 = vmatpush.msra.mxu0 %v881
        %1295 = vmatpush.msra.mxu0 %v877
        %1296 = vmatpush.msra.mxu0 %v873
        %1297 = vmatpush.msra.mxu0 %v869
        %1298 = vmatpush.msra.mxu0 %v865
        %1299 = vmatpush.msra.mxu0 %v861
        %1300 = vmatpush.msra.mxu0 %v857
        %1301 = vmatpush.msra.mxu0 %v853
        %1302 = vmatpush.msra.mxu0 %v849
        %1303 = vmatpush.msra.mxu0 %v845
        %1304 = vmatpush.msra.mxu0 %v841
        %1305 = vmatmul.f32.gmra.mxu0 %v391
        %v1306 = vpop.f32.mrf.mxu0
        %v1307 = vadd.f32 %v1266, %v1306
        %1308 = vmatmul.f32.gmra.mxu0 %v400
        %v1309 = vpop.f32.mrf.mxu0
        %v1310 = vadd.f32 %v1269, %v1309
        %1311 = vmatmul.f32.gmra.mxu0 %v409
        %v1312 = vpop.f32.mrf.mxu0
        %v1313 = vadd.f32 %v1272, %v1312
        %1314 = vmatmul.f32.gmra.mxu0 %v418
        %v1315 = vpop.f32.mrf.mxu0
        %v1316 = vadd.f32 %v1275, %v1315
        %1317 = vmatmul.f32.gmra.mxu0 %v427
        %v1318 = vpop.f32.mrf.mxu0
        %v1319 = vadd.f32 %v1278, %v1318
        %1320 = vmatmul.f32.gmra.mxu0 %v436
        %v1321 = vpop.f32.mrf.mxu0
        %v1322 = vadd.f32 %v1281, %v1321
        %1323 = vmatmul.f32.gmra.mxu0 %v445
        %v1324 = vpop.f32.mrf.mxu0
        %v1325 = vadd.f32 %v1284, %v1324
        %1326 = vmatmul.f32.gmra.mxu0 %v454
        %v1327 = vpop.f32.mrf.mxu0
        %v1328 = vadd.f32 %v1287, %v1327
        %1329 = vdwg.mxu0
        %1330 = vmatpush.msra.mxu0 %v965
        %1331 = vmatpush.msra.mxu0 %v961
        %1332 = vmatpush.msra.mxu0 %v957
        %1333 = vmatpush.msra.mxu0 %v953
        %1334 = vmatpush.msra.mxu0 %v949
        %1335 = vmatpush.msra.mxu0 %v945
        %1336 = vmatpush.msra.mxu0 %v941
        %1337 = vmatpush.msra.mxu0 %v937
        %1338 = vmatpush.msra.mxu0 %v933
        %1339 = vmatpush.msra.mxu0 %v929
        %1340 = vmatpush.msra.mxu0 %v925
        %1341 = vmatpush.msra.mxu0 %v921
        %1342 = vmatpush.msra.mxu0 %v917
        %1343 = vmatpush.msra.mxu0 %v913
        %1344 = vmatpush.msra.mxu0 %v909
        %1345 = vmatpush.msra.mxu0 %v905
        %1346 = vmatmul.f32.gmra.mxu0 %v392
        %v1347 = vpop.f32.mrf.mxu0
        %v1348 = vadd.f32 %v1307, %v1347
        %1349 = vmatmul.f32.gmra.mxu0 %v401
        %v1350 = vpop.f32.mrf.mxu0
        %v1351 = vadd.f32 %v1310, %v1350
        %1352 = vmatmul.f32.gmra.mxu0 %v410
        %v1353 = vpop.f32.mrf.mxu0
        %v1354 = vadd.f32 %v1313, %v1353
        %1355 = vmatmul.f32.gmra.mxu0 %v419
        %v1356 = vpop.f32.mrf.mxu0
        %v1357 = vadd.f32 %v1316, %v1356
        %1358 = vmatmul.f32.gmra.mxu0 %v428
        %v1359 = vpop.f32.mrf.mxu0
        %v1360 = vadd.f32 %v1319, %v1359
        %1361 = vmatmul.f32.gmra.mxu0 %v437
        %v1362 = vpop.f32.mrf.mxu0
        %v1363 = vadd.f32 %v1322, %v1362
        %1364 = vmatmul.f32.gmra.mxu0 %v446
        %v1365 = vpop.f32.mrf.mxu0
        %v1366 = vadd.f32 %v1325, %v1365
        %1367 = vmatmul.f32.gmra.mxu0 %v455
        %v1368 = vpop.f32.mrf.mxu0
        %v1369 = vadd.f32 %v1328, %v1368
        %1370 = vdwg.mxu0
        %1371 = vmatpush.msra.mxu0 %v1029
        %1372 = vmatpush.msra.mxu0 %v1025
        %1373 = vmatpush.msra.mxu0 %v1021
        %1374 = vmatpush.msra.mxu0 %v1017
        %1375 = vmatpush.msra.mxu0 %v1013
        %1376 = vmatpush.msra.mxu0 %v1009
        %1377 = vmatpush.msra.mxu0 %v1005
        %1378 = vmatpush.msra.mxu0 %v1001
        %1379 = vmatpush.msra.mxu0 %v997
        %1380 = vmatpush.msra.mxu0 %v993
        %1381 = vmatpush.msra.mxu0 %v989
        %1382 = vmatpush.msra.mxu0 %v985
        %1383 = vmatpush.msra.mxu0 %v981
        %1384 = vmatpush.msra.mxu0 %v977
        %1385 = vmatpush.msra.mxu0 %v973
        %1386 = vmatpush.msra.mxu0 %v969
        %1387 = vmatmul.f32.gmra.mxu0 %v393
        %v1388 = vpop.f32.mrf.mxu0
        %v1389 = vadd.f32 %v1348, %v1388
        %1390 = vmatmul.f32.gmra.mxu0 %v402
        %v1391 = vpop.f32.mrf.mxu0
        %v1392 = vadd.f32 %v1351, %v1391
        %1393 = vmatmul.f32.gmra.mxu0 %v411
        %v1394 = vpop.f32.mrf.mxu0
        %v1395 = vadd.f32 %v1354, %v1394
        %1396 = vmatmul.f32.gmra.mxu0 %v420
        %v1397 = vpop.f32.mrf.mxu0
        %v1398 = vadd.f32 %v1357, %v1397
        %1399 = vmatmul.f32.gmra.mxu0 %v429
        %v1400 = vpop.f32.mrf.mxu0
        %v1401 = vadd.f32 %v1360, %v1400
        %1402 = vmatmul.f32.gmra.mxu0 %v438
        %v1403 = vpop.f32.mrf.mxu0
        %v1404 = vadd.f32 %v1363, %v1403
        %1405 = vmatmul.f32.gmra.mxu0 %v447
        %v1406 = vpop.f32.mrf.mxu0
        %v1407 = vadd.f32 %v1366, %v1406
        %1408 = vmatmul.f32.gmra.mxu0 %v456
        %v1409 = vpop.f32.mrf.mxu0
        %v1410 = vadd.f32 %v1369, %v1409
        %1411 = vdwg.mxu0
        %1412 = vmatpush.msra.mxu0 %v518
        %1413 = vmatpush.msra.mxu0 %v514
        %1414 = vmatpush.msra.mxu0 %v510
        %1415 = vmatpush.msra.mxu0 %v506
        %1416 = vmatpush.msra.mxu0 %v502
        %1417 = vmatpush.msra.mxu0 %v498
        %1418 = vmatpush.msra.mxu0 %v494
        %1419 = vmatpush.msra.mxu0 %v490
        %1420 = vmatpush.msra.mxu0 %v486
        %1421 = vmatpush.msra.mxu0 %v482
        %1422 = vmatpush.msra.mxu0 %v478
        %1423 = vmatpush.msra.mxu0 %v474
        %1424 = vmatpush.msra.mxu0 %v470
        %1425 = vmatpush.msra.mxu0 %v466
        %1426 = vmatpush.msra.mxu0 %v462
        %1427 = vmatpush.msra.mxu0 %v458
        %1428 = vmatmul.f32.gmra.mxu0 %v385
        %v1429 = vpop.f32.mrf.mxu0
        %v1430 = vadd.f32 %v1036, %v1429
        %1431 = vmatmul.f32.gmra.mxu0 %v394
        %v1432 = vpop.f32.mrf.mxu0
        %v1433 = vadd.f32 %v1036, %v1432
        %1434 = vmatmul.f32.gmra.mxu0 %v403
        %v1435 = vpop.f32.mrf.mxu0
        %v1436 = vadd.f32 %v1036, %v1435
        %1437 = vmatmul.f32.gmra.mxu0 %v412
        %v1438 = vpop.f32.mrf.mxu0
        %v1439 = vadd.f32 %v1036, %v1438
        %1440 = vmatmul.f32.gmra.mxu0 %v421
        %v1441 = vpop.f32.mrf.mxu0
        %v1442 = vadd.f32 %v1036, %v1441
        %1443 = vmatmul.f32.gmra.mxu0 %v430
        %v1444 = vpop.f32.mrf.mxu0
        %v1445 = vadd.f32 %v1036, %v1444
        %1446 = vmatmul.f32.gmra.mxu0 %v439
        %v1447 = vpop.f32.mrf.mxu0
        %v1448 = vadd.f32 %v1036, %v1447
        %1449 = vmatmul.f32.gmra.mxu0 %v448
        %v1450 = vpop.f32.mrf.mxu0
        %v1451 = vadd.f32 %v1036, %v1450
        %1452 = vdwg.mxu0
        %1453 = vmatpush.msra.mxu0 %v582
        %1454 = vmatpush.msra.mxu0 %v578
        %1455 = vmatpush.msra.mxu0 %v574
        %1456 = vmatpush.msra.mxu0 %v570
        %1457 = vmatpush.msra.mxu0 %v566
        %1458 = vmatpush.msra.mxu0 %v562
        %1459 = vmatpush.msra.mxu0 %v558
        %1460 = vmatpush.msra.mxu0 %v554
        %1461 = vmatpush.msra.mxu0 %v550
        %1462 = vmatpush.msra.mxu0 %v546
        %1463 = vmatpush.msra.mxu0 %v542
        %1464 = vmatpush.msra.mxu0 %v538
        %1465 = vmatpush.msra.mxu0 %v534
        %1466 = vmatpush.msra.mxu0 %v530
        %1467 = vmatpush.msra.mxu0 %v526
        %1468 = vmatpush.msra.mxu0 %v522
        %1469 = vmatmul.f32.gmra.mxu0 %v386
        %v1470 = vpop.f32.mrf.mxu0
        %v1471 = vadd.f32 %v1430, %v1470
        %1472 = vmatmul.f32.gmra.mxu0 %v395
        %v1473 = vpop.f32.mrf.mxu0
        %v1474 = vadd.f32 %v1433, %v1473
        %1475 = vmatmul.f32.gmra.mxu0 %v404
        %v1476 = vpop.f32.mrf.mxu0
        %v1477 = vadd.f32 %v1436, %v1476
        %1478 = vmatmul.f32.gmra.mxu0 %v413
        %v1479 = vpop.f32.mrf.mxu0
        %v1480 = vadd.f32 %v1439, %v1479
        %1481 = vmatmul.f32.gmra.mxu0 %v422
        %v1482 = vpop.f32.mrf.mxu0
        %v1483 = vadd.f32 %v1442, %v1482
        %1484 = vmatmul.f32.gmra.mxu0 %v431
        %v1485 = vpop.f32.mrf.mxu0
        %v1486 = vadd.f32 %v1445, %v1485
        %1487 = vmatmul.f32.gmra.mxu0 %v440
        %v1488 = vpop.f32.mrf.mxu0
        %v1489 = vadd.f32 %v1448, %v1488
        %1490 = vmatmul.f32.gmra.mxu0 %v449
        %v1491 = vpop.f32.mrf.mxu0
        %v1492 = vadd.f32 %v1451, %v1491
        %1493 = vdwg.mxu0
        %1494 = vmatpush.msra.mxu0 %v646
        %1495 = vmatpush.msra.mxu0 %v642
        %1496 = vmatpush.msra.mxu0 %v638
        %1497 = vmatpush.msra.mxu0 %v634
        %1498 = vmatpush.msra.mxu0 %v630
        %1499 = vmatpush.msra.mxu0 %v626
        %1500 = vmatpush.msra.mxu0 %v622
        %1501 = vmatpush.msra.mxu0 %v618
        %1502 = vmatpush.msra.mxu0 %v614
        %1503 = vmatpush.msra.mxu0 %v610
        %1504 = vmatpush.msra.mxu0 %v606
        %1505 = vmatpush.msra.mxu0 %v602
        %1506 = vmatpush.msra.mxu0 %v598
        %1507 = vmatpush.msra.mxu0 %v594
        %1508 = vmatpush.msra.mxu0 %v590
        %1509 = vmatpush.msra.mxu0 %v586
        %1510 = vmatmul.f32.gmra.mxu0 %v387
        %v1511 = vpop.f32.mrf.mxu0
        %v1512 = vadd.f32 %v1471, %v1511
        %1513 = vmatmul.f32.gmra.mxu0 %v396
        %v1514 = vpop.f32.mrf.mxu0
        %v1515 = vadd.f32 %v1474, %v1514
        %1516 = vmatmul.f32.gmra.mxu0 %v405
        %v1517 = vpop.f32.mrf.mxu0
        %v1518 = vadd.f32 %v1477, %v1517
        %1519 = vmatmul.f32.gmra.mxu0 %v414
        %v1520 = vpop.f32.mrf.mxu0
        %v1521 = vadd.f32 %v1480, %v1520
        %1522 = vmatmul.f32.gmra.mxu0 %v423
        %v1523 = vpop.f32.mrf.mxu0
        %v1524 = vadd.f32 %v1483, %v1523
        %1525 = vmatmul.f32.gmra.mxu0 %v432
        %v1526 = vpop.f32.mrf.mxu0
        %v1527 = vadd.f32 %v1486, %v1526
        %1528 = vmatmul.f32.gmra.mxu0 %v441
        %v1529 = vpop.f32.mrf.mxu0
        %v1530 = vadd.f32 %v1489, %v1529
        %1531 = vmatmul.f32.gmra.mxu0 %v450
        %v1532 = vpop.f32.mrf.mxu0
        %v1533 = vadd.f32 %v1492, %v1532
        %1534 = vdwg.mxu0
        %1535 = vmatpush.msra.mxu0 %v710
        %1536 = vmatpush.msra.mxu0 %v706
        %1537 = vmatpush.msra.mxu0 %v702
        %1538 = vmatpush.msra.mxu0 %v698
        %1539 = vmatpush.msra.mxu0 %v694
        %1540 = vmatpush.msra.mxu0 %v690
        %1541 = vmatpush.msra.mxu0 %v686
        %1542 = vmatpush.msra.mxu0 %v682
        %1543 = vmatpush.msra.mxu0 %v678
        %1544 = vmatpush.msra.mxu0 %v674
        %1545 = vmatpush.msra.mxu0 %v670
        %1546 = vmatpush.msra.mxu0 %v666
        %1547 = vmatpush.msra.mxu0 %v662
        %1548 = vmatpush.msra.mxu0 %v658
        %1549 = vmatpush.msra.mxu0 %v654
        %1550 = vmatpush.msra.mxu0 %v650
        %1551 = vmatmul.f32.gmra.mxu0 %v388
        %v1552 = vpop.f32.mrf.mxu0
        %v1553 = vadd.f32 %v1512, %v1552
        %1554 = vmatmul.f32.gmra.mxu0 %v397
        %v1555 = vpop.f32.mrf.mxu0
        %v1556 = vadd.f32 %v1515, %v1555
        %1557 = vmatmul.f32.gmra.mxu0 %v406
        %v1558 = vpop.f32.mrf.mxu0
        %v1559 = vadd.f32 %v1518, %v1558
        %1560 = vmatmul.f32.gmra.mxu0 %v415
        %v1561 = vpop.f32.mrf.mxu0
        %v1562 = vadd.f32 %v1521, %v1561
        %1563 = vmatmul.f32.gmra.mxu0 %v424
        %v1564 = vpop.f32.mrf.mxu0
        %v1565 = vadd.f32 %v1524, %v1564
        %1566 = vmatmul.f32.gmra.mxu0 %v433
        %v1567 = vpop.f32.mrf.mxu0
        %v1568 = vadd.f32 %v1527, %v1567
        %1569 = vmatmul.f32.gmra.mxu0 %v442
        %v1570 = vpop.f32.mrf.mxu0
        %v1571 = vadd.f32 %v1530, %v1570
        %1572 = vmatmul.f32.gmra.mxu0 %v451
        %v1573 = vpop.f32.mrf.mxu0
        %v1574 = vadd.f32 %v1533, %v1573
        %1575 = vdwg.mxu0
        %1576 = vmatpush.msra.mxu0 %v774
        %1577 = vmatpush.msra.mxu0 %v770
        %1578 = vmatpush.msra.mxu0 %v766
        %1579 = vmatpush.msra.mxu0 %v762
        %1580 = vmatpush.msra.mxu0 %v758
        %1581 = vmatpush.msra.mxu0 %v754
        %1582 = vmatpush.msra.mxu0 %v750
        %1583 = vmatpush.msra.mxu0 %v746
        %1584 = vmatpush.msra.mxu0 %v742
        %1585 = vmatpush.msra.mxu0 %v738
        %1586 = vmatpush.msra.mxu0 %v734
        %1587 = vmatpush.msra.mxu0 %v730
        %1588 = vmatpush.msra.mxu0 %v726
        %1589 = vmatpush.msra.mxu0 %v722
        %1590 = vmatpush.msra.mxu0 %v718
        %1591 = vmatpush.msra.mxu0 %v714
        %1592 = vmatmul.f32.gmra.mxu0 %v389
        %v1593 = vpop.f32.mrf.mxu0
        %v1594 = vadd.f32 %v1553, %v1593
        %1595 = vmatmul.f32.gmra.mxu0 %v398
        %v1596 = vpop.f32.mrf.mxu0
        %v1597 = vadd.f32 %v1556, %v1596
        %1598 = vmatmul.f32.gmra.mxu0 %v407
        %v1599 = vpop.f32.mrf.mxu0
        %v1600 = vadd.f32 %v1559, %v1599
        %1601 = vmatmul.f32.gmra.mxu0 %v416
        %v1602 = vpop.f32.mrf.mxu0
        %v1603 = vadd.f32 %v1562, %v1602
        %1604 = vmatmul.f32.gmra.mxu0 %v425
        %v1605 = vpop.f32.mrf.mxu0
        %v1606 = vadd.f32 %v1565, %v1605
        %1607 = vmatmul.f32.gmra.mxu0 %v434
        %v1608 = vpop.f32.mrf.mxu0
        %v1609 = vadd.f32 %v1568, %v1608
        %1610 = vmatmul.f32.gmra.mxu0 %v443
        %v1611 = vpop.f32.mrf.mxu0
        %v1612 = vadd.f32 %v1571, %v1611
        %1613 = vmatmul.f32.gmra.mxu0 %v452
        %v1614 = vpop.f32.mrf.mxu0
        %v1615 = vadd.f32 %v1574, %v1614
        %1616 = vdwg.mxu0
        %1617 = vmatpush.msra.mxu0 %v838
        %1618 = vmatpush.msra.mxu0 %v834
        %1619 = vmatpush.msra.mxu0 %v830
        %1620 = vmatpush.msra.mxu0 %v826
        %1621 = vmatpush.msra.mxu0 %v822
        %1622 = vmatpush.msra.mxu0 %v818
        %1623 = vmatpush.msra.mxu0 %v814
        %1624 = vmatpush.msra.mxu0 %v810
        %1625 = vmatpush.msra.mxu0 %v806
        %1626 = vmatpush.msra.mxu0 %v802
        %1627 = vmatpush.msra.mxu0 %v798
        %1628 = vmatpush.msra.mxu0 %v794
        %1629 = vmatpush.msra.mxu0 %v790
        %1630 = vmatpush.msra.mxu0 %v786
        %1631 = vmatpush.msra.mxu0 %v782
        %1632 = vmatpush.msra.mxu0 %v778
        %1633 = vmatmul.f32.gmra.mxu0 %v390
        %v1634 = vpop.f32.mrf.mxu0
        %v1635 = vadd.f32 %v1594, %v1634
        %1636 = vmatmul.f32.gmra.mxu0 %v399
        %v1637 = vpop.f32.mrf.mxu0
        %v1638 = vadd.f32 %v1597, %v1637
        %1639 = vmatmul.f32.gmra.mxu0 %v408
        %v1640 = vpop.f32.mrf.mxu0
        %v1641 = vadd.f32 %v1600, %v1640
        %1642 = vmatmul.f32.gmra.mxu0 %v417
        %v1643 = vpop.f32.mrf.mxu0
        %v1644 = vadd.f32 %v1603, %v1643
        %1645 = vmatmul.f32.gmra.mxu0 %v426
        %v1646 = vpop.f32.mrf.mxu0
        %v1647 = vadd.f32 %v1606, %v1646
        %1648 = vmatmul.f32.gmra.mxu0 %v435
        %v1649 = vpop.f32.mrf.mxu0
        %v1650 = vadd.f32 %v1609, %v1649
        %1651 = vmatmul.f32.gmra.mxu0 %v444
        %v1652 = vpop.f32.mrf.mxu0
        %v1653 = vadd.f32 %v1612, %v1652
        %1654 = vmatmul.f32.gmra.mxu0 %v453
        %v1655 = vpop.f32.mrf.mxu0
        %v1656 = vadd.f32 %v1615, %v1655
        %1657 = vdwg.mxu0
        %1658 = vmatpush.msra.mxu0 %v902
        %1659 = vmatpush.msra.mxu0 %v898
        %1660 = vmatpush.msra.mxu0 %v894
        %1661 = vmatpush.msra.mxu0 %v890
        %1662 = vmatpush.msra.mxu0 %v886
        %1663 = vmatpush.msra.mxu0 %v882
        %1664 = vmatpush.msra.mxu0 %v878
        %1665 = vmatpush.msra.mxu0 %v874
        %1666 = vmatpush.msra.mxu0 %v870
        %1667 = vmatpush.msra.mxu0 %v866
        %1668 = vmatpush.msra.mxu0 %v862
        %1669 = vmatpush.msra.mxu0 %v858
        %1670 = vmatpush.msra.mxu0 %v854
        %1671 = vmatpush.msra.mxu0 %v850
        %1672 = vmatpush.msra.mxu0 %v846
        %1673 = vmatpush.msra.mxu0 %v842
        %1674 = vmatmul.f32.gmra.mxu0 %v391
        %v1675 = vpop.f32.mrf.mxu0
        %v1676 = vadd.f32 %v1635, %v1675
        %1677 = vmatmul.f32.gmra.mxu0 %v400
        %v1678 = vpop.f32.mrf.mxu0
        %v1679 = vadd.f32 %v1638, %v1678
        %1680 = vmatmul.f32.gmra.mxu0 %v409
        %v1681 = vpop.f32.mrf.mxu0
        %v1682 = vadd.f32 %v1641, %v1681
        %1683 = vmatmul.f32.gmra.mxu0 %v418
        %v1684 = vpop.f32.mrf.mxu0
        %v1685 = vadd.f32 %v1644, %v1684
        %1686 = vmatmul.f32.gmra.mxu0 %v427
        %v1687 = vpop.f32.mrf.mxu0
        %v1688 = vadd.f32 %v1647, %v1687
        %1689 = vmatmul.f32.gmra.mxu0 %v436
        %v1690 = vpop.f32.mrf.mxu0
        %v1691 = vadd.f32 %v1650, %v1690
        %1692 = vmatmul.f32.gmra.mxu0 %v445
        %v1693 = vpop.f32.mrf.mxu0
        %v1694 = vadd.f32 %v1653, %v1693
        %1695 = vmatmul.f32.gmra.mxu0 %v454
        %v1696 = vpop.f32.mrf.mxu0
        %v1697 = vadd.f32 %v1656, %v1696
        %1698 = vdwg.mxu0
        %1699 = vmatpush.msra.mxu0 %v966
        %1700 = vmatpush.msra.mxu0 %v962
        %1701 = vmatpush.msra.mxu0 %v958
        %1702 = vmatpush.msra.mxu0 %v954
        %1703 = vmatpush.msra.mxu0 %v950
        %1704 = vmatpush.msra.mxu0 %v946
        %1705 = vmatpush.msra.mxu0 %v942
        %1706 = vmatpush.msra.mxu0 %v938
        %1707 = vmatpush.msra.mxu0 %v934
        %1708 = vmatpush.msra.mxu0 %v930
        %1709 = vmatpush.msra.mxu0 %v926
        %1710 = vmatpush.msra.mxu0 %v922
        %1711 = vmatpush.msra.mxu0 %v918
        %1712 = vmatpush.msra.mxu0 %v914
        %1713 = vmatpush.msra.mxu0 %v910
        %1714 = vmatpush.msra.mxu0 %v906
        %1715 = vmatmul.f32.gmra.mxu0 %v392
        %v1716 = vpop.f32.mrf.mxu0
        %v1717 = vadd.f32 %v1676, %v1716
        %1718 = vmatmul.f32.gmra.mxu0 %v401
        %v1719 = vpop.f32.mrf.mxu0
        %v1720 = vadd.f32 %v1679, %v1719
        %1721 = vmatmul.f32.gmra.mxu0 %v410
        %v1722 = vpop.f32.mrf.mxu0
        %v1723 = vadd.f32 %v1682, %v1722
        %1724 = vmatmul.f32.gmra.mxu0 %v419
        %v1725 = vpop.f32.mrf.mxu0
        %v1726 = vadd.f32 %v1685, %v1725
        %1727 = vmatmul.f32.gmra.mxu0 %v428
        %v1728 = vpop.f32.mrf.mxu0
        %v1729 = vadd.f32 %v1688, %v1728
        %1730 = vmatmul.f32.gmra.mxu0 %v437
        %v1731 = vpop.f32.mrf.mxu0
        %v1732 = vadd.f32 %v1691, %v1731
        %1733 = vmatmul.f32.gmra.mxu0 %v446
        %v1734 = vpop.f32.mrf.mxu0
        %v1735 = vadd.f32 %v1694, %v1734
        %1736 = vmatmul.f32.gmra.mxu0 %v455
        %v1737 = vpop.f32.mrf.mxu0
        %v1738 = vadd.f32 %v1697, %v1737
        %1739 = vdwg.mxu0
        %1740 = vmatpush.msra.mxu0 %v1030
        %1741 = vmatpush.msra.mxu0 %v1026
        %1742 = vmatpush.msra.mxu0 %v1022
        %1743 = vmatpush.msra.mxu0 %v1018
        %1744 = vmatpush.msra.mxu0 %v1014
        %1745 = vmatpush.msra.mxu0 %v1010
        %1746 = vmatpush.msra.mxu0 %v1006
        %1747 = vmatpush.msra.mxu0 %v1002
        %1748 = vmatpush.msra.mxu0 %v998
        %1749 = vmatpush.msra.mxu0 %v994
        %1750 = vmatpush.msra.mxu0 %v990
        %1751 = vmatpush.msra.mxu0 %v986
        %1752 = vmatpush.msra.mxu0 %v982
        %1753 = vmatpush.msra.mxu0 %v978
        %1754 = vmatpush.msra.mxu0 %v974
        %1755 = vmatpush.msra.mxu0 %v970
        %1756 = vmatmul.f32.gmra.mxu0 %v393
        %v1757 = vpop.f32.mrf.mxu0
        %v1758 = vadd.f32 %v1717, %v1757
        %1759 = vmatmul.f32.gmra.mxu0 %v402
        %v1760 = vpop.f32.mrf.mxu0
        %v1761 = vadd.f32 %v1720, %v1760
        %1762 = vmatmul.f32.gmra.mxu0 %v411
        %v1763 = vpop.f32.mrf.mxu0
        %v1764 = vadd.f32 %v1723, %v1763
        %1765 = vmatmul.f32.gmra.mxu0 %v420
        %v1766 = vpop.f32.mrf.mxu0
        %v1767 = vadd.f32 %v1726, %v1766
        %1768 = vmatmul.f32.gmra.mxu0 %v429
        %v1769 = vpop.f32.mrf.mxu0
        %v1770 = vadd.f32 %v1729, %v1769
        %1771 = vmatmul.f32.gmra.mxu0 %v438
        %v1772 = vpop.f32.mrf.mxu0
        %v1773 = vadd.f32 %v1732, %v1772
        %1774 = vmatmul.f32.gmra.mxu0 %v447
        %v1775 = vpop.f32.mrf.mxu0
        %v1776 = vadd.f32 %v1735, %v1775
        %1777 = vmatmul.f32.gmra.mxu0 %v456
        %v1778 = vpop.f32.mrf.mxu0
        %v1779 = vadd.f32 %v1738, %v1778
        %1780 = vdwg.mxu0
        %1781 = vmatpush.msra.mxu0 %v519
        %1782 = vmatpush.msra.mxu0 %v515
        %1783 = vmatpush.msra.mxu0 %v511
        %1784 = vmatpush.msra.mxu0 %v507
        %1785 = vmatpush.msra.mxu0 %v503
        %1786 = vmatpush.msra.mxu0 %v499
        %1787 = vmatpush.msra.mxu0 %v495
        %1788 = vmatpush.msra.mxu0 %v491
        %1789 = vmatpush.msra.mxu0 %v487
        %1790 = vmatpush.msra.mxu0 %v483
        %1791 = vmatpush.msra.mxu0 %v479
        %1792 = vmatpush.msra.mxu0 %v475
        %1793 = vmatpush.msra.mxu0 %v471
        %1794 = vmatpush.msra.mxu0 %v467
        %1795 = vmatpush.msra.mxu0 %v463
        %1796 = vmatpush.msra.mxu0 %v459
        %1797 = vmatmul.f32.gmra.mxu0 %v385
        %v1798 = vpop.f32.mrf.mxu0
        %v1799 = vadd.f32 %v1037, %v1798
        %1800 = vmatmul.f32.gmra.mxu0 %v394
        %v1801 = vpop.f32.mrf.mxu0
        %v1802 = vadd.f32 %v1037, %v1801
        %1803 = vmatmul.f32.gmra.mxu0 %v403
        %v1804 = vpop.f32.mrf.mxu0
        %v1805 = vadd.f32 %v1037, %v1804
        %1806 = vmatmul.f32.gmra.mxu0 %v412
        %v1807 = vpop.f32.mrf.mxu0
        %v1808 = vadd.f32 %v1037, %v1807
        %1809 = vmatmul.f32.gmra.mxu0 %v421
        %v1810 = vpop.f32.mrf.mxu0
        %v1811 = vadd.f32 %v1037, %v1810
        %1812 = vmatmul.f32.gmra.mxu0 %v430
        %v1813 = vpop.f32.mrf.mxu0
        %v1814 = vadd.f32 %v1037, %v1813
        %1815 = vmatmul.f32.gmra.mxu0 %v439
        %v1816 = vpop.f32.mrf.mxu0
        %v1817 = vadd.f32 %v1037, %v1816
        %1818 = vmatmul.f32.gmra.mxu0 %v448
        %v1819 = vpop.f32.mrf.mxu0
        %v1820 = vadd.f32 %v1037, %v1819
        %1821 = vdwg.mxu0
        %1822 = vmatpush.msra.mxu0 %v583
        %1823 = vmatpush.msra.mxu0 %v579
        %1824 = vmatpush.msra.mxu0 %v575
        %1825 = vmatpush.msra.mxu0 %v571
        %1826 = vmatpush.msra.mxu0 %v567
        %1827 = vmatpush.msra.mxu0 %v563
        %1828 = vmatpush.msra.mxu0 %v559
        %1829 = vmatpush.msra.mxu0 %v555
        %1830 = vmatpush.msra.mxu0 %v551
        %1831 = vmatpush.msra.mxu0 %v547
        %1832 = vmatpush.msra.mxu0 %v543
        %1833 = vmatpush.msra.mxu0 %v539
        %1834 = vmatpush.msra.mxu0 %v535
        %1835 = vmatpush.msra.mxu0 %v531
        %1836 = vmatpush.msra.mxu0 %v527
        %1837 = vmatpush.msra.mxu0 %v523
        %1838 = vmatmul.f32.gmra.mxu0 %v386
        %v1839 = vpop.f32.mrf.mxu0
        %v1840 = vadd.f32 %v1799, %v1839
        %1841 = vmatmul.f32.gmra.mxu0 %v395
        %v1842 = vpop.f32.mrf.mxu0
        %v1843 = vadd.f32 %v1802, %v1842
        %1844 = vmatmul.f32.gmra.mxu0 %v404
        %v1845 = vpop.f32.mrf.mxu0
        %v1846 = vadd.f32 %v1805, %v1845
        %1847 = vmatmul.f32.gmra.mxu0 %v413
        %v1848 = vpop.f32.mrf.mxu0
        %v1849 = vadd.f32 %v1808, %v1848
        %1850 = vmatmul.f32.gmra.mxu0 %v422
        %v1851 = vpop.f32.mrf.mxu0
        %v1852 = vadd.f32 %v1811, %v1851
        %1853 = vmatmul.f32.gmra.mxu0 %v431
        %v1854 = vpop.f32.mrf.mxu0
        %v1855 = vadd.f32 %v1814, %v1854
        %1856 = vmatmul.f32.gmra.mxu0 %v440
        %v1857 = vpop.f32.mrf.mxu0
        %v1858 = vadd.f32 %v1817, %v1857
        %1859 = vmatmul.f32.gmra.mxu0 %v449
        %v1860 = vpop.f32.mrf.mxu0
        %v1861 = vadd.f32 %v1820, %v1860
        %1862 = vdwg.mxu0
        %1863 = vmatpush.msra.mxu0 %v647
        %1864 = vmatpush.msra.mxu0 %v643
        %1865 = vmatpush.msra.mxu0 %v639
        %1866 = vmatpush.msra.mxu0 %v635
        %1867 = vmatpush.msra.mxu0 %v631
        %1868 = vmatpush.msra.mxu0 %v627
        %1869 = vmatpush.msra.mxu0 %v623
        %1870 = vmatpush.msra.mxu0 %v619
        %1871 = vmatpush.msra.mxu0 %v615
        %1872 = vmatpush.msra.mxu0 %v611
        %1873 = vmatpush.msra.mxu0 %v607
        %1874 = vmatpush.msra.mxu0 %v603
        %1875 = vmatpush.msra.mxu0 %v599
        %1876 = vmatpush.msra.mxu0 %v595
        %1877 = vmatpush.msra.mxu0 %v591
        %1878 = vmatpush.msra.mxu0 %v587
        %1879 = vmatmul.f32.gmra.mxu0 %v387
        %v1880 = vpop.f32.mrf.mxu0
        %v1881 = vadd.f32 %v1840, %v1880
        %1882 = vmatmul.f32.gmra.mxu0 %v396
        %v1883 = vpop.f32.mrf.mxu0
        %v1884 = vadd.f32 %v1843, %v1883
        %1885 = vmatmul.f32.gmra.mxu0 %v405
        %v1886 = vpop.f32.mrf.mxu0
        %v1887 = vadd.f32 %v1846, %v1886
        %1888 = vmatmul.f32.gmra.mxu0 %v414
        %v1889 = vpop.f32.mrf.mxu0
        %v1890 = vadd.f32 %v1849, %v1889
        %1891 = vmatmul.f32.gmra.mxu0 %v423
        %v1892 = vpop.f32.mrf.mxu0
        %v1893 = vadd.f32 %v1852, %v1892
        %1894 = vmatmul.f32.gmra.mxu0 %v432
        %v1895 = vpop.f32.mrf.mxu0
        %v1896 = vadd.f32 %v1855, %v1895
        %1897 = vmatmul.f32.gmra.mxu0 %v441
        %v1898 = vpop.f32.mrf.mxu0
        %v1899 = vadd.f32 %v1858, %v1898
        %1900 = vmatmul.f32.gmra.mxu0 %v450
        %v1901 = vpop.f32.mrf.mxu0
        %v1902 = vadd.f32 %v1861, %v1901
        %1903 = vdwg.mxu0
        %1904 = vmatpush.msra.mxu0 %v711
        %1905 = vmatpush.msra.mxu0 %v707
        %1906 = vmatpush.msra.mxu0 %v703
        %1907 = vmatpush.msra.mxu0 %v699
        %1908 = vmatpush.msra.mxu0 %v695
        %1909 = vmatpush.msra.mxu0 %v691
        %1910 = vmatpush.msra.mxu0 %v687
        %1911 = vmatpush.msra.mxu0 %v683
        %1912 = vmatpush.msra.mxu0 %v679
        %1913 = vmatpush.msra.mxu0 %v675
        %1914 = vmatpush.msra.mxu0 %v671
        %1915 = vmatpush.msra.mxu0 %v667
        %1916 = vmatpush.msra.mxu0 %v663
        %1917 = vmatpush.msra.mxu0 %v659
        %1918 = vmatpush.msra.mxu0 %v655
        %1919 = vmatpush.msra.mxu0 %v651
        %1920 = vmatmul.f32.gmra.mxu0 %v388
        %v1921 = vpop.f32.mrf.mxu0
        %v1922 = vadd.f32 %v1881, %v1921
        %1923 = vmatmul.f32.gmra.mxu0 %v397
        %v1924 = vpop.f32.mrf.mxu0
        %v1925 = vadd.f32 %v1884, %v1924
        %1926 = vmatmul.f32.gmra.mxu0 %v406
        %v1927 = vpop.f32.mrf.mxu0
        %v1928 = vadd.f32 %v1887, %v1927
        %1929 = vmatmul.f32.gmra.mxu0 %v415
        %v1930 = vpop.f32.mrf.mxu0
        %v1931 = vadd.f32 %v1890, %v1930
        %1932 = vmatmul.f32.gmra.mxu0 %v424
        %v1933 = vpop.f32.mrf.mxu0
        %v1934 = vadd.f32 %v1893, %v1933
        %1935 = vmatmul.f32.gmra.mxu0 %v433
        %v1936 = vpop.f32.mrf.mxu0
        %v1937 = vadd.f32 %v1896, %v1936
        %1938 = vmatmul.f32.gmra.mxu0 %v442
        %v1939 = vpop.f32.mrf.mxu0
        %v1940 = vadd.f32 %v1899, %v1939
        %1941 = vmatmul.f32.gmra.mxu0 %v451
        %v1942 = vpop.f32.mrf.mxu0
        %v1943 = vadd.f32 %v1902, %v1942
        %1944 = vdwg.mxu0
        %1945 = vmatpush.msra.mxu0 %v775
        %1946 = vmatpush.msra.mxu0 %v771
        %1947 = vmatpush.msra.mxu0 %v767
        %1948 = vmatpush.msra.mxu0 %v763
        %1949 = vmatpush.msra.mxu0 %v759
        %1950 = vmatpush.msra.mxu0 %v755
        %1951 = vmatpush.msra.mxu0 %v751
        %1952 = vmatpush.msra.mxu0 %v747
        %1953 = vmatpush.msra.mxu0 %v743
        %1954 = vmatpush.msra.mxu0 %v739
        %1955 = vmatpush.msra.mxu0 %v735
        %1956 = vmatpush.msra.mxu0 %v731
        %1957 = vmatpush.msra.mxu0 %v727
        %1958 = vmatpush.msra.mxu0 %v723
        %1959 = vmatpush.msra.mxu0 %v719
        %1960 = vmatpush.msra.mxu0 %v715
        %1961 = vmatmul.f32.gmra.mxu0 %v389
        %v1962 = vpop.f32.mrf.mxu0
        %v1963 = vadd.f32 %v1922, %v1962
        %1964 = vmatmul.f32.gmra.mxu0 %v398
        %v1965 = vpop.f32.mrf.mxu0
        %v1966 = vadd.f32 %v1925, %v1965
        %1967 = vmatmul.f32.gmra.mxu0 %v407
        %v1968 = vpop.f32.mrf.mxu0
        %v1969 = vadd.f32 %v1928, %v1968
        %1970 = vmatmul.f32.gmra.mxu0 %v416
        %v1971 = vpop.f32.mrf.mxu0
        %v1972 = vadd.f32 %v1931, %v1971
        %1973 = vmatmul.f32.gmra.mxu0 %v425
        %v1974 = vpop.f32.mrf.mxu0
        %v1975 = vadd.f32 %v1934, %v1974
        %1976 = vmatmul.f32.gmra.mxu0 %v434
        %v1977 = vpop.f32.mrf.mxu0
        %v1978 = vadd.f32 %v1937, %v1977
        %1979 = vmatmul.f32.gmra.mxu0 %v443
        %v1980 = vpop.f32.mrf.mxu0
        %v1981 = vadd.f32 %v1940, %v1980
        %1982 = vmatmul.f32.gmra.mxu0 %v452
        %v1983 = vpop.f32.mrf.mxu0
        %v1984 = vadd.f32 %v1943, %v1983
        %1985 = vdwg.mxu0
        %1986 = vmatpush.msra.mxu0 %v839
        %1987 = vmatpush.msra.mxu0 %v835
        %1988 = vmatpush.msra.mxu0 %v831
        %1989 = vmatpush.msra.mxu0 %v827
        %1990 = vmatpush.msra.mxu0 %v823
        %1991 = vmatpush.msra.mxu0 %v819
        %1992 = vmatpush.msra.mxu0 %v815
        %1993 = vmatpush.msra.mxu0 %v811
        %1994 = vmatpush.msra.mxu0 %v807
        %1995 = vmatpush.msra.mxu0 %v803
        %1996 = vmatpush.msra.mxu0 %v799
        %1997 = vmatpush.msra.mxu0 %v795
        %1998 = vmatpush.msra.mxu0 %v791
        %1999 = vmatpush.msra.mxu0 %v787
        %2000 = vmatpush.msra.mxu0 %v783
        %2001 = vmatpush.msra.mxu0 %v779
        %2002 = vmatmul.f32.gmra.mxu0 %v390
        %v2003 = vpop.f32.mrf.mxu0
        %v2004 = vadd.f32 %v1963, %v2003
        %2005 = vmatmul.f32.gmra.mxu0 %v399
        %v2006 = vpop.f32.mrf.mxu0
        %v2007 = vadd.f32 %v1966, %v2006
        %2008 = vmatmul.f32.gmra.mxu0 %v408
        %v2009 = vpop.f32.mrf.mxu0
        %v2010 = vadd.f32 %v1969, %v2009
        %2011 = vmatmul.f32.gmra.mxu0 %v417
        %v2012 = vpop.f32.mrf.mxu0
        %v2013 = vadd.f32 %v1972, %v2012
        %2014 = vmatmul.f32.gmra.mxu0 %v426
        %v2015 = vpop.f32.mrf.mxu0
        %v2016 = vadd.f32 %v1975, %v2015
        %2017 = vmatmul.f32.gmra.mxu0 %v435
        %v2018 = vpop.f32.mrf.mxu0
        %v2019 = vadd.f32 %v1978, %v2018
        %2020 = vmatmul.f32.gmra.mxu0 %v444
        %v2021 = vpop.f32.mrf.mxu0
        %v2022 = vadd.f32 %v1981, %v2021
        %2023 = vmatmul.f32.gmra.mxu0 %v453
        %v2024 = vpop.f32.mrf.mxu0
        %v2025 = vadd.f32 %v1984, %v2024
        %2026 = vdwg.mxu0
        %2027 = vmatpush.msra.mxu0 %v903
        %2028 = vmatpush.msra.mxu0 %v899
        %2029 = vmatpush.msra.mxu0 %v895
        %2030 = vmatpush.msra.mxu0 %v891
        %2031 = vmatpush.msra.mxu0 %v887
        %2032 = vmatpush.msra.mxu0 %v883
        %2033 = vmatpush.msra.mxu0 %v879
        %2034 = vmatpush.msra.mxu0 %v875
        %2035 = vmatpush.msra.mxu0 %v871
        %2036 = vmatpush.msra.mxu0 %v867
        %2037 = vmatpush.msra.mxu0 %v863
        %2038 = vmatpush.msra.mxu0 %v859
        %2039 = vmatpush.msra.mxu0 %v855
        %2040 = vmatpush.msra.mxu0 %v851
        %2041 = vmatpush.msra.mxu0 %v847
        %2042 = vmatpush.msra.mxu0 %v843
        %2043 = vmatmul.f32.gmra.mxu0 %v391
        %v2044 = vpop.f32.mrf.mxu0
        %v2045 = vadd.f32 %v2004, %v2044
        %2046 = vmatmul.f32.gmra.mxu0 %v400
        %v2047 = vpop.f32.mrf.mxu0
        %v2048 = vadd.f32 %v2007, %v2047
        %2049 = vmatmul.f32.gmra.mxu0 %v409
        %v2050 = vpop.f32.mrf.mxu0
        %v2051 = vadd.f32 %v2010, %v2050
        %2052 = vmatmul.f32.gmra.mxu0 %v418
        %v2053 = vpop.f32.mrf.mxu0
        %v2054 = vadd.f32 %v2013, %v2053
        %2055 = vmatmul.f32.gmra.mxu0 %v427
        %v2056 = vpop.f32.mrf.mxu0
        %v2057 = vadd.f32 %v2016, %v2056
        %2058 = vmatmul.f32.gmra.mxu0 %v436
        %v2059 = vpop.f32.mrf.mxu0
        %v2060 = vadd.f32 %v2019, %v2059
        %2061 = vmatmul.f32.gmra.mxu0 %v445
        %v2062 = vpop.f32.mrf.mxu0
        %v2063 = vadd.f32 %v2022, %v2062
        %2064 = vmatmul.f32.gmra.mxu0 %v454
        %v2065 = vpop.f32.mrf.mxu0
        %v2066 = vadd.f32 %v2025, %v2065
        %2067 = vdwg.mxu0
        %2068 = vmatpush.msra.mxu0 %v967
        %2069 = vmatpush.msra.mxu0 %v963
        %2070 = vmatpush.msra.mxu0 %v959
        %2071 = vmatpush.msra.mxu0 %v955
        %2072 = vmatpush.msra.mxu0 %v951
        %2073 = vmatpush.msra.mxu0 %v947
        %2074 = vmatpush.msra.mxu0 %v943
        %2075 = vmatpush.msra.mxu0 %v939
        %2076 = vmatpush.msra.mxu0 %v935
        %2077 = vmatpush.msra.mxu0 %v931
        %2078 = vmatpush.msra.mxu0 %v927
        %2079 = vmatpush.msra.mxu0 %v923
        %2080 = vmatpush.msra.mxu0 %v919
        %2081 = vmatpush.msra.mxu0 %v915
        %2082 = vmatpush.msra.mxu0 %v911
        %2083 = vmatpush.msra.mxu0 %v907
        %2084 = vmatmul.f32.gmra.mxu0 %v392
        %v2085 = vpop.f32.mrf.mxu0
        %v2086 = vadd.f32 %v2045, %v2085
        %2087 = vmatmul.f32.gmra.mxu0 %v401
        %v2088 = vpop.f32.mrf.mxu0
        %v2089 = vadd.f32 %v2048, %v2088
        %2090 = vmatmul.f32.gmra.mxu0 %v410
        %v2091 = vpop.f32.mrf.mxu0
        %v2092 = vadd.f32 %v2051, %v2091
        %2093 = vmatmul.f32.gmra.mxu0 %v419
        %v2094 = vpop.f32.mrf.mxu0
        %v2095 = vadd.f32 %v2054, %v2094
        %2096 = vmatmul.f32.gmra.mxu0 %v428
        %v2097 = vpop.f32.mrf.mxu0
        %v2098 = vadd.f32 %v2057, %v2097
        %2099 = vmatmul.f32.gmra.mxu0 %v437
        %v2100 = vpop.f32.mrf.mxu0
        %v2101 = vadd.f32 %v2060, %v2100
        %2102 = vmatmul.f32.gmra.mxu0 %v446
        %v2103 = vpop.f32.mrf.mxu0
        %v2104 = vadd.f32 %v2063, %v2103
        %2105 = vmatmul.f32.gmra.mxu0 %v455
        %v2106 = vpop.f32.mrf.mxu0
        %v2107 = vadd.f32 %v2066, %v2106
        %2108 = vdwg.mxu0
        %2109 = vmatpush.msra.mxu0 %v1031
        %2110 = vmatpush.msra.mxu0 %v1027
        %2111 = vmatpush.msra.mxu0 %v1023
        %2112 = vmatpush.msra.mxu0 %v1019
        %2113 = vmatpush.msra.mxu0 %v1015
        %2114 = vmatpush.msra.mxu0 %v1011
        %2115 = vmatpush.msra.mxu0 %v1007
        %2116 = vmatpush.msra.mxu0 %v1003
        %2117 = vmatpush.msra.mxu0 %v999
        %2118 = vmatpush.msra.mxu0 %v995
        %2119 = vmatpush.msra.mxu0 %v991
        %2120 = vmatpush.msra.mxu0 %v987
        %2121 = vmatpush.msra.mxu0 %v983
        %2122 = vmatpush.msra.mxu0 %v979
        %2123 = vmatpush.msra.mxu0 %v975
        %2124 = vmatpush.msra.mxu0 %v971
        %2125 = vmatmul.f32.gmra.mxu0 %v393
        %v2126 = vpop.f32.mrf.mxu0
        %v2127 = vadd.f32 %v2086, %v2126
        %2128 = vmatmul.f32.gmra.mxu0 %v402
        %v2129 = vpop.f32.mrf.mxu0
        %v2130 = vadd.f32 %v2089, %v2129
        %2131 = vmatmul.f32.gmra.mxu0 %v411
        %v2132 = vpop.f32.mrf.mxu0
        %v2133 = vadd.f32 %v2092, %v2132
        %2134 = vmatmul.f32.gmra.mxu0 %v420
        %v2135 = vpop.f32.mrf.mxu0
        %v2136 = vadd.f32 %v2095, %v2135
        %2137 = vmatmul.f32.gmra.mxu0 %v429
        %v2138 = vpop.f32.mrf.mxu0
        %v2139 = vadd.f32 %v2098, %v2138
        %2140 = vmatmul.f32.gmra.mxu0 %v438
        %v2141 = vpop.f32.mrf.mxu0
        %v2142 = vadd.f32 %v2101, %v2141
        %2143 = vmatmul.f32.gmra.mxu0 %v447
        %v2144 = vpop.f32.mrf.mxu0
        %v2145 = vadd.f32 %v2104, %v2144
        %2146 = vmatmul.f32.gmra.mxu0 %v456
        %v2147 = vpop.f32.mrf.mxu0
        %v2148 = vadd.f32 %v2107, %v2147
        %2149 = vdwg.mxu0
        %2150 = vmatpush.msra.mxu0 %v520
        %2151 = vmatpush.msra.mxu0 %v516
        %2152 = vmatpush.msra.mxu0 %v512
        %2153 = vmatpush.msra.mxu0 %v508
        %2154 = vmatpush.msra.mxu0 %v504
        %2155 = vmatpush.msra.mxu0 %v500
        %2156 = vmatpush.msra.mxu0 %v496
        %2157 = vmatpush.msra.mxu0 %v492
        %2158 = vmatpush.msra.mxu0 %v488
        %2159 = vmatpush.msra.mxu0 %v484
        %2160 = vmatpush.msra.mxu0 %v480
        %2161 = vmatpush.msra.mxu0 %v476
        %2162 = vmatpush.msra.mxu0 %v472
        %2163 = vmatpush.msra.mxu0 %v468
        %2164 = vmatpush.msra.mxu0 %v464
        %2165 = vmatpush.msra.mxu0 %v460
        %2166 = vmatmul.f32.gmra.mxu0 %v385
        %v2167 = vpop.f32.mrf.mxu0
        %v2168 = vadd.f32 %v1038, %v2167
        %2169 = vmatmul.f32.gmra.mxu0 %v394
        %v2170 = vpop.f32.mrf.mxu0
        %v2171 = vadd.f32 %v1038, %v2170
        %2172 = vmatmul.f32.gmra.mxu0 %v403
        %v2173 = vpop.f32.mrf.mxu0
        %v2174 = vadd.f32 %v1038, %v2173
        %2175 = vmatmul.f32.gmra.mxu0 %v412
        %v2176 = vpop.f32.mrf.mxu0
        %v2177 = vadd.f32 %v1038, %v2176
        %2178 = vmatmul.f32.gmra.mxu0 %v421
        %v2179 = vpop.f32.mrf.mxu0
        %v2180 = vadd.f32 %v1038, %v2179
        %2181 = vmatmul.f32.gmra.mxu0 %v430
        %v2182 = vpop.f32.mrf.mxu0
        %v2183 = vadd.f32 %v1038, %v2182
        %2184 = vmatmul.f32.gmra.mxu0 %v439
        %v2185 = vpop.f32.mrf.mxu0
        %v2186 = vadd.f32 %v1038, %v2185
        %2187 = vmatmul.f32.gmra.mxu0 %v448
        %v2188 = vpop.f32.mrf.mxu0
        %v2189 = vadd.f32 %v1038, %v2188
        %2190 = vdwg.mxu0
        %2191 = vmatpush.msra.mxu0 %v584
        %2192 = vmatpush.msra.mxu0 %v580
        %2193 = vmatpush.msra.mxu0 %v576
        %2194 = vmatpush.msra.mxu0 %v572
        %2195 = vmatpush.msra.mxu0 %v568
        %2196 = vmatpush.msra.mxu0 %v564
        %2197 = vmatpush.msra.mxu0 %v560
        %2198 = vmatpush.msra.mxu0 %v556
        %2199 = vmatpush.msra.mxu0 %v552
        %2200 = vmatpush.msra.mxu0 %v548
        %2201 = vmatpush.msra.mxu0 %v544
        %2202 = vmatpush.msra.mxu0 %v540
        %2203 = vmatpush.msra.mxu0 %v536
        %2204 = vmatpush.msra.mxu0 %v532
        %2205 = vmatpush.msra.mxu0 %v528
        %2206 = vmatpush.msra.mxu0 %v524
        %2207 = vmatmul.f32.gmra.mxu0 %v386
        %v2208 = vpop.f32.mrf.mxu0
        %v2209 = vadd.f32 %v2168, %v2208
        %2210 = vmatmul.f32.gmra.mxu0 %v395
        %v2211 = vpop.f32.mrf.mxu0
        %v2212 = vadd.f32 %v2171, %v2211
        %2213 = vmatmul.f32.gmra.mxu0 %v404
        %v2214 = vpop.f32.mrf.mxu0
        %v2215 = vadd.f32 %v2174, %v2214
        %2216 = vmatmul.f32.gmra.mxu0 %v413
        %v2217 = vpop.f32.mrf.mxu0
        %v2218 = vadd.f32 %v2177, %v2217
        %2219 = vmatmul.f32.gmra.mxu0 %v422
        %v2220 = vpop.f32.mrf.mxu0
        %v2221 = vadd.f32 %v2180, %v2220
        %2222 = vmatmul.f32.gmra.mxu0 %v431
        %v2223 = vpop.f32.mrf.mxu0
        %v2224 = vadd.f32 %v2183, %v2223
        %2225 = vmatmul.f32.gmra.mxu0 %v440
        %v2226 = vpop.f32.mrf.mxu0
        %v2227 = vadd.f32 %v2186, %v2226
        %2228 = vmatmul.f32.gmra.mxu0 %v449
        %v2229 = vpop.f32.mrf.mxu0
        %v2230 = vadd.f32 %v2189, %v2229
        %2231 = vdwg.mxu0
        %2232 = vmatpush.msra.mxu0 %v648
        %2233 = vmatpush.msra.mxu0 %v644
        %2234 = vmatpush.msra.mxu0 %v640
        %2235 = vmatpush.msra.mxu0 %v636
        %2236 = vmatpush.msra.mxu0 %v632
        %2237 = vmatpush.msra.mxu0 %v628
        %2238 = vmatpush.msra.mxu0 %v624
        %2239 = vmatpush.msra.mxu0 %v620
        %2240 = vmatpush.msra.mxu0 %v616
        %2241 = vmatpush.msra.mxu0 %v612
        %2242 = vmatpush.msra.mxu0 %v608
        %2243 = vmatpush.msra.mxu0 %v604
        %2244 = vmatpush.msra.mxu0 %v600
        %2245 = vmatpush.msra.mxu0 %v596
        %2246 = vmatpush.msra.mxu0 %v592
        %2247 = vmatpush.msra.mxu0 %v588
        %2248 = vmatmul.f32.gmra.mxu0 %v387
        %v2249 = vpop.f32.mrf.mxu0
        %v2250 = vadd.f32 %v2209, %v2249
        %2251 = vmatmul.f32.gmra.mxu0 %v396
        %v2252 = vpop.f32.mrf.mxu0
        %v2253 = vadd.f32 %v2212, %v2252
        %2254 = vmatmul.f32.gmra.mxu0 %v405
        %v2255 = vpop.f32.mrf.mxu0
        %v2256 = vadd.f32 %v2215, %v2255
        %2257 = vmatmul.f32.gmra.mxu0 %v414
        %v2258 = vpop.f32.mrf.mxu0
        %v2259 = vadd.f32 %v2218, %v2258
        %2260 = vmatmul.f32.gmra.mxu0 %v423
        %v2261 = vpop.f32.mrf.mxu0
        %v2262 = vadd.f32 %v2221, %v2261
        %2263 = vmatmul.f32.gmra.mxu0 %v432
        %v2264 = vpop.f32.mrf.mxu0
        %v2265 = vadd.f32 %v2224, %v2264
        %2266 = vmatmul.f32.gmra.mxu0 %v441
        %v2267 = vpop.f32.mrf.mxu0
        %v2268 = vadd.f32 %v2227, %v2267
        %2269 = vmatmul.f32.gmra.mxu0 %v450
        %v2270 = vpop.f32.mrf.mxu0
        %v2271 = vadd.f32 %v2230, %v2270
        %2272 = vdwg.mxu0
        %2273 = vmatpush.msra.mxu0 %v712
        %2274 = vmatpush.msra.mxu0 %v708
        %2275 = vmatpush.msra.mxu0 %v704
        %2276 = vmatpush.msra.mxu0 %v700
        %2277 = vmatpush.msra.mxu0 %v696
        %2278 = vmatpush.msra.mxu0 %v692
        %2279 = vmatpush.msra.mxu0 %v688
        %2280 = vmatpush.msra.mxu0 %v684
        %2281 = vmatpush.msra.mxu0 %v680
        %2282 = vmatpush.msra.mxu0 %v676
        %2283 = vmatpush.msra.mxu0 %v672
        %2284 = vmatpush.msra.mxu0 %v668
        %2285 = vmatpush.msra.mxu0 %v664
        %2286 = vmatpush.msra.mxu0 %v660
        %2287 = vmatpush.msra.mxu0 %v656
        %2288 = vmatpush.msra.mxu0 %v652
        %2289 = vmatmul.f32.gmra.mxu0 %v388
        %v2290 = vpop.f32.mrf.mxu0
        %v2291 = vadd.f32 %v2250, %v2290
        %2292 = vmatmul.f32.gmra.mxu0 %v397
        %v2293 = vpop.f32.mrf.mxu0
        %v2294 = vadd.f32 %v2253, %v2293
        %2295 = vmatmul.f32.gmra.mxu0 %v406
        %v2296 = vpop.f32.mrf.mxu0
        %v2297 = vadd.f32 %v2256, %v2296
        %2298 = vmatmul.f32.gmra.mxu0 %v415
        %v2299 = vpop.f32.mrf.mxu0
        %v2300 = vadd.f32 %v2259, %v2299
        %2301 = vmatmul.f32.gmra.mxu0 %v424
        %v2302 = vpop.f32.mrf.mxu0
        %v2303 = vadd.f32 %v2262, %v2302
        %2304 = vmatmul.f32.gmra.mxu0 %v433
        %v2305 = vpop.f32.mrf.mxu0
        %v2306 = vadd.f32 %v2265, %v2305
        %2307 = vmatmul.f32.gmra.mxu0 %v442
        %v2308 = vpop.f32.mrf.mxu0
        %v2309 = vadd.f32 %v2268, %v2308
        %2310 = vmatmul.f32.gmra.mxu0 %v451
        %v2311 = vpop.f32.mrf.mxu0
        %v2312 = vadd.f32 %v2271, %v2311
        %2313 = vdwg.mxu0
        %2314 = vmatpush.msra.mxu0 %v776
        %2315 = vmatpush.msra.mxu0 %v772
        %2316 = vmatpush.msra.mxu0 %v768
        %2317 = vmatpush.msra.mxu0 %v764
        %2318 = vmatpush.msra.mxu0 %v760
        %2319 = vmatpush.msra.mxu0 %v756
        %2320 = vmatpush.msra.mxu0 %v752
        %2321 = vmatpush.msra.mxu0 %v748
        %2322 = vmatpush.msra.mxu0 %v744
        %2323 = vmatpush.msra.mxu0 %v740
        %2324 = vmatpush.msra.mxu0 %v736
        %2325 = vmatpush.msra.mxu0 %v732
        %2326 = vmatpush.msra.mxu0 %v728
        %2327 = vmatpush.msra.mxu0 %v724
        %2328 = vmatpush.msra.mxu0 %v720
        %2329 = vmatpush.msra.mxu0 %v716
        %2330 = vmatmul.f32.gmra.mxu0 %v389
        %v2331 = vpop.f32.mrf.mxu0
        %v2332 = vadd.f32 %v2291, %v2331
        %2333 = vmatmul.f32.gmra.mxu0 %v398
        %v2334 = vpop.f32.mrf.mxu0
        %v2335 = vadd.f32 %v2294, %v2334
        %2336 = vmatmul.f32.gmra.mxu0 %v407
        %v2337 = vpop.f32.mrf.mxu0
        %v2338 = vadd.f32 %v2297, %v2337
        %2339 = vmatmul.f32.gmra.mxu0 %v416
        %v2340 = vpop.f32.mrf.mxu0
        %v2341 = vadd.f32 %v2300, %v2340
        %2342 = vmatmul.f32.gmra.mxu0 %v425
        %v2343 = vpop.f32.mrf.mxu0
        %v2344 = vadd.f32 %v2303, %v2343
        %2345 = vmatmul.f32.gmra.mxu0 %v434
        %v2346 = vpop.f32.mrf.mxu0
        %v2347 = vadd.f32 %v2306, %v2346
        %2348 = vmatmul.f32.gmra.mxu0 %v443
        %v2349 = vpop.f32.mrf.mxu0
        %v2350 = vadd.f32 %v2309, %v2349
        %2351 = vmatmul.f32.gmra.mxu0 %v452
        %v2352 = vpop.f32.mrf.mxu0
        %v2353 = vadd.f32 %v2312, %v2352
        %2354 = vdwg.mxu0
        %2355 = vmatpush.msra.mxu0 %v840
        %2356 = vmatpush.msra.mxu0 %v836
        %2357 = vmatpush.msra.mxu0 %v832
        %2358 = vmatpush.msra.mxu0 %v828
        %2359 = vmatpush.msra.mxu0 %v824
        %2360 = vmatpush.msra.mxu0 %v820
        %2361 = vmatpush.msra.mxu0 %v816
        %2362 = vmatpush.msra.mxu0 %v812
        %2363 = vmatpush.msra.mxu0 %v808
        %2364 = vmatpush.msra.mxu0 %v804
        %2365 = vmatpush.msra.mxu0 %v800
        %2366 = vmatpush.msra.mxu0 %v796
        %2367 = vmatpush.msra.mxu0 %v792
        %2368 = vmatpush.msra.mxu0 %v788
        %2369 = vmatpush.msra.mxu0 %v784
        %2370 = vmatpush.msra.mxu0 %v780
        %2371 = vmatmul.f32.gmra.mxu0 %v390
        %v2372 = vpop.f32.mrf.mxu0
        %v2373 = vadd.f32 %v2332, %v2372
        %2374 = vmatmul.f32.gmra.mxu0 %v399
        %v2375 = vpop.f32.mrf.mxu0
        %v2376 = vadd.f32 %v2335, %v2375
        %2377 = vmatmul.f32.gmra.mxu0 %v408
        %v2378 = vpop.f32.mrf.mxu0
        %v2379 = vadd.f32 %v2338, %v2378
        %2380 = vmatmul.f32.gmra.mxu0 %v417
        %v2381 = vpop.f32.mrf.mxu0
        %v2382 = vadd.f32 %v2341, %v2381
        %2383 = vmatmul.f32.gmra.mxu0 %v426
        %v2384 = vpop.f32.mrf.mxu0
        %v2385 = vadd.f32 %v2344, %v2384
        %2386 = vmatmul.f32.gmra.mxu0 %v435
        %v2387 = vpop.f32.mrf.mxu0
        %v2388 = vadd.f32 %v2347, %v2387
        %2389 = vmatmul.f32.gmra.mxu0 %v444
        %v2390 = vpop.f32.mrf.mxu0
        %v2391 = vadd.f32 %v2350, %v2390
        %2392 = vmatmul.f32.gmra.mxu0 %v453
        %v2393 = vpop.f32.mrf.mxu0
        %v2394 = vadd.f32 %v2353, %v2393
        %2395 = vdwg.mxu0
        %2396 = vmatpush.msra.mxu0 %v904
        %2397 = vmatpush.msra.mxu0 %v900
        %2398 = vmatpush.msra.mxu0 %v896
        %2399 = vmatpush.msra.mxu0 %v892
        %2400 = vmatpush.msra.mxu0 %v888
        %2401 = vmatpush.msra.mxu0 %v884
        %2402 = vmatpush.msra.mxu0 %v880
        %2403 = vmatpush.msra.mxu0 %v876
        %2404 = vmatpush.msra.mxu0 %v872
        %2405 = vmatpush.msra.mxu0 %v868
        %2406 = vmatpush.msra.mxu0 %v864
        %2407 = vmatpush.msra.mxu0 %v860
        %2408 = vmatpush.msra.mxu0 %v856
        %2409 = vmatpush.msra.mxu0 %v852
        %2410 = vmatpush.msra.mxu0 %v848
        %2411 = vmatpush.msra.mxu0 %v844
        %2412 = vmatmul.f32.gmra.mxu0 %v391
        %v2413 = vpop.f32.mrf.mxu0
        %v2414 = vadd.f32 %v2373, %v2413
        %2415 = vmatmul.f32.gmra.mxu0 %v400
        %v2416 = vpop.f32.mrf.mxu0
        %v2417 = vadd.f32 %v2376, %v2416
        %2418 = vmatmul.f32.gmra.mxu0 %v409
        %v2419 = vpop.f32.mrf.mxu0
        %v2420 = vadd.f32 %v2379, %v2419
        %2421 = vmatmul.f32.gmra.mxu0 %v418
        %v2422 = vpop.f32.mrf.mxu0
        %v2423 = vadd.f32 %v2382, %v2422
        %2424 = vmatmul.f32.gmra.mxu0 %v427
        %v2425 = vpop.f32.mrf.mxu0
        %v2426 = vadd.f32 %v2385, %v2425
        %2427 = vmatmul.f32.gmra.mxu0 %v436
        %v2428 = vpop.f32.mrf.mxu0
        %v2429 = vadd.f32 %v2388, %v2428
        %2430 = vmatmul.f32.gmra.mxu0 %v445
        %v2431 = vpop.f32.mrf.mxu0
        %v2432 = vadd.f32 %v2391, %v2431
        %2433 = vmatmul.f32.gmra.mxu0 %v454
        %v2434 = vpop.f32.mrf.mxu0
        %v2435 = vadd.f32 %v2394, %v2434
        %2436 = vdwg.mxu0
        %2437 = vmatpush.msra.mxu0 %v968
        %2438 = vmatpush.msra.mxu0 %v964
        %2439 = vmatpush.msra.mxu0 %v960
        %2440 = vmatpush.msra.mxu0 %v956
        %2441 = vmatpush.msra.mxu0 %v952
        %2442 = vmatpush.msra.mxu0 %v948
        %2443 = vmatpush.msra.mxu0 %v944
        %2444 = vmatpush.msra.mxu0 %v940
        %2445 = vmatpush.msra.mxu0 %v936
        %2446 = vmatpush.msra.mxu0 %v932
        %2447 = vmatpush.msra.mxu0 %v928
        %2448 = vmatpush.msra.mxu0 %v924
        %2449 = vmatpush.msra.mxu0 %v920
        %2450 = vmatpush.msra.mxu0 %v916
        %2451 = vmatpush.msra.mxu0 %v912
        %2452 = vmatpush.msra.mxu0 %v908
        %2453 = vmatmul.f32.gmra.mxu0 %v392
        %v2454 = vpop.f32.mrf.mxu0
        %v2455 = vadd.f32 %v2414, %v2454
        %2456 = vmatmul.f32.gmra.mxu0 %v401
        %v2457 = vpop.f32.mrf.mxu0
        %v2458 = vadd.f32 %v2417, %v2457
        %2459 = vmatmul.f32.gmra.mxu0 %v410
        %v2460 = vpop.f32.mrf.mxu0
        %v2461 = vadd.f32 %v2420, %v2460
        %2462 = vmatmul.f32.gmra.mxu0 %v419
        %v2463 = vpop.f32.mrf.mxu0
        %v2464 = vadd.f32 %v2423, %v2463
        %2465 = vmatmul.f32.gmra.mxu0 %v428
        %v2466 = vpop.f32.mrf.mxu0
        %v2467 = vadd.f32 %v2426, %v2466
        %2468 = vmatmul.f32.gmra.mxu0 %v437
        %v2469 = vpop.f32.mrf.mxu0
        %v2470 = vadd.f32 %v2429, %v2469
        %2471 = vmatmul.f32.gmra.mxu0 %v446
        %v2472 = vpop.f32.mrf.mxu0
        %v2473 = vadd.f32 %v2432, %v2472
        %2474 = vmatmul.f32.gmra.mxu0 %v455
        %v2475 = vpop.f32.mrf.mxu0
        %v2476 = vadd.f32 %v2435, %v2475
        %2477 = vdwg.mxu0
        %2478 = vmatpush.msra.mxu0 %v1032
        %2479 = vmatpush.msra.mxu0 %v1028
        %2480 = vmatpush.msra.mxu0 %v1024
        %2481 = vmatpush.msra.mxu0 %v1020
        %2482 = vmatpush.msra.mxu0 %v1016
        %2483 = vmatpush.msra.mxu0 %v1012
        %2484 = vmatpush.msra.mxu0 %v1008
        %2485 = vmatpush.msra.mxu0 %v1004
        %2486 = vmatpush.msra.mxu0 %v1000
        %2487 = vmatpush.msra.mxu0 %v996
        %2488 = vmatpush.msra.mxu0 %v992
        %2489 = vmatpush.msra.mxu0 %v988
        %2490 = vmatpush.msra.mxu0 %v984
        %2491 = vmatpush.msra.mxu0 %v980
        %2492 = vmatpush.msra.mxu0 %v976
        %2493 = vmatpush.msra.mxu0 %v972
        %2494 = vmatmul.f32.gmra.mxu0 %v393
        %v2495 = vpop.f32.mrf.mxu0
        %v2496 = vadd.f32 %v2455, %v2495
        %2497 = vmatmul.f32.gmra.mxu0 %v402
        %v2498 = vpop.f32.mrf.mxu0
        %v2499 = vadd.f32 %v2458, %v2498
        %2500 = vmatmul.f32.gmra.mxu0 %v411
        %v2501 = vpop.f32.mrf.mxu0
        %v2502 = vadd.f32 %v2461, %v2501
        %2503 = vmatmul.f32.gmra.mxu0 %v420
        %v2504 = vpop.f32.mrf.mxu0
        %v2505 = vadd.f32 %v2464, %v2504
        %2506 = vmatmul.f32.gmra.mxu0 %v429
        %v2507 = vpop.f32.mrf.mxu0
        %v2508 = vadd.f32 %v2467, %v2507
        %2509 = vmatmul.f32.gmra.mxu0 %v438
        %v2510 = vpop.f32.mrf.mxu0
        %v2511 = vadd.f32 %v2470, %v2510
        %2512 = vmatmul.f32.gmra.mxu0 %v447
        %v2513 = vpop.f32.mrf.mxu0
        %v2514 = vadd.f32 %v2473, %v2513
        %2515 = vmatmul.f32.gmra.mxu0 %v456
        %v2516 = vpop.f32.mrf.mxu0
        %v2517 = vadd.f32 %v2476, %v2516
        %2518 = vdwg.mxu0
        %2519 = vst [vmem:[%s202] sm:$0xff] %v1389
        %2520 = vst [vmem:[%s202 + $0x8] sm:$0xff] %v1758
        %2521 = vst [vmem:[%s202 + $0x10] sm:$0xff] %v2127
        %2522 = vst [vmem:[%s202 + $0x18] sm:$0xff] %v2496
        %2523 = vst [vmem:[%s202 + $0x20] sm:$0xff] %v1392
        %2524 = vst [vmem:[%s202 + $0x28] sm:$0xff] %v1761
        %2525 = vst [vmem:[%s202 + $0x30] sm:$0xff] %v2130
        %2526 = vst [vmem:[%s202 + $0x38] sm:$0xff] %v2499
        %2527 = vst [vmem:[%s202 + $0x40] sm:$0xff] %v1395
        %2528 = vst [vmem:[%s202 + $0x48] sm:$0xff] %v1764
        %2529 = vst [vmem:[%s202 + $0x50] sm:$0xff] %v2133
        %2530 = vst [vmem:[%s202 + $0x58] sm:$0xff] %v2502
        %2531 = vst [vmem:[%s202 + $0x60] sm:$0xff] %v1398
        %2532 = vst [vmem:[%s202 + $0x68] sm:$0xff] %v1767
        %2533 = vst [vmem:[%s202 + $0x70] sm:$0xff] %v2136
        %2534 = vst [vmem:[%s202 + $0x78] sm:$0xff] %v2505
        %2535 = vst [vmem:[%s202 + $0x80] sm:$0xff] %v1401
        %2536 = vst [vmem:[%s202 + $0x88] sm:$0xff] %v1770
        %2537 = vst [vmem:[%s202 + $0x90] sm:$0xff] %v2139
        %2538 = vst [vmem:[%s202 + $0x98] sm:$0xff] %v2508
        %2539 = vst [vmem:[%s202 + $0xa0] sm:$0xff] %v1404
        %2540 = vst [vmem:[%s202 + $0xa8] sm:$0xff] %v1773
        %2541 = vst [vmem:[%s202 + $0xb0] sm:$0xff] %v2142
        %2542 = vst [vmem:[%s202 + $0xb8] sm:$0xff] %v2511
        %2543 = vst [vmem:[%s202 + $0xc0] sm:$0xff] %v1407
        %2544 = vst [vmem:[%s202 + $0xc8] sm:$0xff] %v1776
        %2545 = vst [vmem:[%s202 + $0xd0] sm:$0xff] %v2145
        %2546 = vst [vmem:[%s202 + $0xd8] sm:$0xff] %v2514
        %2547 = vst [vmem:[%s202 + $0xe0] sm:$0xff] %v1410
        %2548 = vst [vmem:[%s202 + $0xe8] sm:$0xff] %v1779
        %2549 = vst [vmem:[%s202 + $0xf0] sm:$0xff] %v2148
        %2550 = vst [vmem:[%s202 + $0xf8] sm:$0xff] %v2517
        %p2551 = scmp.lt.s32.totalorder %s16, 1
        %s2552 = scalar_select %p2551, %s16, 1
        %s2553 = smul.addr %s2552, 32
        %s2554 = smul.addr %s2553, 8
        %s2555 = scalar_lea.vmem %s3, %s2554
        // Predicated region
        $region41: #{edsr_forward.6} parent=31 // pred_check
          %p2556 = pneg %p102
        $region42: #{edsr_forward.6} parent=31 // pred_check_branch
          %2558 = sbr.rel (%p2556) target = $region44
        $region43: #{edsr_forward.6} parent=31 // pred_region
          _
        $region44: #{edsr_forward.6} parent=31 // pred_fallthru
          _
      $region32: #{edsr_forward.6} parent=5 // pred_fallthru
        _
      %p2559 = scmp.le.s32.totalorder 2, %s11
      // Predicated region
      $region45: #{edsr_forward.6} parent=5 // pred_check
        %p2560 = pneg %p2559
      $region46: #{edsr_forward.6} parent=5 // pred_check_branch
        %2562 = sbr.rel (%p2560) target = $region48
      $region47: #{edsr_forward.6} parent=5 // pred_region
        %s2563 = ssub.s32 %s11, 2
        // Predicated region
        $region49: #{edsr_forward.6} parent=47 // pred_check
          %p2564 = pneg %p108
        $region50: #{edsr_forward.6} parent=47 // pred_check_branch
          %2566 = sbr.rel (%p2564) target = $region52
        $region51: #{edsr_forward.6} parent=47 // pred_region
          %p2567 = scmp.lt.s32.totalorder %s17, 1
          %s2568 = scalar_select %p2567, %s17, 1
          %s2569 = smul.addr %s2568, 32
          %s2570 = smul.addr %s2569, 8
          %s2571 = scalar_lea.vmem %s3, %s2570
        $region52: #{edsr_forward.6} parent=47 // pred_fallthru
          _
      $region48: #{edsr_forward.6} parent=5 // pred_fallthru
        _
    $region6: #{edsr_forward.6} parent=1 // loop_footer
      %s15 = sadd.s32 1, %s11
    $region7: #{edsr_forward.6} parent=1 // loop_footer_branch
      %10 = sbr.rel target = $region3
    $region8: #{edsr_forward.6} parent=1 // loop_exit
      _
    %2572 = vsyncpa [#allocation5], 1
    %s2573 = scalar_lea.sflag [#allocation5], 1
    %2574 = vsyncpa %s2573, 1
    %2575 = vsyncpa [#allocation7], 1

// kernel: edsr_forward.7
$region0: #{edsr_forward.7}
  #allocation0 [shape = 'u32[]', space=smem, size = 0x4, offset = 0x4, fixed_abs, tag = 'smem constant byte address 0x4 - core index']
  #allocation1 [shape = 'u32[72,128]{1,0:T(1,128)}', space=vmem, size = 0x9000, scoped, tag = 'internal scratch']
  #allocation2 [shape = 'f32[18,18,128]{2,1,0:T(8,128)}', space=vmem, size = 0x36000, scoped, tag = 'scratch operand']
  #allocation3 [shape = 'f32[256,1152]{1,0:T(8,128)}', space=vmem, size = 0x120000, scoped, tag = 'scratch operand']
  %s0 = inlined_call_operand.vmem [shape: f32[2,16,16,128], index: 0, kind: input, shape index: {}]
  %s1 = inlined_call_operand.vmem [shape: f32[1152,128], index: 1, kind: input, shape index: {}]
  %s2 = inlined_call_operand.vmem [shape: f32[1,128], index: 2, kind: input, shape index: {}]
  %s3 = inlined_call_operand.vmem [shape: f32[2,16,16,128], index: 3, kind: output, shape index: {}]
  %s4 = sld [smem:[#allocation0]]
  $region45: #{edsr_forward.7} parent=0
    _
  %s6 = ssub.s32 1, %s4
  %s7 = scalar_select 0, %s6, %s4
  loop: start=0, step=1, limit=4
  $region2: #{edsr_forward.7} parent=0 // loop_pre_header
    _
  $region3: #{edsr_forward.7} parent=0 // loop_header
    %s9 = sphi 0, %s13
    %p10 = scmp.ge.s32.totalorder %s9, 4
    %s19 = sphi 0, %s21
    %s22 = sphi 0, %s19
    %s23 = sphi 0, %s22
    %s39 = sphi 0, %s23
    %s43 = sphi 0, %s43
    %s45 = sphi 0, %s43
    %s46 = sphi 0, %s45
    %s60 = sphi 0, %s46
    %s64 = sphi 0, %s64
    %s66 = sphi 0, %s64
    %s67 = sphi 0, %s66
    %s81 = sphi 0, %s67
    %s87 = sphi 0, %s89
    %s90 = sphi 0, %s87
    %s91 = sphi 0, %s90
    %s107 = sphi 0, %s91
  $region4: #{edsr_forward.7} parent=0 // loop_header_branch
    %12 = sbr.rel (%p10) target = $region8
  $region5: #{edsr_forward.7} parent=0 // loop_body
    %s14 = ssub.s32 %s9, 1
    %s15 = ssub.s32 %s9, 2
    %s16 = sadd.s32 %s9, 1
    %s17 = ssub.s32 %s9, %s16
    %p18 = scmp.eq.s32.totalorder %s17, 0
    %s20 = sadd.s32 %s19, 1
    %s21 = scalar_select %p18, %s19, %s20
    %p24 = pneg %p18
    %p25 = scmp.eq.s32.totalorder %s9, 1
    %p26 = por %p24, %p25
    %p27 = scmp.ne.s32.totalorder %s19, %s22
    %p28 = scmp.eq.s32.totalorder %s9, 0
    %p29 = por %p27, %p28
    %p30 = scmp.ne.s32.totalorder %s19, %s22
    %p31 = scmp.eq.s32.totalorder %s14, 1
    %p32 = por %p30, %p31
    %p33 = scmp.ne.s32.totalorder %s22, %s23
    %p34 = scmp.eq.s32.totalorder %s14, 0
    %p35 = por %p33, %p34
    %p36 = scmp.ne.s32.totalorder %s22, %s23
    %p37 = scmp.eq.s32.totalorder %s15, 1
    %p38 = por %p36, %p37
    %p40 = scmp.ne.s32.totalorder %s23, %s39
    %p41 = scmp.eq.s32.totalorder %s15, 0
    %p42 = por %p40, %p41
    %s44 = sadd.s32 %s43, 1
    %p47 = scmp.eq.s32.totalorder %s9, 1
    %p48 = scmp.ne.s32.totalorder %s43, %s45
    %p49 = scmp.eq.s32.totalorder %s9, 0
    %p50 = por %p48, %p49
    %p51 = scmp.ne.s32.totalorder %s43, %s45
    %p52 = scmp.eq.s32.totalorder %s14, 1
    %p53 = por %p51, %p52
    %p54 = scmp.ne.s32.totalorder %s45, %s46
    %p55 = scmp.eq.s32.totalorder %s14, 0
    %p56 = por %p54, %p55
    %p57 = scmp.ne.s32.totalorder %s45, %s46
    %p58 = scmp.eq.s32.totalorder %s15, 1
    %p59 = por %p57, %p58
    %p61 = scmp.ne.s32.totalorder %s46, %s60
    %p62 = scmp.eq.s32.totalorder %s15, 0
    %p63 = por %p61, %p62
    %s65 = sadd.s32 %s64, 1
    %p68 = scmp.eq.s32.totalorder %s9, 1
    %p69 = scmp.ne.s32.totalorder %s64, %s66
    %p70 = scmp.eq.s32.totalorder %s9, 0
    %p71 = por %p69, %p70
    %p72 = scmp.ne.s32.totalorder %s64, %s66
    %p73 = scmp.eq.s32.totalorder %s14, 1
    %p74 = por %p72, %p73
    %p75 = scmp.ne.s32.totalorder %s66, %s67
    %p76 = scmp.eq.s32.totalorder %s14, 0
    %p77 = por %p75, %p76
    %p78 = scmp.ne.s32.totalorder %s66, %s67
    %p79 = scmp.eq.s32.totalorder %s15, 1
    %p80 = por %p78, %p79
    %p82 = scmp.ne.s32.totalorder %s67, %s81
    %p83 = scmp.eq.s32.totalorder %s15, 0
    %p84 = por %p82, %p83
    %s85 = ssub.s32 %s9, %s16
    %p86 = scmp.eq.s32.totalorder %s85, 0
    %s88 = sadd.s32 %s87, 1
    %s89 = scalar_select %p86, %s87, %s88
    %p92 = pneg %p86
    %p93 = scmp.eq.s32.totalorder %s9, 1
    %p94 = por %p92, %p93
    %p95 = scmp.ne.s32.totalorder %s87, %s90
    %p96 = scmp.eq.s32.totalorder %s9, 0
    %p97 = por %p95, %p96
    %p98 = scmp.ne.s32.totalorder %s87, %s90
    %p99 = scmp.eq.s32.totalorder %s14, 1
    %p100 = por %p98, %p99
    %p101 = scmp.ne.s32.totalorder %s90, %s91
    %p102 = scmp.eq.s32.totalorder %s14, 0
    %p103 = por %p101, %p102
    %p104 = scmp.ne.s32.totalorder %s90, %s91
    %p105 = scmp.eq.s32.totalorder %s15, 1
    %p106 = por %p104, %p105
    %p108 = scmp.ne.s32.totalorder %s91, %s107
    %p109 = scmp.eq.s32.totalorder %s15, 0
    %p110 = por %p108, %p109
    %p111 = scmp.le.s32.totalorder 1, %s9
    %p112 = scmp.lt.s32.totalorder %s9, 3
    %p113 = pnand %p111, %p112
    %p114 = pneg %p113
    // Predicated region
    $region9: #{edsr_forward.7} parent=5 // pred_check
      _
    $region10: #{edsr_forward.7} parent=5 // pred_check_branch
      %116 = sbr.rel (%p113) target = $region12
    $region11: #{edsr_forward.7} parent=5 // pred_region
      %s117 = ssub.s32 %s9, 1
      // Predicated region
      $region13: #{edsr_forward.7} parent=11 // pred_check
        %p118 = pneg %p56
      $region14: #{edsr_forward.7} parent=11 // pred_check_branch
        %120 = sbr.rel (%p118) target = $region16
      $region15: #{edsr_forward.7} parent=11 // pred_region
        _
      $region16: #{edsr_forward.7} parent=11 // pred_fallthru
        _
      // Predicated region
      $region17: #{edsr_forward.7} parent=11 // pred_check
        %p121 = pneg %p77
      $region18: #{edsr_forward.7} parent=11 // pred_check_branch
        %123 = sbr.rel (%p121) target = $region20
      $region19: #{edsr_forward.7} parent=11 // pred_region
        _
      $region20: #{edsr_forward.7} parent=11 // pred_fallthru
        _
    $region12: #{edsr_forward.7} parent=5 // pred_fallthru
      _
    %p124 = scmp.lt.s32.totalorder %s9, 2
    // Predicated region
    $region21: #{edsr_forward.7} parent=5 // pred_check
      %p125 = pneg %p124
    $region22: #{edsr_forward.7} parent=5 // pred_check_branch
      %127 = sbr.rel (%p125) target = $region24
    $region23: #{edsr_forward.7} parent=5 // pred_region
      // Predicated region
      $region25: #{edsr_forward.7} parent=23 // pred_check
        %p128 = pneg %p29
      $region26: #{edsr_forward.7} parent=23 // pred_check_branch
        %130 = sbr.rel (%p128) target = $region28
      $region27: #{edsr_forward.7} parent=23 // pred_region
        %p131 = scmp.lt.s32.totalorder %s9, 1
        %s132 = scalar_select %p131, %s9, 1
        %s133 = smul.addr %s132, 32
        %s134 = smul.addr %s133, 8
        %s135 = scalar_lea.vmem %s0, %s134
      $region28: #{edsr_forward.7} parent=23 // pred_fallthru
        _
    $region24: #{edsr_forward.7} parent=5 // pred_fallthru
      _
    %p136 = scmp.le.s32.totalorder 1, %s9
    %p137 = scmp.lt.s32.totalorder %s9, 3
    %p138 = pnand %p136, %p137
    %p139 = pneg %p138
    // Predicated region
    $region29: #{edsr_forward.7} parent=5 // pred_check
      _
    $region30: #{edsr_forward.7} parent=5 // pred_check_branch
      %141 = sbr.rel (%p138) target = $region32
    $region31: #{edsr_forward.7} parent=5 // pred_region
      %s142 = ssub.s32 %s9, 1
      %p143 = scmp.lt.s32.totalorder %s14, 1
      %s144 = scalar_select %p143, %s14, 1
      %s145 = smul.addr %s144, 32
      %s146 = smul.addr %s145, 8
      %s147 = scalar_lea.vmem %s0, %s146
      %p148 = pneg %p35
      %p149 = pneg %p32
      %p150 = pneg %p56
      %p151 = pneg %p53
      %p152 = pneg %p77
      %p153 = pneg %p74
      %p154 = pneg %p103
      %p155 = pneg %p100
      %p156 = scmp.lt.s32.totalorder %s14, 1
      %s157 = scalar_select %p156, %s14, 1
      %s158 = smul.addr %s157, 32
      %s159 = smul.addr %s158, 8
      %s160 = scalar_lea.vmem %s3, %s159
      %p161 = scmp.lt.s32.totalorder %s14, 1
      %s162 = scalar_select %p161, %s14, 1
      %s163 = smul.addr %s162, 32
      %s164 = smul.addr %s163, 8
      %s165 = scalar_lea.vmem %s0, %s164
      %p166 = scmp.lt.s32.totalorder %s14, 1
      %s167 = scalar_select %p166, %s14, 1
      %s168 = smul.addr %s167, 32
      %s169 = smul.addr %s168, 8
      %s170 = scalar_lea.vmem %s3, %s169
      %v171 = vld [vmem:[%s165] sm:$0xff]
      %v172 = vld [vmem:[%s165 + $0x8] sm:$0xff]
      %v173 = vld [vmem:[%s165 + $0x10] sm:$0xff]
      %v174 = vld [vmem:[%s165 + $0x18] sm:$0xff]
      %v175 = vld [vmem:[%s165 + $0x20] sm:$0xff]
      %v176 = vld [vmem:[%s165 + $0x28] sm:$0xff]
      %v177 = vld [vmem:[%s165 + $0x30] sm:$0xff]
      %v178 = vld [vmem:[%s165 + $0x38] sm:$0xff]
      %v179 = vld [vmem:[%s165 + $0x40] sm:$0xff]
      %v180 = vld [vmem:[%s165 + $0x48] sm:$0xff]
      %v181 = vld [vmem:[%s165 + $0x50] sm:$0xff]
      %v182 = vld [vmem:[%s165 + $0x58] sm:$0xff]
      %v183 = vld [vmem:[%s165 + $0x60] sm:$0xff]
      %v184 = vld [vmem:[%s165 + $0x68] sm:$0xff]
      %v185 = vld [vmem:[%s165 + $0x70] sm:$0xff]
      %v186 = vld [vmem:[%s165 + $0x78] sm:$0xff]
      %v187 = vld [vmem:[%s165 + $0x80] sm:$0xff]
      %v188 = vld [vmem:[%s165 + $0x88] sm:$0xff]
      %v189 = vld [vmem:[%s165 + $0x90] sm:$0xff]
      %v190 = vld [vmem:[%s165 + $0x98] sm:$0xff]
      %v191 = vld [vmem:[%s165 + $0xa0] sm:$0xff]
      %v192 = vld [vmem:[%s165 + $0xa8] sm:$0xff]
      %v193 = vld [vmem:[%s165 + $0xb0] sm:$0xff]
      %v194 = vld [vmem:[%s165 + $0xb8] sm:$0xff]
      %v195 = vld [vmem:[%s165 + $0xc0] sm:$0xff]
      %v196 = vld [vmem:[%s165 + $0xc8] sm:$0xff]
      %v197 = vld [vmem:[%s165 + $0xd0] sm:$0xff]
      %v198 = vld [vmem:[%s165 + $0xd8] sm:$0xff]
      %v199 = vld [vmem:[%s165 + $0xe0] sm:$0xff]
      %v200 = vld [vmem:[%s165 + $0xe8] sm:$0xff]
      %v201 = vld [vmem:[%s165 + $0xf0] sm:$0xff]
      %v202 = vld [vmem:[%s165 + $0xf8] sm:$0xff]
      %203 = vst [vmem:[#allocation2] sm:$0xff] 0.0
      %204 = vst [vmem:[#allocation2 + $0x8] sm:$0xff] 0.0
      %205 = vst [vmem:[#allocation2 + $0x10] sm:$0x3] 0.0
      %206 = vst [vmem:[#allocation2 + $0x18] sm:$0xff] 0.0
      %207 = vst [vmem:[#allocation2 + $0x20] sm:$0xff] 0.0
      %208 = vst [vmem:[#allocation2 + $0x28] sm:$0x3] 0.0
      %209 = vst [vmem:[#allocation2 + $0x30] sm:$0xff] 0.0
      %210 = vst [vmem:[#allocation2 + $0x38] sm:$0xff] 0.0
      %211 = vst [vmem:[#allocation2 + $0x40] sm:$0x3] 0.0
      %212 = vst [vmem:[#allocation2 + $0x48] sm:$0xff] 0.0
      %213 = vst [vmem:[#allocation2 + $0x50] sm:$0xff] 0.0
      %214 = vst [vmem:[#allocation2 + $0x58] sm:$0x3] 0.0
      %215 = vst [vmem:[#allocation2 + $0x60] sm:$0xff] 0.0
      %216 = vst [vmem:[#allocation2 + $0x68] sm:$0xff] 0.0
      %217 = vst [vmem:[#allocation2 + $0x70] sm:$0x3] 0.0
      %218 = vst [vmem:[#allocation2 + $0x78] sm:$0xff] 0.0
      %219 = vst [vmem:[#allocation2 + $0x80] sm:$0xff] 0.0
      %220 = vst [vmem:[#allocation2 + $0x88] sm:$0x3] 0.0
      %221 = vst [vmem:[#allocation2 + $0x90] sm:$0xff] 0.0
      %222 = vst [vmem:[#allocation2 + $0x98] sm:$0xff] 0.0
      %223 = vst [vmem:[#allocation2 + $0xa0] sm:$0x3] 0.0
      %224 = vst [vmem:[#allocation2 + $0xa8] sm:$0xff] 0.0
      %225 = vst [vmem:[#allocation2 + $0xb0] sm:$0xff] 0.0
      %226 = vst [vmem:[#allocation2 + $0xb8] sm:$0x3] 0.0
      %227 = vst [vmem:[#allocation2 + $0xc0] sm:$0xff] 0.0
      %228 = vst [vmem:[#allocation2 + $0xc8] sm:$0xff] 0.0
      %229 = vst [vmem:[#allocation2 + $0xd0] sm:$0x3] 0.0
      %230 = vst [vmem:[#allocation2 + $0xd8] sm:$0xff] 0.0
      %231 = vst [vmem:[#allocation2 + $0xe0] sm:$0xff] 0.0
      %232 = vst [vmem:[#allocation2 + $0xe8] sm:$0x3] 0.0
      %233 = vst [vmem:[#allocation2 + $0xf0] sm:$0xff] 0.0
      %234 = vst [vmem:[#allocation2 + $0xf8] sm:$0xff] 0.0
      %235 = vst [vmem:[#allocation2 + $0x100] sm:$0x3] 0.0
      %236 = vst [vmem:[#allocation2 + $0x108] sm:$0xff] 0.0
      %237 = vst [vmem:[#allocation2 + $0x110] sm:$0xff] 0.0
      %238 = vst [vmem:[#allocation2 + $0x118] sm:$0x3] 0.0
      %239 = vst [vmem:[#allocation2 + $0x120] sm:$0xff] 0.0
      %240 = vst [vmem:[#allocation2 + $0x128] sm:$0xff] 0.0
      %241 = vst [vmem:[#allocation2 + $0x130] sm:$0x3] 0.0
      %242 = vst [vmem:[#allocation2 + $0x138] sm:$0xff] 0.0
      %243 = vst [vmem:[#allocation2 + $0x140] sm:$0xff] 0.0
      %244 = vst [vmem:[#allocation2 + $0x148] sm:$0x3] 0.0
      %245 = vst [vmem:[#allocation2 + $0x150] sm:$0xff] 0.0
      %246 = vst [vmem:[#allocation2 + $0x158] sm:$0xff] 0.0
      %247 = vst [vmem:[#allocation2 + $0x160] sm:$0x3] 0.0
      %248 = vst [vmem:[#allocation2 + $0x168] sm:$0xff] 0.0
      %249 = vst [vmem:[#allocation2 + $0x170] sm:$0xff] 0.0
      %250 = vst [vmem:[#allocation2 + $0x178] sm:$0x3] 0.0
      %251 = vst [vmem:[#allocation2 + $0x180] sm:$0xff] 0.0
      %252 = vst [vmem:[#allocation2 + $0x188] sm:$0xff] 0.0
      %253 = vst [vmem:[#allocation2 + $0x190] sm:$0x3] 0.0
      %254 = vst [vmem:[#allocation2 + $0x198] sm:$0xff] 0.0
      %255 = vst [vmem:[#allocation2 + $0x1a0] sm:$0xff] 0.0
      %256 = vst [vmem:[#allocation2 + $0x1a8] sm:$0x3] 0.0
      %s257 = scalar_lea.vmem [#allocation2], 24
      %258 = vst [vmem:[%s257 + $0x1] sm:$0xff] %v171
      %259 = vst [vmem:[%s257 + $0x9] sm:$0xff] %v172
      %260 = vst [vmem:[%s257 + $0x19] sm:$0xff] %v173
      %261 = vst [vmem:[%s257 + $0x21] sm:$0xff] %v174
      %262 = vst [vmem:[%s257 + $0x31] sm:$0xff] %v175
      %263 = vst [vmem:[%s257 + $0x39] sm:$0xff] %v176
      %264 = vst [vmem:[%s257 + $0x49] sm:$0xff] %v177
      %265 = vst [vmem:[%s257 + $0x51] sm:$0xff] %v178
      %266 = vst [vmem:[%s257 + $0x61] sm:$0xff] %v179
      %267 = vst [vmem:[%s257 + $0x69] sm:$0xff] %v180
      %268 = vst [vmem:[%s257 + $0x79] sm:$0xff] %v181
      %269 = vst [vmem:[%s257 + $0x81] sm:$0xff] %v182
      %270 = vst [vmem:[%s257 + $0x91] sm:$0xff] %v183
      %271 = vst [vmem:[%s257 + $0x99] sm:$0xff] %v184
      %272 = vst [vmem:[%s257 + $0xa9] sm:$0xff] %v185
      %273 = vst [vmem:[%s257 + $0xb1] sm:$0xff] %v186
      %274 = vst [vmem:[%s257 + $0xc1] sm:$0xff] %v187
      %275 = vst [vmem:[%s257 + $0xc9] sm:$0xff] %v188
      %276 = vst [vmem:[%s257 + $0xd9] sm:$0xff] %v189
      %277 = vst [vmem:[%s257 + $0xe1] sm:$0xff] %v190
      %278 = vst [vmem:[%s257 + $0xf1] sm:$0xff] %v191
      %279 = vst [vmem:[%s257 + $0xf9] sm:$0xff] %v192
      %280 = vst [vmem:[%s257 + $0x109] sm:$0xff] %v193
      %281 = vst [vmem:[%s257 + $0x111] sm:$0xff] %v194
      %282 = vst [vmem:[%s257 + $0x121] sm:$0xff] %v195
      %283 = vst [vmem:[%s257 + $0x129] sm:$0xff] %v196
      %284 = vst [vmem:[%s257 + $0x139] sm:$0xff] %v197
      %285 = vst [vmem:[%s257 + $0x141] sm:$0xff] %v198
      %286 = vst [vmem:[%s257 + $0x151] sm:$0xff] %v199
      %287 = vst [vmem:[%s257 + $0x159] sm:$0xff] %v200
      %288 = vst [vmem:[%s257 + $0x169] sm:$0xff] %v201
      %289 = vst [vmem:[%s257 + $0x171] sm:$0xff] %v202
      %v290 = vld [vmem:[#allocation2] sm:$0xff]
      %v291 = vld [vmem:[#allocation2 + $0x8] sm:$0xff]
      %v292 = vld [vmem:[#allocation2 + $0x18] sm:$0xff]
      %v293 = vld [vmem:[#allocation2 + $0x20] sm:$0xff]
      %v294 = vld [vmem:[#allocation2 + $0x30] sm:$0xff]
      %v295 = vld [vmem:[#allocation2 + $0x38] sm:$0xff]
      %v296 = vld [vmem:[#allocation2 + $0x48] sm:$0xff]
      %v297 = vld [vmem:[#allocation2 + $0x50] sm:$0xff]
      %v298 = vld [vmem:[#allocation2 + $0x60] sm:$0xff]
      %v299 = vld [vmem:[#allocation2 + $0x68] sm:$0xff]
      %v300 = vld [vmem:[#allocation2 + $0x78] sm:$0xff]
      %v301 = vld [vmem:[#allocation2 + $0x80] sm:$0xff]
      %v302 = vld [vmem:[#allocation2 + $0x90] sm:$0xff]
      %v303 = vld [vmem:[#allocation2 + $0x98] sm:$0xff]
      %v304 = vld [vmem:[#allocation2 + $0xa8] sm:$0xff]
      %v305 = vld [vmem:[#allocation2 + $0xb0] sm:$0xff]
      %v306 = vld [vmem:[#allocation2 + $0xc0] sm:$0xff]
      %v307 = vld [vmem:[#allocation2 + $0xc8] sm:$0xff]
      %v308 = vld [vmem:[#allocation2 + $0xd8] sm:$0xff]
      %v309 = vld [vmem:[#allocation2 + $0xe0] sm:$0xff]
      %v310 = vld [vmem:[#allocation2 + $0xf0] sm:$0xff]
      %v311 = vld [vmem:[#allocation2 + $0xf8] sm:$0xff]
      %v312 = vld [vmem:[#allocation2 + $0x108] sm:$0xff]
      %v313 = vld [vmem:[#allocation2 + $0x110] sm:$0xff]
      %v314 = vld [vmem:[#allocation2 + $0x120] sm:$0xff]
      %v315 = vld [vmem:[#allocation2 + $0x128] sm:$0xff]
      %v316 = vld [vmem:[#allocation2 + $0x138] sm:$0xff]
      %v317 = vld [vmem:[#allocation2 + $0x140] sm:$0xff]
      %v318 = vld [vmem:[#allocation2 + $0x150] sm:$0xff]
      %v319 = vld [vmem:[#allocation2 + $0x158] sm:$0xff]
      %v320 = vld [vmem:[#allocation2 + $0x168] sm:$0xff]
      %v321 = vld [vmem:[#allocation2 + $0x170] sm:$0xff]
      %322 = vst [vmem:[#allocation3] sm:$0xff] %v290
      %323 = vst [vmem:[#allocation3 + $0x48] sm:$0xff] %v291
      %324 = vst [vmem:[#allocation3 + $0x90] sm:$0xff] %v292
      %325 = vst [vmem:[#allocation3 + $0xd8] sm:$0xff] %v293
      %326 = vst [vmem:[#allocation3 + $0x120] sm:$0xff] %v294
      %327 = vst [vmem:[#allocation3 + $0x168] sm:$0xff] %v295
      %328 = vst [vmem:[#allocation3 + $0x1b0] sm:$0xff] %v296
      %329 = vst [vmem:[#allocation3 + $0x1f8] sm:$0xff] %v297
      %330 = vst [vmem:[#allocation3 + $0x240] sm:$0xff] %v298
      %331 = vst [vmem:[#allocation3 + $0x288] sm:$0xff] %v299
      %332 = vst [vmem:[#allocation3 + $0x2d0] sm:$0xff] %v300
      %333 = vst [vmem:[#allocation3 + $0x318] sm:$0xff] %v301
      %334 = vst [vmem:[#allocation3 + $0x360] sm:$0xff] %v302
      %335 = vst [vmem:[#allocation3 + $0x3a8] sm:$0xff] %v303
      %336 = vst [vmem:[#allocation3 + $0x3f0] sm:$0xff] %v304
      %337 = vst [vmem:[#allocation3 + $0x438] sm:$0xff] %v305
      %338 = vst [vmem:[#allocation3 + $0x480] sm:$0xff] %v306
      %339 = vst [vmem:[#allocation3 + $0x4c8] sm:$0xff] %v307
      %340 = vst [vmem:[#allocation3 + $0x510] sm:$0xff] %v308
      %341 = vst [vmem:[#allocation3 + $0x558] sm:$0xff] %v309
      %342 = vst [vmem:[#allocation3 + $0x5a0] sm:$0xff] %v310
      %343 = vst [vmem:[#allocation3 + $0x5e8] sm:$0xff] %v311
      %344 = vst [vmem:[#allocation3 + $0x630] sm:$0xff] %v312
      %345 = vst [vmem:[#allocation3 + $0x678] sm:$0xff] %v313
      %346 = vst [vmem:[#allocation3 + $0x6c0] sm:$0xff] %v314
      %347 = vst [vmem:[#allocation3 + $0x708] sm:$0xff] %v315
      %348 = vst [vmem:[#allocation3 + $0x750] sm:$0xff] %v316
      %349 = vst [vmem:[#allocation3 + $0x798] sm:$0xff] %v317
      %350 = vst [vmem:[#allocation3 + $0x7e0] sm:$0xff] %v318
      %351 = vst [vmem:[#allocation3 + $0x828] sm:$0xff] %v319
      %352 = vst [vmem:[#allocation3 + $0x870] sm:$0xff] %v320
      %353 = vst [vmem:[#allocation3 + $0x8b8] sm:$0xff] %v321
      %v354 = vld [vmem:[#allocation2 + $0x1] sm:$0xff]
      %v355 = vld [vmem:[#allocation2 + $0x9] sm:$0xff]
      %v356 = vld [vmem:[#allocation2 + $0x19] sm:$0xff]
      %v357 = vld [vmem:[#allocation2 + $0x21] sm:$0xff]
      %v358 = vld [vmem:[#allocation2 + $0x31] sm:$0xff]
      %v359 = vld [vmem:[#allocation2 + $0x39] sm:$0xff]
      %v360 = vld [vmem:[#allocation2 + $0x49] sm:$0xff]
      %v361 = vld [vmem:[#allocation2 + $0x51] sm:$0xff]
      %v362 = vld [vmem:[#allocation2 + $0x61] sm:$0xff]
      %v363 = vld [vmem:[#allocation2 + $0x69] sm:$0xff]
      %v364 = vld [vmem:[#allocation2 + $0x79] sm:$0xff]
      %v365 = vld [vmem:[#allocation2 + $0x81] sm:$0xff]
      %v366 = vld [vmem:[#allocation2 + $0x91] sm:$0xff]
      %v367 = vld [vmem:[#allocation2 + $0x99] sm:$0xff]
      %v368 = vld [vmem:[#allocation2 + $0xa9] sm:$0xff]
      %v369 = vld [vmem:[#allocation2 + $0xb1] sm:$0xff]
      %v370 = vld [vmem:[#allocation2 + $0xc1] sm:$0xff]
      %v371 = vld [vmem:[#allocation2 + $0xc9] sm:$0xff]
      %v372 = vld [vmem:[#allocation2 + $0xd9] sm:$0xff]
      %v373 = vld [vmem:[#allocation2 + $0xe1] sm:$0xff]
      %v374 = vld [vmem:[#allocation2 + $0xf1] sm:$0xff]
      %v375 = vld [vmem:[#allocation2 + $0xf9] sm:$0xff]
      %v376 = vld [vmem:[#allocation2 + $0x109] sm:$0xff]
      %v377 = vld [vmem:[#allocation2 + $0x111] sm:$0xff]
      %v378 = vld [vmem:[#allocation2 + $0x121] sm:$0xff]
      %v379 = vld [vmem:[#allocation2 + $0x129] sm:$0xff]
      %v380 = vld [vmem:[#allocation2 + $0x139] sm:$0xff]
      %v381 = vld [vmem:[#allocation2 + $0x141] sm:$0xff]
      %v382 = vld [vmem:[#allocation2 + $0x151] sm:$0xff]
      %v383 = vld [vmem:[#allocation2 + $0x159] sm:$0xff]
      %v384 = vld [vmem:[#allocation2 + $0x169] sm:$0xff]
      %v385 = vld [vmem:[#allocation2 + $0x171] sm:$0xff]
      %386 = vst [vmem:[#allocation3 + $0x8] sm:$0xff] %v354
      %387 = vst [vmem:[#allocation3 + $0x50] sm:$0xff] %v355
      %388 = vst [vmem:[#allocation3 + $0x98] sm:$0xff] %v356
      %389 = vst [vmem:[#allocation3 + $0xe0] sm:$0xff] %v357
      %390 = vst [vmem:[#allocation3 + $0x128] sm:$0xff] %v358
      %391 = vst [vmem:[#allocation3 + $0x170] sm:$0xff] %v359
      %392 = vst [vmem:[#allocation3 + $0x1b8] sm:$0xff] %v360
      %393 = vst [vmem:[#allocation3 + $0x200] sm:$0xff] %v361
      %394 = vst [vmem:[#allocation3 + $0x248] sm:$0xff] %v362
      %395 = vst [vmem:[#allocation3 + $0x290] sm:$0xff] %v363
      %396 = vst [vmem:[#allocation3 + $0x2d8] sm:$0xff] %v364
      %397 = vst [vmem:[#allocation3 + $0x320] sm:$0xff] %v365
      %398 = vst [vmem:[#allocation3 + $0x368] sm:$0xff] %v366
      %399 = vst [vmem:[#allocation3 + $0x3b0] sm:$0xff] %v367
      %400 = vst [vmem:[#allocation3 + $0x3f8] sm:$0xff] %v368
      %401 = vst [vmem:[#allocation3 + $0x440] sm:$0xff] %v369
      %402 = vst [vmem:[#allocation3 + $0x488] sm:$0xff] %v370
      %403 = vst [vmem:[#allocation3 + $0x4d0] sm:$0xff] %v371
      %404 = vst [vmem:[#allocation3 + $0x518] sm:$0xff] %v372
      %405 = vst [vmem:[#allocation3 + $0x560] sm:$0xff] %v373
      %406 = vst [vmem:[#allocation3 + $0x5a8] sm:$0xff] %v374
      %407 = vst [vmem:[#allocation3 + $0x5f0] sm:$0xff] %v375
      %408 = vst [vmem:[#allocation3 + $0x638] sm:$0xff] %v376
      %409 = vst [vmem:[#allocation3 + $0x680] sm:$0xff] %v377
      %410 = vst [vmem:[#allocation3 + $0x6c8] sm:$0xff] %v378
      %411 = vst [vmem:[#allocation3 + $0x710] sm:$0xff] %v379
      %412 = vst [vmem:[#allocation3 + $0x758] sm:$0xff] %v380
      %413 = vst [vmem:[#allocation3 + $0x7a0] sm:$0xff] %v381
      %414 = vst [vmem:[#allocation3 + $0x7e8] sm:$0xff] %v382
      %415 = vst [vmem:[#allocation3 + $0x830] sm:$0xff] %v383
      %416 = vst [vmem:[#allocation3 + $0x878] sm:$0xff] %v384
      %417 = vst [vmem:[#allocation3 + $0x8c0] sm:$0xff] %v385
      %v418 = vld [vmem:[#allocation2 + $0x2] sm:$0xff]
      %v419 = vld [vmem:[#allocation2 + $0xa] sm:$0xff]
      %v420 = vld [vmem:[#allocation2 + $0x1a] sm:$0xff]
      %v421 = vld [vmem:[#allocation2 + $0x22] sm:$0xff]
      %v422 = vld [vmem:[#allocation2 + $0x32] sm:$0xff]
      %v423 = vld [vmem:[#allocation2 + $0x3a] sm:$0xff]
      %v424 = vld [vmem:[#allocation2 + $0x4a] sm:$0xff]
      %v425 = vld [vmem:[#allocation2 + $0x52] sm:$0xff]
      %v426 = vld [vmem:[#allocation2 + $0x62] sm:$0xff]
      %v427 = vld [vmem:[#allocation2 + $0x6a] sm:$0xff]
      %v428 = vld [vmem:[#allocation2 + $0x7a] sm:$0xff]
      %v429 = vld [vmem:[#allocation2 + $0x82] sm:$0xff]
      %v430 = vld [vmem:[#allocation2 + $0x92] sm:$0xff]
      %v431 = vld [vmem:[#allocation2 + $0x9a] sm:$0xff]
      %v432 = vld [vmem:[#allocation2 + $0xaa] sm:$0xff]
      %v433 = vld [vmem:[#allocation2 + $0xb2] sm:$0xff]
      %v434 = vld [vmem:[#allocation2 + $0xc2] sm:$0xff]
      %v435 = vld [vmem:[#allocation2 + $0xca] sm:$0xff]
      %v436 = vld [vmem:[#allocation2 + $0xda] sm:$0xff]
      %v437 = vld [vmem:[#allocation2 + $0xe2] sm:$0xff]
      %v438 = vld [vmem:[#allocation2 + $0xf2] sm:$0xff]
      %v439 = vld [vmem:[#allocation2 + $0xfa] sm:$0xff]
      %v440 = vld [vmem:[#allocation2 + $0x10a] sm:$0xff]
      %v441 = vld [vmem:[#allocation2 + $0x112] sm:$0xff]
      %v442 = vld [vmem:[#allocation2 + $0x122] sm:$0xff]
      %v443 = vld [vmem:[#allocation2 + $0x12a] sm:$0xff]
      %v444 = vld [vmem:[#allocation2 + $0x13a] sm:$0xff]
      %v445 = vld [vmem:[#allocation2 + $0x142] sm:$0xff]
      %v446 = vld [vmem:[#allocation2 + $0x152] sm:$0xff]
      %v447 = vld [vmem:[#allocation2 + $0x15a] sm:$0xff]
      %v448 = vld [vmem:[#allocation2 + $0x16a] sm:$0xff]
      %v449 = vld [vmem:[#allocation2 + $0x172] sm:$0xff]
      %450 = vst [vmem:[#allocation3 + $0x10] sm:$0xff] %v418
      %451 = vst [vmem:[#allocation3 + $0x58] sm:$0xff] %v419
      %452 = vst [vmem:[#allocation3 + $0xa0] sm:$0xff] %v420
      %453 = vst [vmem:[#allocation3 + $0xe8] sm:$0xff] %v421
      %454 = vst [vmem:[#allocation3 + $0x130] sm:$0xff] %v422
      %455 = vst [vmem:[#allocation3 + $0x178] sm:$0xff] %v423
      %456 = vst [vmem:[#allocation3 + $0x1c0] sm:$0xff] %v424
      %457 = vst [vmem:[#allocation3 + $0x208] sm:$0xff] %v425
      %458 = vst [vmem:[#allocation3 + $0x250] sm:$0xff] %v426
      %459 = vst [vmem:[#allocation3 + $0x298] sm:$0xff] %v427
      %460 = vst [vmem:[#allocation3 + $0x2e0] sm:$0xff] %v428
      %461 = vst [vmem:[#allocation3 + $0x328] sm:$0xff] %v429
      %462 = vst [vmem:[#allocation3 + $0x370] sm:$0xff] %v430
      %463 = vst [vmem:[#allocation3 + $0x3b8] sm:$0xff] %v431
      %464 = vst [vmem:[#allocation3 + $0x400] sm:$0xff] %v432
      %465 = vst [vmem:[#allocation3 + $0x448] sm:$0xff] %v433
      %466 = vst [vmem:[#allocation3 + $0x490] sm:$0xff] %v434
      %467 = vst [vmem:[#allocation3 + $0x4d8] sm:$0xff] %v435
      %468 = vst [vmem:[#allocation3 + $0x520] sm:$0xff] %v436
      %469 = vst [vmem:[#allocation3 + $0x568] sm:$0xff] %v437
      %470 = vst [vmem:[#allocation3 + $0x5b0] sm:$0xff] %v438
      %471 = vst [vmem:[#allocation3 + $0x5f8] sm:$0xff] %v439
      %472 = vst [vmem:[#allocation3 + $0x640] sm:$0xff] %v440
      %473 = vst [vmem:[#allocation3 + $0x688] sm:$0xff] %v441
      %474 = vst [vmem:[#allocation3 + $0x6d0] sm:$0xff] %v442
      %475 = vst [vmem:[#allocation3 + $0x718] sm:$0xff] %v443
      %476 = vst [vmem:[#allocation3 + $0x760] sm:$0xff] %v444
      %477 = vst [vmem:[#allocation3 + $0x7a8] sm:$0xff] %v445
      %478 = vst [vmem:[#allocation3 + $0x7f0] sm:$0xff] %v446
      %479 = vst [vmem:[#allocation3 + $0x838] sm:$0xff] %v447
      %480 = vst [vmem:[#allocation3 + $0x880] sm:$0xff] %v448
      %481 = vst [vmem:[#allocation3 + $0x8c8] sm:$0xff] %v449
      %v482 = vld [vmem:[%s257] sm:$0xff]
      %v483 = vld [vmem:[%s257 + $0x8] sm:$0xff]
      %v484 = vld [vmem:[%s257 + $0x18] sm:$0xff]
      %v485 = vld [vmem:[%s257 + $0x20] sm:$0xff]
      %v486 = vld [vmem:[%s257 + $0x30] sm:$0xff]
      %v487 = vld [vmem:[%s257 + $0x38] sm:$0xff]
      %v488 = vld [vmem:[%s257 + $0x48] sm:$0xff]
      %v489 = vld [vmem:[%s257 + $0x50] sm:$0xff]
      %v490 = vld [vmem:[%s257 + $0x60] sm:$0xff]
      %v491 = vld [vmem:[%s257 + $0x68] sm:$0xff]
      %v492 = vld [vmem:[%s257 + $0x78] sm:$0xff]
      %v493 = vld [vmem:[%s257 + $0x80] sm:$0xff]
      %v494 = vld [vmem:[%s257 + $0x90] sm:$0xff]
      %v495 = vld [vmem:[%s257 + $0x98] sm:$0xff]
      %v496 = vld [vmem:[%s257 + $0xa8] sm:$0xff]
      %v497 = vld [vmem:[%s257 + $0xb0] sm:$0xff]
      %v498 = vld [vmem:[%s257 + $0xc0] sm:$0xff]
      %v499 = vld [vmem:[%s257 + $0xc8] sm:$0xff]
      %v500 = vld [vmem:[%s257 + $0xd8] sm:$0xff]
      %v501 = vld [vmem:[%s257 + $0xe0] sm:$0xff]
      %v502 = vld [vmem:[%s257 + $0xf0] sm:$0xff]
      %v503 = vld [vmem:[%s257 + $0xf8] sm:$0xff]
      %v504 = vld [vmem:[%s257 + $0x108] sm:$0xff]
      %v505 = vld [vmem:[%s257 + $0x110] sm:$0xff]
      %v506 = vld [vmem:[%s257 + $0x120] sm:$0xff]
      %v507 = vld [vmem:[%s257 + $0x128] sm:$0xff]
      %v508 = vld [vmem:[%s257 + $0x138] sm:$0xff]
      %v509 = vld [vmem:[%s257 + $0x140] sm:$0xff]
      %v510 = vld [vmem:[%s257 + $0x150] sm:$0xff]
      %v511 = vld [vmem:[%s257 + $0x158] sm:$0xff]
      %v512 = vld [vmem:[%s257 + $0x168] sm:$0xff]
      %v513 = vld [vmem:[%s257 + $0x170] sm:$0xff]
      %514 = vst [vmem:[#allocation3 + $0x18] sm:$0xff] %v482
      %515 = vst [vmem:[#allocation3 + $0x60] sm:$0xff] %v483
      %516 = vst [vmem:[#allocation3 + $0xa8] sm:$0xff] %v484
      %517 = vst [vmem:[#allocation3 + $0xf0] sm:$0xff] %v485
      %518 = vst [vmem:[#allocation3 + $0x138] sm:$0xff] %v486
      %519 = vst [vmem:[#allocation3 + $0x180] sm:$0xff] %v487
      %520 = vst [vmem:[#allocation3 + $0x1c8] sm:$0xff] %v488
      %521 = vst [vmem:[#allocation3 + $0x210] sm:$0xff] %v489
      %522 = vst [vmem:[#allocation3 + $0x258] sm:$0xff] %v490
      %523 = vst [vmem:[#allocation3 + $0x2a0] sm:$0xff] %v491
      %524 = vst [vmem:[#allocation3 + $0x2e8] sm:$0xff] %v492
      %525 = vst [vmem:[#allocation3 + $0x330] sm:$0xff] %v493
      %526 = vst [vmem:[#allocation3 + $0x378] sm:$0xff] %v494
      %527 = vst [vmem:[#allocation3 + $0x3c0] sm:$0xff] %v495
      %528 = vst [vmem:[#allocation3 + $0x408] sm:$0xff] %v496
      %529 = vst [vmem:[#allocation3 + $0x450] sm:$0xff] %v497
      %530 = vst [vmem:[#allocation3 + $0x498] sm:$0xff] %v498
      %531 = vst [vmem:[#allocation3 + $0x4e0] sm:$0xff] %v499
      %532 = vst [vmem:[#allocation3 + $0x528] sm:$0xff] %v500
      %533 = vst [vmem:[#allocation3 + $0x570] sm:$0xff] %v501
      %534 = vst [vmem:[#allocation3 + $0x5b8] sm:$0xff] %v502
      %535 = vst [vmem:[#allocation3 + $0x600] sm:$0xff] %v503
      %536 = vst [vmem:[#allocation3 + $0x648] sm:$0xff] %v504
      %537 = vst [vmem:[#allocation3 + $0x690] sm:$0xff] %v505
      %538 = vst [vmem:[#allocation3 + $0x6d8] sm:$0xff] %v506
      %539 = vst [vmem:[#allocation3 + $0x720] sm:$0xff] %v507
      %540 = vst [vmem:[#allocation3 + $0x768] sm:$0xff] %v508
      %541 = vst [vmem:[#allocation3 + $0x7b0] sm:$0xff] %v509
      %542 = vst [vmem:[#allocation3 + $0x7f8] sm:$0xff] %v510
      %543 = vst [vmem:[#allocation3 + $0x840] sm:$0xff] %v511
      %544 = vst [vmem:[#allocation3 + $0x888] sm:$0xff] %v512
      %545 = vst [vmem:[#allocation3 + $0x8d0] sm:$0xff] %v513
      %v546 = vld [vmem:[%s257 + $0x1] sm:$0xff]
      %v547 = vld [vmem:[%s257 + $0x9] sm:$0xff]
      %v548 = vld [vmem:[%s257 + $0x19] sm:$0xff]
      %v549 = vld [vmem:[%s257 + $0x21] sm:$0xff]
      %v550 = vld [vmem:[%s257 + $0x31] sm:$0xff]
      %v551 = vld [vmem:[%s257 + $0x39] sm:$0xff]
      %v552 = vld [vmem:[%s257 + $0x49] sm:$0xff]
      %v553 = vld [vmem:[%s257 + $0x51] sm:$0xff]
      %v554 = vld [vmem:[%s257 + $0x61] sm:$0xff]
      %v555 = vld [vmem:[%s257 + $0x69] sm:$0xff]
      %v556 = vld [vmem:[%s257 + $0x79] sm:$0xff]
      %v557 = vld [vmem:[%s257 + $0x81] sm:$0xff]
      %v558 = vld [vmem:[%s257 + $0x91] sm:$0xff]
      %v559 = vld [vmem:[%s257 + $0x99] sm:$0xff]
      %v560 = vld [vmem:[%s257 + $0xa9] sm:$0xff]
      %v561 = vld [vmem:[%s257 + $0xb1] sm:$0xff]
      %v562 = vld [vmem:[%s257 + $0xc1] sm:$0xff]
      %v563 = vld [vmem:[%s257 + $0xc9] sm:$0xff]
      %v564 = vld [vmem:[%s257 + $0xd9] sm:$0xff]
      %v565 = vld [vmem:[%s257 + $0xe1] sm:$0xff]
      %v566 = vld [vmem:[%s257 + $0xf1] sm:$0xff]
      %v567 = vld [vmem:[%s257 + $0xf9] sm:$0xff]
      %v568 = vld [vmem:[%s257 + $0x109] sm:$0xff]
      %v569 = vld [vmem:[%s257 + $0x111] sm:$0xff]
      %v570 = vld [vmem:[%s257 + $0x121] sm:$0xff]
      %v571 = vld [vmem:[%s257 + $0x129] sm:$0xff]
      %v572 = vld [vmem:[%s257 + $0x139] sm:$0xff]
      %v573 = vld [vmem:[%s257 + $0x141] sm:$0xff]
      %v574 = vld [vmem:[%s257 + $0x151] sm:$0xff]
      %v575 = vld [vmem:[%s257 + $0x159] sm:$0xff]
      %v576 = vld [vmem:[%s257 + $0x169] sm:$0xff]
      %v577 = vld [vmem:[%s257 + $0x171] sm:$0xff]
      %578 = vst [vmem:[#allocation3 + $0x20] sm:$0xff] %v546
      %579 = vst [vmem:[#allocation3 + $0x68] sm:$0xff] %v547
      %580 = vst [vmem:[#allocation3 + $0xb0] sm:$0xff] %v548
      %581 = vst [vmem:[#allocation3 + $0xf8] sm:$0xff] %v549
      %582 = vst [vmem:[#allocation3 + $0x140] sm:$0xff] %v550
      %583 = vst [vmem:[#allocation3 + $0x188] sm:$0xff] %v551
      %584 = vst [vmem:[#allocation3 + $0x1d0] sm:$0xff] %v552
      %585 = vst [vmem:[#allocation3 + $0x218] sm:$0xff] %v553
      %586 = vst [vmem:[#allocation3 + $0x260] sm:$0xff] %v554
      %587 = vst [vmem:[#allocation3 + $0x2a8] sm:$0xff] %v555
      %588 = vst [vmem:[#allocation3 + $0x2f0] sm:$0xff] %v556
      %589 = vst [vmem:[#allocation3 + $0x338] sm:$0xff] %v557
      %590 = vst [vmem:[#allocation3 + $0x380] sm:$0xff] %v558
      %591 = vst [vmem:[#allocation3 + $0x3c8] sm:$0xff] %v559
      %592 = vst [vmem:[#allocation3 + $0x410] sm:$0xff] %v560
      %593 = vst [vmem:[#allocation3 + $0x458] sm:$0xff] %v561
      %594 = vst [vmem:[#allocation3 + $0x4a0] sm:$0xff] %v562
      %595 = vst [vmem:[#allocation3 + $0x4e8] sm:$0xff] %v563
      %596 = vst [vmem:[#allocation3 + $0x530] sm:$0xff] %v564
      %597 = vst [vmem:[#allocation3 + $0x578] sm:$0xff] %v565
      %598 = vst [vmem:[#allocation3 + $0x5c0] sm:$0xff] %v566
      %599 = vst [vmem:[#allocation3 + $0x608] sm:$0xff] %v567
      %600 = vst [vmem:[#allocation3 + $0x650] sm:$0xff] %v568
      %601 = vst [vmem:[#allocation3 + $0x698] sm:$0xff] %v569
      %602 = vst [vmem:[#allocation3 + $0x6e0] sm:$0xff] %v570
      %603 = vst [vmem:[#allocation3 + $0x728] sm:$0xff] %v571
      %604 = vst [vmem:[#allocation3 + $0x770] sm:$0xff] %v572
      %605 = vst [vmem:[#allocation3 + $0x7b8] sm:$0xff] %v573
      %606 = vst [vmem:[#allocation3 + $0x800] sm:$0xff] %v574
      %607 = vst [vmem:[#allocation3 + $0x848] sm:$0xff] %v575
      %608 = vst [vmem:[#allocation3 + $0x890] sm:$0xff] %v576
      %609 = vst [vmem:[#allocation3 + $0x8d8] sm:$0xff] %v577
      %v610 = vld [vmem:[%s257 + $0x2] sm:$0xff]
      %v611 = vld [vmem:[%s257 + $0xa] sm:$0xff]
      %v612 = vld [vmem:[%s257 + $0x1a] sm:$0xff]
      %v613 = vld [vmem:[%s257 + $0x22] sm:$0xff]
      %v614 = vld [vmem:[%s257 + $0x32] sm:$0xff]
      %v615 = vld [vmem:[%s257 + $0x3a] sm:$0xff]
      %v616 = vld [vmem:[%s257 + $0x4a] sm:$0xff]
      %v617 = vld [vmem:[%s257 + $0x52] sm:$0xff]
      %v618 = vld [vmem:[%s257 + $0x62] sm:$0xff]
      %v619 = vld [vmem:[%s257 + $0x6a] sm:$0xff]
      %v620 = vld [vmem:[%s257 + $0x7a] sm:$0xff]
      %v621 = vld [vmem:[%s257 + $0x82] sm:$0xff]
      %v622 = vld [vmem:[%s257 + $0x92] sm:$0xff]
      %v623 = vld [vmem:[%s257 + $0x9a] sm:$0xff]
      %v624 = vld [vmem:[%s257 + $0xaa] sm:$0xff]
      %v625 = vld [vmem:[%s257 + $0xb2] sm:$0xff]
      %v626 = vld [vmem:[%s257 + $0xc2] sm:$0xff]
      %v627 = vld [vmem:[%s257 + $0xca] sm:$0xff]
      %v628 = vld [vmem:[%s257 + $0xda] sm:$0xff]
      %v629 = vld [vmem:[%s257 + $0xe2] sm:$0xff]
      %v630 = vld [vmem:[%s257 + $0xf2] sm:$0xff]
      %v631 = vld [vmem:[%s257 + $0xfa] sm:$0xff]
      %v632 = vld [vmem:[%s257 + $0x10a] sm:$0xff]
      %v633 = vld [vmem:[%s257 + $0x112] sm:$0xff]
      %v634 = vld [vmem:[%s257 + $0x122] sm:$0xff]
      %v635 = vld [vmem:[%s257 + $0x12a] sm:$0xff]
      %v636 = vld [vmem:[%s257 + $0x13a] sm:$0xff]
      %v637 = vld [vmem:[%s257 + $0x142] sm:$0xff]
      %v638 = vld [vmem:[%s257 + $0x152] sm:$0xff]
      %v639 = vld [vmem:[%s257 + $0x15a] sm:$0xff]
      %v640 = vld [vmem:[%s257 + $0x16a] sm:$0xff]
      %v641 = vld [vmem:[%s257 + $0x172] sm:$0xff]
      %642 = vst [vmem:[#allocation3 + $0x28] sm:$0xff] %v610
      %643 = vst [vmem:[#allocation3 + $0x70] sm:$0xff] %v611
      %644 = vst [vmem:[#allocation3 + $0xb8] sm:$0xff] %v612
      %645 = vst [vmem:[#allocation3 + $0x100] sm:$0xff] %v613
      %646 = vst [vmem:[#allocation3 + $0x148] sm:$0xff] %v614
      %647 = vst [vmem:[#allocation3 + $0x190] sm:$0xff] %v615
      %648 = vst [vmem:[#allocation3 + $0x1d8] sm:$0xff] %v616
      %649 = vst [vmem:[#allocation3 + $0x220] sm:$0xff] %v617
      %650 = vst [vmem:[#allocation3 + $0x268] sm:$0xff] %v618
      %651 = vst [vmem:[#allocation3 + $0x2b0] sm:$0xff] %v619
      %652 = vst [vmem:[#allocation3 + $0x2f8] sm:$0xff] %v620
      %653 = vst [vmem:[#allocation3 + $0x340] sm:$0xff] %v621
      %654 = vst [vmem:[#allocation3 + $0x388] sm:$0xff] %v622
      %655 = vst [vmem:[#allocation3 + $0x3d0] sm:$0xff] %v623
      %656 = vst [vmem:[#allocation3 + $0x418] sm:$0xff] %v624
      %657 = vst [vmem:[#allocation3 + $0x460] sm:$0xff] %v625
      %658 = vst [vmem:[#allocation3 + $0x4a8] sm:$0xff] %v626
      %659 = vst [vmem:[#allocation3 + $0x4f0] sm:$0xff] %v627
      %660 = vst [vmem:[#allocation3 + $0x538] sm:$0xff] %v628
      %661 = vst [vmem:[#allocation3 + $0x580] sm:$0xff] %v629
      %662 = vst [vmem:[#allocation3 + $0x5c8] sm:$0xff] %v630
      %663 = vst [vmem:[#allocation3 + $0x610] sm:$0xff] %v631
      %664 = vst [vmem:[#allocation3 + $0x658] sm:$0xff] %v632
      %665 = vst [vmem:[#allocation3 + $0x6a0] sm:$0xff] %v633
      %666 = vst [vmem:[#allocation3 + $0x6e8] sm:$0xff] %v634
      %667 = vst [vmem:[#allocation3 + $0x730] sm:$0xff] %v635
      %668 = vst [vmem:[#allocation3 + $0x778] sm:$0xff] %v636
      %669 = vst [vmem:[#allocation3 + $0x7c0] sm:$0xff] %v637
      %670 = vst [vmem:[#allocation3 + $0x808] sm:$0xff] %v638
      %671 = vst [vmem:[#allocation3 + $0x850] sm:$0xff] %v639
      %672 = vst [vmem:[#allocation3 + $0x898] sm:$0xff] %v640
      %673 = vst [vmem:[#allocation3 + $0x8e0] sm:$0xff] %v641
      %s674 = scalar_lea.vmem [#allocation2], 48
      %v675 = vld [vmem:[%s674] sm:$0xff]
      %v676 = vld [vmem:[%s674 + $0x8] sm:$0xff]
      %v677 = vld [vmem:[%s674 + $0x18] sm:$0xff]
      %v678 = vld [vmem:[%s674 + $0x20] sm:$0xff]
      %v679 = vld [vmem:[%s674 + $0x30] sm:$0xff]
      %v680 = vld [vmem:[%s674 + $0x38] sm:$0xff]
      %v681 = vld [vmem:[%s674 + $0x48] sm:$0xff]
      %v682 = vld [vmem:[%s674 + $0x50] sm:$0xff]
      %v683 = vld [vmem:[%s674 + $0x60] sm:$0xff]
      %v684 = vld [vmem:[%s674 + $0x68] sm:$0xff]
      %v685 = vld [vmem:[%s674 + $0x78] sm:$0xff]
      %v686 = vld [vmem:[%s674 + $0x80] sm:$0xff]
      %v687 = vld [vmem:[%s674 + $0x90] sm:$0xff]
      %v688 = vld [vmem:[%s674 + $0x98] sm:$0xff]
      %v689 = vld [vmem:[%s674 + $0xa8] sm:$0xff]
      %v690 = vld [vmem:[%s674 + $0xb0] sm:$0xff]
      %v691 = vld [vmem:[%s674 + $0xc0] sm:$0xff]
      %v692 = vld [vmem:[%s674 + $0xc8] sm:$0xff]
      %v693 = vld [vmem:[%s674 + $0xd8] sm:$0xff]
      %v694 = vld [vmem:[%s674 + $0xe0] sm:$0xff]
      %v695 = vld [vmem:[%s674 + $0xf0] sm:$0xff]
      %v696 = vld [vmem:[%s674 + $0xf8] sm:$0xff]
      %v697 = vld [vmem:[%s674 + $0x108] sm:$0xff]
      %v698 = vld [vmem:[%s674 + $0x110] sm:$0xff]
      %v699 = vld [vmem:[%s674 + $0x120] sm:$0xff]
      %v700 = vld [vmem:[%s674 + $0x128] sm:$0xff]
      %v701 = vld [vmem:[%s674 + $0x138] sm:$0xff]
      %v702 = vld [vmem:[%s674 + $0x140] sm:$0xff]
      %v703 = vld [vmem:[%s674 + $0x150] sm:$0xff]
      %v704 = vld [vmem:[%s674 + $0x158] sm:$0xff]
      %v705 = vld [vmem:[%s674 + $0x168] sm:$0xff]
      %v706 = vld [vmem:[%s674 + $0x170] sm:$0xff]
      %707 = vst [vmem:[#allocation3 + $0x30] sm:$0xff] %v675
      %708 = vst [vmem:[#allocation3 + $0x78] sm:$0xff] %v676
      %709 = vst [vmem:[#allocation3 + $0xc0] sm:$0xff] %v677
      %710 = vst [vmem:[#allocation3 + $0x108] sm:$0xff] %v678
      %711 = vst [vmem:[#allocation3 + $0x150] sm:$0xff] %v679
      %712 = vst [vmem:[#allocation3 + $0x198] sm:$0xff] %v680
      %713 = vst [vmem:[#allocation3 + $0x1e0] sm:$0xff] %v681
      %714 = vst [vmem:[#allocation3 + $0x228] sm:$0xff] %v682
      %715 = vst [vmem:[#allocation3 + $0x270] sm:$0xff] %v683
      %716 = vst [vmem:[#allocation3 + $0x2b8] sm:$0xff] %v684
      %717 = vst [vmem:[#allocation3 + $0x300] sm:$0xff] %v685
      %718 = vst [vmem:[#allocation3 + $0x348] sm:$0xff] %v686
      %719 = vst [vmem:[#allocation3 + $0x390] sm:$0xff] %v687
      %720 = vst [vmem:[#allocation3 + $0x3d8] sm:$0xff] %v688
      %721 = vst [vmem:[#allocation3 + $0x420] sm:$0xff] %v689
      %722 = vst [vmem:[#allocation3 + $0x468] sm:$0xff] %v690
      %723 = vst [vmem:[#allocation3 + $0x4b0] sm:$0xff] %v691
      %724 = vst [vmem:[#allocation3 + $0x4f8] sm:$0xff] %v692
      %725 = vst [vmem:[#allocation3 + $0x540] sm:$0xff] %v693
      %726 = vst [vmem:[#allocation3 + $0x588] sm:$0xff] %v694
      %727 = vst [vmem:[#allocation3 + $0x5d0] sm:$0xff] %v695
      %728 = vst [vmem:[#allocation3 + $0x618] sm:$0xff] %v696
      %729 = vst [vmem:[#allocation3 + $0x660] sm:$0xff] %v697
      %730 = vst [vmem:[#allocation3 + $0x6a8] sm:$0xff] %v698
      %731 = vst [vmem:[#allocation3 + $0x6f0] sm:$0xff] %v699
      %732 = vst [vmem:[#allocation3 + $0x738] sm:$0xff] %v700
      %733 = vst [vmem:[#allocation3 + $0x780] sm:$0xff] %v701
      %734 = vst [vmem:[#allocation3 + $0x7c8] sm:$0xff] %v702
      %735 = vst [vmem:[#allocation3 + $0x810] sm:$0xff] %v703
      %736 = vst [vmem:[#allocation3 + $0x858] sm:$0xff] %v704
      %737 = vst [vmem:[#allocation3 + $0x8a0] sm:$0xff] %v705
      %738 = vst [vmem:[#allocation3 + $0x8e8] sm:$0xff] %v706
      %v739 = vld [vmem:[%s674 + $0x1] sm:$0xff]
      %v740 = vld [vmem:[%s674 + $0x9] sm:$0xff]
      %v741 = vld [vmem:[%s674 + $0x19] sm:$0xff]
      %v742 = vld [vmem:[%s674 + $0x21] sm:$0xff]
      %v743 = vld [vmem:[%s674 + $0x31] sm:$0xff]
      %v744 = vld [vmem:[%s674 + $0x39] sm:$0xff]
      %v745 = vld [vmem:[%s674 + $0x49] sm:$0xff]
      %v746 = vld [vmem:[%s674 + $0x51] sm:$0xff]
      %v747 = vld [vmem:[%s674 + $0x61] sm:$0xff]
      %v748 = vld [vmem:[%s674 + $0x69] sm:$0xff]
      %v749 = vld [vmem:[%s674 + $0x79] sm:$0xff]
      %v750 = vld [vmem:[%s674 + $0x81] sm:$0xff]
      %v751 = vld [vmem:[%s674 + $0x91] sm:$0xff]
      %v752 = vld [vmem:[%s674 + $0x99] sm:$0xff]
      %v753 = vld [vmem:[%s674 + $0xa9] sm:$0xff]
      %v754 = vld [vmem:[%s674 + $0xb1] sm:$0xff]
      %v755 = vld [vmem:[%s674 + $0xc1] sm:$0xff]
      %v756 = vld [vmem:[%s674 + $0xc9] sm:$0xff]
      %v757 = vld [vmem:[%s674 + $0xd9] sm:$0xff]
      %v758 = vld [vmem:[%s674 + $0xe1] sm:$0xff]
      %v759 = vld [vmem:[%s674 + $0xf1] sm:$0xff]
      %v760 = vld [vmem:[%s674 + $0xf9] sm:$0xff]
      %v761 = vld [vmem:[%s674 + $0x109] sm:$0xff]
      %v762 = vld [vmem:[%s674 + $0x111] sm:$0xff]
      %v763 = vld [vmem:[%s674 + $0x121] sm:$0xff]
      %v764 = vld [vmem:[%s674 + $0x129] sm:$0xff]
      %v765 = vld [vmem:[%s674 + $0x139] sm:$0xff]
      %v766 = vld [vmem:[%s674 + $0x141] sm:$0xff]
      %v767 = vld [vmem:[%s674 + $0x151] sm:$0xff]
      %v768 = vld [vmem:[%s674 + $0x159] sm:$0xff]
      %v769 = vld [vmem:[%s674 + $0x169] sm:$0xff]
      %v770 = vld [vmem:[%s674 + $0x171] sm:$0xff]
      %771 = vst [vmem:[#allocation3 + $0x38] sm:$0xff] %v739
      %772 = vst [vmem:[#allocation3 + $0x80] sm:$0xff] %v740
      %773 = vst [vmem:[#allocation3 + $0xc8] sm:$0xff] %v741
      %774 = vst [vmem:[#allocation3 + $0x110] sm:$0xff] %v742
      %775 = vst [vmem:[#allocation3 + $0x158] sm:$0xff] %v743
      %776 = vst [vmem:[#allocation3 + $0x1a0] sm:$0xff] %v744
      %777 = vst [vmem:[#allocation3 + $0x1e8] sm:$0xff] %v745
      %778 = vst [vmem:[#allocation3 + $0x230] sm:$0xff] %v746
      %779 = vst [vmem:[#allocation3 + $0x278] sm:$0xff] %v747
      %780 = vst [vmem:[#allocation3 + $0x2c0] sm:$0xff] %v748
      %781 = vst [vmem:[#allocation3 + $0x308] sm:$0xff] %v749
      %782 = vst [vmem:[#allocation3 + $0x350] sm:$0xff] %v750
      %783 = vst [vmem:[#allocation3 + $0x398] sm:$0xff] %v751
      %784 = vst [vmem:[#allocation3 + $0x3e0] sm:$0xff] %v752
      %785 = vst [vmem:[#allocation3 + $0x428] sm:$0xff] %v753
      %786 = vst [vmem:[#allocation3 + $0x470] sm:$0xff] %v754
      %787 = vst [vmem:[#allocation3 + $0x4b8] sm:$0xff] %v755
      %788 = vst [vmem:[#allocation3 + $0x500] sm:$0xff] %v756
      %789 = vst [vmem:[#allocation3 + $0x548] sm:$0xff] %v757
      %790 = vst [vmem:[#allocation3 + $0x590] sm:$0xff] %v758
      %791 = vst [vmem:[#allocation3 + $0x5d8] sm:$0xff] %v759
      %792 = vst [vmem:[#allocation3 + $0x620] sm:$0xff] %v760
      %793 = vst [vmem:[#allocation3 + $0x668] sm:$0xff] %v761
      %794 = vst [vmem:[#allocation3 + $0x6b0] sm:$0xff] %v762
      %795 = vst [vmem:[#allocation3 + $0x6f8] sm:$0xff] %v763
      %796 = vst [vmem:[#allocation3 + $0x740] sm:$0xff] %v764
      %797 = vst [vmem:[#allocation3 + $0x788] sm:$0xff] %v765
      %798 = vst [vmem:[#allocation3 + $0x7d0] sm:$0xff] %v766
      %799 = vst [vmem:[#allocation3 + $0x818] sm:$0xff] %v767
      %800 = vst [vmem:[#allocation3 + $0x860] sm:$0xff] %v768
      %801 = vst [vmem:[#allocation3 + $0x8a8] sm:$0xff] %v769
      %802 = vst [vmem:[#allocation3 + $0x8f0] sm:$0xff] %v770
      %v803 = vld [vmem:[%s674 + $0x2] sm:$0xff]
      %v804 = vld [vmem:[%s674 + $0xa] sm:$0xff]
      %v805 = vld [vmem:[%s674 + $0x1a] sm:$0xff]
      %v806 = vld [vmem:[%s674 + $0x22] sm:$0xff]
      %v807 = vld [vmem:[%s674 + $0x32] sm:$0xff]
      %v808 = vld [vmem:[%s674 + $0x3a] sm:$0xff]
      %v809 = vld [vmem:[%s674 + $0x4a] sm:$0xff]
      %v810 = vld [vmem:[%s674 + $0x52] sm:$0xff]
      %v811 = vld [vmem:[%s674 + $0x62] sm:$0xff]
      %v812 = vld [vmem:[%s674 + $0x6a] sm:$0xff]
      %v813 = vld [vmem:[%s674 + $0x7a] sm:$0xff]
      %v814 = vld [vmem:[%s674 + $0x82] sm:$0xff]
      %v815 = vld [vmem:[%s674 + $0x92] sm:$0xff]
      %v816 = vld [vmem:[%s674 + $0x9a] sm:$0xff]
      %v817 = vld [vmem:[%s674 + $0xaa] sm:$0xff]
      %v818 = vld [vmem:[%s674 + $0xb2] sm:$0xff]
      %v819 = vld [vmem:[%s674 + $0xc2] sm:$0xff]
      %v820 = vld [vmem:[%s674 + $0xca] sm:$0xff]
      %v821 = vld [vmem:[%s674 + $0xda] sm:$0xff]
      %v822 = vld [vmem:[%s674 + $0xe2] sm:$0xff]
      %v823 = vld [vmem:[%s674 + $0xf2] sm:$0xff]
      %v824 = vld [vmem:[%s674 + $0xfa] sm:$0xff]
      %v825 = vld [vmem:[%s674 + $0x10a] sm:$0xff]
      %v826 = vld [vmem:[%s674 + $0x112] sm:$0xff]
      %v827 = vld [vmem:[%s674 + $0x122] sm:$0xff]
      %v828 = vld [vmem:[%s674 + $0x12a] sm:$0xff]
      %v829 = vld [vmem:[%s674 + $0x13a] sm:$0xff]
      %v830 = vld [vmem:[%s674 + $0x142] sm:$0xff]
      %v831 = vld [vmem:[%s674 + $0x152] sm:$0xff]
      %v832 = vld [vmem:[%s674 + $0x15a] sm:$0xff]
      %v833 = vld [vmem:[%s674 + $0x16a] sm:$0xff]
      %v834 = vld [vmem:[%s674 + $0x172] sm:$0xff]
      %835 = vst [vmem:[#allocation3 + $0x40] sm:$0xff] %v803
      %836 = vst [vmem:[#allocation3 + $0x88] sm:$0xff] %v804
      %837 = vst [vmem:[#allocation3 + $0xd0] sm:$0xff] %v805
      %838 = vst [vmem:[#allocation3 + $0x118] sm:$0xff] %v806
      %839 = vst [vmem:[#allocation3 + $0x160] sm:$0xff] %v807
      %840 = vst [vmem:[#allocation3 + $0x1a8] sm:$0xff] %v808
      %841 = vst [vmem:[#allocation3 + $0x1f0] sm:$0xff] %v809
      %842 = vst [vmem:[#allocation3 + $0x238] sm:$0xff] %v810
      %843 = vst [vmem:[#allocation3 + $0x280] sm:$0xff] %v811
      %844 = vst [vmem:[#allocation3 + $0x2c8] sm:$0xff] %v812
      %845 = vst [vmem:[#allocation3 + $0x310] sm:$0xff] %v813
      %846 = vst [vmem:[#allocation3 + $0x358] sm:$0xff] %v814
      %847 = vst [vmem:[#allocation3 + $0x3a0] sm:$0xff] %v815
      %848 = vst [vmem:[#allocation3 + $0x3e8] sm:$0xff] %v816
      %849 = vst [vmem:[#allocation3 + $0x430] sm:$0xff] %v817
      %850 = vst [vmem:[#allocation3 + $0x478] sm:$0xff] %v818
      %851 = vst [vmem:[#allocation3 + $0x4c0] sm:$0xff] %v819
      %852 = vst [vmem:[#allocation3 + $0x508] sm:$0xff] %v820
      %853 = vst [vmem:[#allocation3 + $0x550] sm:$0xff] %v821
      %854 = vst [vmem:[#allocation3 + $0x598] sm:$0xff] %v822
      %855 = vst [vmem:[#allocation3 + $0x5e0] sm:$0xff] %v823
      %856 = vst [vmem:[#allocation3 + $0x628] sm:$0xff] %v824
      %857 = vst [vmem:[#allocation3 + $0x670] sm:$0xff] %v825
      %858 = vst [vmem:[#allocation3 + $0x6b8] sm:$0xff] %v826
      %859 = vst [vmem:[#allocation3 + $0x700] sm:$0xff] %v827
      %860 = vst [vmem:[#allocation3 + $0x748] sm:$0xff] %v828
      %861 = vst [vmem:[#allocation3 + $0x790] sm:$0xff] %v829
      %862 = vst [vmem:[#allocation3 + $0x7d8] sm:$0xff] %v830
      %863 = vst [vmem:[#allocation3 + $0x820] sm:$0xff] %v831
      %864 = vst [vmem:[#allocation3 + $0x868] sm:$0xff] %v832
      %865 = vst [vmem:[#allocation3 + $0x8b0] sm:$0xff] %v833
      %866 = vst [vmem:[#allocation3 + $0x8f8] sm:$0xff] %v834
      %v867 = vld [vmem:[#allocation3] sm:$0xff]
      %v868 = vld [vmem:[#allocation3 + $0x8] sm:$0xff]
      %v869 = vld [vmem:[#allocation3 + $0x10] sm:$0xff]
      %v870 = vld [vmem:[#allocation3 + $0x18] sm:$0xff]
      %v871 = vld [vmem:[#allocation3 + $0x20] sm:$0xff]
      %v872 = vld [vmem:[#allocation3 + $0x28] sm:$0xff]
      %v873 = vld [vmem:[#allocation3 + $0x30] sm:$0xff]
      %v874 = vld [vmem:[#allocation3 + $0x38] sm:$0xff]
      %v875 = vld [vmem:[#allocation3 + $0x40] sm:$0xff]
      %v876 = vld [vmem:[#allocation3 + $0x48] sm:$0xff]
      %v877 = vld [vmem:[#allocation3 + $0x50] sm:$0xff]
      %v878 = vld [vmem:[#allocation3 + $0x58] sm:$0xff]
      %v879 = vld [vmem:[#allocation3 + $0x60] sm:$0xff]
      %v880 = vld [vmem:[#allocation3 + $0x68] sm:$0xff]
      %v881 = vld [vmem:[#allocation3 + $0x70] sm:$0xff]
      %v882 = vld [vmem:[#allocation3 + $0x78] sm:$0xff]
      %v883 = vld [vmem:[#allocation3 + $0x80] sm:$0xff]
      %v884 = vld [vmem:[#allocation3 + $0x88] sm:$0xff]
      %v885 = vld [vmem:[#allocation3 + $0x90] sm:$0xff]
      %v886 = vld [vmem:[#allocation3 + $0x98] sm:$0xff]
      %v887 = vld [vmem:[#allocation3 + $0xa0] sm:$0xff]
      %v888 = vld [vmem:[#allocation3 + $0xa8] sm:$0xff]
      %v889 = vld [vmem:[#allocation3 + $0xb0] sm:$0xff]
      %v890 = vld [vmem:[#allocation3 + $0xb8] sm:$0xff]
      %v891 = vld [vmem:[#allocation3 + $0xc0] sm:$0xff]
      %v892 = vld [vmem:[#allocation3 + $0xc8] sm:$0xff]
      %v893 = vld [vmem:[#allocation3 + $0xd0] sm:$0xff]
      %v894 = vld [vmem:[#allocation3 + $0xd8] sm:$0xff]
      %v895 = vld [vmem:[#allocation3 + $0xe0] sm:$0xff]
      %v896 = vld [vmem:[#allocation3 + $0xe8] sm:$0xff]
      %v897 = vld [vmem:[#allocation3 + $0xf0] sm:$0xff]
      %v898 = vld [vmem:[#allocation3 + $0xf8] sm:$0xff]
      %v899 = vld [vmem:[#allocation3 + $0x100] sm:$0xff]
      %v900 = vld [vmem:[#allocation3 + $0x108] sm:$0xff]
      %v901 = vld [vmem:[#allocation3 + $0x110] sm:$0xff]
      %v902 = vld [vmem:[#allocation3 + $0x118] sm:$0xff]
      %v903 = vld [vmem:[#allocation3 + $0x120] sm:$0xff]
      %v904 = vld [vmem:[#allocation3 + $0x128] sm:$0xff]
      %v905 = vld [vmem:[#allocation3 + $0x130] sm:$0xff]
      %v906 = vld [vmem:[#allocation3 + $0x138] sm:$0xff]
      %v907 = vld [vmem:[#allocation3 + $0x140] sm:$0xff]
      %v908 = vld [vmem:[#allocation3 + $0x148] sm:$0xff]
      %v909 = vld [vmem:[#allocation3 + $0x150] sm:$0xff]
      %v910 = vld [vmem:[#allocation3 + $0x158] sm:$0xff]
      %v911 = vld [vmem:[#allocation3 + $0x160] sm:$0xff]
      %v912 = vld [vmem:[#allocation3 + $0x168] sm:$0xff]
      %v913 = vld [vmem:[#allocation3 + $0x170] sm:$0xff]
      %v914 = vld [vmem:[#allocation3 + $0x178] sm:$0xff]
      %v915 = vld [vmem:[#allocation3 + $0x180] sm:$0xff]
      %v916 = vld [vmem:[#allocation3 + $0x188] sm:$0xff]
      %v917 = vld [vmem:[#allocation3 + $0x190] sm:$0xff]
      %v918 = vld [vmem:[#allocation3 + $0x198] sm:$0xff]
      %v919 = vld [vmem:[#allocation3 + $0x1a0] sm:$0xff]
      %v920 = vld [vmem:[#allocation3 + $0x1a8] sm:$0xff]
      %v921 = vld [vmem:[#allocation3 + $0x1b0] sm:$0xff]
      %v922 = vld [vmem:[#allocation3 + $0x1b8] sm:$0xff]
      %v923 = vld [vmem:[#allocation3 + $0x1c0] sm:$0xff]
      %v924 = vld [vmem:[#allocation3 + $0x1c8] sm:$0xff]
      %v925 = vld [vmem:[#allocation3 + $0x1d0] sm:$0xff]
      %v926 = vld [vmem:[#allocation3 + $0x1d8] sm:$0xff]
      %v927 = vld [vmem:[#allocation3 + $0x1e0] sm:$0xff]
      %v928 = vld [vmem:[#allocation3 + $0x1e8] sm:$0xff]
      %v929 = vld [vmem:[#allocation3 + $0x1f0] sm:$0xff]
      %v930 = vld [vmem:[#allocation3 + $0x1f8] sm:$0xff]
      %v931 = vld [vmem:[#allocation3 + $0x200] sm:$0xff]
      %v932 = vld [vmem:[#allocation3 + $0x208] sm:$0xff]
      %v933 = vld [vmem:[#allocation3 + $0x210] sm:$0xff]
      %v934 = vld [vmem:[#allocation3 + $0x218] sm:$0xff]
      %v935 = vld [vmem:[#allocation3 + $0x220] sm:$0xff]
      %v936 = vld [vmem:[#allocation3 + $0x228] sm:$0xff]
      %v937 = vld [vmem:[#allocation3 + $0x230] sm:$0xff]
      %v938 = vld [vmem:[#allocation3 + $0x238] sm:$0xff]
      %v939 = vld [vmem:[#allocation3 + $0x240] sm:$0xff]
      %v940 = vld [vmem:[#allocation3 + $0x248] sm:$0xff]
      %v941 = vld [vmem:[#allocation3 + $0x250] sm:$0xff]
      %v942 = vld [vmem:[#allocation3 + $0x258] sm:$0xff]
      %v943 = vld [vmem:[#allocation3 + $0x260] sm:$0xff]
      %v944 = vld [vmem:[#allocation3 + $0x268] sm:$0xff]
      %v945 = vld [vmem:[#allocation3 + $0x270] sm:$0xff]
      %v946 = vld [vmem:[#allocation3 + $0x278] sm:$0xff]
      %v947 = vld [vmem:[#allocation3 + $0x280] sm:$0xff]
      %v948 = vld [vmem:[#allocation3 + $0x288] sm:$0xff]
      %v949 = vld [vmem:[#allocation3 + $0x290] sm:$0xff]
      %v950 = vld [vmem:[#allocation3 + $0x298] sm:$0xff]
      %v951 = vld [vmem:[#allocation3 + $0x2a0] sm:$0xff]
      %v952 = vld [vmem:[#allocation3 + $0x2a8] sm:$0xff]
      %v953 = vld [vmem:[#allocation3 + $0x2b0] sm:$0xff]
      %v954 = vld [vmem:[#allocation3 + $0x2b8] sm:$0xff]
      %v955 = vld [vmem:[#allocation3 + $0x2c0] sm:$0xff]
      %v956 = vld [vmem:[#allocation3 + $0x2c8] sm:$0xff]
      %v957 = vld [vmem:[#allocation3 + $0x2d0] sm:$0xff]
      %v958 = vld [vmem:[#allocation3 + $0x2d8] sm:$0xff]
      %v959 = vld [vmem:[#allocation3 + $0x2e0] sm:$0xff]
      %v960 = vld [vmem:[#allocation3 + $0x2e8] sm:$0xff]
      %v961 = vld [vmem:[#allocation3 + $0x2f0] sm:$0xff]
      %v962 = vld [vmem:[#allocation3 + $0x2f8] sm:$0xff]
      %v963 = vld [vmem:[#allocation3 + $0x300] sm:$0xff]
      %v964 = vld [vmem:[#allocation3 + $0x308] sm:$0xff]
      %v965 = vld [vmem:[#allocation3 + $0x310] sm:$0xff]
      %v966 = vld [vmem:[#allocation3 + $0x318] sm:$0xff]
      %v967 = vld [vmem:[#allocation3 + $0x320] sm:$0xff]
      %v968 = vld [vmem:[#allocation3 + $0x328] sm:$0xff]
      %v969 = vld [vmem:[#allocation3 + $0x330] sm:$0xff]
      %v970 = vld [vmem:[#allocation3 + $0x338] sm:$0xff]
      %v971 = vld [vmem:[#allocation3 + $0x340] sm:$0xff]
      %v972 = vld [vmem:[#allocation3 + $0x348] sm:$0xff]
      %v973 = vld [vmem:[#allocation3 + $0x350] sm:$0xff]
      %v974 = vld [vmem:[#allocation3 + $0x358] sm:$0xff]
      %v975 = vld [vmem:[#allocation3 + $0x360] sm:$0xff]
      %v976 = vld [vmem:[#allocation3 + $0x368] sm:$0xff]
      %v977 = vld [vmem:[#allocation3 + $0x370] sm:$0xff]
      %v978 = vld [vmem:[#allocation3 + $0x378] sm:$0xff]
      %v979 = vld [vmem:[#allocation3 + $0x380] sm:$0xff]
      %v980 = vld [vmem:[#allocation3 + $0x388] sm:$0xff]
      %v981 = vld [vmem:[#allocation3 + $0x390] sm:$0xff]
      %v982 = vld [vmem:[#allocation3 + $0x398] sm:$0xff]
      %v983 = vld [vmem:[#allocation3 + $0x3a0] sm:$0xff]
      %v984 = vld [vmem:[#allocation3 + $0x3a8] sm:$0xff]
      %v985 = vld [vmem:[#allocation3 + $0x3b0] sm:$0xff]
      %v986 = vld [vmem:[#allocation3 + $0x3b8] sm:$0xff]
      %v987 = vld [vmem:[#allocation3 + $0x3c0] sm:$0xff]
      %v988 = vld [vmem:[#allocation3 + $0x3c8] sm:$0xff]
      %v989 = vld [vmem:[#allocation3 + $0x3d0] sm:$0xff]
      %v990 = vld [vmem:[#allocation3 + $0x3d8] sm:$0xff]
      %v991 = vld [vmem:[#allocation3 + $0x3e0] sm:$0xff]
      %v992 = vld [vmem:[#allocation3 + $0x3e8] sm:$0xff]
      %v993 = vld [vmem:[#allocation3 + $0x3f0] sm:$0xff]
      %v994 = vld [vmem:[#allocation3 + $0x3f8] sm:$0xff]
      %v995 = vld [vmem:[#allocation3 + $0x400] sm:$0xff]
      %v996 = vld [vmem:[#allocation3 + $0x408] sm:$0xff]
      %v997 = vld [vmem:[#allocation3 + $0x410] sm:$0xff]
      %v998 = vld [vmem:[#allocation3 + $0x418] sm:$0xff]
      %v999 = vld [vmem:[#allocation3 + $0x420] sm:$0xff]
      %v1000 = vld [vmem:[#allocation3 + $0x428] sm:$0xff]
      %v1001 = vld [vmem:[#allocation3 + $0x430] sm:$0xff]
      %v1002 = vld [vmem:[#allocation3 + $0x438] sm:$0xff]
      %v1003 = vld [vmem:[#allocation3 + $0x440] sm:$0xff]
      %v1004 = vld [vmem:[#allocation3 + $0x448] sm:$0xff]
      %v1005 = vld [vmem:[#allocation3 + $0x450] sm:$0xff]
      %v1006 = vld [vmem:[#allocation3 + $0x458] sm:$0xff]
      %v1007 = vld [vmem:[#allocation3 + $0x460] sm:$0xff]
      %v1008 = vld [vmem:[#allocation3 + $0x468] sm:$0xff]
      %v1009 = vld [vmem:[#allocation3 + $0x470] sm:$0xff]
      %v1010 = vld [vmem:[#allocation3 + $0x478] sm:$0xff]
      %v1011 = vld [vmem:[#allocation3 + $0x480] sm:$0xff]
      %v1012 = vld [vmem:[#allocation3 + $0x488] sm:$0xff]
      %v1013 = vld [vmem:[#allocation3 + $0x490] sm:$0xff]
      %v1014 = vld [vmem:[#allocation3 + $0x498] sm:$0xff]
      %v1015 = vld [vmem:[#allocation3 + $0x4a0] sm:$0xff]
      %v1016 = vld [vmem:[#allocation3 + $0x4a8] sm:$0xff]
      %v1017 = vld [vmem:[#allocation3 + $0x4b0] sm:$0xff]
      %v1018 = vld [vmem:[#allocation3 + $0x4b8] sm:$0xff]
      %v1019 = vld [vmem:[#allocation3 + $0x4c0] sm:$0xff]
      %v1020 = vld [vmem:[#allocation3 + $0x4c8] sm:$0xff]
      %v1021 = vld [vmem:[#allocation3 + $0x4d0] sm:$0xff]
      %v1022 = vld [vmem:[#allocation3 + $0x4d8] sm:$0xff]
      %v1023 = vld [vmem:[#allocation3 + $0x4e0] sm:$0xff]
      %v1024 = vld [vmem:[#allocation3 + $0x4e8] sm:$0xff]
      %v1025 = vld [vmem:[#allocation3 + $0x4f0] sm:$0xff]
      %v1026 = vld [vmem:[#allocation3 + $0x4f8] sm:$0xff]
      %v1027 = vld [vmem:[#allocation3 + $0x500] sm:$0xff]
      %v1028 = vld [vmem:[#allocation3 + $0x508] sm:$0xff]
      %v1029 = vld [vmem:[#allocation3 + $0x510] sm:$0xff]
      %v1030 = vld [vmem:[#allocation3 + $0x518] sm:$0xff]
      %v1031 = vld [vmem:[#allocation3 + $0x520] sm:$0xff]
      %v1032 = vld [vmem:[#allocation3 + $0x528] sm:$0xff]
      %v1033 = vld [vmem:[#allocation3 + $0x530] sm:$0xff]
      %v1034 = vld [vmem:[#allocation3 + $0x538] sm:$0xff]
      %v1035 = vld [vmem:[#allocation3 + $0x540] sm:$0xff]
      %v1036 = vld [vmem:[#allocation3 + $0x548] sm:$0xff]
      %v1037 = vld [vmem:[#allocation3 + $0x550] sm:$0xff]
      %v1038 = vld [vmem:[#allocation3 + $0x558] sm:$0xff]
      %v1039 = vld [vmem:[#allocation3 + $0x560] sm:$0xff]
      %v1040 = vld [vmem:[#allocation3 + $0x568] sm:$0xff]
      %v1041 = vld [vmem:[#allocation3 + $0x570] sm:$0xff]
      %v1042 = vld [vmem:[#allocation3 + $0x578] sm:$0xff]
      %v1043 = vld [vmem:[#allocation3 + $0x580] sm:$0xff]
      %v1044 = vld [vmem:[#allocation3 + $0x588] sm:$0xff]
      %v1045 = vld [vmem:[#allocation3 + $0x590] sm:$0xff]
      %v1046 = vld [vmem:[#allocation3 + $0x598] sm:$0xff]
      %v1047 = vld [vmem:[#allocation3 + $0x5a0] sm:$0xff]
      %v1048 = vld [vmem:[#allocation3 + $0x5a8] sm:$0xff]
      %v1049 = vld [vmem:[#allocation3 + $0x5b0] sm:$0xff]
      %v1050 = vld [vmem:[#allocation3 + $0x5b8] sm:$0xff]
      %v1051 = vld [vmem:[#allocation3 + $0x5c0] sm:$0xff]
      %v1052 = vld [vmem:[#allocation3 + $0x5c8] sm:$0xff]
      %v1053 = vld [vmem:[#allocation3 + $0x5d0] sm:$0xff]
      %v1054 = vld [vmem:[#allocation3 + $0x5d8] sm:$0xff]
      %v1055 = vld [vmem:[#allocation3 + $0x5e0] sm:$0xff]
      %v1056 = vld [vmem:[#allocation3 + $0x5e8] sm:$0xff]
      %v1057 = vld [vmem:[#allocation3 + $0x5f0] sm:$0xff]
      %v1058 = vld [vmem:[#allocation3 + $0x5f8] sm:$0xff]
      %v1059 = vld [vmem:[#allocation3 + $0x600] sm:$0xff]
      %v1060 = vld [vmem:[#allocation3 + $0x608] sm:$0xff]
      %v1061 = vld [vmem:[#allocation3 + $0x610] sm:$0xff]
      %v1062 = vld [vmem:[#allocation3 + $0x618] sm:$0xff]
      %v1063 = vld [vmem:[#allocation3 + $0x620] sm:$0xff]
      %v1064 = vld [vmem:[#allocation3 + $0x628] sm:$0xff]
      %v1065 = vld [vmem:[#allocation3 + $0x630] sm:$0xff]
      %v1066 = vld [vmem:[#allocation3 + $0x638] sm:$0xff]
      %v1067 = vld [vmem:[#allocation3 + $0x640] sm:$0xff]
      %v1068 = vld [vmem:[#allocation3 + $0x648] sm:$0xff]
      %v1069 = vld [vmem:[#allocation3 + $0x650] sm:$0xff]
      %v1070 = vld [vmem:[#allocation3 + $0x658] sm:$0xff]
      %v1071 = vld [vmem:[#allocation3 + $0x660] sm:$0xff]
      %v1072 = vld [vmem:[#allocation3 + $0x668] sm:$0xff]
      %v1073 = vld [vmem:[#allocation3 + $0x670] sm:$0xff]
      %v1074 = vld [vmem:[#allocation3 + $0x678] sm:$0xff]
      %v1075 = vld [vmem:[#allocation3 + $0x680] sm:$0xff]
      %v1076 = vld [vmem:[#allocation3 + $0x688] sm:$0xff]
      %v1077 = vld [vmem:[#allocation3 + $0x690] sm:$0xff]
      %v1078 = vld [vmem:[#allocation3 + $0x698] sm:$0xff]
      %v1079 = vld [vmem:[#allocation3 + $0x6a0] sm:$0xff]
      %v1080 = vld [vmem:[#allocation3 + $0x6a8] sm:$0xff]
      %v1081 = vld [vmem:[#allocation3 + $0x6b0] sm:$0xff]
      %v1082 = vld [vmem:[#allocation3 + $0x6b8] sm:$0xff]
      %v1083 = vld [vmem:[#allocation3 + $0x6c0] sm:$0xff]
      %v1084 = vld [vmem:[#allocation3 + $0x6c8] sm:$0xff]
      %v1085 = vld [vmem:[#allocation3 + $0x6d0] sm:$0xff]
      %v1086 = vld [vmem:[#allocation3 + $0x6d8] sm:$0xff]
      %v1087 = vld [vmem:[#allocation3 + $0x6e0] sm:$0xff]
      %v1088 = vld [vmem:[#allocation3 + $0x6e8] sm:$0xff]
      %v1089 = vld [vmem:[#allocation3 + $0x6f0] sm:$0xff]
      %v1090 = vld [vmem:[#allocation3 + $0x6f8] sm:$0xff]
      %v1091 = vld [vmem:[#allocation3 + $0x700] sm:$0xff]
      %v1092 = vld [vmem:[#allocation3 + $0x708] sm:$0xff]
      %v1093 = vld [vmem:[#allocation3 + $0x710] sm:$0xff]
      %v1094 = vld [vmem:[#allocation3 + $0x718] sm:$0xff]
      %v1095 = vld [vmem:[#allocation3 + $0x720] sm:$0xff]
      %v1096 = vld [vmem:[#allocation3 + $0x728] sm:$0xff]
      %v1097 = vld [vmem:[#allocation3 + $0x730] sm:$0xff]
      %v1098 = vld [vmem:[#allocation3 + $0x738] sm:$0xff]
      %v1099 = vld [vmem:[#allocation3 + $0x740] sm:$0xff]
      %v1100 = vld [vmem:[#allocation3 + $0x748] sm:$0xff]
      %v1101 = vld [vmem:[#allocation3 + $0x750] sm:$0xff]
      %v1102 = vld [vmem:[#allocation3 + $0x758] sm:$0xff]
      %v1103 = vld [vmem:[#allocation3 + $0x760] sm:$0xff]
      %v1104 = vld [vmem:[#allocation3 + $0x768] sm:$0xff]
      %v1105 = vld [vmem:[#allocation3 + $0x770] sm:$0xff]
      %v1106 = vld [vmem:[#allocation3 + $0x778] sm:$0xff]
      %v1107 = vld [vmem:[#allocation3 + $0x780] sm:$0xff]
      %v1108 = vld [vmem:[#allocation3 + $0x788] sm:$0xff]
      %v1109 = vld [vmem:[#allocation3 + $0x790] sm:$0xff]
      %v1110 = vld [vmem:[#allocation3 + $0x798] sm:$0xff]
      %v1111 = vld [vmem:[#allocation3 + $0x7a0] sm:$0xff]
      %v1112 = vld [vmem:[#allocation3 + $0x7a8] sm:$0xff]
      %v1113 = vld [vmem:[#allocation3 + $0x7b0] sm:$0xff]
      %v1114 = vld [vmem:[#allocation3 + $0x7b8] sm:$0xff]
      %v1115 = vld [vmem:[#allocation3 + $0x7c0] sm:$0xff]
      %v1116 = vld [vmem:[#allocation3 + $0x7c8] sm:$0xff]
      %v1117 = vld [vmem:[#allocation3 + $0x7d0] sm:$0xff]
      %v1118 = vld [vmem:[#allocation3 + $0x7d8] sm:$0xff]
      %v1119 = vld [vmem:[#allocation3 + $0x7e0] sm:$0xff]
      %v1120 = vld [vmem:[#allocation3 + $0x7e8] sm:$0xff]
      %v1121 = vld [vmem:[#allocation3 + $0x7f0] sm:$0xff]
      %v1122 = vld [vmem:[#allocation3 + $0x7f8] sm:$0xff]
      %v1123 = vld [vmem:[#allocation3 + $0x800] sm:$0xff]
      %v1124 = vld [vmem:[#allocation3 + $0x808] sm:$0xff]
      %v1125 = vld [vmem:[#allocation3 + $0x810] sm:$0xff]
      %v1126 = vld [vmem:[#allocation3 + $0x818] sm:$0xff]
      %v1127 = vld [vmem:[#allocation3 + $0x820] sm:$0xff]
      %v1128 = vld [vmem:[#allocation3 + $0x828] sm:$0xff]
      %v1129 = vld [vmem:[#allocation3 + $0x830] sm:$0xff]
      %v1130 = vld [vmem:[#allocation3 + $0x838] sm:$0xff]
      %v1131 = vld [vmem:[#allocation3 + $0x840] sm:$0xff]
      %v1132 = vld [vmem:[#allocation3 + $0x848] sm:$0xff]
      %v1133 = vld [vmem:[#allocation3 + $0x850] sm:$0xff]
      %v1134 = vld [vmem:[#allocation3 + $0x858] sm:$0xff]
      %v1135 = vld [vmem:[#allocation3 + $0x860] sm:$0xff]
      %v1136 = vld [vmem:[#allocation3 + $0x868] sm:$0xff]
      %v1137 = vld [vmem:[#allocation3 + $0x870] sm:$0xff]
      %v1138 = vld [vmem:[#allocation3 + $0x878] sm:$0xff]
      %v1139 = vld [vmem:[#allocation3 + $0x880] sm:$0xff]
      %v1140 = vld [vmem:[#allocation3 + $0x888] sm:$0xff]
      %v1141 = vld [vmem:[#allocation3 + $0x890] sm:$0xff]
      %v1142 = vld [vmem:[#allocation3 + $0x898] sm:$0xff]
      %v1143 = vld [vmem:[#allocation3 + $0x8a0] sm:$0xff]
      %v1144 = vld [vmem:[#allocation3 + $0x8a8] sm:$0xff]
      %v1145 = vld [vmem:[#allocation3 + $0x8b0] sm:$0xff]
      %v1146 = vld [vmem:[#allocation3 + $0x8b8] sm:$0xff]
      %v1147 = vld [vmem:[#allocation3 + $0x8c0] sm:$0xff]
      %v1148 = vld [vmem:[#allocation3 + $0x8c8] sm:$0xff]
      %v1149 = vld [vmem:[#allocation3 + $0x8d0] sm:$0xff]
      %v1150 = vld [vmem:[#allocation3 + $0x8d8] sm:$0xff]
      %v1151 = vld [vmem:[#allocation3 + $0x8e0] sm:$0xff]
      %v1152 = vld [vmem:[#allocation3 + $0x8e8] sm:$0xff]
      %v1153 = vld [vmem:[#allocation3 + $0x8f0] sm:$0xff]
      %v1154 = vld [vmem:[#allocation3 + $0x8f8] sm:$0xff]
      %v1155 = vld [vmem:[%s1] sm:$0xff]
      %v1156 = vld [vmem:[%s1 + $0x8] sm:$0xff]
      %v1157 = vld [vmem:[%s1 + $0x10] sm:$0xff]
      %v1158 = vld [vmem:[%s1 + $0x18] sm:$0xff]
      %v1159 = vld [vmem:[%s1 + $0x20] sm:$0xff]
      %v1160 = vld [vmem:[%s1 + $0x28] sm:$0xff]
      %v1161 = vld [vmem:[%s1 + $0x30] sm:$0xff]
      %v1162 = vld [vmem:[%s1 + $0x38] sm:$0xff]
      %v1163 = vld [vmem:[%s1 + $0x40] sm:$0xff]
      %v1164 = vld [vmem:[%s1 + $0x48] sm:$0xff]
      %v1165 = vld [vmem:[%s1 + $0x50] sm:$0xff]
      %v1166 = vld [vmem:[%s1 + $0x58] sm:$0xff]
      %v1167 = vld [vmem:[%s1 + $0x60] sm:$0xff]
      %v1168 = vld [vmem:[%s1 + $0x68] sm:$0xff]
      %v1169 = vld [vmem:[%s1 + $0x70] sm:$0xff]
      %v1170 = vld [vmem:[%s1 + $0x78] sm:$0xff]
      %v1171 = vld [vmem:[%s1 + $0x80] sm:$0xff]
      %v1172 = vld [vmem:[%s1 + $0x88] sm:$0xff]
      %v1173 = vld [vmem:[%s1 + $0x90] sm:$0xff]
      %v1174 = vld [vmem:[%s1 + $0x98] sm:$0xff]
      %v1175 = vld [vmem:[%s1 + $0xa0] sm:$0xff]
      %v1176 = vld [vmem:[%s1 + $0xa8] sm:$0xff]
      %v1177 = vld [vmem:[%s1 + $0xb0] sm:$0xff]
      %v1178 = vld [vmem:[%s1 + $0xb8] sm:$0xff]
      %v1179 = vld [vmem:[%s1 + $0xc0] sm:$0xff]
      %v1180 = vld [vmem:[%s1 + $0xc8] sm:$0xff]
      %v1181 = vld [vmem:[%s1 + $0xd0] sm:$0xff]
      %v1182 = vld [vmem:[%s1 + $0xd8] sm:$0xff]
      %v1183 = vld [vmem:[%s1 + $0xe0] sm:$0xff]
      %v1184 = vld [vmem:[%s1 + $0xe8] sm:$0xff]
      %v1185 = vld [vmem:[%s1 + $0xf0] sm:$0xff]
      %v1186 = vld [vmem:[%s1 + $0xf8] sm:$0xff]
      %v1187 = vld [vmem:[%s1 + $0x100] sm:$0xff]
      %v1188 = vld [vmem:[%s1 + $0x108] sm:$0xff]
      %v1189 = vld [vmem:[%s1 + $0x110] sm:$0xff]
      %v1190 = vld [vmem:[%s1 + $0x118] sm:$0xff]
      %v1191 = vld [vmem:[%s1 + $0x120] sm:$0xff]
      %v1192 = vld [vmem:[%s1 + $0x128] sm:$0xff]
      %v1193 = vld [vmem:[%s1 + $0x130] sm:$0xff]
      %v1194 = vld [vmem:[%s1 + $0x138] sm:$0xff]
      %v1195 = vld [vmem:[%s1 + $0x140] sm:$0xff]
      %v1196 = vld [vmem:[%s1 + $0x148] sm:$0xff]
      %v1197 = vld [vmem:[%s1 + $0x150] sm:$0xff]
      %v1198 = vld [vmem:[%s1 + $0x158] sm:$0xff]
      %v1199 = vld [vmem:[%s1 + $0x160] sm:$0xff]
      %v1200 = vld [vmem:[%s1 + $0x168] sm:$0xff]
      %v1201 = vld [vmem:[%s1 + $0x170] sm:$0xff]
      %v1202 = vld [vmem:[%s1 + $0x178] sm:$0xff]
      %v1203 = vld [vmem:[%s1 + $0x180] sm:$0xff]
      %v1204 = vld [vmem:[%s1 + $0x188] sm:$0xff]
      %v1205 = vld [vmem:[%s1 + $0x190] sm:$0xff]
      %v1206 = vld [vmem:[%s1 + $0x198] sm:$0xff]
      %v1207 = vld [vmem:[%s1 + $0x1a0] sm:$0xff]
      %v1208 = vld [vmem:[%s1 + $0x1a8] sm:$0xff]
      %v1209 = vld [vmem:[%s1 + $0x1b0] sm:$0xff]
      %v1210 = vld [vmem:[%s1 + $0x1b8] sm:$0xff]
      %v1211 = vld [vmem:[%s1 + $0x1c0] sm:$0xff]
      %v1212 = vld [vmem:[%s1 + $0x1c8] sm:$0xff]
      %v1213 = vld [vmem:[%s1 + $0x1d0] sm:$0xff]
      %v1214 = vld [vmem:[%s1 + $0x1d8] sm:$0xff]
      %v1215 = vld [vmem:[%s1 + $0x1e0] sm:$0xff]
      %v1216 = vld [vmem:[%s1 + $0x1e8] sm:$0xff]
      %v1217 = vld [vmem:[%s1 + $0x1f0] sm:$0xff]
      %v1218 = vld [vmem:[%s1 + $0x1f8] sm:$0xff]
      %v1219 = vld [vmem:[%s1 + $0x200] sm:$0xff]
      %v1220 = vld [vmem:[%s1 + $0x208] sm:$0xff]
      %v1221 = vld [vmem:[%s1 + $0x210] sm:$0xff]
      %v1222 = vld [vmem:[%s1 + $0x218] sm:$0xff]
      %v1223 = vld [vmem:[%s1 + $0x220] sm:$0xff]
      %v1224 = vld [vmem:[%s1 + $0x228] sm:$0xff]
      %v1225 = vld [vmem:[%s1 + $0x230] sm:$0xff]
      %v1226 = vld [vmem:[%s1 + $0x238] sm:$0xff]
      %v1227 = vld [vmem:[%s1 + $0x240] sm:$0xff]
      %v1228 = vld [vmem:[%s1 + $0x248] sm:$0xff]
      %v1229 = vld [vmem:[%s1 + $0x250] sm:$0xff]
      %v1230 = vld [vmem:[%s1 + $0x258] sm:$0xff]
      %v1231 = vld [vmem:[%s1 + $0x260] sm:$0xff]
      %v1232 = vld [vmem:[%s1 + $0x268] sm:$0xff]
      %v1233 = vld [vmem:[%s1 + $0x270] sm:$0xff]
      %v1234 = vld [vmem:[%s1 + $0x278] sm:$0xff]
      %v1235 = vld [vmem:[%s1 + $0x280] sm:$0xff]
      %v1236 = vld [vmem:[%s1 + $0x288] sm:$0xff]
      %v1237 = vld [vmem:[%s1 + $0x290] sm:$0xff]
      %v1238 = vld [vmem:[%s1 + $0x298] sm:$0xff]
      %v1239 = vld [vmem:[%s1 + $0x2a0] sm:$0xff]
      %v1240 = vld [vmem:[%s1 + $0x2a8] sm:$0xff]
      %v1241 = vld [vmem:[%s1 + $0x2b0] sm:$0xff]
      %v1242 = vld [vmem:[%s1 + $0x2b8] sm:$0xff]
      %v1243 = vld [vmem:[%s1 + $0x2c0] sm:$0xff]
      %v1244 = vld [vmem:[%s1 + $0x2c8] sm:$0xff]
      %v1245 = vld [vmem:[%s1 + $0x2d0] sm:$0xff]
      %v1246 = vld [vmem:[%s1 + $0x2d8] sm:$0xff]
      %v1247 = vld [vmem:[%s1 + $0x2e0] sm:$0xff]
      %v1248 = vld [vmem:[%s1 + $0x2e8] sm:$0xff]
      %v1249 = vld [vmem:[%s1 + $0x2f0] sm:$0xff]
      %v1250 = vld [vmem:[%s1 + $0x2f8] sm:$0xff]
      %v1251 = vld [vmem:[%s1 + $0x300] sm:$0xff]
      %v1252 = vld [vmem:[%s1 + $0x308] sm:$0xff]
      %v1253 = vld [vmem:[%s1 + $0x310] sm:$0xff]
      %v1254 = vld [vmem:[%s1 + $0x318] sm:$0xff]
      %v1255 = vld [vmem:[%s1 + $0x320] sm:$0xff]
      %v1256 = vld [vmem:[%s1 + $0x328] sm:$0xff]
      %v1257 = vld [vmem:[%s1 + $0x330] sm:$0xff]
      %v1258 = vld [vmem:[%s1 + $0x338] sm:$0xff]
      %v1259 = vld [vmem:[%s1 + $0x340] sm:$0xff]
      %v1260 = vld [vmem:[%s1 + $0x348] sm:$0xff]
      %v1261 = vld [vmem:[%s1 + $0x350] sm:$0xff]
      %v1262 = vld [vmem:[%s1 + $0x358] sm:$0xff]
      %v1263 = vld [vmem:[%s1 + $0x360] sm:$0xff]
      %v1264 = vld [vmem:[%s1 + $0x368] sm:$0xff]
      %v1265 = vld [vmem:[%s1 + $0x370] sm:$0xff]
      %v1266 = vld [vmem:[%s1 + $0x378] sm:$0xff]
      %v1267 = vld [vmem:[%s1 + $0x380] sm:$0xff]
      %v1268 = vld [vmem:[%s1 + $0x388] sm:$0xff]
      %v1269 = vld [vmem:[%s1 + $0x390] sm:$0xff]
      %v1270 = vld [vmem:[%s1 + $0x398] sm:$0xff]
      %v1271 = vld [vmem:[%s1 + $0x3a0] sm:$0xff]
      %v1272 = vld [vmem:[%s1 + $0x3a8] sm:$0xff]
      %v1273 = vld [vmem:[%s1 + $0x3b0] sm:$0xff]
      %v1274 = vld [vmem:[%s1 + $0x3b8] sm:$0xff]
      %v1275 = vld [vmem:[%s1 + $0x3c0] sm:$0xff]
      %v1276 = vld [vmem:[%s1 + $0x3c8] sm:$0xff]
      %v1277 = vld [vmem:[%s1 + $0x3d0] sm:$0xff]
      %v1278 = vld [vmem:[%s1 + $0x3d8] sm:$0xff]
      %v1279 = vld [vmem:[%s1 + $0x3e0] sm:$0xff]
      %v1280 = vld [vmem:[%s1 + $0x3e8] sm:$0xff]
      %v1281 = vld [vmem:[%s1 + $0x3f0] sm:$0xff]
      %v1282 = vld [vmem:[%s1 + $0x3f8] sm:$0xff]
      %v1283 = vld [vmem:[%s1 + $0x400] sm:$0xff]
      %v1284 = vld [vmem:[%s1 + $0x408] sm:$0xff]
      %v1285 = vld [vmem:[%s1 + $0x410] sm:$0xff]
      %v1286 = vld [vmem:[%s1 + $0x418] sm:$0xff]
      %v1287 = vld [vmem:[%s1 + $0x420] sm:$0xff]
      %v1288 = vld [vmem:[%s1 + $0x428] sm:$0xff]
      %v1289 = vld [vmem:[%s1 + $0x430] sm:$0xff]
      %v1290 = vld [vmem:[%s1 + $0x438] sm:$0xff]
      %v1291 = vld [vmem:[%s1 + $0x440] sm:$0xff]
      %v1292 = vld [vmem:[%s1 + $0x448] sm:$0xff]
      %v1293 = vld [vmem:[%s1 + $0x450] sm:$0xff]
      %v1294 = vld [vmem:[%s1 + $0x458] sm:$0xff]
      %v1295 = vld [vmem:[%s1 + $0x460] sm:$0xff]
      %v1296 = vld [vmem:[%s1 + $0x468] sm:$0xff]
      %v1297 = vld [vmem:[%s1 + $0x470] sm:$0xff]
      %v1298 = vld [vmem:[%s1 + $0x478] sm:$0xff]
      %v1299 = vld [vmem:[%s2] sm:$0x1]
      %v1301 = vperm.slane %v1299, 0
      %1303 = vmatpush.msra.mxu0 %v1170
      %1304 = vmatpush.msra.mxu0 %v1169
      %1305 = vmatpush.msra.mxu0 %v1168
      %1306 = vmatpush.msra.mxu0 %v1167
      %1307 = vmatpush.msra.mxu0 %v1166
      %1308 = vmatpush.msra.mxu0 %v1165
      %1309 = vmatpush.msra.mxu0 %v1164
      %1310 = vmatpush.msra.mxu0 %v1163
      %1311 = vmatpush.msra.mxu0 %v1162
      %1312 = vmatpush.msra.mxu0 %v1161
      %1313 = vmatpush.msra.mxu0 %v1160
      %1314 = vmatpush.msra.mxu0 %v1159
      %1315 = vmatpush.msra.mxu0 %v1158
      %1316 = vmatpush.msra.mxu0 %v1157
      %1317 = vmatpush.msra.mxu0 %v1156
      %1318 = vmatpush.msra.mxu0 %v1155
      %1319 = vmatmul.f32.gmra.mxu0 %v867
      %v1320 = vpop.f32.mrf.mxu0
      %v1321 = vadd.f32 %v1301, %v1320
      %1322 = vmatmul.f32.gmra.mxu0 %v876
      %v1323 = vpop.f32.mrf.mxu0
      %v1324 = vadd.f32 %v1301, %v1323
      %1325 = vmatmul.f32.gmra.mxu0 %v885
      %v1326 = vpop.f32.mrf.mxu0
      %v1327 = vadd.f32 %v1301, %v1326
      %1328 = vmatmul.f32.gmra.mxu0 %v894
      %v1329 = vpop.f32.mrf.mxu0
      %v1330 = vadd.f32 %v1301, %v1329
      %1331 = vmatmul.f32.gmra.mxu0 %v903
      %v1332 = vpop.f32.mrf.mxu0
      %v1333 = vadd.f32 %v1301, %v1332
      %1334 = vmatmul.f32.gmra.mxu0 %v912
      %v1335 = vpop.f32.mrf.mxu0
      %v1336 = vadd.f32 %v1301, %v1335
      %1337 = vmatmul.f32.gmra.mxu0 %v921
      %v1338 = vpop.f32.mrf.mxu0
      %v1339 = vadd.f32 %v1301, %v1338
      %1340 = vmatmul.f32.gmra.mxu0 %v930
      %v1341 = vpop.f32.mrf.mxu0
      %v1342 = vadd.f32 %v1301, %v1341
      %1343 = vmatmul.f32.gmra.mxu0 %v939
      %v1344 = vpop.f32.mrf.mxu0
      %v1345 = vadd.f32 %v1301, %v1344
      %1346 = vmatmul.f32.gmra.mxu0 %v948
      %v1347 = vpop.f32.mrf.mxu0
      %v1348 = vadd.f32 %v1301, %v1347
      %1349 = vmatmul.f32.gmra.mxu0 %v957
      %v1350 = vpop.f32.mrf.mxu0
      %v1351 = vadd.f32 %v1301, %v1350
      %1352 = vmatmul.f32.gmra.mxu0 %v966
      %v1353 = vpop.f32.mrf.mxu0
      %v1354 = vadd.f32 %v1301, %v1353
      %1355 = vmatmul.f32.gmra.mxu0 %v975
      %v1356 = vpop.f32.mrf.mxu0
      %v1357 = vadd.f32 %v1301, %v1356
      %1358 = vmatmul.f32.gmra.mxu0 %v984
      %v1359 = vpop.f32.mrf.mxu0
      %v1360 = vadd.f32 %v1301, %v1359
      %1361 = vmatmul.f32.gmra.mxu0 %v993
      %v1362 = vpop.f32.mrf.mxu0
      %v1363 = vadd.f32 %v1301, %v1362
      %1364 = vmatmul.f32.gmra.mxu0 %v1002
      %v1365 = vpop.f32.mrf.mxu0
      %v1366 = vadd.f32 %v1301, %v1365
      %1367 = vmatmul.f32.gmra.mxu0 %v1011
      %v1368 = vpop.f32.mrf.mxu0
      %v1369 = vadd.f32 %v1301, %v1368
      %1370 = vmatmul.f32.gmra.mxu0 %v1020
      %v1371 = vpop.f32.mrf.mxu0
      %v1372 = vadd.f32 %v1301, %v1371
      %1373 = vmatmul.f32.gmra.mxu0 %v1029
      %v1374 = vpop.f32.mrf.mxu0
      %v1375 = vadd.f32 %v1301, %v1374
      %1376 = vmatmul.f32.gmra.mxu0 %v1038
      %v1377 = vpop.f32.mrf.mxu0
      %v1378 = vadd.f32 %v1301, %v1377
      %1379 = vmatmul.f32.gmra.mxu0 %v1047
      %v1380 = vpop.f32.mrf.mxu0
      %v1381 = vadd.f32 %v1301, %v1380
      %1382 = vmatmul.f32.gmra.mxu0 %v1056
      %v1383 = vpop.f32.mrf.mxu0
      %v1384 = vadd.f32 %v1301, %v1383
      %1385 = vmatmul.f32.gmra.mxu0 %v1065
      %v1386 = vpop.f32.mrf.mxu0
      %v1387 = vadd.f32 %v1301, %v1386
      %1388 = vmatmul.f32.gmra.mxu0 %v1074
      %v1389 = vpop.f32.mrf.mxu0
      %v1390 = vadd.f32 %v1301, %v1389
      %1391 = vmatmul.f32.gmra.mxu0 %v1083
      %v1392 = vpop.f32.mrf.mxu0
      %v1393 = vadd.f32 %v1301, %v1392
      %1394 = vmatmul.f32.gmra.mxu0 %v1092
      %v1395 = vpop.f32.mrf.mxu0
      %v1396 = vadd.f32 %v1301, %v1395
      %1397 = vmatmul.f32.gmra.mxu0 %v1101
      %v1398 = vpop.f32.mrf.mxu0
      %v1399 = vadd.f32 %v1301, %v1398
      %1400 = vmatmul.f32.gmra.mxu0 %v1110
      %v1401 = vpop.f32.mrf.mxu0
      %v1402 = vadd.f32 %v1301, %v1401
      %1403 = vmatmul.f32.gmra.mxu0 %v1119
      %v1404 = vpop.f32.mrf.mxu0
      %v1405 = vadd.f32 %v1301, %v1404
      %1406 = vmatmul.f32.gmra.mxu0 %v1128
      %v1407 = vpop.f32.mrf.mxu0
      %v1408 = vadd.f32 %v1301, %v1407
      %1409 = vmatmul.f32.gmra.mxu0 %v1137
      %v1410 = vpop.f32.mrf.mxu0
      %v1411 = vadd.f32 %v1301, %v1410
      %1412 = vmatmul.f32.gmra.mxu0 %v1146
      %v1413 = vpop.f32.mrf.mxu0
      %v1414 = vadd.f32 %v1301, %v1413
      %1415 = vdwg.mxu0
      %1416 = vmatpush.msra.mxu0 %v1186
      %1417 = vmatpush.msra.mxu0 %v1185
      %1418 = vmatpush.msra.mxu0 %v1184
      %1419 = vmatpush.msra.mxu0 %v1183
      %1420 = vmatpush.msra.mxu0 %v1182
      %1421 = vmatpush.msra.mxu0 %v1181
      %1422 = vmatpush.msra.mxu0 %v1180
      %1423 = vmatpush.msra.mxu0 %v1179
      %1424 = vmatpush.msra.mxu0 %v1178
      %1425 = vmatpush.msra.mxu0 %v1177
      %1426 = vmatpush.msra.mxu0 %v1176
      %1427 = vmatpush.msra.mxu0 %v1175
      %1428 = vmatpush.msra.mxu0 %v1174
      %1429 = vmatpush.msra.mxu0 %v1173
      %1430 = vmatpush.msra.mxu0 %v1172
      %1431 = vmatpush.msra.mxu0 %v1171
      %1432 = vmatmul.f32.gmra.mxu0 %v868
      %v1433 = vpop.f32.mrf.mxu0
      %v1434 = vadd.f32 %v1321, %v1433
      %1435 = vmatmul.f32.gmra.mxu0 %v877
      %v1436 = vpop.f32.mrf.mxu0
      %v1437 = vadd.f32 %v1324, %v1436
      %1438 = vmatmul.f32.gmra.mxu0 %v886
      %v1439 = vpop.f32.mrf.mxu0
      %v1440 = vadd.f32 %v1327, %v1439
      %1441 = vmatmul.f32.gmra.mxu0 %v895
      %v1442 = vpop.f32.mrf.mxu0
      %v1443 = vadd.f32 %v1330, %v1442
      %1444 = vmatmul.f32.gmra.mxu0 %v904
      %v1445 = vpop.f32.mrf.mxu0
      %v1446 = vadd.f32 %v1333, %v1445
      %1447 = vmatmul.f32.gmra.mxu0 %v913
      %v1448 = vpop.f32.mrf.mxu0
      %v1449 = vadd.f32 %v1336, %v1448
      %1450 = vmatmul.f32.gmra.mxu0 %v922
      %v1451 = vpop.f32.mrf.mxu0
      %v1452 = vadd.f32 %v1339, %v1451
      %1453 = vmatmul.f32.gmra.mxu0 %v931
      %v1454 = vpop.f32.mrf.mxu0
      %v1455 = vadd.f32 %v1342, %v1454
      %1456 = vmatmul.f32.gmra.mxu0 %v940
      %v1457 = vpop.f32.mrf.mxu0
      %v1458 = vadd.f32 %v1345, %v1457
      %1459 = vmatmul.f32.gmra.mxu0 %v949
      %v1460 = vpop.f32.mrf.mxu0
      %v1461 = vadd.f32 %v1348, %v1460
      %1462 = vmatmul.f32.gmra.mxu0 %v958
      %v1463 = vpop.f32.mrf.mxu0
      %v1464 = vadd.f32 %v1351, %v1463
      %1465 = vmatmul.f32.gmra.mxu0 %v967
      %v1466 = vpop.f32.mrf.mxu0
      %v1467 = vadd.f32 %v1354, %v1466
      %1468 = vmatmul.f32.gmra.mxu0 %v976
      %v1469 = vpop.f32.mrf.mxu0
      %v1470 = vadd.f32 %v1357, %v1469
      %1471 = vmatmul.f32.gmra.mxu0 %v985
      %v1472 = vpop.f32.mrf.mxu0
      %v1473 = vadd.f32 %v1360, %v1472
      %1474 = vmatmul.f32.gmra.mxu0 %v994
      %v1475 = vpop.f32.mrf.mxu0
      %v1476 = vadd.f32 %v1363, %v1475
      %1477 = vmatmul.f32.gmra.mxu0 %v1003
      %v1478 = vpop.f32.mrf.mxu0
      %v1479 = vadd.f32 %v1366, %v1478
      %1480 = vmatmul.f32.gmra.mxu0 %v1012
      %v1481 = vpop.f32.mrf.mxu0
      %v1482 = vadd.f32 %v1369, %v1481
      %1483 = vmatmul.f32.gmra.mxu0 %v1021
      %v1484 = vpop.f32.mrf.mxu0
      %v1485 = vadd.f32 %v1372, %v1484
      %1486 = vmatmul.f32.gmra.mxu0 %v1030
      %v1487 = vpop.f32.mrf.mxu0
      %v1488 = vadd.f32 %v1375, %v1487
      %1489 = vmatmul.f32.gmra.mxu0 %v1039
      %v1490 = vpop.f32.mrf.mxu0
      %v1491 = vadd.f32 %v1378, %v1490
      %1492 = vmatmul.f32.gmra.mxu0 %v1048
      %v1493 = vpop.f32.mrf.mxu0
      %v1494 = vadd.f32 %v1381, %v1493
      %1495 = vmatmul.f32.gmra.mxu0 %v1057
      %v1496 = vpop.f32.mrf.mxu0
      %v1497 = vadd.f32 %v1384, %v1496
      %1498 = vmatmul.f32.gmra.mxu0 %v1066
      %v1499 = vpop.f32.mrf.mxu0
      %v1500 = vadd.f32 %v1387, %v1499
      %1501 = vmatmul.f32.gmra.mxu0 %v1075
      %v1502 = vpop.f32.mrf.mxu0
      %v1503 = vadd.f32 %v1390, %v1502
      %1504 = vmatmul.f32.gmra.mxu0 %v1084
      %v1505 = vpop.f32.mrf.mxu0
      %v1506 = vadd.f32 %v1393, %v1505
      %1507 = vmatmul.f32.gmra.mxu0 %v1093
      %v1508 = vpop.f32.mrf.mxu0
      %v1509 = vadd.f32 %v1396, %v1508
      %1510 = vmatmul.f32.gmra.mxu0 %v1102
      %v1511 = vpop.f32.mrf.mxu0
      %v1512 = vadd.f32 %v1399, %v1511
      %1513 = vmatmul.f32.gmra.mxu0 %v1111
      %v1514 = vpop.f32.mrf.mxu0
      %v1515 = vadd.f32 %v1402, %v1514
      %1516 = vmatmul.f32.gmra.mxu0 %v1120
      %v1517 = vpop.f32.mrf.mxu0
      %v1518 = vadd.f32 %v1405, %v1517
      %1519 = vmatmul.f32.gmra.mxu0 %v1129
      %v1520 = vpop.f32.mrf.mxu0
      %v1521 = vadd.f32 %v1408, %v1520
      %1522 = vmatmul.f32.gmra.mxu0 %v1138
      %v1523 = vpop.f32.mrf.mxu0
      %v1524 = vadd.f32 %v1411, %v1523
      %1525 = vmatmul.f32.gmra.mxu0 %v1147
      %v1526 = vpop.f32.mrf.mxu0
      %v1527 = vadd.f32 %v1414, %v1526
      %1528 = vdwg.mxu0
      %1529 = vmatpush.msra.mxu0 %v1202
      %1530 = vmatpush.msra.mxu0 %v1201
      %1531 = vmatpush.msra.mxu0 %v1200
      %1532 = vmatpush.msra.mxu0 %v1199
      %1533 = vmatpush.msra.mxu0 %v1198
      %1534 = vmatpush.msra.mxu0 %v1197
      %1535 = vmatpush.msra.mxu0 %v1196
      %1536 = vmatpush.msra.mxu0 %v1195
      %1537 = vmatpush.msra.mxu0 %v1194
      %1538 = vmatpush.msra.mxu0 %v1193
      %1539 = vmatpush.msra.mxu0 %v1192
      %1540 = vmatpush.msra.mxu0 %v1191
      %1541 = vmatpush.msra.mxu0 %v1190
      %1542 = vmatpush.msra.mxu0 %v1189
      %1543 = vmatpush.msra.mxu0 %v1188
      %1544 = vmatpush.msra.mxu0 %v1187
      %1545 = vmatmul.f32.gmra.mxu0 %v869
      %v1546 = vpop.f32.mrf.mxu0
      %v1547 = vadd.f32 %v1434, %v1546
      %1548 = vmatmul.f32.gmra.mxu0 %v878
      %v1549 = vpop.f32.mrf.mxu0
      %v1550 = vadd.f32 %v1437, %v1549
      %1551 = vmatmul.f32.gmra.mxu0 %v887
      %v1552 = vpop.f32.mrf.mxu0
      %v1553 = vadd.f32 %v1440, %v1552
      %1554 = vmatmul.f32.gmra.mxu0 %v896
      %v1555 = vpop.f32.mrf.mxu0
      %v1556 = vadd.f32 %v1443, %v1555
      %1557 = vmatmul.f32.gmra.mxu0 %v905
      %v1558 = vpop.f32.mrf.mxu0
      %v1559 = vadd.f32 %v1446, %v1558
      %1560 = vmatmul.f32.gmra.mxu0 %v914
      %v1561 = vpop.f32.mrf.mxu0
      %v1562 = vadd.f32 %v1449, %v1561
      %1563 = vmatmul.f32.gmra.mxu0 %v923
      %v1564 = vpop.f32.mrf.mxu0
      %v1565 = vadd.f32 %v1452, %v1564
      %1566 = vmatmul.f32.gmra.mxu0 %v932
      %v1567 = vpop.f32.mrf.mxu0
      %v1568 = vadd.f32 %v1455, %v1567
      %1569 = vmatmul.f32.gmra.mxu0 %v941
      %v1570 = vpop.f32.mrf.mxu0
      %v1571 = vadd.f32 %v1458, %v1570
      %1572 = vmatmul.f32.gmra.mxu0 %v950
      %v1573 = vpop.f32.mrf.mxu0
      %v1574 = vadd.f32 %v1461, %v1573
      %1575 = vmatmul.f32.gmra.mxu0 %v959
      %v1576 = vpop.f32.mrf.mxu0
      %v1577 = vadd.f32 %v1464, %v1576
      %1578 = vmatmul.f32.gmra.mxu0 %v968
      %v1579 = vpop.f32.mrf.mxu0
      %v1580 = vadd.f32 %v1467, %v1579
      %1581 = vmatmul.f32.gmra.mxu0 %v977
      %v1582 = vpop.f32.mrf.mxu0
      %v1583 = vadd.f32 %v1470, %v1582
      %1584 = vmatmul.f32.gmra.mxu0 %v986
      %v1585 = vpop.f32.mrf.mxu0
      %v1586 = vadd.f32 %v1473, %v1585
      %1587 = vmatmul.f32.gmra.mxu0 %v995
      %v1588 = vpop.f32.mrf.mxu0
      %v1589 = vadd.f32 %v1476, %v1588
      %1590 = vmatmul.f32.gmra.mxu0 %v1004
      %v1591 = vpop.f32.mrf.mxu0
      %v1592 = vadd.f32 %v1479, %v1591
      %1593 = vmatmul.f32.gmra.mxu0 %v1013
      %v1594 = vpop.f32.mrf.mxu0
      %v1595 = vadd.f32 %v1482, %v1594
      %1596 = vmatmul.f32.gmra.mxu0 %v1022
      %v1597 = vpop.f32.mrf.mxu0
      %v1598 = vadd.f32 %v1485, %v1597
      %1599 = vmatmul.f32.gmra.mxu0 %v1031
      %v1600 = vpop.f32.mrf.mxu0
      %v1601 = vadd.f32 %v1488, %v1600
      %1602 = vmatmul.f32.gmra.mxu0 %v1040
      %v1603 = vpop.f32.mrf.mxu0
      %v1604 = vadd.f32 %v1491, %v1603
      %1605 = vmatmul.f32.gmra.mxu0 %v1049
      %v1606 = vpop.f32.mrf.mxu0
      %v1607 = vadd.f32 %v1494, %v1606
      %1608 = vmatmul.f32.gmra.mxu0 %v1058
      %v1609 = vpop.f32.mrf.mxu0
      %v1610 = vadd.f32 %v1497, %v1609
      %1611 = vmatmul.f32.gmra.mxu0 %v1067
      %v1612 = vpop.f32.mrf.mxu0
      %v1613 = vadd.f32 %v1500, %v1612
      %1614 = vmatmul.f32.gmra.mxu0 %v1076
      %v1615 = vpop.f32.mrf.mxu0
      %v1616 = vadd.f32 %v1503, %v1615
      %1617 = vmatmul.f32.gmra.mxu0 %v1085
      %v1618 = vpop.f32.mrf.mxu0
      %v1619 = vadd.f32 %v1506, %v1618
      %1620 = vmatmul.f32.gmra.mxu0 %v1094
      %v1621 = vpop.f32.mrf.mxu0
      %v1622 = vadd.f32 %v1509, %v1621
      %1623 = vmatmul.f32.gmra.mxu0 %v1103
      %v1624 = vpop.f32.mrf.mxu0
      %v1625 = vadd.f32 %v1512, %v1624
      %1626 = vmatmul.f32.gmra.mxu0 %v1112
      %v1627 = vpop.f32.mrf.mxu0
      %v1628 = vadd.f32 %v1515, %v1627
      %1629 = vmatmul.f32.gmra.mxu0 %v1121
      %v1630 = vpop.f32.mrf.mxu0
      %v1631 = vadd.f32 %v1518, %v1630
      %1632 = vmatmul.f32.gmra.mxu0 %v1130
      %v1633 = vpop.f32.mrf.mxu0
      %v1634 = vadd.f32 %v1521, %v1633
      %1635 = vmatmul.f32.gmra.mxu0 %v1139
      %v1636 = vpop.f32.mrf.mxu0
      %v1637 = vadd.f32 %v1524, %v1636
      %1638 = vmatmul.f32.gmra.mxu0 %v1148
      %v1639 = vpop.f32.mrf.mxu0
      %v1640 = vadd.f32 %v1527, %v1639
      %1641 = vdwg.mxu0
      %1642 = vmatpush.msra.mxu0 %v1218
      %1643 = vmatpush.msra.mxu0 %v1217
      %1644 = vmatpush.msra.mxu0 %v1216
      %1645 = vmatpush.msra.mxu0 %v1215
      %1646 = vmatpush.msra.mxu0 %v1214
      %1647 = vmatpush.msra.mxu0 %v1213
      %1648 = vmatpush.msra.mxu0 %v1212
      %1649 = vmatpush.msra.mxu0 %v1211
      %1650 = vmatpush.msra.mxu0 %v1210
      %1651 = vmatpush.msra.mxu0 %v1209
      %1652 = vmatpush.msra.mxu0 %v1208
      %1653 = vmatpush.msra.mxu0 %v1207
      %1654 = vmatpush.msra.mxu0 %v1206
      %1655 = vmatpush.msra.mxu0 %v1205
      %1656 = vmatpush.msra.mxu0 %v1204
      %1657 = vmatpush.msra.mxu0 %v1203
      %1658 = vmatmul.f32.gmra.mxu0 %v870
      %v1659 = vpop.f32.mrf.mxu0
      %v1660 = vadd.f32 %v1547, %v1659
      %1661 = vmatmul.f32.gmra.mxu0 %v879
      %v1662 = vpop.f32.mrf.mxu0
      %v1663 = vadd.f32 %v1550, %v1662
      %1664 = vmatmul.f32.gmra.mxu0 %v888
      %v1665 = vpop.f32.mrf.mxu0
      %v1666 = vadd.f32 %v1553, %v1665
      %1667 = vmatmul.f32.gmra.mxu0 %v897
      %v1668 = vpop.f32.mrf.mxu0
      %v1669 = vadd.f32 %v1556, %v1668
      %1670 = vmatmul.f32.gmra.mxu0 %v906
      %v1671 = vpop.f32.mrf.mxu0
      %v1672 = vadd.f32 %v1559, %v1671
      %1673 = vmatmul.f32.gmra.mxu0 %v915
      %v1674 = vpop.f32.mrf.mxu0
      %v1675 = vadd.f32 %v1562, %v1674
      %1676 = vmatmul.f32.gmra.mxu0 %v924
      %v1677 = vpop.f32.mrf.mxu0
      %v1678 = vadd.f32 %v1565, %v1677
      %1679 = vmatmul.f32.gmra.mxu0 %v933
      %v1680 = vpop.f32.mrf.mxu0
      %v1681 = vadd.f32 %v1568, %v1680
      %1682 = vmatmul.f32.gmra.mxu0 %v942
      %v1683 = vpop.f32.mrf.mxu0
      %v1684 = vadd.f32 %v1571, %v1683
      %1685 = vmatmul.f32.gmra.mxu0 %v951
      %v1686 = vpop.f32.mrf.mxu0
      %v1687 = vadd.f32 %v1574, %v1686
      %1688 = vmatmul.f32.gmra.mxu0 %v960
      %v1689 = vpop.f32.mrf.mxu0
      %v1690 = vadd.f32 %v1577, %v1689
      %1691 = vmatmul.f32.gmra.mxu0 %v969
      %v1692 = vpop.f32.mrf.mxu0
      %v1693 = vadd.f32 %v1580, %v1692
      %1694 = vmatmul.f32.gmra.mxu0 %v978
      %v1695 = vpop.f32.mrf.mxu0
      %v1696 = vadd.f32 %v1583, %v1695
      %1697 = vmatmul.f32.gmra.mxu0 %v987
      %v1698 = vpop.f32.mrf.mxu0
      %v1699 = vadd.f32 %v1586, %v1698
      %1700 = vmatmul.f32.gmra.mxu0 %v996
      %v1701 = vpop.f32.mrf.mxu0
      %v1702 = vadd.f32 %v1589, %v1701
      %1703 = vmatmul.f32.gmra.mxu0 %v1005
      %v1704 = vpop.f32.mrf.mxu0
      %v1705 = vadd.f32 %v1592, %v1704
      %1706 = vmatmul.f32.gmra.mxu0 %v1014
      %v1707 = vpop.f32.mrf.mxu0
      %v1708 = vadd.f32 %v1595, %v1707
      %1709 = vmatmul.f32.gmra.mxu0 %v1023
      %v1710 = vpop.f32.mrf.mxu0
      %v1711 = vadd.f32 %v1598, %v1710
      %1712 = vmatmul.f32.gmra.mxu0 %v1032
      %v1713 = vpop.f32.mrf.mxu0
      %v1714 = vadd.f32 %v1601, %v1713
      %1715 = vmatmul.f32.gmra.mxu0 %v1041
      %v1716 = vpop.f32.mrf.mxu0
      %v1717 = vadd.f32 %v1604, %v1716
      %1718 = vmatmul.f32.gmra.mxu0 %v1050
      %v1719 = vpop.f32.mrf.mxu0
      %v1720 = vadd.f32 %v1607, %v1719
      %1721 = vmatmul.f32.gmra.mxu0 %v1059
      %v1722 = vpop.f32.mrf.mxu0
      %v1723 = vadd.f32 %v1610, %v1722
      %1724 = vmatmul.f32.gmra.mxu0 %v1068
      %v1725 = vpop.f32.mrf.mxu0
      %v1726 = vadd.f32 %v1613, %v1725
      %1727 = vmatmul.f32.gmra.mxu0 %v1077
      %v1728 = vpop.f32.mrf.mxu0
      %v1729 = vadd.f32 %v1616, %v1728
      %1730 = vmatmul.f32.gmra.mxu0 %v1086
      %v1731 = vpop.f32.mrf.mxu0
      %v1732 = vadd.f32 %v1619, %v1731
      %1733 = vmatmul.f32.gmra.mxu0 %v1095
      %v1734 = vpop.f32.mrf.mxu0
      %v1735 = vadd.f32 %v1622, %v1734
      %1736 = vmatmul.f32.gmra.mxu0 %v1104
      %v1737 = vpop.f32.mrf.mxu0
      %v1738 = vadd.f32 %v1625, %v1737
      %1739 = vmatmul.f32.gmra.mxu0 %v1113
      %v1740 = vpop.f32.mrf.mxu0
      %v1741 = vadd.f32 %v1628, %v1740
      %1742 = vmatmul.f32.gmra.mxu0 %v1122
      %v1743 = vpop.f32.mrf.mxu0
      %v1744 = vadd.f32 %v1631, %v1743
      %1745 = vmatmul.f32.gmra.mxu0 %v1131
      %v1746 = vpop.f32.mrf.mxu0
      %v1747 = vadd.f32 %v1634, %v1746
      %1748 = vmatmul.f32.gmra.mxu0 %v1140
      %v1749 = vpop.f32.mrf.mxu0
      %v1750 = vadd.f32 %v1637, %v1749
      %1751 = vmatmul.f32.gmra.mxu0 %v1149
      %v1752 = vpop.f32.mrf.mxu0
      %v1753 = vadd.f32 %v1640, %v1752
      %1754 = vdwg.mxu0
      %1755 = vmatpush.msra.mxu0 %v1234
      %1756 = vmatpush.msra.mxu0 %v1233
      %1757 = vmatpush.msra.mxu0 %v1232
      %1758 = vmatpush.msra.mxu0 %v1231
      %1759 = vmatpush.msra.mxu0 %v1230
      %1760 = vmatpush.msra.mxu0 %v1229
      %1761 = vmatpush.msra.mxu0 %v1228
      %1762 = vmatpush.msra.mxu0 %v1227
      %1763 = vmatpush.msra.mxu0 %v1226
      %1764 = vmatpush.msra.mxu0 %v1225
      %1765 = vmatpush.msra.mxu0 %v1224
      %1766 = vmatpush.msra.mxu0 %v1223
      %1767 = vmatpush.msra.mxu0 %v1222
      %1768 = vmatpush.msra.mxu0 %v1221
      %1769 = vmatpush.msra.mxu0 %v1220
      %1770 = vmatpush.msra.mxu0 %v1219
      %1771 = vmatmul.f32.gmra.mxu0 %v871
      %v1772 = vpop.f32.mrf.mxu0
      %v1773 = vadd.f32 %v1660, %v1772
      %1774 = vmatmul.f32.gmra.mxu0 %v880
      %v1775 = vpop.f32.mrf.mxu0
      %v1776 = vadd.f32 %v1663, %v1775
      %1777 = vmatmul.f32.gmra.mxu0 %v889
      %v1778 = vpop.f32.mrf.mxu0
      %v1779 = vadd.f32 %v1666, %v1778
      %1780 = vmatmul.f32.gmra.mxu0 %v898
      %v1781 = vpop.f32.mrf.mxu0
      %v1782 = vadd.f32 %v1669, %v1781
      %1783 = vmatmul.f32.gmra.mxu0 %v907
      %v1784 = vpop.f32.mrf.mxu0
      %v1785 = vadd.f32 %v1672, %v1784
      %1786 = vmatmul.f32.gmra.mxu0 %v916
      %v1787 = vpop.f32.mrf.mxu0
      %v1788 = vadd.f32 %v1675, %v1787
      %1789 = vmatmul.f32.gmra.mxu0 %v925
      %v1790 = vpop.f32.mrf.mxu0
      %v1791 = vadd.f32 %v1678, %v1790
      %1792 = vmatmul.f32.gmra.mxu0 %v934
      %v1793 = vpop.f32.mrf.mxu0
      %v1794 = vadd.f32 %v1681, %v1793
      %1795 = vmatmul.f32.gmra.mxu0 %v943
      %v1796 = vpop.f32.mrf.mxu0
      %v1797 = vadd.f32 %v1684, %v1796
      %1798 = vmatmul.f32.gmra.mxu0 %v952
      %v1799 = vpop.f32.mrf.mxu0
      %v1800 = vadd.f32 %v1687, %v1799
      %1801 = vmatmul.f32.gmra.mxu0 %v961
      %v1802 = vpop.f32.mrf.mxu0
      %v1803 = vadd.f32 %v1690, %v1802
      %1804 = vmatmul.f32.gmra.mxu0 %v970
      %v1805 = vpop.f32.mrf.mxu0
      %v1806 = vadd.f32 %v1693, %v1805
      %1807 = vmatmul.f32.gmra.mxu0 %v979
      %v1808 = vpop.f32.mrf.mxu0
      %v1809 = vadd.f32 %v1696, %v1808
      %1810 = vmatmul.f32.gmra.mxu0 %v988
      %v1811 = vpop.f32.mrf.mxu0
      %v1812 = vadd.f32 %v1699, %v1811
      %1813 = vmatmul.f32.gmra.mxu0 %v997
      %v1814 = vpop.f32.mrf.mxu0
      %v1815 = vadd.f32 %v1702, %v1814
      %1816 = vmatmul.f32.gmra.mxu0 %v1006
      %v1817 = vpop.f32.mrf.mxu0
      %v1818 = vadd.f32 %v1705, %v1817
      %1819 = vmatmul.f32.gmra.mxu0 %v1015
      %v1820 = vpop.f32.mrf.mxu0
      %v1821 = vadd.f32 %v1708, %v1820
      %1822 = vmatmul.f32.gmra.mxu0 %v1024
      %v1823 = vpop.f32.mrf.mxu0
      %v1824 = vadd.f32 %v1711, %v1823
      %1825 = vmatmul.f32.gmra.mxu0 %v1033
      %v1826 = vpop.f32.mrf.mxu0
      %v1827 = vadd.f32 %v1714, %v1826
      %1828 = vmatmul.f32.gmra.mxu0 %v1042
      %v1829 = vpop.f32.mrf.mxu0
      %v1830 = vadd.f32 %v1717, %v1829
      %1831 = vmatmul.f32.gmra.mxu0 %v1051
      %v1832 = vpop.f32.mrf.mxu0
      %v1833 = vadd.f32 %v1720, %v1832
      %1834 = vmatmul.f32.gmra.mxu0 %v1060
      %v1835 = vpop.f32.mrf.mxu0
      %v1836 = vadd.f32 %v1723, %v1835
      %1837 = vmatmul.f32.gmra.mxu0 %v1069
      %v1838 = vpop.f32.mrf.mxu0
      %v1839 = vadd.f32 %v1726, %v1838
      %1840 = vmatmul.f32.gmra.mxu0 %v1078
      %v1841 = vpop.f32.mrf.mxu0
      %v1842 = vadd.f32 %v1729, %v1841
      %1843 = vmatmul.f32.gmra.mxu0 %v1087
      %v1844 = vpop.f32.mrf.mxu0
      %v1845 = vadd.f32 %v1732, %v1844
      %1846 = vmatmul.f32.gmra.mxu0 %v1096
      %v1847 = vpop.f32.mrf.mxu0
      %v1848 = vadd.f32 %v1735, %v1847
      %1849 = vmatmul.f32.gmra.mxu0 %v1105
      %v1850 = vpop.f32.mrf.mxu0
      %v1851 = vadd.f32 %v1738, %v1850
      %1852 = vmatmul.f32.gmra.mxu0 %v1114
      %v1853 = vpop.f32.mrf.mxu0
      %v1854 = vadd.f32 %v1741, %v1853
      %1855 = vmatmul.f32.gmra.mxu0 %v1123
      %v1856 = vpop.f32.mrf.mxu0
      %v1857 = vadd.f32 %v1744, %v1856
      %1858 = vmatmul.f32.gmra.mxu0 %v1132
      %v1859 = vpop.f32.mrf.mxu0
      %v1860 = vadd.f32 %v1747, %v1859
      %1861 = vmatmul.f32.gmra.mxu0 %v1141
      %v1862 = vpop.f32.mrf.mxu0
      %v1863 = vadd.f32 %v1750, %v1862
      %1864 = vmatmul.f32.gmra.mxu0 %v1150
      %v1865 = vpop.f32.mrf.mxu0
      %v1866 = vadd.f32 %v1753, %v1865
      %1867 = vdwg.mxu0
      %1868 = vmatpush.msra.mxu0 %v1250
      %1869 = vmatpush.msra.mxu0 %v1249
      %1870 = vmatpush.msra.mxu0 %v1248
      %1871 = vmatpush.msra.mxu0 %v1247
      %1872 = vmatpush.msra.mxu0 %v1246
      %1873 = vmatpush.msra.mxu0 %v1245
      %1874 = vmatpush.msra.mxu0 %v1244
      %1875 = vmatpush.msra.mxu0 %v1243
      %1876 = vmatpush.msra.mxu0 %v1242
      %1877 = vmatpush.msra.mxu0 %v1241
      %1878 = vmatpush.msra.mxu0 %v1240
      %1879 = vmatpush.msra.mxu0 %v1239
      %1880 = vmatpush.msra.mxu0 %v1238
      %1881 = vmatpush.msra.mxu0 %v1237
      %1882 = vmatpush.msra.mxu0 %v1236
      %1883 = vmatpush.msra.mxu0 %v1235
      %1884 = vmatmul.f32.gmra.mxu0 %v872
      %v1885 = vpop.f32.mrf.mxu0
      %v1886 = vadd.f32 %v1773, %v1885
      %1887 = vmatmul.f32.gmra.mxu0 %v881
      %v1888 = vpop.f32.mrf.mxu0
      %v1889 = vadd.f32 %v1776, %v1888
      %1890 = vmatmul.f32.gmra.mxu0 %v890
      %v1891 = vpop.f32.mrf.mxu0
      %v1892 = vadd.f32 %v1779, %v1891
      %1893 = vmatmul.f32.gmra.mxu0 %v899
      %v1894 = vpop.f32.mrf.mxu0
      %v1895 = vadd.f32 %v1782, %v1894
      %1896 = vmatmul.f32.gmra.mxu0 %v908
      %v1897 = vpop.f32.mrf.mxu0
      %v1898 = vadd.f32 %v1785, %v1897
      %1899 = vmatmul.f32.gmra.mxu0 %v917
      %v1900 = vpop.f32.mrf.mxu0
      %v1901 = vadd.f32 %v1788, %v1900
      %1902 = vmatmul.f32.gmra.mxu0 %v926
      %v1903 = vpop.f32.mrf.mxu0
      %v1904 = vadd.f32 %v1791, %v1903
      %1905 = vmatmul.f32.gmra.mxu0 %v935
      %v1906 = vpop.f32.mrf.mxu0
      %v1907 = vadd.f32 %v1794, %v1906
      %1908 = vmatmul.f32.gmra.mxu0 %v944
      %v1909 = vpop.f32.mrf.mxu0
      %v1910 = vadd.f32 %v1797, %v1909
      %1911 = vmatmul.f32.gmra.mxu0 %v953
      %v1912 = vpop.f32.mrf.mxu0
      %v1913 = vadd.f32 %v1800, %v1912
      %1914 = vmatmul.f32.gmra.mxu0 %v962
      %v1915 = vpop.f32.mrf.mxu0
      %v1916 = vadd.f32 %v1803, %v1915
      %1917 = vmatmul.f32.gmra.mxu0 %v971
      %v1918 = vpop.f32.mrf.mxu0
      %v1919 = vadd.f32 %v1806, %v1918
      %1920 = vmatmul.f32.gmra.mxu0 %v980
      %v1921 = vpop.f32.mrf.mxu0
      %v1922 = vadd.f32 %v1809, %v1921
      %1923 = vmatmul.f32.gmra.mxu0 %v989
      %v1924 = vpop.f32.mrf.mxu0
      %v1925 = vadd.f32 %v1812, %v1924
      %1926 = vmatmul.f32.gmra.mxu0 %v998
      %v1927 = vpop.f32.mrf.mxu0
      %v1928 = vadd.f32 %v1815, %v1927
      %1929 = vmatmul.f32.gmra.mxu0 %v1007
      %v1930 = vpop.f32.mrf.mxu0
      %v1931 = vadd.f32 %v1818, %v1930
      %1932 = vmatmul.f32.gmra.mxu0 %v1016
      %v1933 = vpop.f32.mrf.mxu0
      %v1934 = vadd.f32 %v1821, %v1933
      %1935 = vmatmul.f32.gmra.mxu0 %v1025
      %v1936 = vpop.f32.mrf.mxu0
      %v1937 = vadd.f32 %v1824, %v1936
      %1938 = vmatmul.f32.gmra.mxu0 %v1034
      %v1939 = vpop.f32.mrf.mxu0
      %v1940 = vadd.f32 %v1827, %v1939
      %1941 = vmatmul.f32.gmra.mxu0 %v1043
      %v1942 = vpop.f32.mrf.mxu0
      %v1943 = vadd.f32 %v1830, %v1942
      %1944 = vmatmul.f32.gmra.mxu0 %v1052
      %v1945 = vpop.f32.mrf.mxu0
      %v1946 = vadd.f32 %v1833, %v1945
      %1947 = vmatmul.f32.gmra.mxu0 %v1061
      %v1948 = vpop.f32.mrf.mxu0
      %v1949 = vadd.f32 %v1836, %v1948
      %1950 = vmatmul.f32.gmra.mxu0 %v1070
      %v1951 = vpop.f32.mrf.mxu0
      %v1952 = vadd.f32 %v1839, %v1951
      %1953 = vmatmul.f32.gmra.mxu0 %v1079
      %v1954 = vpop.f32.mrf.mxu0
      %v1955 = vadd.f32 %v1842, %v1954
      %1956 = vmatmul.f32.gmra.mxu0 %v1088
      %v1957 = vpop.f32.mrf.mxu0
      %v1958 = vadd.f32 %v1845, %v1957
      %1959 = vmatmul.f32.gmra.mxu0 %v1097
      %v1960 = vpop.f32.mrf.mxu0
      %v1961 = vadd.f32 %v1848, %v1960
      %1962 = vmatmul.f32.gmra.mxu0 %v1106
      %v1963 = vpop.f32.mrf.mxu0
      %v1964 = vadd.f32 %v1851, %v1963
      %1965 = vmatmul.f32.gmra.mxu0 %v1115
      %v1966 = vpop.f32.mrf.mxu0
      %v1967 = vadd.f32 %v1854, %v1966
      %1968 = vmatmul.f32.gmra.mxu0 %v1124
      %v1969 = vpop.f32.mrf.mxu0
      %v1970 = vadd.f32 %v1857, %v1969
      %1971 = vmatmul.f32.gmra.mxu0 %v1133
      %v1972 = vpop.f32.mrf.mxu0
      %v1973 = vadd.f32 %v1860, %v1972
      %1974 = vmatmul.f32.gmra.mxu0 %v1142
      %v1975 = vpop.f32.mrf.mxu0
      %v1976 = vadd.f32 %v1863, %v1975
      %1977 = vmatmul.f32.gmra.mxu0 %v1151
      %v1978 = vpop.f32.mrf.mxu0
      %v1979 = vadd.f32 %v1866, %v1978
      %1980 = vdwg.mxu0
      %1981 = vmatpush.msra.mxu0 %v1266
      %1982 = vmatpush.msra.mxu0 %v1265
      %1983 = vmatpush.msra.mxu0 %v1264
      %1984 = vmatpush.msra.mxu0 %v1263
      %1985 = vmatpush.msra.mxu0 %v1262
      %1986 = vmatpush.msra.mxu0 %v1261
      %1987 = vmatpush.msra.mxu0 %v1260
      %1988 = vmatpush.msra.mxu0 %v1259
      %1989 = vmatpush.msra.mxu0 %v1258
      %1990 = vmatpush.msra.mxu0 %v1257
      %1991 = vmatpush.msra.mxu0 %v1256
      %1992 = vmatpush.msra.mxu0 %v1255
      %1993 = vmatpush.msra.mxu0 %v1254
      %1994 = vmatpush.msra.mxu0 %v1253
      %1995 = vmatpush.msra.mxu0 %v1252
      %1996 = vmatpush.msra.mxu0 %v1251
      %1997 = vmatmul.f32.gmra.mxu0 %v873
      %v1998 = vpop.f32.mrf.mxu0
      %v1999 = vadd.f32 %v1886, %v1998
      %2000 = vmatmul.f32.gmra.mxu0 %v882
      %v2001 = vpop.f32.mrf.mxu0
      %v2002 = vadd.f32 %v1889, %v2001
      %2003 = vmatmul.f32.gmra.mxu0 %v891
      %v2004 = vpop.f32.mrf.mxu0
      %v2005 = vadd.f32 %v1892, %v2004
      %2006 = vmatmul.f32.gmra.mxu0 %v900
      %v2007 = vpop.f32.mrf.mxu0
      %v2008 = vadd.f32 %v1895, %v2007
      %2009 = vmatmul.f32.gmra.mxu0 %v909
      %v2010 = vpop.f32.mrf.mxu0
      %v2011 = vadd.f32 %v1898, %v2010
      %2012 = vmatmul.f32.gmra.mxu0 %v918
      %v2013 = vpop.f32.mrf.mxu0
      %v2014 = vadd.f32 %v1901, %v2013
      %2015 = vmatmul.f32.gmra.mxu0 %v927
      %v2016 = vpop.f32.mrf.mxu0
      %v2017 = vadd.f32 %v1904, %v2016
      %2018 = vmatmul.f32.gmra.mxu0 %v936
      %v2019 = vpop.f32.mrf.mxu0
      %v2020 = vadd.f32 %v1907, %v2019
      %2021 = vmatmul.f32.gmra.mxu0 %v945
      %v2022 = vpop.f32.mrf.mxu0
      %v2023 = vadd.f32 %v1910, %v2022
      %2024 = vmatmul.f32.gmra.mxu0 %v954
      %v2025 = vpop.f32.mrf.mxu0
      %v2026 = vadd.f32 %v1913, %v2025
      %2027 = vmatmul.f32.gmra.mxu0 %v963
      %v2028 = vpop.f32.mrf.mxu0
      %v2029 = vadd.f32 %v1916, %v2028
      %2030 = vmatmul.f32.gmra.mxu0 %v972
      %v2031 = vpop.f32.mrf.mxu0
      %v2032 = vadd.f32 %v1919, %v2031
      %2033 = vmatmul.f32.gmra.mxu0 %v981
      %v2034 = vpop.f32.mrf.mxu0
      %v2035 = vadd.f32 %v1922, %v2034
      %2036 = vmatmul.f32.gmra.mxu0 %v990
      %v2037 = vpop.f32.mrf.mxu0
      %v2038 = vadd.f32 %v1925, %v2037
      %2039 = vmatmul.f32.gmra.mxu0 %v999
      %v2040 = vpop.f32.mrf.mxu0
      %v2041 = vadd.f32 %v1928, %v2040
      %2042 = vmatmul.f32.gmra.mxu0 %v1008
      %v2043 = vpop.f32.mrf.mxu0
      %v2044 = vadd.f32 %v1931, %v2043
      %2045 = vmatmul.f32.gmra.mxu0 %v1017
      %v2046 = vpop.f32.mrf.mxu0
      %v2047 = vadd.f32 %v1934, %v2046
      %2048 = vmatmul.f32.gmra.mxu0 %v1026
      %v2049 = vpop.f32.mrf.mxu0
      %v2050 = vadd.f32 %v1937, %v2049
      %2051 = vmatmul.f32.gmra.mxu0 %v1035
      %v2052 = vpop.f32.mrf.mxu0
      %v2053 = vadd.f32 %v1940, %v2052
      %2054 = vmatmul.f32.gmra.mxu0 %v1044
      %v2055 = vpop.f32.mrf.mxu0
      %v2056 = vadd.f32 %v1943, %v2055
      %2057 = vmatmul.f32.gmra.mxu0 %v1053
      %v2058 = vpop.f32.mrf.mxu0
      %v2059 = vadd.f32 %v1946, %v2058
      %2060 = vmatmul.f32.gmra.mxu0 %v1062
      %v2061 = vpop.f32.mrf.mxu0
      %v2062 = vadd.f32 %v1949, %v2061
      %2063 = vmatmul.f32.gmra.mxu0 %v1071
      %v2064 = vpop.f32.mrf.mxu0
      %v2065 = vadd.f32 %v1952, %v2064
      %2066 = vmatmul.f32.gmra.mxu0 %v1080
      %v2067 = vpop.f32.mrf.mxu0
      %v2068 = vadd.f32 %v1955, %v2067
      %2069 = vmatmul.f32.gmra.mxu0 %v1089
      %v2070 = vpop.f32.mrf.mxu0
      %v2071 = vadd.f32 %v1958, %v2070
      %2072 = vmatmul.f32.gmra.mxu0 %v1098
      %v2073 = vpop.f32.mrf.mxu0
      %v2074 = vadd.f32 %v1961, %v2073
      %2075 = vmatmul.f32.gmra.mxu0 %v1107
      %v2076 = vpop.f32.mrf.mxu0
      %v2077 = vadd.f32 %v1964, %v2076
      %2078 = vmatmul.f32.gmra.mxu0 %v1116
      %v2079 = vpop.f32.mrf.mxu0
      %v2080 = vadd.f32 %v1967, %v2079
      %2081 = vmatmul.f32.gmra.mxu0 %v1125
      %v2082 = vpop.f32.mrf.mxu0
      %v2083 = vadd.f32 %v1970, %v2082
      %2084 = vmatmul.f32.gmra.mxu0 %v1134
      %v2085 = vpop.f32.mrf.mxu0
      %v2086 = vadd.f32 %v1973, %v2085
      %2087 = vmatmul.f32.gmra.mxu0 %v1143
      %v2088 = vpop.f32.mrf.mxu0
      %v2089 = vadd.f32 %v1976, %v2088
      %2090 = vmatmul.f32.gmra.mxu0 %v1152
      %v2091 = vpop.f32.mrf.mxu0
      %v2092 = vadd.f32 %v1979, %v2091
      %2093 = vdwg.mxu0
      %2094 = vmatpush.msra.mxu0 %v1282
      %2095 = vmatpush.msra.mxu0 %v1281
      %2096 = vmatpush.msra.mxu0 %v1280
      %2097 = vmatpush.msra.mxu0 %v1279
      %2098 = vmatpush.msra.mxu0 %v1278
      %2099 = vmatpush.msra.mxu0 %v1277
      %2100 = vmatpush.msra.mxu0 %v1276
      %2101 = vmatpush.msra.mxu0 %v1275
      %2102 = vmatpush.msra.mxu0 %v1274
      %2103 = vmatpush.msra.mxu0 %v1273
      %2104 = vmatpush.msra.mxu0 %v1272
      %2105 = vmatpush.msra.mxu0 %v1271
      %2106 = vmatpush.msra.mxu0 %v1270
      %2107 = vmatpush.msra.mxu0 %v1269
      %2108 = vmatpush.msra.mxu0 %v1268
      %2109 = vmatpush.msra.mxu0 %v1267
      %2110 = vmatmul.f32.gmra.mxu0 %v874
      %v2111 = vpop.f32.mrf.mxu0
      %v2112 = vadd.f32 %v1999, %v2111
      %2113 = vmatmul.f32.gmra.mxu0 %v883
      %v2114 = vpop.f32.mrf.mxu0
      %v2115 = vadd.f32 %v2002, %v2114
      %2116 = vmatmul.f32.gmra.mxu0 %v892
      %v2117 = vpop.f32.mrf.mxu0
      %v2118 = vadd.f32 %v2005, %v2117
      %2119 = vmatmul.f32.gmra.mxu0 %v901
      %v2120 = vpop.f32.mrf.mxu0
      %v2121 = vadd.f32 %v2008, %v2120
      %2122 = vmatmul.f32.gmra.mxu0 %v910
      %v2123 = vpop.f32.mrf.mxu0
      %v2124 = vadd.f32 %v2011, %v2123
      %2125 = vmatmul.f32.gmra.mxu0 %v919
      %v2126 = vpop.f32.mrf.mxu0
      %v2127 = vadd.f32 %v2014, %v2126
      %2128 = vmatmul.f32.gmra.mxu0 %v928
      %v2129 = vpop.f32.mrf.mxu0
      %v2130 = vadd.f32 %v2017, %v2129
      %2131 = vmatmul.f32.gmra.mxu0 %v937
      %v2132 = vpop.f32.mrf.mxu0
      %v2133 = vadd.f32 %v2020, %v2132
      %2134 = vmatmul.f32.gmra.mxu0 %v946
      %v2135 = vpop.f32.mrf.mxu0
      %v2136 = vadd.f32 %v2023, %v2135
      %2137 = vmatmul.f32.gmra.mxu0 %v955
      %v2138 = vpop.f32.mrf.mxu0
      %v2139 = vadd.f32 %v2026, %v2138
      %2140 = vmatmul.f32.gmra.mxu0 %v964
      %v2141 = vpop.f32.mrf.mxu0
      %v2142 = vadd.f32 %v2029, %v2141
      %2143 = vmatmul.f32.gmra.mxu0 %v973
      %v2144 = vpop.f32.mrf.mxu0
      %v2145 = vadd.f32 %v2032, %v2144
      %2146 = vmatmul.f32.gmra.mxu0 %v982
      %v2147 = vpop.f32.mrf.mxu0
      %v2148 = vadd.f32 %v2035, %v2147
      %2149 = vmatmul.f32.gmra.mxu0 %v991
      %v2150 = vpop.f32.mrf.mxu0
      %v2151 = vadd.f32 %v2038, %v2150
      %2152 = vmatmul.f32.gmra.mxu0 %v1000
      %v2153 = vpop.f32.mrf.mxu0
      %v2154 = vadd.f32 %v2041, %v2153
      %2155 = vmatmul.f32.gmra.mxu0 %v1009
      %v2156 = vpop.f32.mrf.mxu0
      %v2157 = vadd.f32 %v2044, %v2156
      %2158 = vmatmul.f32.gmra.mxu0 %v1018
      %v2159 = vpop.f32.mrf.mxu0
      %v2160 = vadd.f32 %v2047, %v2159
      %2161 = vmatmul.f32.gmra.mxu0 %v1027
      %v2162 = vpop.f32.mrf.mxu0
      %v2163 = vadd.f32 %v2050, %v2162
      %2164 = vmatmul.f32.gmra.mxu0 %v1036
      %v2165 = vpop.f32.mrf.mxu0
      %v2166 = vadd.f32 %v2053, %v2165
      %2167 = vmatmul.f32.gmra.mxu0 %v1045
      %v2168 = vpop.f32.mrf.mxu0
      %v2169 = vadd.f32 %v2056, %v2168
      %2170 = vmatmul.f32.gmra.mxu0 %v1054
      %v2171 = vpop.f32.mrf.mxu0
      %v2172 = vadd.f32 %v2059, %v2171
      %2173 = vmatmul.f32.gmra.mxu0 %v1063
      %v2174 = vpop.f32.mrf.mxu0
      %v2175 = vadd.f32 %v2062, %v2174
      %2176 = vmatmul.f32.gmra.mxu0 %v1072
      %v2177 = vpop.f32.mrf.mxu0
      %v2178 = vadd.f32 %v2065, %v2177
      %2179 = vmatmul.f32.gmra.mxu0 %v1081
      %v2180 = vpop.f32.mrf.mxu0
      %v2181 = vadd.f32 %v2068, %v2180
      %2182 = vmatmul.f32.gmra.mxu0 %v1090
      %v2183 = vpop.f32.mrf.mxu0
      %v2184 = vadd.f32 %v2071, %v2183
      %2185 = vmatmul.f32.gmra.mxu0 %v1099
      %v2186 = vpop.f32.mrf.mxu0
      %v2187 = vadd.f32 %v2074, %v2186
      %2188 = vmatmul.f32.gmra.mxu0 %v1108
      %v2189 = vpop.f32.mrf.mxu0
      %v2190 = vadd.f32 %v2077, %v2189
      %2191 = vmatmul.f32.gmra.mxu0 %v1117
      %v2192 = vpop.f32.mrf.mxu0
      %v2193 = vadd.f32 %v2080, %v2192
      %2194 = vmatmul.f32.gmra.mxu0 %v1126
      %v2195 = vpop.f32.mrf.mxu0
      %v2196 = vadd.f32 %v2083, %v2195
      %2197 = vmatmul.f32.gmra.mxu0 %v1135
      %v2198 = vpop.f32.mrf.mxu0
      %v2199 = vadd.f32 %v2086, %v2198
      %2200 = vmatmul.f32.gmra.mxu0 %v1144
      %v2201 = vpop.f32.mrf.mxu0
      %v2202 = vadd.f32 %v2089, %v2201
      %2203 = vmatmul.f32.gmra.mxu0 %v1153
      %v2204 = vpop.f32.mrf.mxu0
      %v2205 = vadd.f32 %v2092, %v2204
      %2206 = vdwg.mxu0
      %2207 = vmatpush.msra.mxu0 %v1298
      %2208 = vmatpush.msra.mxu0 %v1297
      %2209 = vmatpush.msra.mxu0 %v1296
      %2210 = vmatpush.msra.mxu0 %v1295
      %2211 = vmatpush.msra.mxu0 %v1294
      %2212 = vmatpush.msra.mxu0 %v1293
      %2213 = vmatpush.msra.mxu0 %v1292
      %2214 = vmatpush.msra.mxu0 %v1291
      %2215 = vmatpush.msra.mxu0 %v1290
      %2216 = vmatpush.msra.mxu0 %v1289
      %2217 = vmatpush.msra.mxu0 %v1288
      %2218 = vmatpush.msra.mxu0 %v1287
      %2219 = vmatpush.msra.mxu0 %v1286
      %2220 = vmatpush.msra.mxu0 %v1285
      %2221 = vmatpush.msra.mxu0 %v1284
      %2222 = vmatpush.msra.mxu0 %v1283
      %2223 = vmatmul.f32.gmra.mxu0 %v875
      %v2224 = vpop.f32.mrf.mxu0
      %v2225 = vadd.f32 %v2112, %v2224
      %2226 = vmatmul.f32.gmra.mxu0 %v884
      %v2227 = vpop.f32.mrf.mxu0
      %v2228 = vadd.f32 %v2115, %v2227
      %2229 = vmatmul.f32.gmra.mxu0 %v893
      %v2230 = vpop.f32.mrf.mxu0
      %v2231 = vadd.f32 %v2118, %v2230
      %2232 = vmatmul.f32.gmra.mxu0 %v902
      %v2233 = vpop.f32.mrf.mxu0
      %v2234 = vadd.f32 %v2121, %v2233
      %2235 = vmatmul.f32.gmra.mxu0 %v911
      %v2236 = vpop.f32.mrf.mxu0
      %v2237 = vadd.f32 %v2124, %v2236
      %2238 = vmatmul.f32.gmra.mxu0 %v920
      %v2239 = vpop.f32.mrf.mxu0
      %v2240 = vadd.f32 %v2127, %v2239
      %2241 = vmatmul.f32.gmra.mxu0 %v929
      %v2242 = vpop.f32.mrf.mxu0
      %v2243 = vadd.f32 %v2130, %v2242
      %2244 = vmatmul.f32.gmra.mxu0 %v938
      %v2245 = vpop.f32.mrf.mxu0
      %v2246 = vadd.f32 %v2133, %v2245
      %2247 = vmatmul.f32.gmra.mxu0 %v947
      %v2248 = vpop.f32.mrf.mxu0
      %v2249 = vadd.f32 %v2136, %v2248
      %2250 = vmatmul.f32.gmra.mxu0 %v956
      %v2251 = vpop.f32.mrf.mxu0
      %v2252 = vadd.f32 %v2139, %v2251
      %2253 = vmatmul.f32.gmra.mxu0 %v965
      %v2254 = vpop.f32.mrf.mxu0
      %v2255 = vadd.f32 %v2142, %v2254
      %2256 = vmatmul.f32.gmra.mxu0 %v974
      %v2257 = vpop.f32.mrf.mxu0
      %v2258 = vadd.f32 %v2145, %v2257
      %2259 = vmatmul.f32.gmra.mxu0 %v983
      %v2260 = vpop.f32.mrf.mxu0
      %v2261 = vadd.f32 %v2148, %v2260
      %2262 = vmatmul.f32.gmra.mxu0 %v992
      %v2263 = vpop.f32.mrf.mxu0
      %v2264 = vadd.f32 %v2151, %v2263
      %2265 = vmatmul.f32.gmra.mxu0 %v1001
      %v2266 = vpop.f32.mrf.mxu0
      %v2267 = vadd.f32 %v2154, %v2266
      %2268 = vmatmul.f32.gmra.mxu0 %v1010
      %v2269 = vpop.f32.mrf.mxu0
      %v2270 = vadd.f32 %v2157, %v2269
      %2271 = vmatmul.f32.gmra.mxu0 %v1019
      %v2272 = vpop.f32.mrf.mxu0
      %v2273 = vadd.f32 %v2160, %v2272
      %2274 = vmatmul.f32.gmra.mxu0 %v1028
      %v2275 = vpop.f32.mrf.mxu0
      %v2276 = vadd.f32 %v2163, %v2275
      %2277 = vmatmul.f32.gmra.mxu0 %v1037
      %v2278 = vpop.f32.mrf.mxu0
      %v2279 = vadd.f32 %v2166, %v2278
      %2280 = vmatmul.f32.gmra.mxu0 %v1046
      %v2281 = vpop.f32.mrf.mxu0
      %v2282 = vadd.f32 %v2169, %v2281
      %2283 = vmatmul.f32.gmra.mxu0 %v1055
      %v2284 = vpop.f32.mrf.mxu0
      %v2285 = vadd.f32 %v2172, %v2284
      %2286 = vmatmul.f32.gmra.mxu0 %v1064
      %v2287 = vpop.f32.mrf.mxu0
      %v2288 = vadd.f32 %v2175, %v2287
      %2289 = vmatmul.f32.gmra.mxu0 %v1073
      %v2290 = vpop.f32.mrf.mxu0
      %v2291 = vadd.f32 %v2178, %v2290
      %2292 = vmatmul.f32.gmra.mxu0 %v1082
      %v2293 = vpop.f32.mrf.mxu0
      %v2294 = vadd.f32 %v2181, %v2293
      %2295 = vmatmul.f32.gmra.mxu0 %v1091
      %v2296 = vpop.f32.mrf.mxu0
      %v2297 = vadd.f32 %v2184, %v2296
      %2298 = vmatmul.f32.gmra.mxu0 %v1100
      %v2299 = vpop.f32.mrf.mxu0
      %v2300 = vadd.f32 %v2187, %v2299
      %2301 = vmatmul.f32.gmra.mxu0 %v1109
      %v2302 = vpop.f32.mrf.mxu0
      %v2303 = vadd.f32 %v2190, %v2302
      %2304 = vmatmul.f32.gmra.mxu0 %v1118
      %v2305 = vpop.f32.mrf.mxu0
      %v2306 = vadd.f32 %v2193, %v2305
      %2307 = vmatmul.f32.gmra.mxu0 %v1127
      %v2308 = vpop.f32.mrf.mxu0
      %v2309 = vadd.f32 %v2196, %v2308
      %2310 = vmatmul.f32.gmra.mxu0 %v1136
      %v2311 = vpop.f32.mrf.mxu0
      %v2312 = vadd.f32 %v2199, %v2311
      %2313 = vmatmul.f32.gmra.mxu0 %v1145
      %v2314 = vpop.f32.mrf.mxu0
      %v2315 = vadd.f32 %v2202, %v2314
      %2316 = vmatmul.f32.gmra.mxu0 %v1154
      %v2317 = vpop.f32.mrf.mxu0
      %v2318 = vadd.f32 %v2205, %v2317
      %2319 = vdwg.mxu0
      %2320 = vst [vmem:[%s170] sm:$0xff] %v2225
      %2321 = vst [vmem:[%s170 + $0x8] sm:$0xff] %v2228
      %2322 = vst [vmem:[%s170 + $0x10] sm:$0xff] %v2231
      %2323 = vst [vmem:[%s170 + $0x18] sm:$0xff] %v2234
      %2324 = vst [vmem:[%s170 + $0x20] sm:$0xff] %v2237
      %2325 = vst [vmem:[%s170 + $0x28] sm:$0xff] %v2240
      %2326 = vst [vmem:[%s170 + $0x30] sm:$0xff] %v2243
      %2327 = vst [vmem:[%s170 + $0x38] sm:$0xff] %v2246
      %2328 = vst [vmem:[%s170 + $0x40] sm:$0xff] %v2249
      %2329 = vst [vmem:[%s170 + $0x48] sm:$0xff] %v2252
      %2330 = vst [vmem:[%s170 + $0x50] sm:$0xff] %v2255
      %2331 = vst [vmem:[%s170 + $0x58] sm:$0xff] %v2258
      %2332 = vst [vmem:[%s170 + $0x60] sm:$0xff] %v2261
      %2333 = vst [vmem:[%s170 + $0x68] sm:$0xff] %v2264
      %2334 = vst [vmem:[%s170 + $0x70] sm:$0xff] %v2267
      %2335 = vst [vmem:[%s170 + $0x78] sm:$0xff] %v2270
      %2336 = vst [vmem:[%s170 + $0x80] sm:$0xff] %v2273
      %2337 = vst [vmem:[%s170 + $0x88] sm:$0xff] %v2276
      %2338 = vst [vmem:[%s170 + $0x90] sm:$0xff] %v2279
      %2339 = vst [vmem:[%s170 + $0x98] sm:$0xff] %v2282
      %2340 = vst [vmem:[%s170 + $0xa0] sm:$0xff] %v2285
      %2341 = vst [vmem:[%s170 + $0xa8] sm:$0xff] %v2288
      %2342 = vst [vmem:[%s170 + $0xb0] sm:$0xff] %v2291
      %2343 = vst [vmem:[%s170 + $0xb8] sm:$0xff] %v2294
      %2344 = vst [vmem:[%s170 + $0xc0] sm:$0xff] %v2297
      %2345 = vst [vmem:[%s170 + $0xc8] sm:$0xff] %v2300
      %2346 = vst [vmem:[%s170 + $0xd0] sm:$0xff] %v2303
      %2347 = vst [vmem:[%s170 + $0xd8] sm:$0xff] %v2306
      %2348 = vst [vmem:[%s170 + $0xe0] sm:$0xff] %v2309
      %2349 = vst [vmem:[%s170 + $0xe8] sm:$0xff] %v2312
      %2350 = vst [vmem:[%s170 + $0xf0] sm:$0xff] %v2315
      %2351 = vst [vmem:[%s170 + $0xf8] sm:$0xff] %v2318
      %p2352 = scmp.lt.s32.totalorder %s14, 1
      %s2353 = scalar_select %p2352, %s14, 1
      %s2354 = smul.addr %s2353, 32
      %s2355 = smul.addr %s2354, 8
      %s2356 = scalar_lea.vmem %s3, %s2355
      // Predicated region
      $region33: #{edsr_forward.7} parent=31 // pred_check
        %p2357 = pneg %p100
      $region34: #{edsr_forward.7} parent=31 // pred_check_branch
        %2359 = sbr.rel (%p2357) target = $region36
      $region35: #{edsr_forward.7} parent=31 // pred_region
        _
      $region36: #{edsr_forward.7} parent=31 // pred_fallthru
        _
    $region32: #{edsr_forward.7} parent=5 // pred_fallthru
      _
    %p2360 = scmp.le.s32.totalorder 2, %s9
    // Predicated region
    $region37: #{edsr_forward.7} parent=5 // pred_check
      %p2361 = pneg %p2360
    $region38: #{edsr_forward.7} parent=5 // pred_check_branch
      %2363 = sbr.rel (%p2361) target = $region40
    $region39: #{edsr_forward.7} parent=5 // pred_region
      %s2364 = ssub.s32 %s9, 2
      // Predicated region
      $region41: #{edsr_forward.7} parent=39 // pred_check
        %p2365 = pneg %p106
      $region42: #{edsr_forward.7} parent=39 // pred_check_branch
        %2367 = sbr.rel (%p2365) target = $region44
      $region43: #{edsr_forward.7} parent=39 // pred_region
        %p2368 = scmp.lt.s32.totalorder %s15, 1
        %s2369 = scalar_select %p2368, %s15, 1
        %s2370 = smul.addr %s2369, 32
        %s2371 = smul.addr %s2370, 8
        %s2372 = scalar_lea.vmem %s3, %s2371
      $region44: #{edsr_forward.7} parent=39 // pred_fallthru
        _
    $region40: #{edsr_forward.7} parent=5 // pred_fallthru
      _
  $region6: #{edsr_forward.7} parent=0 // loop_footer
    %s13 = sadd.s32 1, %s9
  $region7: #{edsr_forward.7} parent=0 // loop_footer_branch
    %8 = sbr.rel target = $region3
  $region8: #{edsr_forward.7} parent=0 // loop_exit
    _

</llo_original>
